<compile_context>
chip_gen: v5e
topology: v5e:2x2
jax: 0.10.0
libtpu: 0.0.40
codegen_flags: <defaults>
</compile_context>

<pallas_src>
import functools

import jax
import jax.numpy as jnp
from jax.experimental import pallas as pl
from jax.experimental.pallas import tpu as pltpu

_LN_EPS = 1e-5
_W_DTYPE = jnp.bfloat16          # MXU operand dtype (accumulation stays f32)
_TRANS_B = (((1,), (1,)), ((), ()))   # dot_general dims for q @ k^T


def _row_tile(n):
    """Largest row-tile (multiple of 8) dividing n, capped at 512."""
    for t in (512, 256, 128, 64, 32, 16, 8):
        if n % t == 0:
            return t
    return n


def _ff_tile(ff):
    """FF-dimension tile: full if small, else a 128-multiple divisor."""
    if ff <= 512:
        return ff
    for t in (512, 384, 256, 128):
        if ff % t == 0:
            return t
    return ff


def _vmem_params(semantics, resident_arrays, stream_block_bytes):
    """CompilerParams with a vmem_limit sized from block shapes.

    resident_arrays: weights/biases whose block == full array (stay in VMEM).
    stream_block_bytes: per-grid-step streamed block bytes (activations, out,
    scratch, streamed weight tiles).
    """
    resident = sum(int(a.size) * a.dtype.itemsize for a in resident_arrays)
    limit = int(min(max(2 * (resident + int(stream_block_bytes)) + (4 << 20),
                        8 << 20),
                    64 << 20))
    return pltpu.CompilerParams(dimension_semantics=semantics,
                                vmem_limit_bytes=limit)


# ----------------------------- in-kernel helpers -----------------------------

def _layer_norm(y, g, b, eps):
    # y:(S,D) f32, g/b:(1,D)
    mu = jnp.mean(y, axis=-1, keepdims=True)
    var = jnp.mean(jnp.square(y - mu), axis=-1, keepdims=True)
    return (y - mu) * jax.lax.rsqrt(var + eps) * g + b


def _mha_lane_dense(q, k, v, mask_add, nhead):
    """Multi-head attention on lane-packed projections.

    q:(S,D), k,v:(M,D) f32 (scale already folded into Wq); mask_add:(1,M)
    additive.  Heads are split by static lane slices; the per-head outputs are
    re-packed lane-dense so the caller can do a single (S,D)@(D,D) out-proj.
    Returns (S,D) f32.
    """
    S, D = q.shape
    Dh = D // nhead
    outs = []
    for h in range(nhead):           # per-head contraction is inherent to MHA
        lo = h * Dh
        qh = q[:, lo:lo + Dh].astype(jnp.bfloat16)
        kh = k[:, lo:lo + Dh].astype(jnp.bfloat16)
        vh = v[:, lo:lo + Dh].astype(jnp.bfloat16)
        s = jax.lax.dot_general(qh, kh, _TRANS_B,
                                preferred_element_type=jnp.float32)   # (S,M)
        s = s + mask_add
        s = s - jnp.max(s, axis=-1, keepdims=True)
        p = jnp.exp(s)
        p = p * pl.reciprocal(jnp.sum(p, axis=-1, keepdims=True), approx=True)
        outs.append(jnp.dot(p.astype(jnp.bfloat16), vh,
                            preferred_element_type=jnp.float32))      # (S,Dh)
    return jnp.concatenate(outs, axis=-1)                             # (S,D)


def _attn_epilogue(attn, x, wo, bo, g, b, eps):
    # single (S,D)@(D,D) out-proj + residual + LayerNorm, all f32 epilogue
    y = (jnp.dot(attn.astype(jnp.bfloat16), wo,
                 preferred_element_type=jnp.float32) + bo + x)
    return _layer_norm(y, g, b, eps)


# --------------------------------- kernels -----------------------------------

def _self_attn_block_kernel(x_ref, m_ref, wqkv_ref, bqkv_ref, wo_ref, bo_ref,
                            g_ref, b_ref, o_ref, *, nhead, eps):
    # Fused: QKV proj -> MHA -> out-proj + residual + LN, one batch element.
    x = x_ref[0]                                           # (S, D) f32
    D = x.shape[-1]
    qkv = (jnp.dot(x.astype(jnp.bfloat16), wqkv_ref[...],
                   preferred_element_type=jnp.float32) + bqkv_ref[...])
    attn = _mha_lane_dense(qkv[:, :D], qkv[:, D:2 * D], qkv[:, 2 * D:],
                           m_ref[0], nhead)
    o_ref[0] = _attn_epilogue(attn, x, wo_ref[...], bo_ref[...],
                              g_ref[...], b_ref[...], eps).astype(o_ref.dtype)


def _skip_self_attn_block_kernel(x_ref, s_ref, m_ref, wa_ref, wb_ref, bs_ref,
                                 wqkv_ref, bqkv_ref, wo_ref, bo_ref,
                                 g_ref, b_ref, o_ref, *, nhead, eps):
    # Fused: skip linear (x@Wa + skip@Wb + b == concat([x,skip])@W) -> QKV proj
    # -> MHA -> out-proj + residual + LN, one batch element.
    xn = (jnp.dot(x_ref[0].astype(jnp.bfloat16), wa_ref[...],
                  preferred_element_type=jnp.float32)
          + jnp.dot(s_ref[0].astype(jnp.bfloat16), wb_ref[...],
                    preferred_element_type=jnp.float32)
          + bs_ref[...])                                   # (S, D) f32
    D = xn.shape[-1]
    qkv = (jnp.dot(xn.astype(jnp.bfloat16), wqkv_ref[...],
                   preferred_element_type=jnp.float32) + bqkv_ref[...])
    attn = _mha_lane_dense(qkv[:, :D], qkv[:, D:2 * D], qkv[:, 2 * D:],
                           m_ref[0], nhead)
    o_ref[0] = _attn_epilogue(attn, xn, wo_ref[...], bo_ref[...],
                              g_ref[...], b_ref[...], eps).astype(o_ref.dtype)


def _cross_attn_block_kernel(x_ref, mem_ref, m_ref, wq_ref, bq_ref,
                             wkv_ref, bkv_ref, wo_ref, bo_ref,
                             g_ref, b_ref, o_ref, *, nhead, eps):
    # Fused: Q proj + KV proj(memory) -> MHA -> out-proj + residual + LN.
    x = x_ref[0]                                           # (S, D) f32
    mem = mem_ref[0]                                       # (M, D) f32
    D = x.shape[-1]
    q = (jnp.dot(x.astype(jnp.bfloat16), wq_ref[...],
                 preferred_element_type=jnp.float32) + bq_ref[...])
    kv = (jnp.dot(mem.astype(jnp.bfloat16), wkv_ref[...],
                  preferred_element_type=jnp.float32) + bkv_ref[...])
    attn = _mha_lane_dense(q, kv[:, :D], kv[:, D:], m_ref[0], nhead)
    o_ref[0] = _attn_epilogue(attn, x, wo_ref[...], bo_ref[...],
                              g_ref[...], b_ref[...], eps).astype(o_ref.dtype)


def _ffn_add_ln_kernel(x_ref, w1_ref, b1_ref, w2_ref, b2_ref, g_ref, b_ref,
                       o_ref, acc_ref, *, eps):
    # y = LN( x + relu(x @ W1 + b1) @ W2 + b2 ), FF axis tiled ('arbitrary')
    # with a VMEM f32 accumulator; residual + LN only on the last FF step.
    ffi = pl.program_id(1)

    @pl.when(ffi == 0)
    def _():
        acc_ref[...] = jnp.zeros_like(acc_ref)

    xb = x_ref[...].astype(jnp.bfloat16)
    h = (jnp.dot(xb, w1_ref[...], preferred_element_type=jnp.float32)
         + b1_ref[...])
    h = jnp.maximum(h, 0.0)
    acc_ref[...] += jnp.dot(h.astype(jnp.bfloat16), w2_ref[...],
                            preferred_element_type=jnp.float32)

    @pl.when(ffi == pl.num_programs(1) - 1)
    def _():
        y = acc_ref[...] + b2_ref[...] + x_ref[...].astype(jnp.float32)
        o_ref[...] = _layer_norm(y, g_ref[...], b_ref[...],
                                 eps).astype(o_ref.dtype)


# ----------------------------- kernel wrappers --------------------------------

def self_attn_block(x, mask_add, attn, norm, nhead, eps=_LN_EPS,
                    skip=None, lin=None):
    """Fused self-attention sublayer; optionally fused with the skip linear."""
    B, S, D = x.shape
    act_blk = (1, S, D)
    mask_blk = (1, 1, S)
    if skip is None:
        kern = functools.partial(_self_attn_block_kernel, nhead=nhead, eps=eps)
        resident = (attn["wqkv"], attn["bqkv"], attn["wo"], attn["bo"],
                    norm["g"], norm["b"])
        args = (x, mask_add) + resident
        in_specs = ([pl.BlockSpec(act_blk, lambda b: (b, 0, 0)),
                     pl.BlockSpec(mask_blk, lambda b: (b, 0, 0))]
                    + [pl.BlockSpec(a.shape, lambda b: (0, 0))
                       for a in resident])
        stream = 4 * (2 * S * D + S)
    else:
        kern = functools.partial(_skip_self_attn_block_kernel,
                                 nhead=nhead, eps=eps)
        resident = (lin["wa"], lin["wb"], lin["b"],
                    attn["wqkv"], attn["bqkv"], attn["wo"], attn["bo"],
                    norm["g"], norm["b"])
        args = (x, skip, mask_add) + resident
        in_specs = ([pl.BlockSpec(act_blk, lambda b: (b, 0, 0)),
                     pl.BlockSpec(act_blk, lambda b: (b, 0, 0)),
                     pl.BlockSpec(mask_blk, lambda b: (b, 0, 0))]
                    + [pl.BlockSpec(a.shape, lambda b: (0, 0))
                       for a in resident])
        stream = 4 * (3 * S * D + S)
    return pl.pallas_call(
        kern,
        out_shape=jax.ShapeDtypeStruct((B, S, D), x.dtype),
        grid=(B,),
        in_specs=in_specs,
        out_specs=pl.BlockSpec(act_blk, lambda b: (b, 0, 0)),
        compiler_params=_vmem_params(("parallel",), resident, stream),
    )(*args)


def cross_attn_block(x, memory, mask_add, attn, norm, nhead, eps=_LN_EPS):
    """Fused cross-attention sublayer (Q/KV proj + MHA + out-proj + LN)."""
    B, S, D = x.shape
    M = memory.shape[1]
    kern = functools.partial(_cross_attn_block_kernel, nhead=nhead, eps=eps)
    resident = (attn["wq"], attn["bq"], attn["wkv"], attn["bkv"],
                attn["wo"], attn["bo"], norm["g"], norm["b"])
    args = (x, memory, mask_add) + resident
    in_specs = ([pl.BlockSpec((1, S, D), lambda b: (b, 0, 0)),
                 pl.BlockSpec((1, M, D), lambda b: (b, 0, 0)),
                 pl.BlockSpec((1, 1, M), lambda b: (b, 0, 0))]
                + [pl.BlockSpec(a.shape, lambda b: (0, 0)) for a in resident])
    stream = 4 * (2 * S * D + M * D + M)
    return pl.pallas_call(
        kern,
        out_shape=jax.ShapeDtypeStruct((B, S, D), x.dtype),
        grid=(B,),
        in_specs=in_specs,
        out_specs=pl.BlockSpec((1, S, D), lambda b: (b, 0, 0)),
        compiler_params=_vmem_params(("parallel",), resident, stream),
    )(*args)


def ffn_add_ln(x2d, pffn, pln, eps=_LN_EPS):
    """Fused FFN + residual + LayerNorm, row-tiled and FF-dim tiled."""
    n, d = x2d.shape
    ff = pffn["w1"].shape[1]
    tm = _row_tile(n)
    tff = _ff_tile(ff)
    kern = functools.partial(_ffn_add_ln_kernel, eps=eps)
    in_specs = [
        pl.BlockSpec((tm, d), lambda i, j: (i, 0)),
        pl.BlockSpec((d, tff), lambda i, j: (0, j)),
        pl.BlockSpec((1, tff), lambda i, j: (0, j)),
        pl.BlockSpec((tff, d), lambda i, j: (j, 0)),
        pl.BlockSpec((1, d), lambda i, j: (0, 0)),
        pl.BlockSpec((1, d), lambda i, j: (0, 0)),
        pl.BlockSpec((1, d), lambda i, j: (0, 0)),
    ]
    resident = (pffn["b2"], pln["g"], pln["b"])
    stream = (4 * tm * d * 3                       # x block + out block + acc
              + 2 * (d * tff + tff * d) + 4 * tff)  # streamed bf16 W tiles + b1
    return pl.pallas_call(
        kern,
        out_shape=jax.ShapeDtypeStruct((n, d), x2d.dtype),
        grid=(n // tm, ff // tff),
        in_specs=in_specs,
        out_specs=pl.BlockSpec((tm, d), lambda i, j: (i, 0)),
        scratch_shapes=[pltpu.VMEM((tm, d), jnp.float32)],
        compiler_params=_vmem_params(("parallel", "arbitrary"),
                                     resident, stream),
    )(x2d, pffn["w1"], pffn["b1"], pffn["w2"], pffn["b2"],
      pln["g"], pln["b"])


# --------------------------- model building blocks ---------------------------

def decoder_layer(x, memory, p, src_mask, mem_mask, nhead,
                  skip=None, skip_lin=None):
    B, S, D = x.shape
    # self-attention sublayer (optionally fused with the U-Net skip linear)
    x = self_attn_block(x, src_mask, p["self_attn"], p["norm1"], nhead,
                        skip=skip, lin=skip_lin)
    # cross-attention sublayer
    x = cross_attn_block(x, memory, mem_mask, p["cross_attn"], p["norm2"],
                         nhead)
    # FFN sublayer
    x = ffn_add_ln(x.reshape(B * S, D), p["ffn"], p["norm3"]).reshape(B, S, D)
    return x


def skip_decode_transformer(params, src, memory, src_kpm=None, mem_kpm=None,
                            nhead=4):
    B, S, D = src.shape
    M = memory.shape[1]

    def to_additive(kpm, L):
        # PyTorch key_padding_mask: True = padded / ignored.
        # NOTE: fully-masked rows give a uniform softmax here instead of
        # PyTorch's NaN behaviour; not hit in practice.
        if kpm is None:
            return jnp.zeros((B, 1, L), jnp.float32)
        return jnp.where(kpm, jnp.float32(-1e30),
                         jnp.float32(0.0)).reshape(B, 1, L)

    src_mask = to_additive(src_kpm, S)
    mem_mask = to_additive(mem_kpm, M)

    x = src
    xs = []
    for p in params["input_blocks"]:
        x = decoder_layer(x, memory, p, src_mask, mem_mask, nhead)
        xs.append(x)
    x = decoder_layer(x, memory, params["middle_block"],
                      src_mask, mem_mask, nhead)
    for p, lin in zip(params["output_blocks"], params["linear_blocks"]):
        skip = xs.pop()
        x = decoder_layer(x, memory, p, src_mask, mem_mask, nhead,
                          skip=skip, skip_lin=lin)
    # TODO(synk): `norm` is None in this instantiation; if provided, apply a
    # final LayerNorm here (reuse the fused LN epilogue with zero residual).
    return x


# ------------------------------ parameter init ------------------------------

def xavier_uniform(key, shape):
    fan_in, fan_out = shape[0], shape[1]
    a = (6.0 / (fan_in + fan_out)) ** 0.5
    return jax.random.uniform(key, shape, jnp.float32, -a, a)


def init_attn(key, d, nhead, fuse_qkv):
    ks = jax.random.split(key, 4)
    dh = d // nhead
    scale = 1.0 / (dh ** 0.5)
    # fold 1/sqrt(Dh) into Wq (biases are zero, so no bias scaling needed)
    wq = xavier_uniform(ks[0], (d, d)) * scale
    wk = xavier_uniform(ks[1], (d, d))
    wv = xavier_uniform(ks[2], (d, d))
    wo = xavier_uniform(ks[3], (d, d))
    z = lambda n: jnp.zeros((1, n), jnp.float32)
    p = {"wo": wo.astype(_W_DTYPE), "bo": z(d)}
    if fuse_qkv:                                  # self-attn: one (D,3D) proj
        p["wqkv"] = jnp.concatenate([wq, wk, wv], axis=1).astype(_W_DTYPE)
        p["bqkv"] = z(3 * d)
    else:                                         # cross-attn: Wq + packed Wkv
        p["wq"], p["bq"] = wq.astype(_W_DTYPE), z(d)
        p["wkv"] = jnp.concatenate([wk, wv], axis=1).astype(_W_DTYPE)
        p["bkv"] = z(2 * d)
    return p


def init_decoder_layer(key, d, dff, nhead):
    ks = jax.random.split(key, 4)
    ln = lambda: {"g": jnp.ones((1, d), jnp.float32),
                  "b": jnp.zeros((1, d), jnp.float32)}
    return {"self_attn": init_attn(ks[0], d, nhead, True),
            "cross_attn": init_attn(ks[1], d, nhead, False),
            "ffn": {"w1": xavier_uniform(ks[2], (d, dff)).astype(_W_DTYPE),
                    "b1": jnp.zeros((1, dff), jnp.float32),
                    "w2": xavier_uniform(ks[3], (dff, d)).astype(_W_DTYPE),
                    "b2": jnp.zeros((1, d), jnp.float32)},
            "norm1": ln(), "norm2": ln(), "norm3": ln()}


def init_model(key, num_layers, d, dff, nhead):
    assert num_layers % 2 == 1
    num_block = (num_layers - 1) // 2
    n_keys = 3 * num_block + 1
    ks = jax.random.split(key, max(n_keys, 2))
    idx = 0
    input_blocks, output_blocks, linear_blocks = [], [], []
    for _ in range(num_block):
        input_blocks.append(init_decoder_layer(ks[idx], d, dff, nhead)); idx += 1
    middle_block = init_decoder_layer(ks[idx], d, dff, nhead); idx += 1
    for _ in range(num_block):
        output_blocks.append(init_decoder_layer(ks[idx], d, dff, nhead)); idx += 1
    for _ in range(num_block):
        w = xavier_uniform(ks[idx], (2 * d, d)); idx += 1
        linear_blocks.append({"wa": w[:d].astype(_W_DTYPE),   # multiplies x
                              "wb": w[d:].astype(_W_DTYPE),   # multiplies skip
                              "b": jnp.zeros((1, d), jnp.float32)})
    return {"input_blocks": input_blocks,
            "middle_block": middle_block,
            "output_blocks": output_blocks,
            "linear_blocks": linear_blocks}


# ----------------------------------- main -----------------------------------

if __name__ == "__main__":
    B, S, M, D = 2, 8, 8, 32           # batch, tgt seq, memory seq, d_model
    NHEAD, DFF, NUM_LAYERS = 4, 64, 3  # num_layers odd -> 1 input/middle/output

    key = jax.random.PRNGKey(0)
    kp, kx, km = jax.random.split(key, 3)
    params = init_model(kp, NUM_LAYERS, D, DFF, NHEAD)

    src = jax.random.normal(kx, (B, S, D), jnp.float32)
    memory = jax.random.normal(km, (B, M, D), jnp.float32)
    # key padding masks: True = padded (ignored)
    src_kpm = jnp.zeros((B, S), bool).at[:, S - 1:].set(True)
    mem_kpm = jnp.zeros((B, M), bool).at[:, M - 2:].set(True)

    fwd = jax.jit(functools.partial(skip_decode_transformer, nhead=NHEAD))
    out = fwd(params, src, memory, src_kpm, mem_kpm)
    out = jax.block_until_ready(out)

    assert out.shape == (B, S, D), out.shape
    assert bool(jnp.all(jnp.isfinite(out)))
    print("KERNEL_OK")
</pallas_src>

<mosaic_0001>
module attributes {stable_mosaic.version = 11 : i64} {
  func.func @_cross_attn_block_kernel(%arg0: i32, %arg1: memref<1x8x32xf32, #tpu.memory_space<vmem>>, %arg2: memref<1x8x32xf32, #tpu.memory_space<vmem>>, %arg3: memref<1x1x8xf32, #tpu.memory_space<vmem>>, %arg4: memref<32x32xbf16, #tpu.memory_space<vmem>>, %arg5: memref<1x32xf32, #tpu.memory_space<vmem>>, %arg6: memref<32x64xbf16, #tpu.memory_space<vmem>>, %arg7: memref<1x64xf32, #tpu.memory_space<vmem>>, %arg8: memref<32x32xbf16, #tpu.memory_space<vmem>>, %arg9: memref<1x32xf32, #tpu.memory_space<vmem>>, %arg10: memref<1x32xf32, #tpu.memory_space<vmem>>, %arg11: memref<1x32xf32, #tpu.memory_space<vmem>>, %arg12: memref<1x8x32xf32, #tpu.memory_space<vmem>>) attributes {dimension_semantics = [#tpu.dimension_semantics<parallel>], iteration_bounds = array<i64: 2>, scalar_prefetch = 0 : i64, scratch_operands = 0 : i64, tpu.core_type = #tpu.core_type<tc>, window_params = [{transform_indices = @transform_0, window_bounds = array<i64: 1, 8, 32>}, {transform_indices = @transform_1, window_bounds = array<i64: 1, 8, 32>}, {transform_indices = @transform_2, window_bounds = array<i64: 1, 1, 8>}, {pipeline_mode = #tpu.pipeline_mode<synchronous>, transform_indices = @transform_3, window_bounds = array<i64: 32, 32>}, {pipeline_mode = #tpu.pipeline_mode<synchronous>, transform_indices = @transform_4, window_bounds = array<i64: 1, 32>}, {pipeline_mode = #tpu.pipeline_mode<synchronous>, transform_indices = @transform_5, window_bounds = array<i64: 32, 64>}, {pipeline_mode = #tpu.pipeline_mode<synchronous>, transform_indices = @transform_6, window_bounds = array<i64: 1, 64>}, {pipeline_mode = #tpu.pipeline_mode<synchronous>, transform_indices = @transform_7, window_bounds = array<i64: 32, 32>}, {pipeline_mode = #tpu.pipeline_mode<synchronous>, transform_indices = @transform_8, window_bounds = array<i64: 1, 32>}, {pipeline_mode = #tpu.pipeline_mode<synchronous>, transform_indices = @transform_9, window_bounds = array<i64: 1, 32>}, {pipeline_mode = #tpu.pipeline_mode<synchronous>, transform_indices = @transform_10, window_bounds = array<i64: 1, 32>}, {transform_indices = @transform_11, window_bounds = array<i64: 1, 8, 32>}]} {
    %c0 = arith.constant 0 : index
    %c0_0 = arith.constant 0 : index
    %c0_1 = arith.constant 0 : index
    %0 = vector.load %arg1[%c0, %c0_0, %c0_1] : memref<1x8x32xf32, #tpu.memory_space<vmem>>, vector<1x8x32xf32>
    %1 = vector.shape_cast %0 : vector<1x8x32xf32> to vector<8x32xf32>
    %c0_2 = arith.constant 0 : index
    %c0_3 = arith.constant 0 : index
    %c0_4 = arith.constant 0 : index
    %2 = vector.load %arg2[%c0_2, %c0_3, %c0_4] : memref<1x8x32xf32, #tpu.memory_space<vmem>>, vector<1x8x32xf32>
    %3 = vector.shape_cast %2 : vector<1x8x32xf32> to vector<8x32xf32>
    %4 = arith.truncf %1 : vector<8x32xf32> to vector<8x32xbf16>
    %c0_5 = arith.constant 0 : index
    %c0_6 = arith.constant 0 : index
    %5 = vector.load %arg4[%c0_5, %c0_6] : memref<32x32xbf16, #tpu.memory_space<vmem>>, vector<32x32xbf16>
    %cst = arith.constant dense<0.000000e+00> : vector<8x32xf32>
    %6 = tpu.matmul %4, %5, %cst {dimension_numbers = #tpu.dot_dimension_numbers<[1], [0], [0], [1], [0, 0, 1, 1], [], []>} : vector<8x32xbf16>, vector<32x32xbf16>, vector<8x32xf32> -> vector<8x32xf32>
    %c0_7 = arith.constant 0 : index
    %c0_8 = arith.constant 0 : index
    %7 = vector.load %arg5[%c0_7, %c0_8] : memref<1x32xf32, #tpu.memory_space<vmem>>, vector<1x32xf32>
    %8 = vector.broadcast %7 : vector<1x32xf32> to vector<8x32xf32>
    %9 = arith.addf %6, %8 : vector<8x32xf32>
    %10 = arith.truncf %3 : vector<8x32xf32> to vector<8x32xbf16>
    %c0_9 = arith.constant 0 : index
    %c0_10 = arith.constant 0 : index
    %11 = vector.load %arg6[%c0_9, %c0_10] : memref<32x64xbf16, #tpu.memory_space<vmem>>, vector<32x64xbf16>
    %cst_11 = arith.constant dense<0.000000e+00> : vector<8x64xf32>
    %12 = tpu.matmul %10, %11, %cst_11 {dimension_numbers = #tpu.dot_dimension_numbers<[1], [0], [0], [1], [0, 0, 1, 1], [], []>} : vector<8x32xbf16>, vector<32x64xbf16>, vector<8x64xf32> -> vector<8x64xf32>
    %c0_12 = arith.constant 0 : index
    %c0_13 = arith.constant 0 : index
    %13 = vector.load %arg7[%c0_12, %c0_13] : memref<1x64xf32, #tpu.memory_space<vmem>>, vector<1x64xf32>
    %14 = vector.broadcast %13 : vector<1x64xf32> to vector<8x64xf32>
    %15 = arith.addf %12, %14 : vector<8x64xf32>
    %16 = vector.extract_strided_slice %15 {offsets = [0, 0], sizes = [8, 32], strides = [1, 1]} : vector<8x64xf32> to vector<8x32xf32>
    %17 = vector.extract_strided_slice %15 {offsets = [0, 32], sizes = [8, 32], strides = [1, 1]} : vector<8x64xf32> to vector<8x32xf32>
    %c0_14 = arith.constant 0 : index
    %c0_15 = arith.constant 0 : index
    %c0_16 = arith.constant 0 : index
    %18 = vector.load %arg3[%c0_14, %c0_15, %c0_16] : memref<1x1x8xf32, #tpu.memory_space<vmem>>, vector<1x1x8xf32>
    %19 = vector.shape_cast %18 : vector<1x1x8xf32> to vector<1x8xf32>
    %20 = vector.extract_strided_slice %9 {offsets = [0, 0], sizes = [8, 8], strides = [1, 1]} : vector<8x32xf32> to vector<8x8xf32>
    %21 = arith.truncf %20 : vector<8x8xf32> to vector<8x8xbf16>
    %22 = vector.extract_strided_slice %16 {offsets = [0, 0], sizes = [8, 8], strides = [1, 1]} : vector<8x32xf32> to vector<8x8xf32>
    %23 = arith.truncf %22 : vector<8x8xf32> to vector<8x8xbf16>
    %24 = vector.extract_strided_slice %17 {offsets = [0, 0], sizes = [8, 8], strides = [1, 1]} : vector<8x32xf32> to vector<8x8xf32>
    %25 = arith.truncf %24 : vector<8x8xf32> to vector<8x8xbf16>
    %cst_17 = arith.constant dense<0.000000e+00> : vector<8x8xf32>
    %26 = tpu.matmul %21, %23, %cst_17 {dimension_numbers = #tpu.dot_dimension_numbers<[1], [1], [0], [0], [0, 0, 1, 0], [], []>} : vector<8x8xbf16>, vector<8x8xbf16>, vector<8x8xf32> -> vector<8x8xf32>
    %27 = vector.broadcast %19 : vector<1x8xf32> to vector<8x8xf32>
    %28 = arith.addf %26, %27 : vector<8x8xf32>
    %cst_18 = arith.constant dense<0xFF800000> : vector<8xf32>
    %29 = vector.multi_reduction <maximumf>, %28, %cst_18 [1] : vector<8x8xf32> to vector<8xf32>
    %30 = vector.shape_cast %29 : vector<8xf32> to vector<8x1xf32>
    %31 = vector.broadcast %30 : vector<8x1xf32> to vector<8x8xf32>
    %32 = arith.subf %28, %31 : vector<8x8xf32>
    %33 = math.exp %32 : vector<8x8xf32>
    %cst_19 = arith.constant dense<0.000000e+00> : vector<8xf32>
    %34 = vector.multi_reduction <add>, %33, %cst_19 [1] : vector<8x8xf32> to vector<8xf32>
    %35 = vector.shape_cast %34 : vector<8xf32> to vector<8x1xf32>
    %36 = tpu.reciprocal %35 {approx = true} : vector<8x1xf32> -> vector<8x1xf32>
    %37 = vector.broadcast %36 : vector<8x1xf32> to vector<8x8xf32>
    %38 = arith.mulf %33, %37 : vector<8x8xf32>
    %39 = arith.truncf %38 : vector<8x8xf32> to vector<8x8xbf16>
    %cst_20 = arith.constant dense<0.000000e+00> : vector<8x8xf32>
    %40 = tpu.matmul %39, %25, %cst_20 {dimension_numbers = #tpu.dot_dimension_numbers<[1], [0], [0], [1], [0, 0, 1, 1], [], []>} : vector<8x8xbf16>, vector<8x8xbf16>, vector<8x8xf32> -> vector<8x8xf32>
    %41 = vector.extract_strided_slice %9 {offsets = [0, 8], sizes = [8, 8], strides = [1, 1]} : vector<8x32xf32> to vector<8x8xf32>
    %42 = arith.truncf %41 : vector<8x8xf32> to vector<8x8xbf16>
    %43 = vector.extract_strided_slice %16 {offsets = [0, 8], sizes = [8, 8], strides = [1, 1]} : vector<8x32xf32> to vector<8x8xf32>
    %44 = arith.truncf %43 : vector<8x8xf32> to vector<8x8xbf16>
    %45 = vector.extract_strided_slice %17 {offsets = [0, 8], sizes = [8, 8], strides = [1, 1]} : vector<8x32xf32> to vector<8x8xf32>
    %46 = arith.truncf %45 : vector<8x8xf32> to vector<8x8xbf16>
    %cst_21 = arith.constant dense<0.000000e+00> : vector<8x8xf32>
    %47 = tpu.matmul %42, %44, %cst_21 {dimension_numbers = #tpu.dot_dimension_numbers<[1], [1], [0], [0], [0, 0, 1, 0], [], []>} : vector<8x8xbf16>, vector<8x8xbf16>, vector<8x8xf32> -> vector<8x8xf32>
    %48 = vector.broadcast %19 : vector<1x8xf32> to vector<8x8xf32>
    %49 = arith.addf %47, %48 : vector<8x8xf32>
    %cst_22 = arith.constant dense<0xFF800000> : vector<8xf32>
    %50 = vector.multi_reduction <maximumf>, %49, %cst_22 [1] : vector<8x8xf32> to vector<8xf32>
    %51 = vector.shape_cast %50 : vector<8xf32> to vector<8x1xf32>
    %52 = vector.broadcast %51 : vector<8x1xf32> to vector<8x8xf32>
    %53 = arith.subf %49, %52 : vector<8x8xf32>
    %54 = math.exp %53 : vector<8x8xf32>
    %cst_23 = arith.constant dense<0.000000e+00> : vector<8xf32>
    %55 = vector.multi_reduction <add>, %54, %cst_23 [1] : vector<8x8xf32> to vector<8xf32>
    %56 = vector.shape_cast %55 : vector<8xf32> to vector<8x1xf32>
    %57 = tpu.reciprocal %56 {approx = true} : vector<8x1xf32> -> vector<8x1xf32>
    %58 = vector.broadcast %57 : vector<8x1xf32> to vector<8x8xf32>
    %59 = arith.mulf %54, %58 : vector<8x8xf32>
    %60 = arith.truncf %59 : vector<8x8xf32> to vector<8x8xbf16>
    %cst_24 = arith.constant dense<0.000000e+00> : vector<8x8xf32>
    %61 = tpu.matmul %60, %46, %cst_24 {dimension_numbers = #tpu.dot_dimension_numbers<[1], [0], [0], [1], [0, 0, 1, 1], [], []>} : vector<8x8xbf16>, vector<8x8xbf16>, vector<8x8xf32> -> vector<8x8xf32>
    %62 = vector.extract_strided_slice %9 {offsets = [0, 16], sizes = [8, 8], strides = [1, 1]} : vector<8x32xf32> to vector<8x8xf32>
    %63 = arith.truncf %62 : vector<8x8xf32> to vector<8x8xbf16>
    %64 = vector.extract_strided_slice %16 {offsets = [0, 16], sizes = [8, 8], strides = [1, 1]} : vector<8x32xf32> to vector<8x8xf32>
    %65 = arith.truncf %64 : vector<8x8xf32> to vector<8x8xbf16>
    %66 = vector.extract_strided_slice %17 {offsets = [0, 16], sizes = [8, 8], strides = [1, 1]} : vector<8x32xf32> to vector<8x8xf32>
    %67 = arith.truncf %66 : vector<8x8xf32> to vector<8x8xbf16>
    %cst_25 = arith.constant dense<0.000000e+00> : vector<8x8xf32>
    %68 = tpu.matmul %63, %65, %cst_25 {dimension_numbers = #tpu.dot_dimension_numbers<[1], [1], [0], [0], [0, 0, 1, 0], [], []>} : vector<8x8xbf16>, vector<8x8xbf16>, vector<8x8xf32> -> vector<8x8xf32>
    %69 = vector.broadcast %19 : vector<1x8xf32> to vector<8x8xf32>
    %70 = arith.addf %68, %69 : vector<8x8xf32>
    %cst_26 = arith.constant dense<0xFF800000> : vector<8xf32>
    %71 = vector.multi_reduction <maximumf>, %70, %cst_26 [1] : vector<8x8xf32> to vector<8xf32>
    %72 = vector.shape_cast %71 : vector<8xf32> to vector<8x1xf32>
    %73 = vector.broadcast %72 : vector<8x1xf32> to vector<8x8xf32>
    %74 = arith.subf %70, %73 : vector<8x8xf32>
    %75 = math.exp %74 : vector<8x8xf32>
    %cst_27 = arith.constant dense<0.000000e+00> : vector<8xf32>
    %76 = vector.multi_reduction <add>, %75, %cst_27 [1] : vector<8x8xf32> to vector<8xf32>
    %77 = vector.shape_cast %76 : vector<8xf32> to vector<8x1xf32>
    %78 = tpu.reciprocal %77 {approx = true} : vector<8x1xf32> -> vector<8x1xf32>
    %79 = vector.broadcast %78 : vector<8x1xf32> to vector<8x8xf32>
    %80 = arith.mulf %75, %79 : vector<8x8xf32>
    %81 = arith.truncf %80 : vector<8x8xf32> to vector<8x8xbf16>
    %cst_28 = arith.constant dense<0.000000e+00> : vector<8x8xf32>
    %82 = tpu.matmul %81, %67, %cst_28 {dimension_numbers = #tpu.dot_dimension_numbers<[1], [0], [0], [1], [0, 0, 1, 1], [], []>} : vector<8x8xbf16>, vector<8x8xbf16>, vector<8x8xf32> -> vector<8x8xf32>
    %83 = vector.extract_strided_slice %9 {offsets = [0, 24], sizes = [8, 8], strides = [1, 1]} : vector<8x32xf32> to vector<8x8xf32>
    %84 = arith.truncf %83 : vector<8x8xf32> to vector<8x8xbf16>
    %85 = vector.extract_strided_slice %16 {offsets = [0, 24], sizes = [8, 8], strides = [1, 1]} : vector<8x32xf32> to vector<8x8xf32>
    %86 = arith.truncf %85 : vector<8x8xf32> to vector<8x8xbf16>
    %87 = vector.extract_strided_slice %17 {offsets = [0, 24], sizes = [8, 8], strides = [1, 1]} : vector<8x32xf32> to vector<8x8xf32>
    %88 = arith.truncf %87 : vector<8x8xf32> to vector<8x8xbf16>
    %cst_29 = arith.constant dense<0.000000e+00> : vector<8x8xf32>
    %89 = tpu.matmul %84, %86, %cst_29 {dimension_numbers = #tpu.dot_dimension_numbers<[1], [1], [0], [0], [0, 0, 1, 0], [], []>} : vector<8x8xbf16>, vector<8x8xbf16>, vector<8x8xf32> -> vector<8x8xf32>
    %90 = vector.broadcast %19 : vector<1x8xf32> to vector<8x8xf32>
    %91 = arith.addf %89, %90 : vector<8x8xf32>
    %cst_30 = arith.constant dense<0xFF800000> : vector<8xf32>
    %92 = vector.multi_reduction <maximumf>, %91, %cst_30 [1] : vector<8x8xf32> to vector<8xf32>
    %93 = vector.shape_cast %92 : vector<8xf32> to vector<8x1xf32>
    %94 = vector.broadcast %93 : vector<8x1xf32> to vector<8x8xf32>
    %95 = arith.subf %91, %94 : vector<8x8xf32>
    %96 = math.exp %95 : vector<8x8xf32>
    %cst_31 = arith.constant dense<0.000000e+00> : vector<8xf32>
    %97 = vector.multi_reduction <add>, %96, %cst_31 [1] : vector<8x8xf32> to vector<8xf32>
    %98 = vector.shape_cast %97 : vector<8xf32> to vector<8x1xf32>
    %99 = tpu.reciprocal %98 {approx = true} : vector<8x1xf32> -> vector<8x1xf32>
    %100 = vector.broadcast %99 : vector<8x1xf32> to vector<8x8xf32>
    %101 = arith.mulf %96, %100 : vector<8x8xf32>
    %102 = arith.truncf %101 : vector<8x8xf32> to vector<8x8xbf16>
    %cst_32 = arith.constant dense<0.000000e+00> : vector<8x8xf32>
    %103 = tpu.matmul %102, %88, %cst_32 {dimension_numbers = #tpu.dot_dimension_numbers<[1], [0], [0], [1], [0, 0, 1, 1], [], []>} : vector<8x8xbf16>, vector<8x8xbf16>, vector<8x8xf32> -> vector<8x8xf32>
    %104 = tpu.concatenate %40, %61, %82, %103 in 1 : vector<8x8xf32>, vector<8x8xf32>, vector<8x8xf32>, vector<8x8xf32> -> vector<8x32xf32>
    %c0_33 = arith.constant 0 : index
    %c0_34 = arith.constant 0 : index
    %105 = vector.load %arg8[%c0_33, %c0_34] : memref<32x32xbf16, #tpu.memory_space<vmem>>, vector<32x32xbf16>
    %c0_35 = arith.constant 0 : index
    %c0_36 = arith.constant 0 : index
    %106 = vector.load %arg9[%c0_35, %c0_36] : memref<1x32xf32, #tpu.memory_space<vmem>>, vector<1x32xf32>
    %c0_37 = arith.constant 0 : index
    %c0_38 = arith.constant 0 : index
    %107 = vector.load %arg10[%c0_37, %c0_38] : memref<1x32xf32, #tpu.memory_space<vmem>>, vector<1x32xf32>
    %c0_39 = arith.constant 0 : index
    %c0_40 = arith.constant 0 : index
    %108 = vector.load %arg11[%c0_39, %c0_40] : memref<1x32xf32, #tpu.memory_space<vmem>>, vector<1x32xf32>
    %109 = arith.truncf %104 : vector<8x32xf32> to vector<8x32xbf16>
    %cst_41 = arith.constant dense<0.000000e+00> : vector<8x32xf32>
    %110 = tpu.matmul %109, %105, %cst_41 {dimension_numbers = #tpu.dot_dimension_numbers<[1], [0], [0], [1], [0, 0, 1, 1], [], []>} : vector<8x32xbf16>, vector<32x32xbf16>, vector<8x32xf32> -> vector<8x32xf32>
    %111 = vector.broadcast %106 : vector<1x32xf32> to vector<8x32xf32>
    %112 = arith.addf %110, %111 : vector<8x32xf32>
    %113 = arith.addf %112, %1 : vector<8x32xf32>
    %cst_42 = arith.constant dense<0.000000e+00> : vector<8xf32>
    %114 = vector.multi_reduction <add>, %113, %cst_42 [1] : vector<8x32xf32> to vector<8xf32>
    %115 = vector.shape_cast %114 : vector<8xf32> to vector<8x1xf32>
    %cst_43 = arith.constant 3.200000e+01 : f32
    %116 = vector.broadcast %cst_43 : f32 to vector<8x1xf32>
    %117 = arith.divf %115, %116 : vector<8x1xf32>
    %118 = vector.broadcast %117 : vector<8x1xf32> to vector<8x32xf32>
    %119 = arith.subf %113, %118 : vector<8x32xf32>
    %120 = arith.mulf %119, %119 : vector<8x32xf32>
    %cst_44 = arith.constant dense<0.000000e+00> : vector<8xf32>
    %121 = vector.multi_reduction <add>, %120, %cst_44 [1] : vector<8x32xf32> to vector<8xf32>
    %122 = vector.shape_cast %121 : vector<8xf32> to vector<8x1xf32>
    %cst_45 = arith.constant 3.200000e+01 : f32
    %123 = vector.broadcast %cst_45 : f32 to vector<8x1xf32>
    %124 = arith.divf %122, %123 : vector<8x1xf32>
    %125 = vector.broadcast %117 : vector<8x1xf32> to vector<8x32xf32>
    %126 = arith.subf %113, %125 : vector<8x32xf32>
    %cst_46 = arith.constant 9.99999974E-6 : f32
    %127 = vector.broadcast %cst_46 : f32 to vector<8x1xf32>
    %128 = arith.addf %124, %127 : vector<8x1xf32>
    %129 = math.rsqrt %128 : vector<8x1xf32>
    %130 = vector.broadcast %129 : vector<8x1xf32> to vector<8x32xf32>
    %131 = arith.mulf %126, %130 : vector<8x32xf32>
    %132 = vector.broadcast %107 : vector<1x32xf32> to vector<8x32xf32>
    %133 = arith.mulf %131, %132 : vector<8x32xf32>
    %134 = vector.broadcast %108 : vector<1x32xf32> to vector<8x32xf32>
    %135 = arith.addf %133, %134 : vector<8x32xf32>
    %c0_47 = arith.constant 0 : index
    %c0_48 = arith.constant 0 : index
    %c0_49 = arith.constant 0 : index
    %136 = vector.load %arg12[%c0_47, %c0_48, %c0_49] : memref<1x8x32xf32, #tpu.memory_space<vmem>>, vector<1x8x32xf32>
    %137 = vector.shape_cast %136 : vector<1x8x32xf32> to vector<8x32xf32>
    %138 = vector.shape_cast %135 : vector<8x32xf32> to vector<1x8x32xf32>
    tpu.vector_store %arg12[%c0_47, %c0_48, %c0_49], %138 {strides = array<i32>} : memref<1x8x32xf32, #tpu.memory_space<vmem>>, vector<1x8x32xf32>,
    return
  }
  func.func @transform_0(%arg0: i32) -> (i32, i32, i32) {
    %c0_i32 = arith.constant 0 : i32
    %c0_i32_0 = arith.constant 0 : i32
    %c0_i32_1 = arith.constant 0 : i32
    return %arg0, %c0_i32, %c0_i32_0 : i32, i32, i32
  }
  func.func @transform_1(%arg0: i32) -> (i32, i32, i32) {
    %c0_i32 = arith.constant 0 : i32
    %c0_i32_0 = arith.constant 0 : i32
    %c0_i32_1 = arith.constant 0 : i32
    return %arg0, %c0_i32, %c0_i32_0 : i32, i32, i32
  }
  func.func @transform_2(%arg0: i32) -> (i32, i32, i32) {
    %c0_i32 = arith.constant 0 : i32
    %c0_i32_0 = arith.constant 0 : i32
    %c0_i32_1 = arith.constant 0 : i32
    return %arg0, %c0_i32, %c0_i32_0 : i32, i32, i32
  }
  func.func @transform_3(%arg0: i32) -> (i32, i32) {
    %c0_i32 = arith.constant 0 : i32
    %c0_i32_0 = arith.constant 0 : i32
    %c0_i32_1 = arith.constant 0 : i32
    return %c0_i32, %c0_i32_0 : i32, i32
  }
  func.func @transform_4(%arg0: i32) -> (i32, i32) {
    %c0_i32 = arith.constant 0 : i32
    %c0_i32_0 = arith.constant 0 : i32
    %c0_i32_1 = arith.constant 0 : i32
    return %c0_i32, %c0_i32_0 : i32, i32
  }
  func.func @transform_5(%arg0: i32) -> (i32, i32) {
    %c0_i32 = arith.constant 0 : i32
    %c0_i32_0 = arith.constant 0 : i32
    %c0_i32_1 = arith.constant 0 : i32
    return %c0_i32, %c0_i32_0 : i32, i32
  }
  func.func @transform_6(%arg0: i32) -> (i32, i32) {
    %c0_i32 = arith.constant 0 : i32
    %c0_i32_0 = arith.constant 0 : i32
    %c0_i32_1 = arith.constant 0 : i32
    return %c0_i32, %c0_i32_0 : i32, i32
  }
  func.func @transform_7(%arg0: i32) -> (i32, i32) {
    %c0_i32 = arith.constant 0 : i32
    %c0_i32_0 = arith.constant 0 : i32
    %c0_i32_1 = arith.constant 0 : i32
    return %c0_i32, %c0_i32_0 : i32, i32
  }
  func.func @transform_8(%arg0: i32) -> (i32, i32) {
    %c0_i32 = arith.constant 0 : i32
    %c0_i32_0 = arith.constant 0 : i32
    %c0_i32_1 = arith.constant 0 : i32
    return %c0_i32, %c0_i32_0 : i32, i32
  }
  func.func @transform_9(%arg0: i32) -> (i32, i32) {
    %c0_i32 = arith.constant 0 : i32
    %c0_i32_0 = arith.constant 0 : i32
    %c0_i32_1 = arith.constant 0 : i32
    return %c0_i32, %c0_i32_0 : i32, i32
  }
  func.func @transform_10(%arg0: i32) -> (i32, i32) {
    %c0_i32 = arith.constant 0 : i32
    %c0_i32_0 = arith.constant 0 : i32
    %c0_i32_1 = arith.constant 0 : i32
    return %c0_i32, %c0_i32_0 : i32, i32
  }
  func.func @transform_11(%arg0: i32) -> (i32, i32, i32) {
    %c0_i32 = arith.constant 0 : i32
    %c0_i32_0 = arith.constant 0 : i32
    %c0_i32_1 = arith.constant 0 : i32
    return %arg0, %c0_i32, %c0_i32_0 : i32, i32, i32
  }
}

module attributes {stable_mosaic.version = 11 : i64} {
  func.func @_ffn_add_ln_kernel(%arg0: i32, %arg1: i32, %arg2: memref<16x32xf32, #tpu.memory_space<vmem>>, %arg3: memref<32x64xbf16, #tpu.memory_space<vmem>>, %arg4: memref<1x64xf32, #tpu.memory_space<vmem>>, %arg5: memref<64x32xbf16, #tpu.memory_space<vmem>>, %arg6: memref<1x32xf32, #tpu.memory_space<vmem>>, %arg7: memref<1x32xf32, #tpu.memory_space<vmem>>, %arg8: memref<1x32xf32, #tpu.memory_space<vmem>>, %arg9: memref<16x32xf32, #tpu.memory_space<vmem>>, %arg10: memref<16x32xf32, #tpu.memory_space<vmem>>) attributes {dimension_semantics = [#tpu.dimension_semantics<parallel>, #tpu.dimension_semantics<arbitrary>], iteration_bounds = array<i64: 1, 1>, scalar_prefetch = 0 : i64, scratch_operands = 1 : i64, tpu.core_type = #tpu.core_type<tc>, window_params = [{transform_indices = @transform_0, window_bounds = array<i64: 16, 32>}, {transform_indices = @transform_1, window_bounds = array<i64: 32, 64>}, {transform_indices = @transform_2, window_bounds = array<i64: 1, 64>}, {transform_indices = @transform_3, window_bounds = array<i64: 64, 32>}, {pipeline_mode = #tpu.pipeline_mode<synchronous>, transform_indices = @transform_4, window_bounds = array<i64: 1, 32>}, {pipeline_mode = #tpu.pipeline_mode<synchronous>, transform_indices = @transform_5, window_bounds = array<i64: 1, 32>}, {pipeline_mode = #tpu.pipeline_mode<synchronous>, transform_indices = @transform_6, window_bounds = array<i64: 1, 32>}, {transform_indices = @transform_7, window_bounds = array<i64: 16, 32>}]} {
    %c0_i32 = arith.constant 0 : i32
    %0 = arith.cmpi eq, %arg1, %c0_i32 : i32
    %1 = arith.extui %0 : i1 to i32
    %c0_i32_0 = arith.constant 0 : i32
    %2 = arith.cmpi ne, %1, %c0_i32_0 : i32
    scf.if %2 {
      %cst_16 = arith.constant 0.000000e+00 : f32
      %21 = vector.broadcast %cst_16 : f32 to vector<16x32xf32>
      %c0_17 = arith.constant 0 : index
      %c0_18 = arith.constant 0 : index
      %22 = vector.load %arg10[%c0_17, %c0_18] : memref<16x32xf32, #tpu.memory_space<vmem>>, vector<16x32xf32>
      tpu.vector_store %arg10[%c0_17, %c0_18], %21 {strides = array<i32>} : memref<16x32xf32, #tpu.memory_space<vmem>>, vector<16x32xf32>,
    } else {
    }
    %c0 = arith.constant 0 : index
    %c0_1 = arith.constant 0 : index
    %3 = vector.load %arg2[%c0, %c0_1] : memref<16x32xf32, #tpu.memory_space<vmem>>, vector<16x32xf32>
    %4 = arith.truncf %3 : vector<16x32xf32> to vector<16x32xbf16>
    %c0_2 = arith.constant 0 : index
    %c0_3 = arith.constant 0 : index
    %5 = vector.load %arg3[%c0_2, %c0_3] : memref<32x64xbf16, #tpu.memory_space<vmem>>, vector<32x64xbf16>
    %cst = arith.constant dense<0.000000e+00> : vector<16x64xf32>
    %6 = tpu.matmul %4, %5, %cst {dimension_numbers = #tpu.dot_dimension_numbers<[1], [0], [0], [1], [0, 0, 1, 1], [], []>} : vector<16x32xbf16>, vector<32x64xbf16>, vector<16x64xf32> -> vector<16x64xf32>
    %c0_4 = arith.constant 0 : index
    %c0_5 = arith.constant 0 : index
    %7 = vector.load %arg4[%c0_4, %c0_5] : memref<1x64xf32, #tpu.memory_space<vmem>>, vector<1x64xf32>
    %8 = vector.broadcast %7 : vector<1x64xf32> to vector<16x64xf32>
    %9 = arith.addf %6, %8 : vector<16x64xf32>
    %cst_6 = arith.constant 0.000000e+00 : f32
    %10 = vector.broadcast %cst_6 : f32 to vector<16x64xf32>
    %11 = arith.maximumf %9, %10 : vector<16x64xf32>
    %c0_7 = arith.constant 0 : index
    %c0_8 = arith.constant 0 : index
    %12 = vector.load %arg10[%c0_7, %c0_8] : memref<16x32xf32, #tpu.memory_space<vmem>>, vector<16x32xf32>
    %13 = arith.truncf %11 : vector<16x64xf32> to vector<16x64xbf16>
    %c0_9 = arith.constant 0 : index
    %c0_10 = arith.constant 0 : index
    %14 = vector.load %arg5[%c0_9, %c0_10] : memref<64x32xbf16, #tpu.memory_space<vmem>>, vector<64x32xbf16>
    %cst_11 = arith.constant dense<0.000000e+00> : vector<16x32xf32>
    %15 = tpu.matmul %13, %14, %cst_11 {dimension_numbers = #tpu.dot_dimension_numbers<[1], [0], [0], [1], [0, 0, 1, 1], [], []>} : vector<16x64xbf16>, vector<64x32xbf16>, vector<16x32xf32> -> vector<16x32xf32>
    %16 = arith.addf %12, %15 : vector<16x32xf32>
    %c0_12 = arith.constant 0 : index
    %c0_13 = arith.constant 0 : index
    %17 = vector.load %arg10[%c0_12, %c0_13] : memref<16x32xf32, #tpu.memory_space<vmem>>, vector<16x32xf32>
    tpu.vector_store %arg10[%c0_12, %c0_13], %16 {strides = array<i32>} : memref<16x32xf32, #tpu.memory_space<vmem>>, vector<16x32xf32>,
    %c0_i32_14 = arith.constant 0 : i32
    %18 = arith.cmpi eq, %arg1, %c0_i32_14 : i32
    %19 = arith.extui %18 : i1 to i32
    %c0_i32_15 = arith.constant 0 : i32
    %20 = arith.cmpi ne, %19, %c0_i32_15 : i32
    scf.if %20 {
      %c0_16 = arith.constant 0 : index
      %c0_17 = arith.constant 0 : index
      %21 = vector.load %arg10[%c0_16, %c0_17] : memref<16x32xf32, #tpu.memory_space<vmem>>, vector<16x32xf32>
      %c0_18 = arith.constant 0 : index
      %c0_19 = arith.constant 0 : index
      %22 = vector.load %arg6[%c0_18, %c0_19] : memref<1x32xf32, #tpu.memory_space<vmem>>, vector<1x32xf32>
      %23 = vector.broadcast %22 : vector<1x32xf32> to vector<16x32xf32>
      %24 = arith.addf %21, %23 : vector<16x32xf32>
      %c0_20 = arith.constant 0 : index
      %c0_21 = arith.constant 0 : index
      %25 = vector.load %arg2[%c0_20, %c0_21] : memref<16x32xf32, #tpu.memory_space<vmem>>, vector<16x32xf32>
      %26 = arith.addf %24, %25 : vector<16x32xf32>
      %c0_22 = arith.constant 0 : index
      %c0_23 = arith.constant 0 : index
      %27 = vector.load %arg7[%c0_22, %c0_23] : memref<1x32xf32, #tpu.memory_space<vmem>>, vector<1x32xf32>
      %c0_24 = arith.constant 0 : index
      %c0_25 = arith.constant 0 : index
      %28 = vector.load %arg8[%c0_24, %c0_25] : memref<1x32xf32, #tpu.memory_space<vmem>>, vector<1x32xf32>
      %cst_26 = arith.constant dense<0.000000e+00> : vector<16xf32>
      %29 = vector.multi_reduction <add>, %26, %cst_26 [1] : vector<16x32xf32> to vector<16xf32>
      %30 = vector.shape_cast %29 : vector<16xf32> to vector<16x1xf32>
      %cst_27 = arith.constant 3.200000e+01 : f32
      %31 = vector.broadcast %cst_27 : f32 to vector<16x1xf32>
      %32 = arith.divf %30, %31 : vector<16x1xf32>
      %33 = vector.broadcast %32 : vector<16x1xf32> to vector<16x32xf32>
      %34 = arith.subf %26, %33 : vector<16x32xf32>
      %35 = arith.mulf %34, %34 : vector<16x32xf32>
      %cst_28 = arith.constant dense<0.000000e+00> : vector<16xf32>
      %36 = vector.multi_reduction <add>, %35, %cst_28 [1] : vector<16x32xf32> to vector<16xf32>
      %37 = vector.shape_cast %36 : vector<16xf32> to vector<16x1xf32>
      %cst_29 = arith.constant 3.200000e+01 : f32
      %38 = vector.broadcast %cst_29 : f32 to vector<16x1xf32>
      %39 = arith.divf %37, %38 : vector<16x1xf32>
      %40 = vector.broadcast %32 : vector<16x1xf32> to vector<16x32xf32>
      %41 = arith.subf %26, %40 : vector<16x32xf32>
      %cst_30 = arith.constant 9.99999974E-6 : f32
      %42 = vector.broadcast %cst_30 : f32 to vector<16x1xf32>
      %43 = arith.addf %39, %42 : vector<16x1xf32>
      %44 = math.rsqrt %43 : vector<16x1xf32>
      %45 = vector.broadcast %44 : vector<16x1xf32> to vector<16x32xf32>
      %46 = arith.mulf %41, %45 : vector<16x32xf32>
      %47 = vector.broadcast %27 : vector<1x32xf32> to vector<16x32xf32>
      %48 = arith.mulf %46, %47 : vector<16x32xf32>
      %49 = vector.broadcast %28 : vector<1x32xf32> to vector<16x32xf32>
      %50 = arith.addf %48, %49 : vector<16x32xf32>
      %c0_31 = arith.constant 0 : index
      %c0_32 = arith.constant 0 : index
      %51 = vector.load %arg9[%c0_31, %c0_32] : memref<16x32xf32, #tpu.memory_space<vmem>>, vector<16x32xf32>
      tpu.vector_store %arg9[%c0_31, %c0_32], %50 {strides = array<i32>} : memref<16x32xf32, #tpu.memory_space<vmem>>, vector<16x32xf32>,
    } else {
    }
    return
  }
  func.func @transform_0(%arg0: i32, %arg1: i32) -> (i32, i32) {
    %c0_i32 = arith.constant 0 : i32
    %c0_i32_0 = arith.constant 0 : i32
    return %arg0, %c0_i32 : i32, i32
  }
  func.func @transform_1(%arg0: i32, %arg1: i32) -> (i32, i32) {
    %c0_i32 = arith.constant 0 : i32
    %c0_i32_0 = arith.constant 0 : i32
    return %c0_i32, %arg1 : i32, i32
  }
  func.func @transform_2(%arg0: i32, %arg1: i32) -> (i32, i32) {
    %c0_i32 = arith.constant 0 : i32
    %c0_i32_0 = arith.constant 0 : i32
    return %c0_i32, %arg1 : i32, i32
  }
  func.func @transform_3(%arg0: i32, %arg1: i32) -> (i32, i32) {
    %c0_i32 = arith.constant 0 : i32
    %c0_i32_0 = arith.constant 0 : i32
    return %arg1, %c0_i32 : i32, i32
  }
  func.func @transform_4(%arg0: i32, %arg1: i32) -> (i32, i32) {
    %c0_i32 = arith.constant 0 : i32
    %c0_i32_0 = arith.constant 0 : i32
    %c0_i32_1 = arith.constant 0 : i32
    return %c0_i32, %c0_i32_0 : i32, i32
  }
  func.func @transform_5(%arg0: i32, %arg1: i32) -> (i32, i32) {
    %c0_i32 = arith.constant 0 : i32
    %c0_i32_0 = arith.constant 0 : i32
    %c0_i32_1 = arith.constant 0 : i32
    return %c0_i32, %c0_i32_0 : i32, i32
  }
  func.func @transform_6(%arg0: i32, %arg1: i32) -> (i32, i32) {
    %c0_i32 = arith.constant 0 : i32
    %c0_i32_0 = arith.constant 0 : i32
    %c0_i32_1 = arith.constant 0 : i32
    return %c0_i32, %c0_i32_0 : i32, i32
  }
  func.func @transform_7(%arg0: i32, %arg1: i32) -> (i32, i32) {
    %c0_i32 = arith.constant 0 : i32
    %c0_i32_0 = arith.constant 0 : i32
    return %arg0, %c0_i32 : i32, i32
  }
}

module attributes {stable_mosaic.version = 11 : i64} {
  func.func @_self_attn_block_kernel(%arg0: i32, %arg1: memref<1x8x32xf32, #tpu.memory_space<vmem>>, %arg2: memref<1x1x8xf32, #tpu.memory_space<vmem>>, %arg3: memref<32x96xbf16, #tpu.memory_space<vmem>>, %arg4: memref<1x96xf32, #tpu.memory_space<vmem>>, %arg5: memref<32x32xbf16, #tpu.memory_space<vmem>>, %arg6: memref<1x32xf32, #tpu.memory_space<vmem>>, %arg7: memref<1x32xf32, #tpu.memory_space<vmem>>, %arg8: memref<1x32xf32, #tpu.memory_space<vmem>>, %arg9: memref<1x8x32xf32, #tpu.memory_space<vmem>>) attributes {dimension_semantics = [#tpu.dimension_semantics<parallel>], iteration_bounds = array<i64: 2>, scalar_prefetch = 0 : i64, scratch_operands = 0 : i64, tpu.core_type = #tpu.core_type<tc>, window_params = [{transform_indices = @transform_0, window_bounds = array<i64: 1, 8, 32>}, {transform_indices = @transform_1, window_bounds = array<i64: 1, 1, 8>}, {pipeline_mode = #tpu.pipeline_mode<synchronous>, transform_indices = @transform_2, window_bounds = array<i64: 32, 96>}, {pipeline_mode = #tpu.pipeline_mode<synchronous>, transform_indices = @transform_3, window_bounds = array<i64: 1, 96>}, {pipeline_mode = #tpu.pipeline_mode<synchronous>, transform_indices = @transform_4, window_bounds = array<i64: 32, 32>}, {pipeline_mode = #tpu.pipeline_mode<synchronous>, transform_indices = @transform_5, window_bounds = array<i64: 1, 32>}, {pipeline_mode = #tpu.pipeline_mode<synchronous>, transform_indices = @transform_6, window_bounds = array<i64: 1, 32>}, {pipeline_mode = #tpu.pipeline_mode<synchronous>, transform_indices = @transform_7, window_bounds = array<i64: 1, 32>}, {transform_indices = @transform_8, window_bounds = array<i64: 1, 8, 32>}]} {
    %c0 = arith.constant 0 : index
    %c0_0 = arith.constant 0 : index
    %c0_1 = arith.constant 0 : index
    %0 = vector.load %arg1[%c0, %c0_0, %c0_1] : memref<1x8x32xf32, #tpu.memory_space<vmem>>, vector<1x8x32xf32>
    %1 = vector.shape_cast %0 : vector<1x8x32xf32> to vector<8x32xf32>
    %2 = arith.truncf %1 : vector<8x32xf32> to vector<8x32xbf16>
    %c0_2 = arith.constant 0 : index
    %c0_3 = arith.constant 0 : index
    %3 = vector.load %arg3[%c0_2, %c0_3] : memref<32x96xbf16, #tpu.memory_space<vmem>>, vector<32x96xbf16>
    %cst = arith.constant dense<0.000000e+00> : vector<8x96xf32>
    %4 = tpu.matmul %2, %3, %cst {dimension_numbers = #tpu.dot_dimension_numbers<[1], [0], [0], [1], [0, 0, 1, 1], [], []>} : vector<8x32xbf16>, vector<32x96xbf16>, vector<8x96xf32> -> vector<8x96xf32>
    %c0_4 = arith.constant 0 : index
    %c0_5 = arith.constant 0 : index
    %5 = vector.load %arg4[%c0_4, %c0_5] : memref<1x96xf32, #tpu.memory_space<vmem>>, vector<1x96xf32>
    %6 = vector.broadcast %5 : vector<1x96xf32> to vector<8x96xf32>
    %7 = arith.addf %4, %6 : vector<8x96xf32>
    %8 = vector.extract_strided_slice %7 {offsets = [0, 0], sizes = [8, 32], strides = [1, 1]} : vector<8x96xf32> to vector<8x32xf32>
    %9 = vector.extract_strided_slice %7 {offsets = [0, 32], sizes = [8, 32], strides = [1, 1]} : vector<8x96xf32> to vector<8x32xf32>
    %10 = vector.extract_strided_slice %7 {offsets = [0, 64], sizes = [8, 32], strides = [1, 1]} : vector<8x96xf32> to vector<8x32xf32>
    %c0_6 = arith.constant 0 : index
    %c0_7 = arith.constant 0 : index
    %c0_8 = arith.constant 0 : index
    %11 = vector.load %arg2[%c0_6, %c0_7, %c0_8] : memref<1x1x8xf32, #tpu.memory_space<vmem>>, vector<1x1x8xf32>
    %12 = vector.shape_cast %11 : vector<1x1x8xf32> to vector<1x8xf32>
    %13 = vector.extract_strided_slice %8 {offsets = [0, 0], sizes = [8, 8], strides = [1, 1]} : vector<8x32xf32> to vector<8x8xf32>
    %14 = arith.truncf %13 : vector<8x8xf32> to vector<8x8xbf16>
    %15 = vector.extract_strided_slice %9 {offsets = [0, 0], sizes = [8, 8], strides = [1, 1]} : vector<8x32xf32> to vector<8x8xf32>
    %16 = arith.truncf %15 : vector<8x8xf32> to vector<8x8xbf16>
    %17 = vector.extract_strided_slice %10 {offsets = [0, 0], sizes = [8, 8], strides = [1, 1]} : vector<8x32xf32> to vector<8x8xf32>
    %18 = arith.truncf %17 : vector<8x8xf32> to vector<8x8xbf16>
    %cst_9 = arith.constant dense<0.000000e+00> : vector<8x8xf32>
    %19 = tpu.matmul %14, %16, %cst_9 {dimension_numbers = #tpu.dot_dimension_numbers<[1], [1], [0], [0], [0, 0, 1, 0], [], []>} : vector<8x8xbf16>, vector<8x8xbf16>, vector<8x8xf32> -> vector<8x8xf32>
    %20 = vector.broadcast %12 : vector<1x8xf32> to vector<8x8xf32>
    %21 = arith.addf %19, %20 : vector<8x8xf32>
    %cst_10 = arith.constant dense<0xFF800000> : vector<8xf32>
    %22 = vector.multi_reduction <maximumf>, %21, %cst_10 [1] : vector<8x8xf32> to vector<8xf32>
    %23 = vector.shape_cast %22 : vector<8xf32> to vector<8x1xf32>
    %24 = vector.broadcast %23 : vector<8x1xf32> to vector<8x8xf32>
    %25 = arith.subf %21, %24 : vector<8x8xf32>
    %26 = math.exp %25 : vector<8x8xf32>
    %cst_11 = arith.constant dense<0.000000e+00> : vector<8xf32>
    %27 = vector.multi_reduction <add>, %26, %cst_11 [1] : vector<8x8xf32> to vector<8xf32>
    %28 = vector.shape_cast %27 : vector<8xf32> to vector<8x1xf32>
    %29 = tpu.reciprocal %28 {approx = true} : vector<8x1xf32> -> vector<8x1xf32>
    %30 = vector.broadcast %29 : vector<8x1xf32> to vector<8x8xf32>
    %31 = arith.mulf %26, %30 : vector<8x8xf32>
    %32 = arith.truncf %31 : vector<8x8xf32> to vector<8x8xbf16>
    %cst_12 = arith.constant dense<0.000000e+00> : vector<8x8xf32>
    %33 = tpu.matmul %32, %18, %cst_12 {dimension_numbers = #tpu.dot_dimension_numbers<[1], [0], [0], [1], [0, 0, 1, 1], [], []>} : vector<8x8xbf16>, vector<8x8xbf16>, vector<8x8xf32> -> vector<8x8xf32>
    %34 = vector.extract_strided_slice %8 {offsets = [0, 8], sizes = [8, 8], strides = [1, 1]} : vector<8x32xf32> to vector<8x8xf32>
    %35 = arith.truncf %34 : vector<8x8xf32> to vector<8x8xbf16>
    %36 = vector.extract_strided_slice %9 {offsets = [0, 8], sizes = [8, 8], strides = [1, 1]} : vector<8x32xf32> to vector<8x8xf32>
    %37 = arith.truncf %36 : vector<8x8xf32> to vector<8x8xbf16>
    %38 = vector.extract_strided_slice %10 {offsets = [0, 8], sizes = [8, 8], strides = [1, 1]} : vector<8x32xf32> to vector<8x8xf32>
    %39 = arith.truncf %38 : vector<8x8xf32> to vector<8x8xbf16>
    %cst_13 = arith.constant dense<0.000000e+00> : vector<8x8xf32>
    %40 = tpu.matmul %35, %37, %cst_13 {dimension_numbers = #tpu.dot_dimension_numbers<[1], [1], [0], [0], [0, 0, 1, 0], [], []>} : vector<8x8xbf16>, vector<8x8xbf16>, vector<8x8xf32> -> vector<8x8xf32>
    %41 = vector.broadcast %12 : vector<1x8xf32> to vector<8x8xf32>
    %42 = arith.addf %40, %41 : vector<8x8xf32>
    %cst_14 = arith.constant dense<0xFF800000> : vector<8xf32>
    %43 = vector.multi_reduction <maximumf>, %42, %cst_14 [1] : vector<8x8xf32> to vector<8xf32>
    %44 = vector.shape_cast %43 : vector<8xf32> to vector<8x1xf32>
    %45 = vector.broadcast %44 : vector<8x1xf32> to vector<8x8xf32>
    %46 = arith.subf %42, %45 : vector<8x8xf32>
    %47 = math.exp %46 : vector<8x8xf32>
    %cst_15 = arith.constant dense<0.000000e+00> : vector<8xf32>
    %48 = vector.multi_reduction <add>, %47, %cst_15 [1] : vector<8x8xf32> to vector<8xf32>
    %49 = vector.shape_cast %48 : vector<8xf32> to vector<8x1xf32>
    %50 = tpu.reciprocal %49 {approx = true} : vector<8x1xf32> -> vector<8x1xf32>
    %51 = vector.broadcast %50 : vector<8x1xf32> to vector<8x8xf32>
    %52 = arith.mulf %47, %51 : vector<8x8xf32>
    %53 = arith.truncf %52 : vector<8x8xf32> to vector<8x8xbf16>
    %cst_16 = arith.constant dense<0.000000e+00> : vector<8x8xf32>
    %54 = tpu.matmul %53, %39, %cst_16 {dimension_numbers = #tpu.dot_dimension_numbers<[1], [0], [0], [1], [0, 0, 1, 1], [], []>} : vector<8x8xbf16>, vector<8x8xbf16>, vector<8x8xf32> -> vector<8x8xf32>
    %55 = vector.extract_strided_slice %8 {offsets = [0, 16], sizes = [8, 8], strides = [1, 1]} : vector<8x32xf32> to vector<8x8xf32>
    %56 = arith.truncf %55 : vector<8x8xf32> to vector<8x8xbf16>
    %57 = vector.extract_strided_slice %9 {offsets = [0, 16], sizes = [8, 8], strides = [1, 1]} : vector<8x32xf32> to vector<8x8xf32>
    %58 = arith.truncf %57 : vector<8x8xf32> to vector<8x8xbf16>
    %59 = vector.extract_strided_slice %10 {offsets = [0, 16], sizes = [8, 8], strides = [1, 1]} : vector<8x32xf32> to vector<8x8xf32>
    %60 = arith.truncf %59 : vector<8x8xf32> to vector<8x8xbf16>
    %cst_17 = arith.constant dense<0.000000e+00> : vector<8x8xf32>
    %61 = tpu.matmul %56, %58, %cst_17 {dimension_numbers = #tpu.dot_dimension_numbers<[1], [1], [0], [0], [0, 0, 1, 0], [], []>} : vector<8x8xbf16>, vector<8x8xbf16>, vector<8x8xf32> -> vector<8x8xf32>
    %62 = vector.broadcast %12 : vector<1x8xf32> to vector<8x8xf32>
    %63 = arith.addf %61, %62 : vector<8x8xf32>
    %cst_18 = arith.constant dense<0xFF800000> : vector<8xf32>
    %64 = vector.multi_reduction <maximumf>, %63, %cst_18 [1] : vector<8x8xf32> to vector<8xf32>
    %65 = vector.shape_cast %64 : vector<8xf32> to vector<8x1xf32>
    %66 = vector.broadcast %65 : vector<8x1xf32> to vector<8x8xf32>
    %67 = arith.subf %63, %66 : vector<8x8xf32>
    %68 = math.exp %67 : vector<8x8xf32>
    %cst_19 = arith.constant dense<0.000000e+00> : vector<8xf32>
    %69 = vector.multi_reduction <add>, %68, %cst_19 [1] : vector<8x8xf32> to vector<8xf32>
    %70 = vector.shape_cast %69 : vector<8xf32> to vector<8x1xf32>
    %71 = tpu.reciprocal %70 {approx = true} : vector<8x1xf32> -> vector<8x1xf32>
    %72 = vector.broadcast %71 : vector<8x1xf32> to vector<8x8xf32>
    %73 = arith.mulf %68, %72 : vector<8x8xf32>
    %74 = arith.truncf %73 : vector<8x8xf32> to vector<8x8xbf16>
    %cst_20 = arith.constant dense<0.000000e+00> : vector<8x8xf32>
    %75 = tpu.matmul %74, %60, %cst_20 {dimension_numbers = #tpu.dot_dimension_numbers<[1], [0], [0], [1], [0, 0, 1, 1], [], []>} : vector<8x8xbf16>, vector<8x8xbf16>, vector<8x8xf32> -> vector<8x8xf32>
    %76 = vector.extract_strided_slice %8 {offsets = [0, 24], sizes = [8, 8], strides = [1, 1]} : vector<8x32xf32> to vector<8x8xf32>
    %77 = arith.truncf %76 : vector<8x8xf32> to vector<8x8xbf16>
    %78 = vector.extract_strided_slice %9 {offsets = [0, 24], sizes = [8, 8], strides = [1, 1]} : vector<8x32xf32> to vector<8x8xf32>
    %79 = arith.truncf %78 : vector<8x8xf32> to vector<8x8xbf16>
    %80 = vector.extract_strided_slice %10 {offsets = [0, 24], sizes = [8, 8], strides = [1, 1]} : vector<8x32xf32> to vector<8x8xf32>
    %81 = arith.truncf %80 : vector<8x8xf32> to vector<8x8xbf16>
    %cst_21 = arith.constant dense<0.000000e+00> : vector<8x8xf32>
    %82 = tpu.matmul %77, %79, %cst_21 {dimension_numbers = #tpu.dot_dimension_numbers<[1], [1], [0], [0], [0, 0, 1, 0], [], []>} : vector<8x8xbf16>, vector<8x8xbf16>, vector<8x8xf32> -> vector<8x8xf32>
    %83 = vector.broadcast %12 : vector<1x8xf32> to vector<8x8xf32>
    %84 = arith.addf %82, %83 : vector<8x8xf32>
    %cst_22 = arith.constant dense<0xFF800000> : vector<8xf32>
    %85 = vector.multi_reduction <maximumf>, %84, %cst_22 [1] : vector<8x8xf32> to vector<8xf32>
    %86 = vector.shape_cast %85 : vector<8xf32> to vector<8x1xf32>
    %87 = vector.broadcast %86 : vector<8x1xf32> to vector<8x8xf32>
    %88 = arith.subf %84, %87 : vector<8x8xf32>
    %89 = math.exp %88 : vector<8x8xf32>
    %cst_23 = arith.constant dense<0.000000e+00> : vector<8xf32>
    %90 = vector.multi_reduction <add>, %89, %cst_23 [1] : vector<8x8xf32> to vector<8xf32>
    %91 = vector.shape_cast %90 : vector<8xf32> to vector<8x1xf32>
    %92 = tpu.reciprocal %91 {approx = true} : vector<8x1xf32> -> vector<8x1xf32>
    %93 = vector.broadcast %92 : vector<8x1xf32> to vector<8x8xf32>
    %94 = arith.mulf %89, %93 : vector<8x8xf32>
    %95 = arith.truncf %94 : vector<8x8xf32> to vector<8x8xbf16>
    %cst_24 = arith.constant dense<0.000000e+00> : vector<8x8xf32>
    %96 = tpu.matmul %95, %81, %cst_24 {dimension_numbers = #tpu.dot_dimension_numbers<[1], [0], [0], [1], [0, 0, 1, 1], [], []>} : vector<8x8xbf16>, vector<8x8xbf16>, vector<8x8xf32> -> vector<8x8xf32>
    %97 = tpu.concatenate %33, %54, %75, %96 in 1 : vector<8x8xf32>, vector<8x8xf32>, vector<8x8xf32>, vector<8x8xf32> -> vector<8x32xf32>
    %c0_25 = arith.constant 0 : index
    %c0_26 = arith.constant 0 : index
    %98 = vector.load %arg5[%c0_25, %c0_26] : memref<32x32xbf16, #tpu.memory_space<vmem>>, vector<32x32xbf16>
    %c0_27 = arith.constant 0 : index
    %c0_28 = arith.constant 0 : index
    %99 = vector.load %arg6[%c0_27, %c0_28] : memref<1x32xf32, #tpu.memory_space<vmem>>, vector<1x32xf32>
    %c0_29 = arith.constant 0 : index
    %c0_30 = arith.constant 0 : index
    %100 = vector.load %arg7[%c0_29, %c0_30] : memref<1x32xf32, #tpu.memory_space<vmem>>, vector<1x32xf32>
    %c0_31 = arith.constant 0 : index
    %c0_32 = arith.constant 0 : index
    %101 = vector.load %arg8[%c0_31, %c0_32] : memref<1x32xf32, #tpu.memory_space<vmem>>, vector<1x32xf32>
    %102 = arith.truncf %97 : vector<8x32xf32> to vector<8x32xbf16>
    %cst_33 = arith.constant dense<0.000000e+00> : vector<8x32xf32>
    %103 = tpu.matmul %102, %98, %cst_33 {dimension_numbers = #tpu.dot_dimension_numbers<[1], [0], [0], [1], [0, 0, 1, 1], [], []>} : vector<8x32xbf16>, vector<32x32xbf16>, vector<8x32xf32> -> vector<8x32xf32>
    %104 = vector.broadcast %99 : vector<1x32xf32> to vector<8x32xf32>
    %105 = arith.addf %103, %104 : vector<8x32xf32>
    %106 = arith.addf %105, %1 : vector<8x32xf32>
    %cst_34 = arith.constant dense<0.000000e+00> : vector<8xf32>
    %107 = vector.multi_reduction <add>, %106, %cst_34 [1] : vector<8x32xf32> to vector<8xf32>
    %108 = vector.shape_cast %107 : vector<8xf32> to vector<8x1xf32>
    %cst_35 = arith.constant 3.200000e+01 : f32
    %109 = vector.broadcast %cst_35 : f32 to vector<8x1xf32>
    %110 = arith.divf %108, %109 : vector<8x1xf32>
    %111 = vector.broadcast %110 : vector<8x1xf32> to vector<8x32xf32>
    %112 = arith.subf %106, %111 : vector<8x32xf32>
    %113 = arith.mulf %112, %112 : vector<8x32xf32>
    %cst_36 = arith.constant dense<0.000000e+00> : vector<8xf32>
    %114 = vector.multi_reduction <add>, %113, %cst_36 [1] : vector<8x32xf32> to vector<8xf32>
    %115 = vector.shape_cast %114 : vector<8xf32> to vector<8x1xf32>
    %cst_37 = arith.constant 3.200000e+01 : f32
    %116 = vector.broadcast %cst_37 : f32 to vector<8x1xf32>
    %117 = arith.divf %115, %116 : vector<8x1xf32>
    %118 = vector.broadcast %110 : vector<8x1xf32> to vector<8x32xf32>
    %119 = arith.subf %106, %118 : vector<8x32xf32>
    %cst_38 = arith.constant 9.99999974E-6 : f32
    %120 = vector.broadcast %cst_38 : f32 to vector<8x1xf32>
    %121 = arith.addf %117, %120 : vector<8x1xf32>
    %122 = math.rsqrt %121 : vector<8x1xf32>
    %123 = vector.broadcast %122 : vector<8x1xf32> to vector<8x32xf32>
    %124 = arith.mulf %119, %123 : vector<8x32xf32>
    %125 = vector.broadcast %100 : vector<1x32xf32> to vector<8x32xf32>
    %126 = arith.mulf %124, %125 : vector<8x32xf32>
    %127 = vector.broadcast %101 : vector<1x32xf32> to vector<8x32xf32>
    %128 = arith.addf %126, %127 : vector<8x32xf32>
    %c0_39 = arith.constant 0 : index
    %c0_40 = arith.constant 0 : index
    %c0_41 = arith.constant 0 : index
    %129 = vector.load %arg9[%c0_39, %c0_40, %c0_41] : memref<1x8x32xf32, #tpu.memory_space<vmem>>, vector<1x8x32xf32>
    %130 = vector.shape_cast %129 : vector<1x8x32xf32> to vector<8x32xf32>
    %131 = vector.shape_cast %128 : vector<8x32xf32> to vector<1x8x32xf32>
    tpu.vector_store %arg9[%c0_39, %c0_40, %c0_41], %131 {strides = array<i32>} : memref<1x8x32xf32, #tpu.memory_space<vmem>>, vector<1x8x32xf32>,
    return
  }
  func.func @transform_0(%arg0: i32) -> (i32, i32, i32) {
    %c0_i32 = arith.constant 0 : i32
    %c0_i32_0 = arith.constant 0 : i32
    %c0_i32_1 = arith.constant 0 : i32
    return %arg0, %c0_i32, %c0_i32_0 : i32, i32, i32
  }
  func.func @transform_1(%arg0: i32) -> (i32, i32, i32) {
    %c0_i32 = arith.constant 0 : i32
    %c0_i32_0 = arith.constant 0 : i32
    %c0_i32_1 = arith.constant 0 : i32
    return %arg0, %c0_i32, %c0_i32_0 : i32, i32, i32
  }
  func.func @transform_2(%arg0: i32) -> (i32, i32) {
    %c0_i32 = arith.constant 0 : i32
    %c0_i32_0 = arith.constant 0 : i32
    %c0_i32_1 = arith.constant 0 : i32
    return %c0_i32, %c0_i32_0 : i32, i32
  }
  func.func @transform_3(%arg0: i32) -> (i32, i32) {
    %c0_i32 = arith.constant 0 : i32
    %c0_i32_0 = arith.constant 0 : i32
    %c0_i32_1 = arith.constant 0 : i32
    return %c0_i32, %c0_i32_0 : i32, i32
  }
  func.func @transform_4(%arg0: i32) -> (i32, i32) {
    %c0_i32 = arith.constant 0 : i32
    %c0_i32_0 = arith.constant 0 : i32
    %c0_i32_1 = arith.constant 0 : i32
    return %c0_i32, %c0_i32_0 : i32, i32
  }
  func.func @transform_5(%arg0: i32) -> (i32, i32) {
    %c0_i32 = arith.constant 0 : i32
    %c0_i32_0 = arith.constant 0 : i32
    %c0_i32_1 = arith.constant 0 : i32
    return %c0_i32, %c0_i32_0 : i32, i32
  }
  func.func @transform_6(%arg0: i32) -> (i32, i32) {
    %c0_i32 = arith.constant 0 : i32
    %c0_i32_0 = arith.constant 0 : i32
    %c0_i32_1 = arith.constant 0 : i32
    return %c0_i32, %c0_i32_0 : i32, i32
  }
  func.func @transform_7(%arg0: i32) -> (i32, i32) {
    %c0_i32 = arith.constant 0 : i32
    %c0_i32_0 = arith.constant 0 : i32
    %c0_i32_1 = arith.constant 0 : i32
    return %c0_i32, %c0_i32_0 : i32, i32
  }
  func.func @transform_8(%arg0: i32) -> (i32, i32, i32) {
    %c0_i32 = arith.constant 0 : i32
    %c0_i32_0 = arith.constant 0 : i32
    %c0_i32_1 = arith.constant 0 : i32
    return %arg0, %c0_i32, %c0_i32_0 : i32, i32, i32
  }
}

module attributes {stable_mosaic.version = 11 : i64} {
  func.func @_self_attn_block_kernel(%arg0: i32, %arg1: memref<1x8x32xf32, #tpu.memory_space<vmem>>, %arg2: memref<1x1x8xf32, #tpu.memory_space<vmem>>, %arg3: memref<32x96xbf16, #tpu.memory_space<vmem>>, %arg4: memref<1x96xf32, #tpu.memory_space<vmem>>, %arg5: memref<32x32xbf16, #tpu.memory_space<vmem>>, %arg6: memref<1x32xf32, #tpu.memory_space<vmem>>, %arg7: memref<1x32xf32, #tpu.memory_space<vmem>>, %arg8: memref<1x32xf32, #tpu.memory_space<vmem>>, %arg9: memref<1x8x32xf32, #tpu.memory_space<vmem>>) attributes {dimension_semantics = [#tpu.dimension_semantics<parallel>], iteration_bounds = array<i64: 2>, scalar_prefetch = 0 : i64, scratch_operands = 0 : i64, tpu.core_type = #tpu.core_type<tc>, window_params = [{transform_indices = @transform_0, window_bounds = array<i64: 1, 8, 32>}, {transform_indices = @transform_1, window_bounds = array<i64: 1, 1, 8>}, {pipeline_mode = #tpu.pipeline_mode<synchronous>, transform_indices = @transform_2, window_bounds = array<i64: 32, 96>}, {pipeline_mode = #tpu.pipeline_mode<synchronous>, transform_indices = @transform_3, window_bounds = array<i64: 1, 96>}, {pipeline_mode = #tpu.pipeline_mode<synchronous>, transform_indices = @transform_4, window_bounds = array<i64: 32, 32>}, {pipeline_mode = #tpu.pipeline_mode<synchronous>, transform_indices = @transform_5, window_bounds = array<i64: 1, 32>}, {pipeline_mode = #tpu.pipeline_mode<synchronous>, transform_indices = @transform_6, window_bounds = array<i64: 1, 32>}, {pipeline_mode = #tpu.pipeline_mode<synchronous>, transform_indices = @transform_7, window_bounds = array<i64: 1, 32>}, {transform_indices = @transform_8, window_bounds = array<i64: 1, 8, 32>}]} {
    %c0 = arith.constant 0 : index
    %c0_0 = arith.constant 0 : index
    %c0_1 = arith.constant 0 : index
    %0 = vector.load %arg1[%c0, %c0_0, %c0_1] : memref<1x8x32xf32, #tpu.memory_space<vmem>>, vector<1x8x32xf32>
    %1 = vector.shape_cast %0 : vector<1x8x32xf32> to vector<8x32xf32>
    %2 = arith.truncf %1 : vector<8x32xf32> to vector<8x32xbf16>
    %c0_2 = arith.constant 0 : index
    %c0_3 = arith.constant 0 : index
    %3 = vector.load %arg3[%c0_2, %c0_3] : memref<32x96xbf16, #tpu.memory_space<vmem>>, vector<32x96xbf16>
    %cst = arith.constant dense<0.000000e+00> : vector<8x96xf32>
    %4 = tpu.matmul %2, %3, %cst {dimension_numbers = #tpu.dot_dimension_numbers<[1], [0], [0], [1], [0, 0, 1, 1], [], []>} : vector<8x32xbf16>, vector<32x96xbf16>, vector<8x96xf32> -> vector<8x96xf32>
    %c0_4 = arith.constant 0 : index
    %c0_5 = arith.constant 0 : index
    %5 = vector.load %arg4[%c0_4, %c0_5] : memref<1x96xf32, #tpu.memory_space<vmem>>, vector<1x96xf32>
    %6 = vector.broadcast %5 : vector<1x96xf32> to vector<8x96xf32>
    %7 = arith.addf %4, %6 : vector<8x96xf32>
    %8 = vector.extract_strided_slice %7 {offsets = [0, 0], sizes = [8, 32], strides = [1, 1]} : vector<8x96xf32> to vector<8x32xf32>
    %9 = vector.extract_strided_slice %7 {offsets = [0, 32], sizes = [8, 32], strides = [1, 1]} : vector<8x96xf32> to vector<8x32xf32>
    %10 = vector.extract_strided_slice %7 {offsets = [0, 64], sizes = [8, 32], strides = [1, 1]} : vector<8x96xf32> to vector<8x32xf32>
    %c0_6 = arith.constant 0 : index
    %c0_7 = arith.constant 0 : index
    %c0_8 = arith.constant 0 : index
    %11 = vector.load %arg2[%c0_6, %c0_7, %c0_8] : memref<1x1x8xf32, #tpu.memory_space<vmem>>, vector<1x1x8xf32>
    %12 = vector.shape_cast %11 : vector<1x1x8xf32> to vector<1x8xf32>
    %13 = vector.extract_strided_slice %8 {offsets = [0, 0], sizes = [8, 8], strides = [1, 1]} : vector<8x32xf32> to vector<8x8xf32>
    %14 = arith.truncf %13 : vector<8x8xf32> to vector<8x8xbf16>
    %15 = vector.extract_strided_slice %9 {offsets = [0, 0], sizes = [8, 8], strides = [1, 1]} : vector<8x32xf32> to vector<8x8xf32>
    %16 = arith.truncf %15 : vector<8x8xf32> to vector<8x8xbf16>
    %17 = vector.extract_strided_slice %10 {offsets = [0, 0], sizes = [8, 8], strides = [1, 1]} : vector<8x32xf32> to vector<8x8xf32>
    %18 = arith.truncf %17 : vector<8x8xf32> to vector<8x8xbf16>
    %cst_9 = arith.constant dense<0.000000e+00> : vector<8x8xf32>
    %19 = tpu.matmul %14, %16, %cst_9 {dimension_numbers = #tpu.dot_dimension_numbers<[1], [1], [0], [0], [0, 0, 1, 0], [], []>} : vector<8x8xbf16>, vector<8x8xbf16>, vector<8x8xf32> -> vector<8x8xf32>
    %20 = vector.broadcast %12 : vector<1x8xf32> to vector<8x8xf32>
    %21 = arith.addf %19, %20 : vector<8x8xf32>
    %cst_10 = arith.constant dense<0xFF800000> : vector<8xf32>
    %22 = vector.multi_reduction <maximumf>, %21, %cst_10 [1] : vector<8x8xf32> to vector<8xf32>
    %23 = vector.shape_cast %22 : vector<8xf32> to vector<8x1xf32>
    %24 = vector.broadcast %23 : vector<8x1xf32> to vector<8x8xf32>
    %25 = arith.subf %21, %24 : vector<8x8xf32>
    %26 = math.exp %25 : vector<8x8xf32>
    %cst_11 = arith.constant dense<0.000000e+00> : vector<8xf32>
    %27 = vector.multi_reduction <add>, %26, %cst_11 [1] : vector<8x8xf32> to vector<8xf32>
    %28 = vector.shape_cast %27 : vector<8xf32> to vector<8x1xf32>
    %29 = tpu.reciprocal %28 {approx = true} : vector<8x1xf32> -> vector<8x1xf32>
    %30 = vector.broadcast %29 : vector<8x1xf32> to vector<8x8xf32>
    %31 = arith.mulf %26, %30 : vector<8x8xf32>
    %32 = arith.truncf %31 : vector<8x8xf32> to vector<8x8xbf16>
    %cst_12 = arith.constant dense<0.000000e+00> : vector<8x8xf32>
    %33 = tpu.matmul %32, %18, %cst_12 {dimension_numbers = #tpu.dot_dimension_numbers<[1], [0], [0], [1], [0, 0, 1, 1], [], []>} : vector<8x8xbf16>, vector<8x8xbf16>, vector<8x8xf32> -> vector<8x8xf32>
    %34 = vector.extract_strided_slice %8 {offsets = [0, 8], sizes = [8, 8], strides = [1, 1]} : vector<8x32xf32> to vector<8x8xf32>
    %35 = arith.truncf %34 : vector<8x8xf32> to vector<8x8xbf16>
    %36 = vector.extract_strided_slice %9 {offsets = [0, 8], sizes = [8, 8], strides = [1, 1]} : vector<8x32xf32> to vector<8x8xf32>
    %37 = arith.truncf %36 : vector<8x8xf32> to vector<8x8xbf16>
    %38 = vector.extract_strided_slice %10 {offsets = [0, 8], sizes = [8, 8], strides = [1, 1]} : vector<8x32xf32> to vector<8x8xf32>
    %39 = arith.truncf %38 : vector<8x8xf32> to vector<8x8xbf16>
    %cst_13 = arith.constant dense<0.000000e+00> : vector<8x8xf32>
    %40 = tpu.matmul %35, %37, %cst_13 {dimension_numbers = #tpu.dot_dimension_numbers<[1], [1], [0], [0], [0, 0, 1, 0], [], []>} : vector<8x8xbf16>, vector<8x8xbf16>, vector<8x8xf32> -> vector<8x8xf32>
    %41 = vector.broadcast %12 : vector<1x8xf32> to vector<8x8xf32>
    %42 = arith.addf %40, %41 : vector<8x8xf32>
    %cst_14 = arith.constant dense<0xFF800000> : vector<8xf32>
    %43 = vector.multi_reduction <maximumf>, %42, %cst_14 [1] : vector<8x8xf32> to vector<8xf32>
    %44 = vector.shape_cast %43 : vector<8xf32> to vector<8x1xf32>
    %45 = vector.broadcast %44 : vector<8x1xf32> to vector<8x8xf32>
    %46 = arith.subf %42, %45 : vector<8x8xf32>
    %47 = math.exp %46 : vector<8x8xf32>
    %cst_15 = arith.constant dense<0.000000e+00> : vector<8xf32>
    %48 = vector.multi_reduction <add>, %47, %cst_15 [1] : vector<8x8xf32> to vector<8xf32>
    %49 = vector.shape_cast %48 : vector<8xf32> to vector<8x1xf32>
    %50 = tpu.reciprocal %49 {approx = true} : vector<8x1xf32> -> vector<8x1xf32>
    %51 = vector.broadcast %50 : vector<8x1xf32> to vector<8x8xf32>
    %52 = arith.mulf %47, %51 : vector<8x8xf32>
    %53 = arith.truncf %52 : vector<8x8xf32> to vector<8x8xbf16>
    %cst_16 = arith.constant dense<0.000000e+00> : vector<8x8xf32>
    %54 = tpu.matmul %53, %39, %cst_16 {dimension_numbers = #tpu.dot_dimension_numbers<[1], [0], [0], [1], [0, 0, 1, 1], [], []>} : vector<8x8xbf16>, vector<8x8xbf16>, vector<8x8xf32> -> vector<8x8xf32>
    %55 = vector.extract_strided_slice %8 {offsets = [0, 16], sizes = [8, 8], strides = [1, 1]} : vector<8x32xf32> to vector<8x8xf32>
    %56 = arith.truncf %55 : vector<8x8xf32> to vector<8x8xbf16>
    %57 = vector.extract_strided_slice %9 {offsets = [0, 16], sizes = [8, 8], strides = [1, 1]} : vector<8x32xf32> to vector<8x8xf32>
    %58 = arith.truncf %57 : vector<8x8xf32> to vector<8x8xbf16>
    %59 = vector.extract_strided_slice %10 {offsets = [0, 16], sizes = [8, 8], strides = [1, 1]} : vector<8x32xf32> to vector<8x8xf32>
    %60 = arith.truncf %59 : vector<8x8xf32> to vector<8x8xbf16>
    %cst_17 = arith.constant dense<0.000000e+00> : vector<8x8xf32>
    %61 = tpu.matmul %56, %58, %cst_17 {dimension_numbers = #tpu.dot_dimension_numbers<[1], [1], [0], [0], [0, 0, 1, 0], [], []>} : vector<8x8xbf16>, vector<8x8xbf16>, vector<8x8xf32> -> vector<8x8xf32>
    %62 = vector.broadcast %12 : vector<1x8xf32> to vector<8x8xf32>
    %63 = arith.addf %61, %62 : vector<8x8xf32>
    %cst_18 = arith.constant dense<0xFF800000> : vector<8xf32>
    %64 = vector.multi_reduction <maximumf>, %63, %cst_18 [1] : vector<8x8xf32> to vector<8xf32>
    %65 = vector.shape_cast %64 : vector<8xf32> to vector<8x1xf32>
    %66 = vector.broadcast %65 : vector<8x1xf32> to vector<8x8xf32>
    %67 = arith.subf %63, %66 : vector<8x8xf32>
    %68 = math.exp %67 : vector<8x8xf32>
    %cst_19 = arith.constant dense<0.000000e+00> : vector<8xf32>
    %69 = vector.multi_reduction <add>, %68, %cst_19 [1] : vector<8x8xf32> to vector<8xf32>
    %70 = vector.shape_cast %69 : vector<8xf32> to vector<8x1xf32>
    %71 = tpu.reciprocal %70 {approx = true} : vector<8x1xf32> -> vector<8x1xf32>
    %72 = vector.broadcast %71 : vector<8x1xf32> to vector<8x8xf32>
    %73 = arith.mulf %68, %72 : vector<8x8xf32>
    %74 = arith.truncf %73 : vector<8x8xf32> to vector<8x8xbf16>
    %cst_20 = arith.constant dense<0.000000e+00> : vector<8x8xf32>
    %75 = tpu.matmul %74, %60, %cst_20 {dimension_numbers = #tpu.dot_dimension_numbers<[1], [0], [0], [1], [0, 0, 1, 1], [], []>} : vector<8x8xbf16>, vector<8x8xbf16>, vector<8x8xf32> -> vector<8x8xf32>
    %76 = vector.extract_strided_slice %8 {offsets = [0, 24], sizes = [8, 8], strides = [1, 1]} : vector<8x32xf32> to vector<8x8xf32>
    %77 = arith.truncf %76 : vector<8x8xf32> to vector<8x8xbf16>
    %78 = vector.extract_strided_slice %9 {offsets = [0, 24], sizes = [8, 8], strides = [1, 1]} : vector<8x32xf32> to vector<8x8xf32>
    %79 = arith.truncf %78 : vector<8x8xf32> to vector<8x8xbf16>
    %80 = vector.extract_strided_slice %10 {offsets = [0, 24], sizes = [8, 8], strides = [1, 1]} : vector<8x32xf32> to vector<8x8xf32>
    %81 = arith.truncf %80 : vector<8x8xf32> to vector<8x8xbf16>
    %cst_21 = arith.constant dense<0.000000e+00> : vector<8x8xf32>
    %82 = tpu.matmul %77, %79, %cst_21 {dimension_numbers = #tpu.dot_dimension_numbers<[1], [1], [0], [0], [0, 0, 1, 0], [], []>} : vector<8x8xbf16>, vector<8x8xbf16>, vector<8x8xf32> -> vector<8x8xf32>
    %83 = vector.broadcast %12 : vector<1x8xf32> to vector<8x8xf32>
    %84 = arith.addf %82, %83 : vector<8x8xf32>
    %cst_22 = arith.constant dense<0xFF800000> : vector<8xf32>
    %85 = vector.multi_reduction <maximumf>, %84, %cst_22 [1] : vector<8x8xf32> to vector<8xf32>
    %86 = vector.shape_cast %85 : vector<8xf32> to vector<8x1xf32>
    %87 = vector.broadcast %86 : vector<8x1xf32> to vector<8x8xf32>
    %88 = arith.subf %84, %87 : vector<8x8xf32>
    %89 = math.exp %88 : vector<8x8xf32>
    %cst_23 = arith.constant dense<0.000000e+00> : vector<8xf32>
    %90 = vector.multi_reduction <add>, %89, %cst_23 [1] : vector<8x8xf32> to vector<8xf32>
    %91 = vector.shape_cast %90 : vector<8xf32> to vector<8x1xf32>
    %92 = tpu.reciprocal %91 {approx = true} : vector<8x1xf32> -> vector<8x1xf32>
    %93 = vector.broadcast %92 : vector<8x1xf32> to vector<8x8xf32>
    %94 = arith.mulf %89, %93 : vector<8x8xf32>
    %95 = arith.truncf %94 : vector<8x8xf32> to vector<8x8xbf16>
    %cst_24 = arith.constant dense<0.000000e+00> : vector<8x8xf32>
    %96 = tpu.matmul %95, %81, %cst_24 {dimension_numbers = #tpu.dot_dimension_numbers<[1], [0], [0], [1], [0, 0, 1, 1], [], []>} : vector<8x8xbf16>, vector<8x8xbf16>, vector<8x8xf32> -> vector<8x8xf32>
    %97 = tpu.concatenate %33, %54, %75, %96 in 1 : vector<8x8xf32>, vector<8x8xf32>, vector<8x8xf32>, vector<8x8xf32> -> vector<8x32xf32>
    %c0_25 = arith.constant 0 : index
    %c0_26 = arith.constant 0 : index
    %98 = vector.load %arg5[%c0_25, %c0_26] : memref<32x32xbf16, #tpu.memory_space<vmem>>, vector<32x32xbf16>
    %c0_27 = arith.constant 0 : index
    %c0_28 = arith.constant 0 : index
    %99 = vector.load %arg6[%c0_27, %c0_28] : memref<1x32xf32, #tpu.memory_space<vmem>>, vector<1x32xf32>
    %c0_29 = arith.constant 0 : index
    %c0_30 = arith.constant 0 : index
    %100 = vector.load %arg7[%c0_29, %c0_30] : memref<1x32xf32, #tpu.memory_space<vmem>>, vector<1x32xf32>
    %c0_31 = arith.constant 0 : index
    %c0_32 = arith.constant 0 : index
    %101 = vector.load %arg8[%c0_31, %c0_32] : memref<1x32xf32, #tpu.memory_space<vmem>>, vector<1x32xf32>
    %102 = arith.truncf %97 : vector<8x32xf32> to vector<8x32xbf16>
    %cst_33 = arith.constant dense<0.000000e+00> : vector<8x32xf32>
    %103 = tpu.matmul %102, %98, %cst_33 {dimension_numbers = #tpu.dot_dimension_numbers<[1], [0], [0], [1], [0, 0, 1, 1], [], []>} : vector<8x32xbf16>, vector<32x32xbf16>, vector<8x32xf32> -> vector<8x32xf32>
    %104 = vector.broadcast %99 : vector<1x32xf32> to vector<8x32xf32>
    %105 = arith.addf %103, %104 : vector<8x32xf32>
    %106 = arith.addf %105, %1 : vector<8x32xf32>
    %cst_34 = arith.constant dense<0.000000e+00> : vector<8xf32>
    %107 = vector.multi_reduction <add>, %106, %cst_34 [1] : vector<8x32xf32> to vector<8xf32>
    %108 = vector.shape_cast %107 : vector<8xf32> to vector<8x1xf32>
    %cst_35 = arith.constant 3.200000e+01 : f32
    %109 = vector.broadcast %cst_35 : f32 to vector<8x1xf32>
    %110 = arith.divf %108, %109 : vector<8x1xf32>
    %111 = vector.broadcast %110 : vector<8x1xf32> to vector<8x32xf32>
    %112 = arith.subf %106, %111 : vector<8x32xf32>
    %113 = arith.mulf %112, %112 : vector<8x32xf32>
    %cst_36 = arith.constant dense<0.000000e+00> : vector<8xf32>
    %114 = vector.multi_reduction <add>, %113, %cst_36 [1] : vector<8x32xf32> to vector<8xf32>
    %115 = vector.shape_cast %114 : vector<8xf32> to vector<8x1xf32>
    %cst_37 = arith.constant 3.200000e+01 : f32
    %116 = vector.broadcast %cst_37 : f32 to vector<8x1xf32>
    %117 = arith.divf %115, %116 : vector<8x1xf32>
    %118 = vector.broadcast %110 : vector<8x1xf32> to vector<8x32xf32>
    %119 = arith.subf %106, %118 : vector<8x32xf32>
    %cst_38 = arith.constant 9.99999974E-6 : f32
    %120 = vector.broadcast %cst_38 : f32 to vector<8x1xf32>
    %121 = arith.addf %117, %120 : vector<8x1xf32>
    %122 = math.rsqrt %121 : vector<8x1xf32>
    %123 = vector.broadcast %122 : vector<8x1xf32> to vector<8x32xf32>
    %124 = arith.mulf %119, %123 : vector<8x32xf32>
    %125 = vector.broadcast %100 : vector<1x32xf32> to vector<8x32xf32>
    %126 = arith.mulf %124, %125 : vector<8x32xf32>
    %127 = vector.broadcast %101 : vector<1x32xf32> to vector<8x32xf32>
    %128 = arith.addf %126, %127 : vector<8x32xf32>
    %c0_39 = arith.constant 0 : index
    %c0_40 = arith.constant 0 : index
    %c0_41 = arith.constant 0 : index
    %129 = vector.load %arg9[%c0_39, %c0_40, %c0_41] : memref<1x8x32xf32, #tpu.memory_space<vmem>>, vector<1x8x32xf32>
    %130 = vector.shape_cast %129 : vector<1x8x32xf32> to vector<8x32xf32>
    %131 = vector.shape_cast %128 : vector<8x32xf32> to vector<1x8x32xf32>
    tpu.vector_store %arg9[%c0_39, %c0_40, %c0_41], %131 {strides = array<i32>} : memref<1x8x32xf32, #tpu.memory_space<vmem>>, vector<1x8x32xf32>,
    return
  }
  func.func @transform_0(%arg0: i32) -> (i32, i32, i32) {
    %c0_i32 = arith.constant 0 : i32
    %c0_i32_0 = arith.constant 0 : i32
    %c0_i32_1 = arith.constant 0 : i32
    return %arg0, %c0_i32, %c0_i32_0 : i32, i32, i32
  }
  func.func @transform_1(%arg0: i32) -> (i32, i32, i32) {
    %c0_i32 = arith.constant 0 : i32
    %c0_i32_0 = arith.constant 0 : i32
    %c0_i32_1 = arith.constant 0 : i32
    return %arg0, %c0_i32, %c0_i32_0 : i32, i32, i32
  }
  func.func @transform_2(%arg0: i32) -> (i32, i32) {
    %c0_i32 = arith.constant 0 : i32
    %c0_i32_0 = arith.constant 0 : i32
    %c0_i32_1 = arith.constant 0 : i32
    return %c0_i32, %c0_i32_0 : i32, i32
  }
  func.func @transform_3(%arg0: i32) -> (i32, i32) {
    %c0_i32 = arith.constant 0 : i32
    %c0_i32_0 = arith.constant 0 : i32
    %c0_i32_1 = arith.constant 0 : i32
    return %c0_i32, %c0_i32_0 : i32, i32
  }
  func.func @transform_4(%arg0: i32) -> (i32, i32) {
    %c0_i32 = arith.constant 0 : i32
    %c0_i32_0 = arith.constant 0 : i32
    %c0_i32_1 = arith.constant 0 : i32
    return %c0_i32, %c0_i32_0 : i32, i32
  }
  func.func @transform_5(%arg0: i32) -> (i32, i32) {
    %c0_i32 = arith.constant 0 : i32
    %c0_i32_0 = arith.constant 0 : i32
    %c0_i32_1 = arith.constant 0 : i32
    return %c0_i32, %c0_i32_0 : i32, i32
  }
  func.func @transform_6(%arg0: i32) -> (i32, i32) {
    %c0_i32 = arith.constant 0 : i32
    %c0_i32_0 = arith.constant 0 : i32
    %c0_i32_1 = arith.constant 0 : i32
    return %c0_i32, %c0_i32_0 : i32, i32
  }
  func.func @transform_7(%arg0: i32) -> (i32, i32) {
    %c0_i32 = arith.constant 0 : i32
    %c0_i32_0 = arith.constant 0 : i32
    %c0_i32_1 = arith.constant 0 : i32
    return %c0_i32, %c0_i32_0 : i32, i32
  }
  func.func @transform_8(%arg0: i32) -> (i32, i32, i32) {
    %c0_i32 = arith.constant 0 : i32
    %c0_i32_0 = arith.constant 0 : i32
    %c0_i32_1 = arith.constant 0 : i32
    return %arg0, %c0_i32, %c0_i32_0 : i32, i32, i32
  }
}

module attributes {stable_mosaic.version = 11 : i64} {
  func.func @_cross_attn_block_kernel(%arg0: i32, %arg1: memref<1x8x32xf32, #tpu.memory_space<vmem>>, %arg2: memref<1x8x32xf32, #tpu.memory_space<vmem>>, %arg3: memref<1x1x8xf32, #tpu.memory_space<vmem>>, %arg4: memref<32x32xbf16, #tpu.memory_space<vmem>>, %arg5: memref<1x32xf32, #tpu.memory_space<vmem>>, %arg6: memref<32x64xbf16, #tpu.memory_space<vmem>>, %arg7: memref<1x64xf32, #tpu.memory_space<vmem>>, %arg8: memref<32x32xbf16, #tpu.memory_space<vmem>>, %arg9: memref<1x32xf32, #tpu.memory_space<vmem>>, %arg10: memref<1x32xf32, #tpu.memory_space<vmem>>, %arg11: memref<1x32xf32, #tpu.memory_space<vmem>>, %arg12: memref<1x8x32xf32, #tpu.memory_space<vmem>>) attributes {dimension_semantics = [#tpu.dimension_semantics<parallel>], iteration_bounds = array<i64: 2>, scalar_prefetch = 0 : i64, scratch_operands = 0 : i64, tpu.core_type = #tpu.core_type<tc>, window_params = [{transform_indices = @transform_0, window_bounds = array<i64: 1, 8, 32>}, {transform_indices = @transform_1, window_bounds = array<i64: 1, 8, 32>}, {transform_indices = @transform_2, window_bounds = array<i64: 1, 1, 8>}, {pipeline_mode = #tpu.pipeline_mode<synchronous>, transform_indices = @transform_3, window_bounds = array<i64: 32, 32>}, {pipeline_mode = #tpu.pipeline_mode<synchronous>, transform_indices = @transform_4, window_bounds = array<i64: 1, 32>}, {pipeline_mode = #tpu.pipeline_mode<synchronous>, transform_indices = @transform_5, window_bounds = array<i64: 32, 64>}, {pipeline_mode = #tpu.pipeline_mode<synchronous>, transform_indices = @transform_6, window_bounds = array<i64: 1, 64>}, {pipeline_mode = #tpu.pipeline_mode<synchronous>, transform_indices = @transform_7, window_bounds = array<i64: 32, 32>}, {pipeline_mode = #tpu.pipeline_mode<synchronous>, transform_indices = @transform_8, window_bounds = array<i64: 1, 32>}, {pipeline_mode = #tpu.pipeline_mode<synchronous>, transform_indices = @transform_9, window_bounds = array<i64: 1, 32>}, {pipeline_mode = #tpu.pipeline_mode<synchronous>, transform_indices = @transform_10, window_bounds = array<i64: 1, 32>}, {transform_indices = @transform_11, window_bounds = array<i64: 1, 8, 32>}]} {
    %c0 = arith.constant 0 : index
    %c0_0 = arith.constant 0 : index
    %c0_1 = arith.constant 0 : index
    %0 = vector.load %arg1[%c0, %c0_0, %c0_1] : memref<1x8x32xf32, #tpu.memory_space<vmem>>, vector<1x8x32xf32>
    %1 = vector.shape_cast %0 : vector<1x8x32xf32> to vector<8x32xf32>
    %c0_2 = arith.constant 0 : index
    %c0_3 = arith.constant 0 : index
    %c0_4 = arith.constant 0 : index
    %2 = vector.load %arg2[%c0_2, %c0_3, %c0_4] : memref<1x8x32xf32, #tpu.memory_space<vmem>>, vector<1x8x32xf32>
    %3 = vector.shape_cast %2 : vector<1x8x32xf32> to vector<8x32xf32>
    %4 = arith.truncf %1 : vector<8x32xf32> to vector<8x32xbf16>
    %c0_5 = arith.constant 0 : index
    %c0_6 = arith.constant 0 : index
    %5 = vector.load %arg4[%c0_5, %c0_6] : memref<32x32xbf16, #tpu.memory_space<vmem>>, vector<32x32xbf16>
    %cst = arith.constant dense<0.000000e+00> : vector<8x32xf32>
    %6 = tpu.matmul %4, %5, %cst {dimension_numbers = #tpu.dot_dimension_numbers<[1], [0], [0], [1], [0, 0, 1, 1], [], []>} : vector<8x32xbf16>, vector<32x32xbf16>, vector<8x32xf32> -> vector<8x32xf32>
    %c0_7 = arith.constant 0 : index
    %c0_8 = arith.constant 0 : index
    %7 = vector.load %arg5[%c0_7, %c0_8] : memref<1x32xf32, #tpu.memory_space<vmem>>, vector<1x32xf32>
    %8 = vector.broadcast %7 : vector<1x32xf32> to vector<8x32xf32>
    %9 = arith.addf %6, %8 : vector<8x32xf32>
    %10 = arith.truncf %3 : vector<8x32xf32> to vector<8x32xbf16>
    %c0_9 = arith.constant 0 : index
    %c0_10 = arith.constant 0 : index
    %11 = vector.load %arg6[%c0_9, %c0_10] : memref<32x64xbf16, #tpu.memory_space<vmem>>, vector<32x64xbf16>
    %cst_11 = arith.constant dense<0.000000e+00> : vector<8x64xf32>
    %12 = tpu.matmul %10, %11, %cst_11 {dimension_numbers = #tpu.dot_dimension_numbers<[1], [0], [0], [1], [0, 0, 1, 1], [], []>} : vector<8x32xbf16>, vector<32x64xbf16>, vector<8x64xf32> -> vector<8x64xf32>
    %c0_12 = arith.constant 0 : index
    %c0_13 = arith.constant 0 : index
    %13 = vector.load %arg7[%c0_12, %c0_13] : memref<1x64xf32, #tpu.memory_space<vmem>>, vector<1x64xf32>
    %14 = vector.broadcast %13 : vector<1x64xf32> to vector<8x64xf32>
    %15 = arith.addf %12, %14 : vector<8x64xf32>
    %16 = vector.extract_strided_slice %15 {offsets = [0, 0], sizes = [8, 32], strides = [1, 1]} : vector<8x64xf32> to vector<8x32xf32>
    %17 = vector.extract_strided_slice %15 {offsets = [0, 32], sizes = [8, 32], strides = [1, 1]} : vector<8x64xf32> to vector<8x32xf32>
    %c0_14 = arith.constant 0 : index
    %c0_15 = arith.constant 0 : index
    %c0_16 = arith.constant 0 : index
    %18 = vector.load %arg3[%c0_14, %c0_15, %c0_16] : memref<1x1x8xf32, #tpu.memory_space<vmem>>, vector<1x1x8xf32>
    %19 = vector.shape_cast %18 : vector<1x1x8xf32> to vector<1x8xf32>
    %20 = vector.extract_strided_slice %9 {offsets = [0, 0], sizes = [8, 8], strides = [1, 1]} : vector<8x32xf32> to vector<8x8xf32>
    %21 = arith.truncf %20 : vector<8x8xf32> to vector<8x8xbf16>
    %22 = vector.extract_strided_slice %16 {offsets = [0, 0], sizes = [8, 8], strides = [1, 1]} : vector<8x32xf32> to vector<8x8xf32>
    %23 = arith.truncf %22 : vector<8x8xf32> to vector<8x8xbf16>
    %24 = vector.extract_strided_slice %17 {offsets = [0, 0], sizes = [8, 8], strides = [1, 1]} : vector<8x32xf32> to vector<8x8xf32>
    %25 = arith.truncf %24 : vector<8x8xf32> to vector<8x8xbf16>
    %cst_17 = arith.constant dense<0.000000e+00> : vector<8x8xf32>
    %26 = tpu.matmul %21, %23, %cst_17 {dimension_numbers = #tpu.dot_dimension_numbers<[1], [1], [0], [0], [0, 0, 1, 0], [], []>} : vector<8x8xbf16>, vector<8x8xbf16>, vector<8x8xf32> -> vector<8x8xf32>
    %27 = vector.broadcast %19 : vector<1x8xf32> to vector<8x8xf32>
    %28 = arith.addf %26, %27 : vector<8x8xf32>
    %cst_18 = arith.constant dense<0xFF800000> : vector<8xf32>
    %29 = vector.multi_reduction <maximumf>, %28, %cst_18 [1] : vector<8x8xf32> to vector<8xf32>
    %30 = vector.shape_cast %29 : vector<8xf32> to vector<8x1xf32>
    %31 = vector.broadcast %30 : vector<8x1xf32> to vector<8x8xf32>
    %32 = arith.subf %28, %31 : vector<8x8xf32>
    %33 = math.exp %32 : vector<8x8xf32>
    %cst_19 = arith.constant dense<0.000000e+00> : vector<8xf32>
    %34 = vector.multi_reduction <add>, %33, %cst_19 [1] : vector<8x8xf32> to vector<8xf32>
    %35 = vector.shape_cast %34 : vector<8xf32> to vector<8x1xf32>
    %36 = tpu.reciprocal %35 {approx = true} : vector<8x1xf32> -> vector<8x1xf32>
    %37 = vector.broadcast %36 : vector<8x1xf32> to vector<8x8xf32>
    %38 = arith.mulf %33, %37 : vector<8x8xf32>
    %39 = arith.truncf %38 : vector<8x8xf32> to vector<8x8xbf16>
    %cst_20 = arith.constant dense<0.000000e+00> : vector<8x8xf32>
    %40 = tpu.matmul %39, %25, %cst_20 {dimension_numbers = #tpu.dot_dimension_numbers<[1], [0], [0], [1], [0, 0, 1, 1], [], []>} : vector<8x8xbf16>, vector<8x8xbf16>, vector<8x8xf32> -> vector<8x8xf32>
    %41 = vector.extract_strided_slice %9 {offsets = [0, 8], sizes = [8, 8], strides = [1, 1]} : vector<8x32xf32> to vector<8x8xf32>
    %42 = arith.truncf %41 : vector<8x8xf32> to vector<8x8xbf16>
    %43 = vector.extract_strided_slice %16 {offsets = [0, 8], sizes = [8, 8], strides = [1, 1]} : vector<8x32xf32> to vector<8x8xf32>
    %44 = arith.truncf %43 : vector<8x8xf32> to vector<8x8xbf16>
    %45 = vector.extract_strided_slice %17 {offsets = [0, 8], sizes = [8, 8], strides = [1, 1]} : vector<8x32xf32> to vector<8x8xf32>
    %46 = arith.truncf %45 : vector<8x8xf32> to vector<8x8xbf16>
    %cst_21 = arith.constant dense<0.000000e+00> : vector<8x8xf32>
    %47 = tpu.matmul %42, %44, %cst_21 {dimension_numbers = #tpu.dot_dimension_numbers<[1], [1], [0], [0], [0, 0, 1, 0], [], []>} : vector<8x8xbf16>, vector<8x8xbf16>, vector<8x8xf32> -> vector<8x8xf32>
    %48 = vector.broadcast %19 : vector<1x8xf32> to vector<8x8xf32>
    %49 = arith.addf %47, %48 : vector<8x8xf32>
    %cst_22 = arith.constant dense<0xFF800000> : vector<8xf32>
    %50 = vector.multi_reduction <maximumf>, %49, %cst_22 [1] : vector<8x8xf32> to vector<8xf32>
    %51 = vector.shape_cast %50 : vector<8xf32> to vector<8x1xf32>
    %52 = vector.broadcast %51 : vector<8x1xf32> to vector<8x8xf32>
    %53 = arith.subf %49, %52 : vector<8x8xf32>
    %54 = math.exp %53 : vector<8x8xf32>
    %cst_23 = arith.constant dense<0.000000e+00> : vector<8xf32>
    %55 = vector.multi_reduction <add>, %54, %cst_23 [1] : vector<8x8xf32> to vector<8xf32>
    %56 = vector.shape_cast %55 : vector<8xf32> to vector<8x1xf32>
    %57 = tpu.reciprocal %56 {approx = true} : vector<8x1xf32> -> vector<8x1xf32>
    %58 = vector.broadcast %57 : vector<8x1xf32> to vector<8x8xf32>
    %59 = arith.mulf %54, %58 : vector<8x8xf32>
    %60 = arith.truncf %59 : vector<8x8xf32> to vector<8x8xbf16>
    %cst_24 = arith.constant dense<0.000000e+00> : vector<8x8xf32>
    %61 = tpu.matmul %60, %46, %cst_24 {dimension_numbers = #tpu.dot_dimension_numbers<[1], [0], [0], [1], [0, 0, 1, 1], [], []>} : vector<8x8xbf16>, vector<8x8xbf16>, vector<8x8xf32> -> vector<8x8xf32>
    %62 = vector.extract_strided_slice %9 {offsets = [0, 16], sizes = [8, 8], strides = [1, 1]} : vector<8x32xf32> to vector<8x8xf32>
    %63 = arith.truncf %62 : vector<8x8xf32> to vector<8x8xbf16>
    %64 = vector.extract_strided_slice %16 {offsets = [0, 16], sizes = [8, 8], strides = [1, 1]} : vector<8x32xf32> to vector<8x8xf32>
    %65 = arith.truncf %64 : vector<8x8xf32> to vector<8x8xbf16>
    %66 = vector.extract_strided_slice %17 {offsets = [0, 16], sizes = [8, 8], strides = [1, 1]} : vector<8x32xf32> to vector<8x8xf32>
    %67 = arith.truncf %66 : vector<8x8xf32> to vector<8x8xbf16>
    %cst_25 = arith.constant dense<0.000000e+00> : vector<8x8xf32>
    %68 = tpu.matmul %63, %65, %cst_25 {dimension_numbers = #tpu.dot_dimension_numbers<[1], [1], [0], [0], [0, 0, 1, 0], [], []>} : vector<8x8xbf16>, vector<8x8xbf16>, vector<8x8xf32> -> vector<8x8xf32>
    %69 = vector.broadcast %19 : vector<1x8xf32> to vector<8x8xf32>
    %70 = arith.addf %68, %69 : vector<8x8xf32>
    %cst_26 = arith.constant dense<0xFF800000> : vector<8xf32>
    %71 = vector.multi_reduction <maximumf>, %70, %cst_26 [1] : vector<8x8xf32> to vector<8xf32>
    %72 = vector.shape_cast %71 : vector<8xf32> to vector<8x1xf32>
    %73 = vector.broadcast %72 : vector<8x1xf32> to vector<8x8xf32>
    %74 = arith.subf %70, %73 : vector<8x8xf32>
    %75 = math.exp %74 : vector<8x8xf32>
    %cst_27 = arith.constant dense<0.000000e+00> : vector<8xf32>
    %76 = vector.multi_reduction <add>, %75, %cst_27 [1] : vector<8x8xf32> to vector<8xf32>
    %77 = vector.shape_cast %76 : vector<8xf32> to vector<8x1xf32>
    %78 = tpu.reciprocal %77 {approx = true} : vector<8x1xf32> -> vector<8x1xf32>
    %79 = vector.broadcast %78 : vector<8x1xf32> to vector<8x8xf32>
    %80 = arith.mulf %75, %79 : vector<8x8xf32>
    %81 = arith.truncf %80 : vector<8x8xf32> to vector<8x8xbf16>
    %cst_28 = arith.constant dense<0.000000e+00> : vector<8x8xf32>
    %82 = tpu.matmul %81, %67, %cst_28 {dimension_numbers = #tpu.dot_dimension_numbers<[1], [0], [0], [1], [0, 0, 1, 1], [], []>} : vector<8x8xbf16>, vector<8x8xbf16>, vector<8x8xf32> -> vector<8x8xf32>
    %83 = vector.extract_strided_slice %9 {offsets = [0, 24], sizes = [8, 8], strides = [1, 1]} : vector<8x32xf32> to vector<8x8xf32>
    %84 = arith.truncf %83 : vector<8x8xf32> to vector<8x8xbf16>
    %85 = vector.extract_strided_slice %16 {offsets = [0, 24], sizes = [8, 8], strides = [1, 1]} : vector<8x32xf32> to vector<8x8xf32>
    %86 = arith.truncf %85 : vector<8x8xf32> to vector<8x8xbf16>
    %87 = vector.extract_strided_slice %17 {offsets = [0, 24], sizes = [8, 8], strides = [1, 1]} : vector<8x32xf32> to vector<8x8xf32>
    %88 = arith.truncf %87 : vector<8x8xf32> to vector<8x8xbf16>
    %cst_29 = arith.constant dense<0.000000e+00> : vector<8x8xf32>
    %89 = tpu.matmul %84, %86, %cst_29 {dimension_numbers = #tpu.dot_dimension_numbers<[1], [1], [0], [0], [0, 0, 1, 0], [], []>} : vector<8x8xbf16>, vector<8x8xbf16>, vector<8x8xf32> -> vector<8x8xf32>
    %90 = vector.broadcast %19 : vector<1x8xf32> to vector<8x8xf32>
    %91 = arith.addf %89, %90 : vector<8x8xf32>
    %cst_30 = arith.constant dense<0xFF800000> : vector<8xf32>
    %92 = vector.multi_reduction <maximumf>, %91, %cst_30 [1] : vector<8x8xf32> to vector<8xf32>
    %93 = vector.shape_cast %92 : vector<8xf32> to vector<8x1xf32>
    %94 = vector.broadcast %93 : vector<8x1xf32> to vector<8x8xf32>
    %95 = arith.subf %91, %94 : vector<8x8xf32>
    %96 = math.exp %95 : vector<8x8xf32>
    %cst_31 = arith.constant dense<0.000000e+00> : vector<8xf32>
    %97 = vector.multi_reduction <add>, %96, %cst_31 [1] : vector<8x8xf32> to vector<8xf32>
    %98 = vector.shape_cast %97 : vector<8xf32> to vector<8x1xf32>
    %99 = tpu.reciprocal %98 {approx = true} : vector<8x1xf32> -> vector<8x1xf32>
    %100 = vector.broadcast %99 : vector<8x1xf32> to vector<8x8xf32>
    %101 = arith.mulf %96, %100 : vector<8x8xf32>
    %102 = arith.truncf %101 : vector<8x8xf32> to vector<8x8xbf16>
    %cst_32 = arith.constant dense<0.000000e+00> : vector<8x8xf32>
    %103 = tpu.matmul %102, %88, %cst_32 {dimension_numbers = #tpu.dot_dimension_numbers<[1], [0], [0], [1], [0, 0, 1, 1], [], []>} : vector<8x8xbf16>, vector<8x8xbf16>, vector<8x8xf32> -> vector<8x8xf32>
    %104 = tpu.concatenate %40, %61, %82, %103 in 1 : vector<8x8xf32>, vector<8x8xf32>, vector<8x8xf32>, vector<8x8xf32> -> vector<8x32xf32>
    %c0_33 = arith.constant 0 : index
    %c0_34 = arith.constant 0 : index
    %105 = vector.load %arg8[%c0_33, %c0_34] : memref<32x32xbf16, #tpu.memory_space<vmem>>, vector<32x32xbf16>
    %c0_35 = arith.constant 0 : index
    %c0_36 = arith.constant 0 : index
    %106 = vector.load %arg9[%c0_35, %c0_36] : memref<1x32xf32, #tpu.memory_space<vmem>>, vector<1x32xf32>
    %c0_37 = arith.constant 0 : index
    %c0_38 = arith.constant 0 : index
    %107 = vector.load %arg10[%c0_37, %c0_38] : memref<1x32xf32, #tpu.memory_space<vmem>>, vector<1x32xf32>
    %c0_39 = arith.constant 0 : index
    %c0_40 = arith.constant 0 : index
    %108 = vector.load %arg11[%c0_39, %c0_40] : memref<1x32xf32, #tpu.memory_space<vmem>>, vector<1x32xf32>
    %109 = arith.truncf %104 : vector<8x32xf32> to vector<8x32xbf16>
    %cst_41 = arith.constant dense<0.000000e+00> : vector<8x32xf32>
    %110 = tpu.matmul %109, %105, %cst_41 {dimension_numbers = #tpu.dot_dimension_numbers<[1], [0], [0], [1], [0, 0, 1, 1], [], []>} : vector<8x32xbf16>, vector<32x32xbf16>, vector<8x32xf32> -> vector<8x32xf32>
    %111 = vector.broadcast %106 : vector<1x32xf32> to vector<8x32xf32>
    %112 = arith.addf %110, %111 : vector<8x32xf32>
    %113 = arith.addf %112, %1 : vector<8x32xf32>
    %cst_42 = arith.constant dense<0.000000e+00> : vector<8xf32>
    %114 = vector.multi_reduction <add>, %113, %cst_42 [1] : vector<8x32xf32> to vector<8xf32>
    %115 = vector.shape_cast %114 : vector<8xf32> to vector<8x1xf32>
    %cst_43 = arith.constant 3.200000e+01 : f32
    %116 = vector.broadcast %cst_43 : f32 to vector<8x1xf32>
    %117 = arith.divf %115, %116 : vector<8x1xf32>
    %118 = vector.broadcast %117 : vector<8x1xf32> to vector<8x32xf32>
    %119 = arith.subf %113, %118 : vector<8x32xf32>
    %120 = arith.mulf %119, %119 : vector<8x32xf32>
    %cst_44 = arith.constant dense<0.000000e+00> : vector<8xf32>
    %121 = vector.multi_reduction <add>, %120, %cst_44 [1] : vector<8x32xf32> to vector<8xf32>
    %122 = vector.shape_cast %121 : vector<8xf32> to vector<8x1xf32>
    %cst_45 = arith.constant 3.200000e+01 : f32
    %123 = vector.broadcast %cst_45 : f32 to vector<8x1xf32>
    %124 = arith.divf %122, %123 : vector<8x1xf32>
    %125 = vector.broadcast %117 : vector<8x1xf32> to vector<8x32xf32>
    %126 = arith.subf %113, %125 : vector<8x32xf32>
    %cst_46 = arith.constant 9.99999974E-6 : f32
    %127 = vector.broadcast %cst_46 : f32 to vector<8x1xf32>
    %128 = arith.addf %124, %127 : vector<8x1xf32>
    %129 = math.rsqrt %128 : vector<8x1xf32>
    %130 = vector.broadcast %129 : vector<8x1xf32> to vector<8x32xf32>
    %131 = arith.mulf %126, %130 : vector<8x32xf32>
    %132 = vector.broadcast %107 : vector<1x32xf32> to vector<8x32xf32>
    %133 = arith.mulf %131, %132 : vector<8x32xf32>
    %134 = vector.broadcast %108 : vector<1x32xf32> to vector<8x32xf32>
    %135 = arith.addf %133, %134 : vector<8x32xf32>
    %c0_47 = arith.constant 0 : index
    %c0_48 = arith.constant 0 : index
    %c0_49 = arith.constant 0 : index
    %136 = vector.load %arg12[%c0_47, %c0_48, %c0_49] : memref<1x8x32xf32, #tpu.memory_space<vmem>>, vector<1x8x32xf32>
    %137 = vector.shape_cast %136 : vector<1x8x32xf32> to vector<8x32xf32>
    %138 = vector.shape_cast %135 : vector<8x32xf32> to vector<1x8x32xf32>
    tpu.vector_store %arg12[%c0_47, %c0_48, %c0_49], %138 {strides = array<i32>} : memref<1x8x32xf32, #tpu.memory_space<vmem>>, vector<1x8x32xf32>,
    return
  }
  func.func @transform_0(%arg0: i32) -> (i32, i32, i32) {
    %c0_i32 = arith.constant 0 : i32
    %c0_i32_0 = arith.constant 0 : i32
    %c0_i32_1 = arith.constant 0 : i32
    return %arg0, %c0_i32, %c0_i32_0 : i32, i32, i32
  }
  func.func @transform_1(%arg0: i32) -> (i32, i32, i32) {
    %c0_i32 = arith.constant 0 : i32
    %c0_i32_0 = arith.constant 0 : i32
    %c0_i32_1 = arith.constant 0 : i32
    return %arg0, %c0_i32, %c0_i32_0 : i32, i32, i32
  }
  func.func @transform_2(%arg0: i32) -> (i32, i32, i32) {
    %c0_i32 = arith.constant 0 : i32
    %c0_i32_0 = arith.constant 0 : i32
    %c0_i32_1 = arith.constant 0 : i32
    return %arg0, %c0_i32, %c0_i32_0 : i32, i32, i32
  }
  func.func @transform_3(%arg0: i32) -> (i32, i32) {
    %c0_i32 = arith.constant 0 : i32
    %c0_i32_0 = arith.constant 0 : i32
    %c0_i32_1 = arith.constant 0 : i32
    return %c0_i32, %c0_i32_0 : i32, i32
  }
  func.func @transform_4(%arg0: i32) -> (i32, i32) {
    %c0_i32 = arith.constant 0 : i32
    %c0_i32_0 = arith.constant 0 : i32
    %c0_i32_1 = arith.constant 0 : i32
    return %c0_i32, %c0_i32_0 : i32, i32
  }
  func.func @transform_5(%arg0: i32) -> (i32, i32) {
    %c0_i32 = arith.constant 0 : i32
    %c0_i32_0 = arith.constant 0 : i32
    %c0_i32_1 = arith.constant 0 : i32
    return %c0_i32, %c0_i32_0 : i32, i32
  }
  func.func @transform_6(%arg0: i32) -> (i32, i32) {
    %c0_i32 = arith.constant 0 : i32
    %c0_i32_0 = arith.constant 0 : i32
    %c0_i32_1 = arith.constant 0 : i32
    return %c0_i32, %c0_i32_0 : i32, i32
  }
  func.func @transform_7(%arg0: i32) -> (i32, i32) {
    %c0_i32 = arith.constant 0 : i32
    %c0_i32_0 = arith.constant 0 : i32
    %c0_i32_1 = arith.constant 0 : i32
    return %c0_i32, %c0_i32_0 : i32, i32
  }
  func.func @transform_8(%arg0: i32) -> (i32, i32) {
    %c0_i32 = arith.constant 0 : i32
    %c0_i32_0 = arith.constant 0 : i32
    %c0_i32_1 = arith.constant 0 : i32
    return %c0_i32, %c0_i32_0 : i32, i32
  }
  func.func @transform_9(%arg0: i32) -> (i32, i32) {
    %c0_i32 = arith.constant 0 : i32
    %c0_i32_0 = arith.constant 0 : i32
    %c0_i32_1 = arith.constant 0 : i32
    return %c0_i32, %c0_i32_0 : i32, i32
  }
  func.func @transform_10(%arg0: i32) -> (i32, i32) {
    %c0_i32 = arith.constant 0 : i32
    %c0_i32_0 = arith.constant 0 : i32
    %c0_i32_1 = arith.constant 0 : i32
    return %c0_i32, %c0_i32_0 : i32, i32
  }
  func.func @transform_11(%arg0: i32) -> (i32, i32, i32) {
    %c0_i32 = arith.constant 0 : i32
    %c0_i32_0 = arith.constant 0 : i32
    %c0_i32_1 = arith.constant 0 : i32
    return %arg0, %c0_i32, %c0_i32_0 : i32, i32, i32
  }
}

module attributes {stable_mosaic.version = 11 : i64} {
  func.func @_ffn_add_ln_kernel(%arg0: i32, %arg1: i32, %arg2: memref<16x32xf32, #tpu.memory_space<vmem>>, %arg3: memref<32x64xbf16, #tpu.memory_space<vmem>>, %arg4: memref<1x64xf32, #tpu.memory_space<vmem>>, %arg5: memref<64x32xbf16, #tpu.memory_space<vmem>>, %arg6: memref<1x32xf32, #tpu.memory_space<vmem>>, %arg7: memref<1x32xf32, #tpu.memory_space<vmem>>, %arg8: memref<1x32xf32, #tpu.memory_space<vmem>>, %arg9: memref<16x32xf32, #tpu.memory_space<vmem>>, %arg10: memref<16x32xf32, #tpu.memory_space<vmem>>) attributes {dimension_semantics = [#tpu.dimension_semantics<parallel>, #tpu.dimension_semantics<arbitrary>], iteration_bounds = array<i64: 1, 1>, scalar_prefetch = 0 : i64, scratch_operands = 1 : i64, tpu.core_type = #tpu.core_type<tc>, window_params = [{transform_indices = @transform_0, window_bounds = array<i64: 16, 32>}, {transform_indices = @transform_1, window_bounds = array<i64: 32, 64>}, {transform_indices = @transform_2, window_bounds = array<i64: 1, 64>}, {transform_indices = @transform_3, window_bounds = array<i64: 64, 32>}, {pipeline_mode = #tpu.pipeline_mode<synchronous>, transform_indices = @transform_4, window_bounds = array<i64: 1, 32>}, {pipeline_mode = #tpu.pipeline_mode<synchronous>, transform_indices = @transform_5, window_bounds = array<i64: 1, 32>}, {pipeline_mode = #tpu.pipeline_mode<synchronous>, transform_indices = @transform_6, window_bounds = array<i64: 1, 32>}, {transform_indices = @transform_7, window_bounds = array<i64: 16, 32>}]} {
    %c0_i32 = arith.constant 0 : i32
    %0 = arith.cmpi eq, %arg1, %c0_i32 : i32
    %1 = arith.extui %0 : i1 to i32
    %c0_i32_0 = arith.constant 0 : i32
    %2 = arith.cmpi ne, %1, %c0_i32_0 : i32
    scf.if %2 {
      %cst_16 = arith.constant 0.000000e+00 : f32
      %21 = vector.broadcast %cst_16 : f32 to vector<16x32xf32>
      %c0_17 = arith.constant 0 : index
      %c0_18 = arith.constant 0 : index
      %22 = vector.load %arg10[%c0_17, %c0_18] : memref<16x32xf32, #tpu.memory_space<vmem>>, vector<16x32xf32>
      tpu.vector_store %arg10[%c0_17, %c0_18], %21 {strides = array<i32>} : memref<16x32xf32, #tpu.memory_space<vmem>>, vector<16x32xf32>,
    } else {
    }
    %c0 = arith.constant 0 : index
    %c0_1 = arith.constant 0 : index
    %3 = vector.load %arg2[%c0, %c0_1] : memref<16x32xf32, #tpu.memory_space<vmem>>, vector<16x32xf32>
    %4 = arith.truncf %3 : vector<16x32xf32> to vector<16x32xbf16>
    %c0_2 = arith.constant 0 : index
    %c0_3 = arith.constant 0 : index
    %5 = vector.load %arg3[%c0_2, %c0_3] : memref<32x64xbf16, #tpu.memory_space<vmem>>, vector<32x64xbf16>
    %cst = arith.constant dense<0.000000e+00> : vector<16x64xf32>
    %6 = tpu.matmul %4, %5, %cst {dimension_numbers = #tpu.dot_dimension_numbers<[1], [0], [0], [1], [0, 0, 1, 1], [], []>} : vector<16x32xbf16>, vector<32x64xbf16>, vector<16x64xf32> -> vector<16x64xf32>
    %c0_4 = arith.constant 0 : index
    %c0_5 = arith.constant 0 : index
    %7 = vector.load %arg4[%c0_4, %c0_5] : memref<1x64xf32, #tpu.memory_space<vmem>>, vector<1x64xf32>
    %8 = vector.broadcast %7 : vector<1x64xf32> to vector<16x64xf32>
    %9 = arith.addf %6, %8 : vector<16x64xf32>
    %cst_6 = arith.constant 0.000000e+00 : f32
    %10 = vector.broadcast %cst_6 : f32 to vector<16x64xf32>
    %11 = arith.maximumf %9, %10 : vector<16x64xf32>
    %c0_7 = arith.constant 0 : index
    %c0_8 = arith.constant 0 : index
    %12 = vector.load %arg10[%c0_7, %c0_8] : memref<16x32xf32, #tpu.memory_space<vmem>>, vector<16x32xf32>
    %13 = arith.truncf %11 : vector<16x64xf32> to vector<16x64xbf16>
    %c0_9 = arith.constant 0 : index
    %c0_10 = arith.constant 0 : index
    %14 = vector.load %arg5[%c0_9, %c0_10] : memref<64x32xbf16, #tpu.memory_space<vmem>>, vector<64x32xbf16>
    %cst_11 = arith.constant dense<0.000000e+00> : vector<16x32xf32>
    %15 = tpu.matmul %13, %14, %cst_11 {dimension_numbers = #tpu.dot_dimension_numbers<[1], [0], [0], [1], [0, 0, 1, 1], [], []>} : vector<16x64xbf16>, vector<64x32xbf16>, vector<16x32xf32> -> vector<16x32xf32>
    %16 = arith.addf %12, %15 : vector<16x32xf32>
    %c0_12 = arith.constant 0 : index
    %c0_13 = arith.constant 0 : index
    %17 = vector.load %arg10[%c0_12, %c0_13] : memref<16x32xf32, #tpu.memory_space<vmem>>, vector<16x32xf32>
    tpu.vector_store %arg10[%c0_12, %c0_13], %16 {strides = array<i32>} : memref<16x32xf32, #tpu.memory_space<vmem>>, vector<16x32xf32>,
    %c0_i32_14 = arith.constant 0 : i32
    %18 = arith.cmpi eq, %arg1, %c0_i32_14 : i32
    %19 = arith.extui %18 : i1 to i32
    %c0_i32_15 = arith.constant 0 : i32
    %20 = arith.cmpi ne, %19, %c0_i32_15 : i32
    scf.if %20 {
      %c0_16 = arith.constant 0 : index
      %c0_17 = arith.constant 0 : index
      %21 = vector.load %arg10[%c0_16, %c0_17] : memref<16x32xf32, #tpu.memory_space<vmem>>, vector<16x32xf32>
      %c0_18 = arith.constant 0 : index
      %c0_19 = arith.constant 0 : index
      %22 = vector.load %arg6[%c0_18, %c0_19] : memref<1x32xf32, #tpu.memory_space<vmem>>, vector<1x32xf32>
      %23 = vector.broadcast %22 : vector<1x32xf32> to vector<16x32xf32>
      %24 = arith.addf %21, %23 : vector<16x32xf32>
      %c0_20 = arith.constant 0 : index
      %c0_21 = arith.constant 0 : index
      %25 = vector.load %arg2[%c0_20, %c0_21] : memref<16x32xf32, #tpu.memory_space<vmem>>, vector<16x32xf32>
      %26 = arith.addf %24, %25 : vector<16x32xf32>
      %c0_22 = arith.constant 0 : index
      %c0_23 = arith.constant 0 : index
      %27 = vector.load %arg7[%c0_22, %c0_23] : memref<1x32xf32, #tpu.memory_space<vmem>>, vector<1x32xf32>
      %c0_24 = arith.constant 0 : index
      %c0_25 = arith.constant 0 : index
      %28 = vector.load %arg8[%c0_24, %c0_25] : memref<1x32xf32, #tpu.memory_space<vmem>>, vector<1x32xf32>
      %cst_26 = arith.constant dense<0.000000e+00> : vector<16xf32>
      %29 = vector.multi_reduction <add>, %26, %cst_26 [1] : vector<16x32xf32> to vector<16xf32>
      %30 = vector.shape_cast %29 : vector<16xf32> to vector<16x1xf32>
      %cst_27 = arith.constant 3.200000e+01 : f32
      %31 = vector.broadcast %cst_27 : f32 to vector<16x1xf32>
      %32 = arith.divf %30, %31 : vector<16x1xf32>
      %33 = vector.broadcast %32 : vector<16x1xf32> to vector<16x32xf32>
      %34 = arith.subf %26, %33 : vector<16x32xf32>
      %35 = arith.mulf %34, %34 : vector<16x32xf32>
      %cst_28 = arith.constant dense<0.000000e+00> : vector<16xf32>
      %36 = vector.multi_reduction <add>, %35, %cst_28 [1] : vector<16x32xf32> to vector<16xf32>
      %37 = vector.shape_cast %36 : vector<16xf32> to vector<16x1xf32>
      %cst_29 = arith.constant 3.200000e+01 : f32
      %38 = vector.broadcast %cst_29 : f32 to vector<16x1xf32>
      %39 = arith.divf %37, %38 : vector<16x1xf32>
      %40 = vector.broadcast %32 : vector<16x1xf32> to vector<16x32xf32>
      %41 = arith.subf %26, %40 : vector<16x32xf32>
      %cst_30 = arith.constant 9.99999974E-6 : f32
      %42 = vector.broadcast %cst_30 : f32 to vector<16x1xf32>
      %43 = arith.addf %39, %42 : vector<16x1xf32>
      %44 = math.rsqrt %43 : vector<16x1xf32>
      %45 = vector.broadcast %44 : vector<16x1xf32> to vector<16x32xf32>
      %46 = arith.mulf %41, %45 : vector<16x32xf32>
      %47 = vector.broadcast %27 : vector<1x32xf32> to vector<16x32xf32>
      %48 = arith.mulf %46, %47 : vector<16x32xf32>
      %49 = vector.broadcast %28 : vector<1x32xf32> to vector<16x32xf32>
      %50 = arith.addf %48, %49 : vector<16x32xf32>
      %c0_31 = arith.constant 0 : index
      %c0_32 = arith.constant 0 : index
      %51 = vector.load %arg9[%c0_31, %c0_32] : memref<16x32xf32, #tpu.memory_space<vmem>>, vector<16x32xf32>
      tpu.vector_store %arg9[%c0_31, %c0_32], %50 {strides = array<i32>} : memref<16x32xf32, #tpu.memory_space<vmem>>, vector<16x32xf32>,
    } else {
    }
    return
  }
  func.func @transform_0(%arg0: i32, %arg1: i32) -> (i32, i32) {
    %c0_i32 = arith.constant 0 : i32
    %c0_i32_0 = arith.constant 0 : i32
    return %arg0, %c0_i32 : i32, i32
  }
  func.func @transform_1(%arg0: i32, %arg1: i32) -> (i32, i32) {
    %c0_i32 = arith.constant 0 : i32
    %c0_i32_0 = arith.constant 0 : i32
    return %c0_i32, %arg1 : i32, i32
  }
  func.func @transform_2(%arg0: i32, %arg1: i32) -> (i32, i32) {
    %c0_i32 = arith.constant 0 : i32
    %c0_i32_0 = arith.constant 0 : i32
    return %c0_i32, %arg1 : i32, i32
  }
  func.func @transform_3(%arg0: i32, %arg1: i32) -> (i32, i32) {
    %c0_i32 = arith.constant 0 : i32
    %c0_i32_0 = arith.constant 0 : i32
    return %arg1, %c0_i32 : i32, i32
  }
  func.func @transform_4(%arg0: i32, %arg1: i32) -> (i32, i32) {
    %c0_i32 = arith.constant 0 : i32
    %c0_i32_0 = arith.constant 0 : i32
    %c0_i32_1 = arith.constant 0 : i32
    return %c0_i32, %c0_i32_0 : i32, i32
  }
  func.func @transform_5(%arg0: i32, %arg1: i32) -> (i32, i32) {
    %c0_i32 = arith.constant 0 : i32
    %c0_i32_0 = arith.constant 0 : i32
    %c0_i32_1 = arith.constant 0 : i32
    return %c0_i32, %c0_i32_0 : i32, i32
  }
  func.func @transform_6(%arg0: i32, %arg1: i32) -> (i32, i32) {
    %c0_i32 = arith.constant 0 : i32
    %c0_i32_0 = arith.constant 0 : i32
    %c0_i32_1 = arith.constant 0 : i32
    return %c0_i32, %c0_i32_0 : i32, i32
  }
  func.func @transform_7(%arg0: i32, %arg1: i32) -> (i32, i32) {
    %c0_i32 = arith.constant 0 : i32
    %c0_i32_0 = arith.constant 0 : i32
    return %arg0, %c0_i32 : i32, i32
  }
}

module attributes {stable_mosaic.version = 11 : i64} {
  func.func @_skip_self_attn_block_kernel(%arg0: i32, %arg1: memref<1x8x32xf32, #tpu.memory_space<vmem>>, %arg2: memref<1x8x32xf32, #tpu.memory_space<vmem>>, %arg3: memref<1x1x8xf32, #tpu.memory_space<vmem>>, %arg4: memref<32x32xbf16, #tpu.memory_space<vmem>>, %arg5: memref<32x32xbf16, #tpu.memory_space<vmem>>, %arg6: memref<1x32xf32, #tpu.memory_space<vmem>>, %arg7: memref<32x96xbf16, #tpu.memory_space<vmem>>, %arg8: memref<1x96xf32, #tpu.memory_space<vmem>>, %arg9: memref<32x32xbf16, #tpu.memory_space<vmem>>, %arg10: memref<1x32xf32, #tpu.memory_space<vmem>>, %arg11: memref<1x32xf32, #tpu.memory_space<vmem>>, %arg12: memref<1x32xf32, #tpu.memory_space<vmem>>, %arg13: memref<1x8x32xf32, #tpu.memory_space<vmem>>) attributes {dimension_semantics = [#tpu.dimension_semantics<parallel>], iteration_bounds = array<i64: 2>, scalar_prefetch = 0 : i64, scratch_operands = 0 : i64, tpu.core_type = #tpu.core_type<tc>, window_params = [{transform_indices = @transform_0, window_bounds = array<i64: 1, 8, 32>}, {transform_indices = @transform_1, window_bounds = array<i64: 1, 8, 32>}, {transform_indices = @transform_2, window_bounds = array<i64: 1, 1, 8>}, {pipeline_mode = #tpu.pipeline_mode<synchronous>, transform_indices = @transform_3, window_bounds = array<i64: 32, 32>}, {pipeline_mode = #tpu.pipeline_mode<synchronous>, transform_indices = @transform_4, window_bounds = array<i64: 32, 32>}, {pipeline_mode = #tpu.pipeline_mode<synchronous>, transform_indices = @transform_5, window_bounds = array<i64: 1, 32>}, {pipeline_mode = #tpu.pipeline_mode<synchronous>, transform_indices = @transform_6, window_bounds = array<i64: 32, 96>}, {pipeline_mode = #tpu.pipeline_mode<synchronous>, transform_indices = @transform_7, window_bounds = array<i64: 1, 96>}, {pipeline_mode = #tpu.pipeline_mode<synchronous>, transform_indices = @transform_8, window_bounds = array<i64: 32, 32>}, {pipeline_mode = #tpu.pipeline_mode<synchronous>, transform_indices = @transform_9, window_bounds = array<i64: 1, 32>}, {pipeline_mode = #tpu.pipeline_mode<synchronous>, transform_indices = @transform_10, window_bounds = array<i64: 1, 32>}, {pipeline_mode = #tpu.pipeline_mode<synchronous>, transform_indices = @transform_11, window_bounds = array<i64: 1, 32>}, {transform_indices = @transform_12, window_bounds = array<i64: 1, 8, 32>}]} {
    %c0 = arith.constant 0 : index
    %c0_0 = arith.constant 0 : index
    %c0_1 = arith.constant 0 : index
    %0 = vector.load %arg1[%c0, %c0_0, %c0_1] : memref<1x8x32xf32, #tpu.memory_space<vmem>>, vector<1x8x32xf32>
    %1 = vector.shape_cast %0 : vector<1x8x32xf32> to vector<8x32xf32>
    %2 = arith.truncf %1 : vector<8x32xf32> to vector<8x32xbf16>
    %c0_2 = arith.constant 0 : index
    %c0_3 = arith.constant 0 : index
    %3 = vector.load %arg4[%c0_2, %c0_3] : memref<32x32xbf16, #tpu.memory_space<vmem>>, vector<32x32xbf16>
    %cst = arith.constant dense<0.000000e+00> : vector<8x32xf32>
    %4 = tpu.matmul %2, %3, %cst {dimension_numbers = #tpu.dot_dimension_numbers<[1], [0], [0], [1], [0, 0, 1, 1], [], []>} : vector<8x32xbf16>, vector<32x32xbf16>, vector<8x32xf32> -> vector<8x32xf32>
    %c0_4 = arith.constant 0 : index
    %c0_5 = arith.constant 0 : index
    %c0_6 = arith.constant 0 : index
    %5 = vector.load %arg2[%c0_4, %c0_5, %c0_6] : memref<1x8x32xf32, #tpu.memory_space<vmem>>, vector<1x8x32xf32>
    %6 = vector.shape_cast %5 : vector<1x8x32xf32> to vector<8x32xf32>
    %7 = arith.truncf %6 : vector<8x32xf32> to vector<8x32xbf16>
    %c0_7 = arith.constant 0 : index
    %c0_8 = arith.constant 0 : index
    %8 = vector.load %arg5[%c0_7, %c0_8] : memref<32x32xbf16, #tpu.memory_space<vmem>>, vector<32x32xbf16>
    %cst_9 = arith.constant dense<0.000000e+00> : vector<8x32xf32>
    %9 = tpu.matmul %7, %8, %cst_9 {dimension_numbers = #tpu.dot_dimension_numbers<[1], [0], [0], [1], [0, 0, 1, 1], [], []>} : vector<8x32xbf16>, vector<32x32xbf16>, vector<8x32xf32> -> vector<8x32xf32>
    %10 = arith.addf %4, %9 : vector<8x32xf32>
    %c0_10 = arith.constant 0 : index
    %c0_11 = arith.constant 0 : index
    %11 = vector.load %arg6[%c0_10, %c0_11] : memref<1x32xf32, #tpu.memory_space<vmem>>, vector<1x32xf32>
    %12 = vector.broadcast %11 : vector<1x32xf32> to vector<8x32xf32>
    %13 = arith.addf %10, %12 : vector<8x32xf32>
    %14 = arith.truncf %13 : vector<8x32xf32> to vector<8x32xbf16>
    %c0_12 = arith.constant 0 : index
    %c0_13 = arith.constant 0 : index
    %15 = vector.load %arg7[%c0_12, %c0_13] : memref<32x96xbf16, #tpu.memory_space<vmem>>, vector<32x96xbf16>
    %cst_14 = arith.constant dense<0.000000e+00> : vector<8x96xf32>
    %16 = tpu.matmul %14, %15, %cst_14 {dimension_numbers = #tpu.dot_dimension_numbers<[1], [0], [0], [1], [0, 0, 1, 1], [], []>} : vector<8x32xbf16>, vector<32x96xbf16>, vector<8x96xf32> -> vector<8x96xf32>
    %c0_15 = arith.constant 0 : index
    %c0_16 = arith.constant 0 : index
    %17 = vector.load %arg8[%c0_15, %c0_16] : memref<1x96xf32, #tpu.memory_space<vmem>>, vector<1x96xf32>
    %18 = vector.broadcast %17 : vector<1x96xf32> to vector<8x96xf32>
    %19 = arith.addf %16, %18 : vector<8x96xf32>
    %20 = vector.extract_strided_slice %19 {offsets = [0, 0], sizes = [8, 32], strides = [1, 1]} : vector<8x96xf32> to vector<8x32xf32>
    %21 = vector.extract_strided_slice %19 {offsets = [0, 32], sizes = [8, 32], strides = [1, 1]} : vector<8x96xf32> to vector<8x32xf32>
    %22 = vector.extract_strided_slice %19 {offsets = [0, 64], sizes = [8, 32], strides = [1, 1]} : vector<8x96xf32> to vector<8x32xf32>
    %c0_17 = arith.constant 0 : index
    %c0_18 = arith.constant 0 : index
    %c0_19 = arith.constant 0 : index
    %23 = vector.load %arg3[%c0_17, %c0_18, %c0_19] : memref<1x1x8xf32, #tpu.memory_space<vmem>>, vector<1x1x8xf32>
    %24 = vector.shape_cast %23 : vector<1x1x8xf32> to vector<1x8xf32>
    %25 = vector.extract_strided_slice %20 {offsets = [0, 0], sizes = [8, 8], strides = [1, 1]} : vector<8x32xf32> to vector<8x8xf32>
    %26 = arith.truncf %25 : vector<8x8xf32> to vector<8x8xbf16>
    %27 = vector.extract_strided_slice %21 {offsets = [0, 0], sizes = [8, 8], strides = [1, 1]} : vector<8x32xf32> to vector<8x8xf32>
    %28 = arith.truncf %27 : vector<8x8xf32> to vector<8x8xbf16>
    %29 = vector.extract_strided_slice %22 {offsets = [0, 0], sizes = [8, 8], strides = [1, 1]} : vector<8x32xf32> to vector<8x8xf32>
    %30 = arith.truncf %29 : vector<8x8xf32> to vector<8x8xbf16>
    %cst_20 = arith.constant dense<0.000000e+00> : vector<8x8xf32>
    %31 = tpu.matmul %26, %28, %cst_20 {dimension_numbers = #tpu.dot_dimension_numbers<[1], [1], [0], [0], [0, 0, 1, 0], [], []>} : vector<8x8xbf16>, vector<8x8xbf16>, vector<8x8xf32> -> vector<8x8xf32>
    %32 = vector.broadcast %24 : vector<1x8xf32> to vector<8x8xf32>
    %33 = arith.addf %31, %32 : vector<8x8xf32>
    %cst_21 = arith.constant dense<0xFF800000> : vector<8xf32>
    %34 = vector.multi_reduction <maximumf>, %33, %cst_21 [1] : vector<8x8xf32> to vector<8xf32>
    %35 = vector.shape_cast %34 : vector<8xf32> to vector<8x1xf32>
    %36 = vector.broadcast %35 : vector<8x1xf32> to vector<8x8xf32>
    %37 = arith.subf %33, %36 : vector<8x8xf32>
    %38 = math.exp %37 : vector<8x8xf32>
    %cst_22 = arith.constant dense<0.000000e+00> : vector<8xf32>
    %39 = vector.multi_reduction <add>, %38, %cst_22 [1] : vector<8x8xf32> to vector<8xf32>
    %40 = vector.shape_cast %39 : vector<8xf32> to vector<8x1xf32>
    %41 = tpu.reciprocal %40 {approx = true} : vector<8x1xf32> -> vector<8x1xf32>
    %42 = vector.broadcast %41 : vector<8x1xf32> to vector<8x8xf32>
    %43 = arith.mulf %38, %42 : vector<8x8xf32>
    %44 = arith.truncf %43 : vector<8x8xf32> to vector<8x8xbf16>
    %cst_23 = arith.constant dense<0.000000e+00> : vector<8x8xf32>
    %45 = tpu.matmul %44, %30, %cst_23 {dimension_numbers = #tpu.dot_dimension_numbers<[1], [0], [0], [1], [0, 0, 1, 1], [], []>} : vector<8x8xbf16>, vector<8x8xbf16>, vector<8x8xf32> -> vector<8x8xf32>
    %46 = vector.extract_strided_slice %20 {offsets = [0, 8], sizes = [8, 8], strides = [1, 1]} : vector<8x32xf32> to vector<8x8xf32>
    %47 = arith.truncf %46 : vector<8x8xf32> to vector<8x8xbf16>
    %48 = vector.extract_strided_slice %21 {offsets = [0, 8], sizes = [8, 8], strides = [1, 1]} : vector<8x32xf32> to vector<8x8xf32>
    %49 = arith.truncf %48 : vector<8x8xf32> to vector<8x8xbf16>
    %50 = vector.extract_strided_slice %22 {offsets = [0, 8], sizes = [8, 8], strides = [1, 1]} : vector<8x32xf32> to vector<8x8xf32>
    %51 = arith.truncf %50 : vector<8x8xf32> to vector<8x8xbf16>
    %cst_24 = arith.constant dense<0.000000e+00> : vector<8x8xf32>
    %52 = tpu.matmul %47, %49, %cst_24 {dimension_numbers = #tpu.dot_dimension_numbers<[1], [1], [0], [0], [0, 0, 1, 0], [], []>} : vector<8x8xbf16>, vector<8x8xbf16>, vector<8x8xf32> -> vector<8x8xf32>
    %53 = vector.broadcast %24 : vector<1x8xf32> to vector<8x8xf32>
    %54 = arith.addf %52, %53 : vector<8x8xf32>
    %cst_25 = arith.constant dense<0xFF800000> : vector<8xf32>
    %55 = vector.multi_reduction <maximumf>, %54, %cst_25 [1] : vector<8x8xf32> to vector<8xf32>
    %56 = vector.shape_cast %55 : vector<8xf32> to vector<8x1xf32>
    %57 = vector.broadcast %56 : vector<8x1xf32> to vector<8x8xf32>
    %58 = arith.subf %54, %57 : vector<8x8xf32>
    %59 = math.exp %58 : vector<8x8xf32>
    %cst_26 = arith.constant dense<0.000000e+00> : vector<8xf32>
    %60 = vector.multi_reduction <add>, %59, %cst_26 [1] : vector<8x8xf32> to vector<8xf32>
    %61 = vector.shape_cast %60 : vector<8xf32> to vector<8x1xf32>
    %62 = tpu.reciprocal %61 {approx = true} : vector<8x1xf32> -> vector<8x1xf32>
    %63 = vector.broadcast %62 : vector<8x1xf32> to vector<8x8xf32>
    %64 = arith.mulf %59, %63 : vector<8x8xf32>
    %65 = arith.truncf %64 : vector<8x8xf32> to vector<8x8xbf16>
    %cst_27 = arith.constant dense<0.000000e+00> : vector<8x8xf32>
    %66 = tpu.matmul %65, %51, %cst_27 {dimension_numbers = #tpu.dot_dimension_numbers<[1], [0], [0], [1], [0, 0, 1, 1], [], []>} : vector<8x8xbf16>, vector<8x8xbf16>, vector<8x8xf32> -> vector<8x8xf32>
    %67 = vector.extract_strided_slice %20 {offsets = [0, 16], sizes = [8, 8], strides = [1, 1]} : vector<8x32xf32> to vector<8x8xf32>
    %68 = arith.truncf %67 : vector<8x8xf32> to vector<8x8xbf16>
    %69 = vector.extract_strided_slice %21 {offsets = [0, 16], sizes = [8, 8], strides = [1, 1]} : vector<8x32xf32> to vector<8x8xf32>
    %70 = arith.truncf %69 : vector<8x8xf32> to vector<8x8xbf16>
    %71 = vector.extract_strided_slice %22 {offsets = [0, 16], sizes = [8, 8], strides = [1, 1]} : vector<8x32xf32> to vector<8x8xf32>
    %72 = arith.truncf %71 : vector<8x8xf32> to vector<8x8xbf16>
    %cst_28 = arith.constant dense<0.000000e+00> : vector<8x8xf32>
    %73 = tpu.matmul %68, %70, %cst_28 {dimension_numbers = #tpu.dot_dimension_numbers<[1], [1], [0], [0], [0, 0, 1, 0], [], []>} : vector<8x8xbf16>, vector<8x8xbf16>, vector<8x8xf32> -> vector<8x8xf32>
    %74 = vector.broadcast %24 : vector<1x8xf32> to vector<8x8xf32>
    %75 = arith.addf %73, %74 : vector<8x8xf32>
    %cst_29 = arith.constant dense<0xFF800000> : vector<8xf32>
    %76 = vector.multi_reduction <maximumf>, %75, %cst_29 [1] : vector<8x8xf32> to vector<8xf32>
    %77 = vector.shape_cast %76 : vector<8xf32> to vector<8x1xf32>
    %78 = vector.broadcast %77 : vector<8x1xf32> to vector<8x8xf32>
    %79 = arith.subf %75, %78 : vector<8x8xf32>
    %80 = math.exp %79 : vector<8x8xf32>
    %cst_30 = arith.constant dense<0.000000e+00> : vector<8xf32>
    %81 = vector.multi_reduction <add>, %80, %cst_30 [1] : vector<8x8xf32> to vector<8xf32>
    %82 = vector.shape_cast %81 : vector<8xf32> to vector<8x1xf32>
    %83 = tpu.reciprocal %82 {approx = true} : vector<8x1xf32> -> vector<8x1xf32>
    %84 = vector.broadcast %83 : vector<8x1xf32> to vector<8x8xf32>
    %85 = arith.mulf %80, %84 : vector<8x8xf32>
    %86 = arith.truncf %85 : vector<8x8xf32> to vector<8x8xbf16>
    %cst_31 = arith.constant dense<0.000000e+00> : vector<8x8xf32>
    %87 = tpu.matmul %86, %72, %cst_31 {dimension_numbers = #tpu.dot_dimension_numbers<[1], [0], [0], [1], [0, 0, 1, 1], [], []>} : vector<8x8xbf16>, vector<8x8xbf16>, vector<8x8xf32> -> vector<8x8xf32>
    %88 = vector.extract_strided_slice %20 {offsets = [0, 24], sizes = [8, 8], strides = [1, 1]} : vector<8x32xf32> to vector<8x8xf32>
    %89 = arith.truncf %88 : vector<8x8xf32> to vector<8x8xbf16>
    %90 = vector.extract_strided_slice %21 {offsets = [0, 24], sizes = [8, 8], strides = [1, 1]} : vector<8x32xf32> to vector<8x8xf32>
    %91 = arith.truncf %90 : vector<8x8xf32> to vector<8x8xbf16>
    %92 = vector.extract_strided_slice %22 {offsets = [0, 24], sizes = [8, 8], strides = [1, 1]} : vector<8x32xf32> to vector<8x8xf32>
    %93 = arith.truncf %92 : vector<8x8xf32> to vector<8x8xbf16>
    %cst_32 = arith.constant dense<0.000000e+00> : vector<8x8xf32>
    %94 = tpu.matmul %89, %91, %cst_32 {dimension_numbers = #tpu.dot_dimension_numbers<[1], [1], [0], [0], [0, 0, 1, 0], [], []>} : vector<8x8xbf16>, vector<8x8xbf16>, vector<8x8xf32> -> vector<8x8xf32>
    %95 = vector.broadcast %24 : vector<1x8xf32> to vector<8x8xf32>
    %96 = arith.addf %94, %95 : vector<8x8xf32>
    %cst_33 = arith.constant dense<0xFF800000> : vector<8xf32>
    %97 = vector.multi_reduction <maximumf>, %96, %cst_33 [1] : vector<8x8xf32> to vector<8xf32>
    %98 = vector.shape_cast %97 : vector<8xf32> to vector<8x1xf32>
    %99 = vector.broadcast %98 : vector<8x1xf32> to vector<8x8xf32>
    %100 = arith.subf %96, %99 : vector<8x8xf32>
    %101 = math.exp %100 : vector<8x8xf32>
    %cst_34 = arith.constant dense<0.000000e+00> : vector<8xf32>
    %102 = vector.multi_reduction <add>, %101, %cst_34 [1] : vector<8x8xf32> to vector<8xf32>
    %103 = vector.shape_cast %102 : vector<8xf32> to vector<8x1xf32>
    %104 = tpu.reciprocal %103 {approx = true} : vector<8x1xf32> -> vector<8x1xf32>
    %105 = vector.broadcast %104 : vector<8x1xf32> to vector<8x8xf32>
    %106 = arith.mulf %101, %105 : vector<8x8xf32>
    %107 = arith.truncf %106 : vector<8x8xf32> to vector<8x8xbf16>
    %cst_35 = arith.constant dense<0.000000e+00> : vector<8x8xf32>
    %108 = tpu.matmul %107, %93, %cst_35 {dimension_numbers = #tpu.dot_dimension_numbers<[1], [0], [0], [1], [0, 0, 1, 1], [], []>} : vector<8x8xbf16>, vector<8x8xbf16>, vector<8x8xf32> -> vector<8x8xf32>
    %109 = tpu.concatenate %45, %66, %87, %108 in 1 : vector<8x8xf32>, vector<8x8xf32>, vector<8x8xf32>, vector<8x8xf32> -> vector<8x32xf32>
    %c0_36 = arith.constant 0 : index
    %c0_37 = arith.constant 0 : index
    %110 = vector.load %arg9[%c0_36, %c0_37] : memref<32x32xbf16, #tpu.memory_space<vmem>>, vector<32x32xbf16>
    %c0_38 = arith.constant 0 : index
    %c0_39 = arith.constant 0 : index
    %111 = vector.load %arg10[%c0_38, %c0_39] : memref<1x32xf32, #tpu.memory_space<vmem>>, vector<1x32xf32>
    %c0_40 = arith.constant 0 : index
    %c0_41 = arith.constant 0 : index
    %112 = vector.load %arg11[%c0_40, %c0_41] : memref<1x32xf32, #tpu.memory_space<vmem>>, vector<1x32xf32>
    %c0_42 = arith.constant 0 : index
    %c0_43 = arith.constant 0 : index
    %113 = vector.load %arg12[%c0_42, %c0_43] : memref<1x32xf32, #tpu.memory_space<vmem>>, vector<1x32xf32>
    %114 = arith.truncf %109 : vector<8x32xf32> to vector<8x32xbf16>
    %cst_44 = arith.constant dense<0.000000e+00> : vector<8x32xf32>
    %115 = tpu.matmul %114, %110, %cst_44 {dimension_numbers = #tpu.dot_dimension_numbers<[1], [0], [0], [1], [0, 0, 1, 1], [], []>} : vector<8x32xbf16>, vector<32x32xbf16>, vector<8x32xf32> -> vector<8x32xf32>
    %116 = vector.broadcast %111 : vector<1x32xf32> to vector<8x32xf32>
    %117 = arith.addf %115, %116 : vector<8x32xf32>
    %118 = arith.addf %117, %13 : vector<8x32xf32>
    %cst_45 = arith.constant dense<0.000000e+00> : vector<8xf32>
    %119 = vector.multi_reduction <add>, %118, %cst_45 [1] : vector<8x32xf32> to vector<8xf32>
    %120 = vector.shape_cast %119 : vector<8xf32> to vector<8x1xf32>
    %cst_46 = arith.constant 3.200000e+01 : f32
    %121 = vector.broadcast %cst_46 : f32 to vector<8x1xf32>
    %122 = arith.divf %120, %121 : vector<8x1xf32>
    %123 = vector.broadcast %122 : vector<8x1xf32> to vector<8x32xf32>
    %124 = arith.subf %118, %123 : vector<8x32xf32>
    %125 = arith.mulf %124, %124 : vector<8x32xf32>
    %cst_47 = arith.constant dense<0.000000e+00> : vector<8xf32>
    %126 = vector.multi_reduction <add>, %125, %cst_47 [1] : vector<8x32xf32> to vector<8xf32>
    %127 = vector.shape_cast %126 : vector<8xf32> to vector<8x1xf32>
    %cst_48 = arith.constant 3.200000e+01 : f32
    %128 = vector.broadcast %cst_48 : f32 to vector<8x1xf32>
    %129 = arith.divf %127, %128 : vector<8x1xf32>
    %130 = vector.broadcast %122 : vector<8x1xf32> to vector<8x32xf32>
    %131 = arith.subf %118, %130 : vector<8x32xf32>
    %cst_49 = arith.constant 9.99999974E-6 : f32
    %132 = vector.broadcast %cst_49 : f32 to vector<8x1xf32>
    %133 = arith.addf %129, %132 : vector<8x1xf32>
    %134 = math.rsqrt %133 : vector<8x1xf32>
    %135 = vector.broadcast %134 : vector<8x1xf32> to vector<8x32xf32>
    %136 = arith.mulf %131, %135 : vector<8x32xf32>
    %137 = vector.broadcast %112 : vector<1x32xf32> to vector<8x32xf32>
    %138 = arith.mulf %136, %137 : vector<8x32xf32>
    %139 = vector.broadcast %113 : vector<1x32xf32> to vector<8x32xf32>
    %140 = arith.addf %138, %139 : vector<8x32xf32>
    %c0_50 = arith.constant 0 : index
    %c0_51 = arith.constant 0 : index
    %c0_52 = arith.constant 0 : index
    %141 = vector.load %arg13[%c0_50, %c0_51, %c0_52] : memref<1x8x32xf32, #tpu.memory_space<vmem>>, vector<1x8x32xf32>
    %142 = vector.shape_cast %141 : vector<1x8x32xf32> to vector<8x32xf32>
    %143 = vector.shape_cast %140 : vector<8x32xf32> to vector<1x8x32xf32>
    tpu.vector_store %arg13[%c0_50, %c0_51, %c0_52], %143 {strides = array<i32>} : memref<1x8x32xf32, #tpu.memory_space<vmem>>, vector<1x8x32xf32>,
    return
  }
  func.func @transform_0(%arg0: i32) -> (i32, i32, i32) {
    %c0_i32 = arith.constant 0 : i32
    %c0_i32_0 = arith.constant 0 : i32
    %c0_i32_1 = arith.constant 0 : i32
    return %arg0, %c0_i32, %c0_i32_0 : i32, i32, i32
  }
  func.func @transform_1(%arg0: i32) -> (i32, i32, i32) {
    %c0_i32 = arith.constant 0 : i32
    %c0_i32_0 = arith.constant 0 : i32
    %c0_i32_1 = arith.constant 0 : i32
    return %arg0, %c0_i32, %c0_i32_0 : i32, i32, i32
  }
  func.func @transform_2(%arg0: i32) -> (i32, i32, i32) {
    %c0_i32 = arith.constant 0 : i32
    %c0_i32_0 = arith.constant 0 : i32
    %c0_i32_1 = arith.constant 0 : i32
    return %arg0, %c0_i32, %c0_i32_0 : i32, i32, i32
  }
  func.func @transform_3(%arg0: i32) -> (i32, i32) {
    %c0_i32 = arith.constant 0 : i32
    %c0_i32_0 = arith.constant 0 : i32
    %c0_i32_1 = arith.constant 0 : i32
    return %c0_i32, %c0_i32_0 : i32, i32
  }
  func.func @transform_4(%arg0: i32) -> (i32, i32) {
    %c0_i32 = arith.constant 0 : i32
    %c0_i32_0 = arith.constant 0 : i32
    %c0_i32_1 = arith.constant 0 : i32
    return %c0_i32, %c0_i32_0 : i32, i32
  }
  func.func @transform_5(%arg0: i32) -> (i32, i32) {
    %c0_i32 = arith.constant 0 : i32
    %c0_i32_0 = arith.constant 0 : i32
    %c0_i32_1 = arith.constant 0 : i32
    return %c0_i32, %c0_i32_0 : i32, i32
  }
  func.func @transform_6(%arg0: i32) -> (i32, i32) {
    %c0_i32 = arith.constant 0 : i32
    %c0_i32_0 = arith.constant 0 : i32
    %c0_i32_1 = arith.constant 0 : i32
    return %c0_i32, %c0_i32_0 : i32, i32
  }
  func.func @transform_7(%arg0: i32) -> (i32, i32) {
    %c0_i32 = arith.constant 0 : i32
    %c0_i32_0 = arith.constant 0 : i32
    %c0_i32_1 = arith.constant 0 : i32
    return %c0_i32, %c0_i32_0 : i32, i32
  }
  func.func @transform_8(%arg0: i32) -> (i32, i32) {
    %c0_i32 = arith.constant 0 : i32
    %c0_i32_0 = arith.constant 0 : i32
    %c0_i32_1 = arith.constant 0 : i32
    return %c0_i32, %c0_i32_0 : i32, i32
  }
  func.func @transform_9(%arg0: i32) -> (i32, i32) {
    %c0_i32 = arith.constant 0 : i32
    %c0_i32_0 = arith.constant 0 : i32
    %c0_i32_1 = arith.constant 0 : i32
    return %c0_i32, %c0_i32_0 : i32, i32
  }
  func.func @transform_10(%arg0: i32) -> (i32, i32) {
    %c0_i32 = arith.constant 0 : i32
    %c0_i32_0 = arith.constant 0 : i32
    %c0_i32_1 = arith.constant 0 : i32
    return %c0_i32, %c0_i32_0 : i32, i32
  }
  func.func @transform_11(%arg0: i32) -> (i32, i32) {
    %c0_i32 = arith.constant 0 : i32
    %c0_i32_0 = arith.constant 0 : i32
    %c0_i32_1 = arith.constant 0 : i32
    return %c0_i32, %c0_i32_0 : i32, i32
  }
  func.func @transform_12(%arg0: i32) -> (i32, i32, i32) {
    %c0_i32 = arith.constant 0 : i32
    %c0_i32_0 = arith.constant 0 : i32
    %c0_i32_1 = arith.constant 0 : i32
    return %arg0, %c0_i32, %c0_i32_0 : i32, i32, i32
  }
}

module attributes {stable_mosaic.version = 11 : i64} {
  func.func @_ffn_add_ln_kernel(%arg0: i32, %arg1: i32, %arg2: memref<16x32xf32, #tpu.memory_space<vmem>>, %arg3: memref<32x64xbf16, #tpu.memory_space<vmem>>, %arg4: memref<1x64xf32, #tpu.memory_space<vmem>>, %arg5: memref<64x32xbf16, #tpu.memory_space<vmem>>, %arg6: memref<1x32xf32, #tpu.memory_space<vmem>>, %arg7: memref<1x32xf32, #tpu.memory_space<vmem>>, %arg8: memref<1x32xf32, #tpu.memory_space<vmem>>, %arg9: memref<16x32xf32, #tpu.memory_space<vmem>>, %arg10: memref<16x32xf32, #tpu.memory_space<vmem>>) attributes {dimension_semantics = [#tpu.dimension_semantics<parallel>, #tpu.dimension_semantics<arbitrary>], iteration_bounds = array<i64: 1, 1>, scalar_prefetch = 0 : i64, scratch_operands = 1 : i64, tpu.core_type = #tpu.core_type<tc>, window_params = [{transform_indices = @transform_0, window_bounds = array<i64: 16, 32>}, {transform_indices = @transform_1, window_bounds = array<i64: 32, 64>}, {transform_indices = @transform_2, window_bounds = array<i64: 1, 64>}, {transform_indices = @transform_3, window_bounds = array<i64: 64, 32>}, {pipeline_mode = #tpu.pipeline_mode<synchronous>, transform_indices = @transform_4, window_bounds = array<i64: 1, 32>}, {pipeline_mode = #tpu.pipeline_mode<synchronous>, transform_indices = @transform_5, window_bounds = array<i64: 1, 32>}, {pipeline_mode = #tpu.pipeline_mode<synchronous>, transform_indices = @transform_6, window_bounds = array<i64: 1, 32>}, {transform_indices = @transform_7, window_bounds = array<i64: 16, 32>}]} {
    %c0_i32 = arith.constant 0 : i32
    %0 = arith.cmpi eq, %arg1, %c0_i32 : i32
    %1 = arith.extui %0 : i1 to i32
    %c0_i32_0 = arith.constant 0 : i32
    %2 = arith.cmpi ne, %1, %c0_i32_0 : i32
    scf.if %2 {
      %cst_16 = arith.constant 0.000000e+00 : f32
      %21 = vector.broadcast %cst_16 : f32 to vector<16x32xf32>
      %c0_17 = arith.constant 0 : index
      %c0_18 = arith.constant 0 : index
      %22 = vector.load %arg10[%c0_17, %c0_18] : memref<16x32xf32, #tpu.memory_space<vmem>>, vector<16x32xf32>
      tpu.vector_store %arg10[%c0_17, %c0_18], %21 {strides = array<i32>} : memref<16x32xf32, #tpu.memory_space<vmem>>, vector<16x32xf32>,
    } else {
    }
    %c0 = arith.constant 0 : index
    %c0_1 = arith.constant 0 : index
    %3 = vector.load %arg2[%c0, %c0_1] : memref<16x32xf32, #tpu.memory_space<vmem>>, vector<16x32xf32>
    %4 = arith.truncf %3 : vector<16x32xf32> to vector<16x32xbf16>
    %c0_2 = arith.constant 0 : index
    %c0_3 = arith.constant 0 : index
    %5 = vector.load %arg3[%c0_2, %c0_3] : memref<32x64xbf16, #tpu.memory_space<vmem>>, vector<32x64xbf16>
    %cst = arith.constant dense<0.000000e+00> : vector<16x64xf32>
    %6 = tpu.matmul %4, %5, %cst {dimension_numbers = #tpu.dot_dimension_numbers<[1], [0], [0], [1], [0, 0, 1, 1], [], []>} : vector<16x32xbf16>, vector<32x64xbf16>, vector<16x64xf32> -> vector<16x64xf32>
    %c0_4 = arith.constant 0 : index
    %c0_5 = arith.constant 0 : index
    %7 = vector.load %arg4[%c0_4, %c0_5] : memref<1x64xf32, #tpu.memory_space<vmem>>, vector<1x64xf32>
    %8 = vector.broadcast %7 : vector<1x64xf32> to vector<16x64xf32>
    %9 = arith.addf %6, %8 : vector<16x64xf32>
    %cst_6 = arith.constant 0.000000e+00 : f32
    %10 = vector.broadcast %cst_6 : f32 to vector<16x64xf32>
    %11 = arith.maximumf %9, %10 : vector<16x64xf32>
    %c0_7 = arith.constant 0 : index
    %c0_8 = arith.constant 0 : index
    %12 = vector.load %arg10[%c0_7, %c0_8] : memref<16x32xf32, #tpu.memory_space<vmem>>, vector<16x32xf32>
    %13 = arith.truncf %11 : vector<16x64xf32> to vector<16x64xbf16>
    %c0_9 = arith.constant 0 : index
    %c0_10 = arith.constant 0 : index
    %14 = vector.load %arg5[%c0_9, %c0_10] : memref<64x32xbf16, #tpu.memory_space<vmem>>, vector<64x32xbf16>
    %cst_11 = arith.constant dense<0.000000e+00> : vector<16x32xf32>
    %15 = tpu.matmul %13, %14, %cst_11 {dimension_numbers = #tpu.dot_dimension_numbers<[1], [0], [0], [1], [0, 0, 1, 1], [], []>} : vector<16x64xbf16>, vector<64x32xbf16>, vector<16x32xf32> -> vector<16x32xf32>
    %16 = arith.addf %12, %15 : vector<16x32xf32>
    %c0_12 = arith.constant 0 : index
    %c0_13 = arith.constant 0 : index
    %17 = vector.load %arg10[%c0_12, %c0_13] : memref<16x32xf32, #tpu.memory_space<vmem>>, vector<16x32xf32>
    tpu.vector_store %arg10[%c0_12, %c0_13], %16 {strides = array<i32>} : memref<16x32xf32, #tpu.memory_space<vmem>>, vector<16x32xf32>,
    %c0_i32_14 = arith.constant 0 : i32
    %18 = arith.cmpi eq, %arg1, %c0_i32_14 : i32
    %19 = arith.extui %18 : i1 to i32
    %c0_i32_15 = arith.constant 0 : i32
    %20 = arith.cmpi ne, %19, %c0_i32_15 : i32
    scf.if %20 {
      %c0_16 = arith.constant 0 : index
      %c0_17 = arith.constant 0 : index
      %21 = vector.load %arg10[%c0_16, %c0_17] : memref<16x32xf32, #tpu.memory_space<vmem>>, vector<16x32xf32>
      %c0_18 = arith.constant 0 : index
      %c0_19 = arith.constant 0 : index
      %22 = vector.load %arg6[%c0_18, %c0_19] : memref<1x32xf32, #tpu.memory_space<vmem>>, vector<1x32xf32>
      %23 = vector.broadcast %22 : vector<1x32xf32> to vector<16x32xf32>
      %24 = arith.addf %21, %23 : vector<16x32xf32>
      %c0_20 = arith.constant 0 : index
      %c0_21 = arith.constant 0 : index
      %25 = vector.load %arg2[%c0_20, %c0_21] : memref<16x32xf32, #tpu.memory_space<vmem>>, vector<16x32xf32>
      %26 = arith.addf %24, %25 : vector<16x32xf32>
      %c0_22 = arith.constant 0 : index
      %c0_23 = arith.constant 0 : index
      %27 = vector.load %arg7[%c0_22, %c0_23] : memref<1x32xf32, #tpu.memory_space<vmem>>, vector<1x32xf32>
      %c0_24 = arith.constant 0 : index
      %c0_25 = arith.constant 0 : index
      %28 = vector.load %arg8[%c0_24, %c0_25] : memref<1x32xf32, #tpu.memory_space<vmem>>, vector<1x32xf32>
      %cst_26 = arith.constant dense<0.000000e+00> : vector<16xf32>
      %29 = vector.multi_reduction <add>, %26, %cst_26 [1] : vector<16x32xf32> to vector<16xf32>
      %30 = vector.shape_cast %29 : vector<16xf32> to vector<16x1xf32>
      %cst_27 = arith.constant 3.200000e+01 : f32
      %31 = vector.broadcast %cst_27 : f32 to vector<16x1xf32>
      %32 = arith.divf %30, %31 : vector<16x1xf32>
      %33 = vector.broadcast %32 : vector<16x1xf32> to vector<16x32xf32>
      %34 = arith.subf %26, %33 : vector<16x32xf32>
      %35 = arith.mulf %34, %34 : vector<16x32xf32>
      %cst_28 = arith.constant dense<0.000000e+00> : vector<16xf32>
      %36 = vector.multi_reduction <add>, %35, %cst_28 [1] : vector<16x32xf32> to vector<16xf32>
      %37 = vector.shape_cast %36 : vector<16xf32> to vector<16x1xf32>
      %cst_29 = arith.constant 3.200000e+01 : f32
      %38 = vector.broadcast %cst_29 : f32 to vector<16x1xf32>
      %39 = arith.divf %37, %38 : vector<16x1xf32>
      %40 = vector.broadcast %32 : vector<16x1xf32> to vector<16x32xf32>
      %41 = arith.subf %26, %40 : vector<16x32xf32>
      %cst_30 = arith.constant 9.99999974E-6 : f32
      %42 = vector.broadcast %cst_30 : f32 to vector<16x1xf32>
      %43 = arith.addf %39, %42 : vector<16x1xf32>
      %44 = math.rsqrt %43 : vector<16x1xf32>
      %45 = vector.broadcast %44 : vector<16x1xf32> to vector<16x32xf32>
      %46 = arith.mulf %41, %45 : vector<16x32xf32>
      %47 = vector.broadcast %27 : vector<1x32xf32> to vector<16x32xf32>
      %48 = arith.mulf %46, %47 : vector<16x32xf32>
      %49 = vector.broadcast %28 : vector<1x32xf32> to vector<16x32xf32>
      %50 = arith.addf %48, %49 : vector<16x32xf32>
      %c0_31 = arith.constant 0 : index
      %c0_32 = arith.constant 0 : index
      %51 = vector.load %arg9[%c0_31, %c0_32] : memref<16x32xf32, #tpu.memory_space<vmem>>, vector<16x32xf32>
      tpu.vector_store %arg9[%c0_31, %c0_32], %50 {strides = array<i32>} : memref<16x32xf32, #tpu.memory_space<vmem>>, vector<16x32xf32>,
    } else {
    }
    return
  }
  func.func @transform_0(%arg0: i32, %arg1: i32) -> (i32, i32) {
    %c0_i32 = arith.constant 0 : i32
    %c0_i32_0 = arith.constant 0 : i32
    return %arg0, %c0_i32 : i32, i32
  }
  func.func @transform_1(%arg0: i32, %arg1: i32) -> (i32, i32) {
    %c0_i32 = arith.constant 0 : i32
    %c0_i32_0 = arith.constant 0 : i32
    return %c0_i32, %arg1 : i32, i32
  }
  func.func @transform_2(%arg0: i32, %arg1: i32) -> (i32, i32) {
    %c0_i32 = arith.constant 0 : i32
    %c0_i32_0 = arith.constant 0 : i32
    return %c0_i32, %arg1 : i32, i32
  }
  func.func @transform_3(%arg0: i32, %arg1: i32) -> (i32, i32) {
    %c0_i32 = arith.constant 0 : i32
    %c0_i32_0 = arith.constant 0 : i32
    return %arg1, %c0_i32 : i32, i32
  }
  func.func @transform_4(%arg0: i32, %arg1: i32) -> (i32, i32) {
    %c0_i32 = arith.constant 0 : i32
    %c0_i32_0 = arith.constant 0 : i32
    %c0_i32_1 = arith.constant 0 : i32
    return %c0_i32, %c0_i32_0 : i32, i32
  }
  func.func @transform_5(%arg0: i32, %arg1: i32) -> (i32, i32) {
    %c0_i32 = arith.constant 0 : i32
    %c0_i32_0 = arith.constant 0 : i32
    %c0_i32_1 = arith.constant 0 : i32
    return %c0_i32, %c0_i32_0 : i32, i32
  }
  func.func @transform_6(%arg0: i32, %arg1: i32) -> (i32, i32) {
    %c0_i32 = arith.constant 0 : i32
    %c0_i32_0 = arith.constant 0 : i32
    %c0_i32_1 = arith.constant 0 : i32
    return %c0_i32, %c0_i32_0 : i32, i32
  }
  func.func @transform_7(%arg0: i32, %arg1: i32) -> (i32, i32) {
    %c0_i32 = arith.constant 0 : i32
    %c0_i32_0 = arith.constant 0 : i32
    return %arg0, %c0_i32 : i32, i32
  }
}

</mosaic_0001>

<llo_original>
// kernel: skip_decode_transformer.11
$region0: #{skip_decode_transformer.11}
  #allocation0 [shape = 'u32[]', space=smem, size = 0x4, offset = 0x4, fixed_abs, tag = 'smem constant byte address 0x4 - core index']
  #allocation1 [shape = 'u32[72,128]{1,0:T(1,128)}', space=vmem, size = 0x9000, scoped, tag = 'internal scratch']
  #allocation2 [shape = 'f32[16,32]{1,0:T(8,128)}', space=vmem, size = 0x2000, scoped, tag = 'scratch operand']
  %s0 = inlined_call_operand.vmem [shape: f32[16,32], index: 0, kind: input, shape index: {}]
  %s1 = inlined_call_operand.vmem [shape: bf16[32,64], index: 1, kind: input, shape index: {}]
  %s2 = inlined_call_operand.vmem [shape: f32[1,64], index: 2, kind: input, shape index: {}]
  %s3 = inlined_call_operand.vmem [shape: bf16[64,32], index: 3, kind: input, shape index: {}]
  %s4 = inlined_call_operand.vmem [shape: f32[1,32], index: 4, kind: input, shape index: {}]
  %s5 = inlined_call_operand.hbm [shape: f32[1,32], index: 5, kind: input, shape index: {}]
  %s6 = inlined_call_operand.hbm [shape: f32[1,32], index: 6, kind: input, shape index: {}]
  %s7 = inlined_call_operand.vmem [shape: f32[16,32], index: 7, kind: output, shape index: {}]
  %s8 = sld [smem:[#allocation0]]
  $region54: #{skip_decode_transformer.11} parent=0
    _
  %s10 = ssub.s32 1, %s8
  %s11 = scalar_select 0, %s10, %s8
  $region1: #{skip_decode_transformer.11} parent=0
    #allocation3 [shape = 'u8[512]{0}', space=vmem, size = 0x400, scoped, tag = 'input window, operand 5, single buffered']
    #allocation4 [shape = 's32[1]{0}', space=sflag, size = 0x4, scoped, tag = 'scoped memory for skip_decode_transformer.11']
    #allocation5 [shape = 'u8[512]{0}', space=vmem, size = 0x400, scoped, tag = 'input window, operand 6, single buffered']
    #allocation6 [shape = 's32[1]{0}', space=sflag, size = 0x4, scoped, tag = 'scoped memory for skip_decode_transformer.11']
    %12 = vsyncpa [#allocation4], 0
    %13 = vsyncpa [#allocation6], 0
    // Predicated region
    $region2: #{skip_decode_transformer.11} parent=1 // pred_check
      _
    $region3: #{skip_decode_transformer.11} parent=1 // pred_check_branch
      %15 = sbr.rel (0) target = $region5
    $region4: #{skip_decode_transformer.11} parent=1 // pred_region
      _
    $region5: #{skip_decode_transformer.11} parent=1 // pred_fallthru
      _
    // Predicated region
    $region6: #{skip_decode_transformer.11} parent=1 // pred_check
      _
    $region7: #{skip_decode_transformer.11} parent=1 // pred_check_branch
      %17 = sbr.rel (0) target = $region9
    $region8: #{skip_decode_transformer.11} parent=1 // pred_region
      _
    $region9: #{skip_decode_transformer.11} parent=1 // pred_fallthru
      _
    // Predicated region
    $region10: #{skip_decode_transformer.11} parent=1 // pred_check
      _
    $region11: #{skip_decode_transformer.11} parent=1 // pred_check_branch
      %19 = sbr.rel (0) target = $region13
    $region12: #{skip_decode_transformer.11} parent=1 // pred_region
      _
    $region13: #{skip_decode_transformer.11} parent=1 // pred_fallthru
      _
    // Predicated region
    $region14: #{skip_decode_transformer.11} parent=1 // pred_check
      _
    $region15: #{skip_decode_transformer.11} parent=1 // pred_check_branch
      %21 = sbr.rel (0) target = $region17
    $region16: #{skip_decode_transformer.11} parent=1 // pred_region
      _
    $region17: #{skip_decode_transformer.11} parent=1 // pred_fallthru
      _
    // Predicated region
    $region18: #{skip_decode_transformer.11} parent=1 // pred_check
      _
    $region19: #{skip_decode_transformer.11} parent=1 // pred_check_branch
      %23 = sbr.rel (0) target = $region21
    $region20: #{skip_decode_transformer.11} parent=1 // pred_region
      _
    $region21: #{skip_decode_transformer.11} parent=1 // pred_fallthru
      _
    // Predicated region
    $region22: #{skip_decode_transformer.11} parent=1 // pred_check
      _
    $region23: #{skip_decode_transformer.11} parent=1 // pred_check_branch
      %25 = sbr.rel (0) target = $region25
    $region24: #{skip_decode_transformer.11} parent=1 // pred_region
      %27 = vsyncadd [#allocation4], 0
      %s29 = sshll.u32 %s5, 4
      %s30 = int_to_ptr.hbm [resolvable:$true] %s29
      %s31 = sshll.u32 [#allocation3], 4
      %s32 = int_to_ptr.vmem [resolvable:$true] %s31
      %34 = dma.hbm_to_vmem [thread:$0]  %s30, 16, %s32, [#allocation4]
    $region25: #{skip_decode_transformer.11} parent=1 // pred_fallthru
      _
    // Predicated region
    $region26: #{skip_decode_transformer.11} parent=1 // pred_check
      _
    $region27: #{skip_decode_transformer.11} parent=1 // pred_check_branch
      %36 = sbr.rel (0) target = $region29
    $region28: #{skip_decode_transformer.11} parent=1 // pred_region
      %38 = vsyncadd [#allocation6], 0
      %s40 = sshll.u32 %s6, 4
      %s41 = int_to_ptr.hbm [resolvable:$true] %s40
      %s42 = sshll.u32 [#allocation5], 4
      %s43 = int_to_ptr.vmem [resolvable:$true] %s42
      %45 = dma.hbm_to_vmem [thread:$0]  %s41, 16, %s43, [#allocation6]
    $region29: #{skip_decode_transformer.11} parent=1 // pred_fallthru
      _
    // Predicated region
    $region30: #{skip_decode_transformer.11} parent=1 // pred_check
      _
    $region31: #{skip_decode_transformer.11} parent=1 // pred_check_branch
      %47 = sbr.rel (0) target = $region33
    $region32: #{skip_decode_transformer.11} parent=1 // pred_region
      %49 = dma.done [#allocation4], 16
    $region33: #{skip_decode_transformer.11} parent=1 // pred_fallthru
      _
    // Predicated region
    $region34: #{skip_decode_transformer.11} parent=1 // pred_check
      _
    $region35: #{skip_decode_transformer.11} parent=1 // pred_check_branch
      %51 = sbr.rel (0) target = $region37
    $region36: #{skip_decode_transformer.11} parent=1 // pred_region
      %53 = dma.done [#allocation6], 16
    $region37: #{skip_decode_transformer.11} parent=1 // pred_fallthru
      _
    %p55 = scmp.eq.s32.totalorder 0, 0
    // Predicated region
    $region38: #{skip_decode_transformer.11} parent=1 // pred_check
      %p56 = pneg %p55
    $region39: #{skip_decode_transformer.11} parent=1 // pred_check_branch
      %58 = sbr.rel (%p56) target = $region41
    $region40: #{skip_decode_transformer.11} parent=1 // pred_region
      %vm59 = vcmask 261120
      %60 = vst.msk [vmem:[#allocation2] sm:$0xff] %vm59, 0.0
      %61 = vst.msk [vmem:[#allocation2 + $0x8] sm:$0xff] %vm59, 0.0
    $region41: #{skip_decode_transformer.11} parent=1 // pred_fallthru
      _
    %v62 = vld [vmem:[%s0] sm:$0xff]
    %v63 = vld [vmem:[%s0 + $0x8] sm:$0xff]
    %v64 = vpack.c.bf16 %v63, %v62
    %v65 = vld [vmem:[%s1] sm:$0xf]
    %v66 = vld [vmem:[%s1 + $0x4] sm:$0xf]
    %v67 = vld [vmem:[%s1 + $0x8] sm:$0xf]
    %v68 = vld [vmem:[%s1 + $0xc] sm:$0xf]
    %v69 = vld [vmem:[%s2] sm:$0x1]
    %v71 = vperm.slane %v69, 0
    %v77 = vunpack.c.l.b16 %v65
    %v78 = vunpack.c.l.b16 %v66
    %v79 = vunpack.c.l.b16 %v67
    %v80 = vunpack.c.l.b16 %v68
    %v81 = vpack.c.b16 %v78, %v77
    %v82 = vpack.c.b16 %v80, %v79
    %vm85 = vcmask 261120
    %v87 = vsel %vm85, %v64, 0
    %89 = vmatpush.bf16.msra.mxu0 0
    %90 = vmatpush.bf16.msra.mxu0 0
    %91 = vmatpush.bf16.msra.mxu0 0
    %92 = vmatpush.bf16.msra.mxu0 0
    %93 = vmatpush.bf16.msra.mxu0 0
    %94 = vmatpush.bf16.msra.mxu0 0
    %95 = vmatpush.bf16.msra.mxu0 %v82
    %96 = vmatpush.bf16.msra.mxu0 %v81
    %97 = vmatmul.bf16.gmra.mxu0 %v87
    %v98 = vpop.f32.mrf.mxu0
    %v99 = vadd.f32 %v71, %v98
    %v100 = vpop.f32.mrf.mxu0
    %v101 = vadd.f32 %v71, %v100
    %102 = vdwg.mxu0
    %v103 = vmax.f32 %v99, 0.0
    %v104 = vmax.f32 %v101, 0.0
    %v105 = vld [vmem:[#allocation2] sm:$0xff]
    %v106 = vld [vmem:[#allocation2 + $0x8] sm:$0xff]
    %v107 = vpack.c.bf16 %v104, %v103
    %v108 = vld [vmem:[%s3] sm:$0xf]
    %v109 = vld [vmem:[%s3 + $0x4] sm:$0xf]
    %v110 = vld [vmem:[%s3 + $0x8] sm:$0xf]
    %v111 = vld [vmem:[%s3 + $0xc] sm:$0xf]
    %v112 = vld [vmem:[%s3 + $0x10] sm:$0xf]
    %v113 = vld [vmem:[%s3 + $0x14] sm:$0xf]
    %v114 = vld [vmem:[%s3 + $0x18] sm:$0xf]
    %v115 = vld [vmem:[%s3 + $0x1c] sm:$0xf]
    %v124 = vunpack.c.l.b16 %v108
    %v125 = vunpack.c.l.b16 %v109
    %v126 = vunpack.c.l.b16 %v110
    %v127 = vunpack.c.l.b16 %v111
    %v128 = vunpack.c.l.b16 %v112
    %v129 = vunpack.c.l.b16 %v113
    %v130 = vunpack.c.l.b16 %v114
    %v131 = vunpack.c.l.b16 %v115
    %v132 = vpack.c.b16 %v125, %v124
    %v133 = vpack.c.b16 %v127, %v126
    %v134 = vpack.c.b16 %v129, %v128
    %v135 = vpack.c.b16 %v131, %v130
    %vm140 = vcmask 523264
    %v142 = vsel %vm140, %v107, 0
    %144 = vmatpush.bf16.msra.mxu0 0
    %145 = vmatpush.bf16.msra.mxu0 0
    %146 = vmatpush.bf16.msra.mxu0 0
    %147 = vmatpush.bf16.msra.mxu0 0
    %148 = vmatpush.bf16.msra.mxu0 %v135
    %149 = vmatpush.bf16.msra.mxu0 %v134
    %150 = vmatpush.bf16.msra.mxu0 %v133
    %151 = vmatpush.bf16.msra.mxu0 %v132
    %152 = vmatmul.bf16.gmra.mxu0 %v142
    %v153 = vpop.f32.mrf.mxu0
    %v154 = vadd.f32 0.0, %v153
    %v155 = vpop.f32.mrf.mxu0
    %v156 = vadd.f32 0.0, %v155
    %157 = vdwg.mxu0
    %v158 = vadd.f32 %v105, %v154
    %v159 = vadd.f32 %v106, %v156
    %160 = vst.msk [vmem:[#allocation2] sm:$0xff] %vm85, %v158
    %161 = vst.msk [vmem:[#allocation2 + $0x8] sm:$0xff] %vm85, %v159
    // Predicated region
    $region42: #{skip_decode_transformer.11} parent=1 // pred_check
      %p162 = pneg %p55
    $region43: #{skip_decode_transformer.11} parent=1 // pred_check_branch
      %164 = sbr.rel (%p162) target = $region45
    $region44: #{skip_decode_transformer.11} parent=1 // pred_region
      %v165 = vld [vmem:[#allocation2] sm:$0xff]
      %v166 = vld [vmem:[#allocation2 + $0x8] sm:$0xff]
      %v167 = vld [vmem:[%s4] sm:$0x1]
      %v169 = vperm.slane %v167, 0
      %v171 = vadd.f32 %v165, %v169
      %v172 = vadd.f32 %v166, %v169
      %v173 = vld [vmem:[%s0] sm:$0xff]
      %v174 = vld [vmem:[%s0 + $0x8] sm:$0xff]
      %v175 = vadd.f32 %v171, %v173
      %v176 = vadd.f32 %v172, %v174
      %v177 = vld [vmem:[#allocation3] sm:$0x1]
      %v178 = vld [vmem:[#allocation5] sm:$0x1]
      %v179 = vsel %vm85, %v175, 0.0
      %180 = vadd.xlane.f32.xlu0 %v179
      %v181 = vpop.xlane.xlu0 %180
      %v182 = vsel %vm85, %v176, 0.0
      %183 = vadd.xlane.f32.xlu0 %v182
      %v184 = vpop.xlane.xlu0 %183
      %v185 = vrcp.pop 32.0
      %v186 = vmul.f32 32.0, %v185
      %v187 = vsub.f32 1.0, %v186
      %v188 = vmul.f32 %v185, %v187
      %v189 = vadd.f32 %v185, %v188
      %vm190 = vweird.f32 %v185
      %v191 = vsel %vm190, %v185, %v189
      %v192 = vmul.f32 %v181, %v191
      %v193 = vmul.f32 %v184, %v191
      %v194 = vsub.f32 %v175, %v192
      %v195 = vsub.f32 %v176, %v193
      %v196 = vmul.f32 %v194, %v194
      %v197 = vmul.f32 %v195, %v195
      %v198 = vsel %vm85, %v196, 0.0
      %199 = vadd.xlane.f32.xlu0 %v198
      %v200 = vpop.xlane.xlu0 %199
      %v201 = vsel %vm85, %v197, 0.0
      %202 = vadd.xlane.f32.xlu0 %v201
      %v203 = vpop.xlane.xlu0 %202
      %v204 = vmul.f32 %v200, %v191
      %v205 = vmul.f32 %v203, %v191
      %v206 = vadd.f32 %v204, 1e-05
      %v207 = vadd.f32 %v205, 1e-05
      %v208 = vrsqrt.pop %v206
      %v209 = vmul.f32 %v208, %v206
      %v210 = vmul.f32 %v209, %v208
      %v211 = vmul.f32 0.5, %v210
      %v212 = vsub.f32 1.5, %v211
      %v213 = vmul.f32 %v208, %v212
      %vm214 = vweird.f32 %v206
      %vm215 = vweird.f32 %v208
      %vm216 = vmor %vm214, %vm215
      %v217 = vsel %vm216, %v208, %v213
      %v218 = vrsqrt.pop %v207
      %v219 = vmul.f32 %v218, %v207
      %v220 = vmul.f32 %v219, %v218
      %v221 = vmul.f32 0.5, %v220
      %v222 = vsub.f32 1.5, %v221
      %v223 = vmul.f32 %v218, %v222
      %vm224 = vweird.f32 %v207
      %vm225 = vweird.f32 %v218
      %vm226 = vmor %vm224, %vm225
      %v227 = vsel %vm226, %v218, %v223
      %v228 = vmul.f32 %v194, %v217
      %v229 = vmul.f32 %v195, %v227
      %v231 = vperm.slane %v177, 0
      %v233 = vmul.f32 %v228, %v231
      %v234 = vmul.f32 %v229, %v231
      %v236 = vperm.slane %v178, 0
      %v238 = vadd.f32 %v233, %v236
      %v239 = vadd.f32 %v234, %v236
      %240 = vst.msk [vmem:[%s7] sm:$0xff] %vm85, %v238
      %241 = vst.msk [vmem:[%s7 + $0x8] sm:$0xff] %vm85, %v239
    $region45: #{skip_decode_transformer.11} parent=1 // pred_fallthru
      _
    // Predicated region
    $region46: #{skip_decode_transformer.11} parent=1 // pred_check
      _
    $region47: #{skip_decode_transformer.11} parent=1 // pred_check_branch
      %243 = sbr.rel (0) target = $region49
    $region48: #{skip_decode_transformer.11} parent=1 // pred_region
      _
    $region49: #{skip_decode_transformer.11} parent=1 // pred_fallthru
      _
    // Predicated region
    $region50: #{skip_decode_transformer.11} parent=1 // pred_check
      _
    $region51: #{skip_decode_transformer.11} parent=1 // pred_check_branch
      %245 = sbr.rel (0) target = $region53
    $region52: #{skip_decode_transformer.11} parent=1 // pred_region
      _
    $region53: #{skip_decode_transformer.11} parent=1 // pred_fallthru
      _
    %246 = vsyncpa [#allocation4], 1
    %247 = vsyncpa [#allocation6], 1

// kernel: skip_decode_transformer.9
$region0: #{skip_decode_transformer.9}
  #allocation0 [shape = 'u32[]', space=smem, size = 0x4, offset = 0x4, fixed_abs, tag = 'smem constant byte address 0x4 - core index']
  #allocation1 [shape = 'u32[72,128]{1,0:T(1,128)}', space=vmem, size = 0x9000, scoped, tag = 'internal scratch']
  %s0 = inlined_call_operand.vmem [shape: f32[2,8,32], index: 0, kind: input, shape index: {}]
  %s1 = inlined_call_operand.vmem [shape: f32[2,1,8], index: 1, kind: input, shape index: {}]
  %s2 = inlined_call_operand.hbm [shape: bf16[32,96], index: 2, kind: input, shape index: {}]
  %s3 = inlined_call_operand.hbm [shape: f32[1,96], index: 3, kind: input, shape index: {}]
  %s4 = inlined_call_operand.hbm [shape: bf16[32,32], index: 4, kind: input, shape index: {}]
  %s5 = inlined_call_operand.hbm [shape: f32[1,32], index: 5, kind: input, shape index: {}]
  %s6 = inlined_call_operand.hbm [shape: f32[1,32], index: 6, kind: input, shape index: {}]
  %s7 = inlined_call_operand.hbm [shape: f32[1,32], index: 7, kind: input, shape index: {}]
  %s8 = inlined_call_operand.vmem [shape: f32[2,8,32], index: 8, kind: output, shape index: {}]
  %s9 = sld [smem:[#allocation0]]
  $region89: #{skip_decode_transformer.9} parent=0
    _
  %s11 = ssub.s32 1, %s9
  %s12 = scalar_select 0, %s11, %s9
  $region1: #{skip_decode_transformer.9} parent=0
    #allocation2 [shape = 'u8[8192]{0}', space=vmem, size = 0x2000, scoped, tag = 'input window, operand 2, single buffered']
    #allocation3 [shape = 's32[2]{0}', space=sflag, size = 0x8, scoped, tag = 'scoped memory for skip_decode_transformer.9']
    #allocation4 [shape = 'u8[512]{0}', space=vmem, size = 0x400, scoped, tag = 'input window, operand 3, single buffered']
    #allocation5 [shape = 's32[1]{0}', space=sflag, size = 0x4, scoped, tag = 'scoped memory for skip_decode_transformer.9']
    #allocation6 [shape = 'u8[8192]{0}', space=vmem, size = 0x2000, scoped, tag = 'input window, operand 4, single buffered']
    #allocation7 [shape = 'u8[512]{0}', space=vmem, size = 0x400, scoped, tag = 'input window, operand 5, single buffered']
    #allocation8 [shape = 's32[1]{0}', space=sflag, size = 0x4, scoped, tag = 'scoped memory for skip_decode_transformer.9']
    #allocation9 [shape = 'u8[512]{0}', space=vmem, size = 0x400, scoped, tag = 'input window, operand 6, single buffered']
    #allocation10 [shape = 'u8[512]{0}', space=vmem, size = 0x400, scoped, tag = 'input window, operand 7, single buffered']
    #allocation11 [shape = 's32[1]{0}', space=sflag, size = 0x4, scoped, tag = 'scoped memory for skip_decode_transformer.9']
    %13 = vsyncpa [#allocation3], 0
    %14 = vsyncpa [#allocation5], 0
    %15 = vsyncpa [#allocation8], 0
    %16 = vsyncpa [#allocation11], 0
    loop: start=0, step=1, limit=4
    $region2: #{skip_decode_transformer.9} parent=1 // loop_pre_header
      _
    $region3: #{skip_decode_transformer.9} parent=1 // loop_header
      %s18 = sphi 0, %s22
      %p19 = scmp.ge.s32.totalorder %s18, 4
      %s28 = sphi 0, %s30
      %s31 = sphi 0, %s28
      %s32 = sphi 0, %s31
      %s48 = sphi 0, %s32
      %s54 = sphi 0, %s56
      %s57 = sphi 0, %s54
      %s58 = sphi 0, %s57
      %s74 = sphi 0, %s58
      %s78 = sphi 0, %s78
      %s80 = sphi 0, %s78
      %s81 = sphi 0, %s80
      %s95 = sphi 0, %s81
      %s99 = sphi 0, %s99
      %s101 = sphi 0, %s99
      %s102 = sphi 0, %s101
      %s116 = sphi 0, %s102
      %s120 = sphi 0, %s120
      %s122 = sphi 0, %s120
      %s123 = sphi 0, %s122
      %s137 = sphi 0, %s123
      %s141 = sphi 0, %s141
      %s143 = sphi 0, %s141
      %s144 = sphi 0, %s143
      %s158 = sphi 0, %s144
      %s162 = sphi 0, %s162
      %s164 = sphi 0, %s162
      %s165 = sphi 0, %s164
      %s179 = sphi 0, %s165
      %s183 = sphi 0, %s183
      %s185 = sphi 0, %s183
      %s186 = sphi 0, %s185
      %s200 = sphi 0, %s186
      %s206 = sphi 0, %s208
      %s209 = sphi 0, %s206
      %s210 = sphi 0, %s209
      %s226 = sphi 0, %s210
    $region4: #{skip_decode_transformer.9} parent=1 // loop_header_branch
      %21 = sbr.rel (%p19) target = $region8
    $region5: #{skip_decode_transformer.9} parent=1 // loop_body
      %s23 = ssub.s32 %s18, 1
      %s24 = ssub.s32 %s18, 2
      %s25 = sadd.s32 %s18, 1
      %s26 = ssub.s32 %s18, %s25
      %p27 = scmp.eq.s32.totalorder %s26, 0
      %s29 = sadd.s32 %s28, 1
      %s30 = scalar_select %p27, %s28, %s29
      %p33 = pneg %p27
      %p34 = scmp.eq.s32.totalorder %s18, 1
      %p35 = por %p33, %p34
      %p36 = scmp.ne.s32.totalorder %s28, %s31
      %p37 = scmp.eq.s32.totalorder %s18, 0
      %p38 = por %p36, %p37
      %p39 = scmp.ne.s32.totalorder %s28, %s31
      %p40 = scmp.eq.s32.totalorder %s23, 1
      %p41 = por %p39, %p40
      %p42 = scmp.ne.s32.totalorder %s31, %s32
      %p43 = scmp.eq.s32.totalorder %s23, 0
      %p44 = por %p42, %p43
      %p45 = scmp.ne.s32.totalorder %s31, %s32
      %p46 = scmp.eq.s32.totalorder %s24, 1
      %p47 = por %p45, %p46
      %p49 = scmp.ne.s32.totalorder %s32, %s48
      %p50 = scmp.eq.s32.totalorder %s24, 0
      %p51 = por %p49, %p50
      %s52 = ssub.s32 %s18, %s25
      %p53 = scmp.eq.s32.totalorder %s52, 0
      %s55 = sadd.s32 %s54, 1
      %s56 = scalar_select %p53, %s54, %s55
      %p59 = pneg %p53
      %p60 = scmp.eq.s32.totalorder %s18, 1
      %p61 = por %p59, %p60
      %p62 = scmp.ne.s32.totalorder %s54, %s57
      %p63 = scmp.eq.s32.totalorder %s18, 0
      %p64 = por %p62, %p63
      %p65 = scmp.ne.s32.totalorder %s54, %s57
      %p66 = scmp.eq.s32.totalorder %s23, 1
      %p67 = por %p65, %p66
      %p68 = scmp.ne.s32.totalorder %s57, %s58
      %p69 = scmp.eq.s32.totalorder %s23, 0
      %p70 = por %p68, %p69
      %p71 = scmp.ne.s32.totalorder %s57, %s58
      %p72 = scmp.eq.s32.totalorder %s24, 1
      %p73 = por %p71, %p72
      %p75 = scmp.ne.s32.totalorder %s58, %s74
      %p76 = scmp.eq.s32.totalorder %s24, 0
      %p77 = por %p75, %p76
      %s79 = sadd.s32 %s78, 1
      %p82 = scmp.eq.s32.totalorder %s18, 1
      %p83 = scmp.ne.s32.totalorder %s78, %s80
      %p84 = scmp.eq.s32.totalorder %s18, 0
      %p85 = por %p83, %p84
      %p86 = scmp.ne.s32.totalorder %s78, %s80
      %p87 = scmp.eq.s32.totalorder %s23, 1
      %p88 = por %p86, %p87
      %p89 = scmp.ne.s32.totalorder %s80, %s81
      %p90 = scmp.eq.s32.totalorder %s23, 0
      %p91 = por %p89, %p90
      %p92 = scmp.ne.s32.totalorder %s80, %s81
      %p93 = scmp.eq.s32.totalorder %s24, 1
      %p94 = por %p92, %p93
      %p96 = scmp.ne.s32.totalorder %s81, %s95
      %p97 = scmp.eq.s32.totalorder %s24, 0
      %p98 = por %p96, %p97
      %s100 = sadd.s32 %s99, 1
      %p103 = scmp.eq.s32.totalorder %s18, 1
      %p104 = scmp.ne.s32.totalorder %s99, %s101
      %p105 = scmp.eq.s32.totalorder %s18, 0
      %p106 = por %p104, %p105
      %p107 = scmp.ne.s32.totalorder %s99, %s101
      %p108 = scmp.eq.s32.totalorder %s23, 1
      %p109 = por %p107, %p108
      %p110 = scmp.ne.s32.totalorder %s101, %s102
      %p111 = scmp.eq.s32.totalorder %s23, 0
      %p112 = por %p110, %p111
      %p113 = scmp.ne.s32.totalorder %s101, %s102
      %p114 = scmp.eq.s32.totalorder %s24, 1
      %p115 = por %p113, %p114
      %p117 = scmp.ne.s32.totalorder %s102, %s116
      %p118 = scmp.eq.s32.totalorder %s24, 0
      %p119 = por %p117, %p118
      %s121 = sadd.s32 %s120, 1
      %p124 = scmp.eq.s32.totalorder %s18, 1
      %p125 = scmp.ne.s32.totalorder %s120, %s122
      %p126 = scmp.eq.s32.totalorder %s18, 0
      %p127 = por %p125, %p126
      %p128 = scmp.ne.s32.totalorder %s120, %s122
      %p129 = scmp.eq.s32.totalorder %s23, 1
      %p130 = por %p128, %p129
      %p131 = scmp.ne.s32.totalorder %s122, %s123
      %p132 = scmp.eq.s32.totalorder %s23, 0
      %p133 = por %p131, %p132
      %p134 = scmp.ne.s32.totalorder %s122, %s123
      %p135 = scmp.eq.s32.totalorder %s24, 1
      %p136 = por %p134, %p135
      %p138 = scmp.ne.s32.totalorder %s123, %s137
      %p139 = scmp.eq.s32.totalorder %s24, 0
      %p140 = por %p138, %p139
      %s142 = sadd.s32 %s141, 1
      %p145 = scmp.eq.s32.totalorder %s18, 1
      %p146 = scmp.ne.s32.totalorder %s141, %s143
      %p147 = scmp.eq.s32.totalorder %s18, 0
      %p148 = por %p146, %p147
      %p149 = scmp.ne.s32.totalorder %s141, %s143
      %p150 = scmp.eq.s32.totalorder %s23, 1
      %p151 = por %p149, %p150
      %p152 = scmp.ne.s32.totalorder %s143, %s144
      %p153 = scmp.eq.s32.totalorder %s23, 0
      %p154 = por %p152, %p153
      %p155 = scmp.ne.s32.totalorder %s143, %s144
      %p156 = scmp.eq.s32.totalorder %s24, 1
      %p157 = por %p155, %p156
      %p159 = scmp.ne.s32.totalorder %s144, %s158
      %p160 = scmp.eq.s32.totalorder %s24, 0
      %p161 = por %p159, %p160
      %s163 = sadd.s32 %s162, 1
      %p166 = scmp.eq.s32.totalorder %s18, 1
      %p167 = scmp.ne.s32.totalorder %s162, %s164
      %p168 = scmp.eq.s32.totalorder %s18, 0
      %p169 = por %p167, %p168
      %p170 = scmp.ne.s32.totalorder %s162, %s164
      %p171 = scmp.eq.s32.totalorder %s23, 1
      %p172 = por %p170, %p171
      %p173 = scmp.ne.s32.totalorder %s164, %s165
      %p174 = scmp.eq.s32.totalorder %s23, 0
      %p175 = por %p173, %p174
      %p176 = scmp.ne.s32.totalorder %s164, %s165
      %p177 = scmp.eq.s32.totalorder %s24, 1
      %p178 = por %p176, %p177
      %p180 = scmp.ne.s32.totalorder %s165, %s179
      %p181 = scmp.eq.s32.totalorder %s24, 0
      %p182 = por %p180, %p181
      %s184 = sadd.s32 %s183, 1
      %p187 = scmp.eq.s32.totalorder %s18, 1
      %p188 = scmp.ne.s32.totalorder %s183, %s185
      %p189 = scmp.eq.s32.totalorder %s18, 0
      %p190 = por %p188, %p189
      %p191 = scmp.ne.s32.totalorder %s183, %s185
      %p192 = scmp.eq.s32.totalorder %s23, 1
      %p193 = por %p191, %p192
      %p194 = scmp.ne.s32.totalorder %s185, %s186
      %p195 = scmp.eq.s32.totalorder %s23, 0
      %p196 = por %p194, %p195
      %p197 = scmp.ne.s32.totalorder %s185, %s186
      %p198 = scmp.eq.s32.totalorder %s24, 1
      %p199 = por %p197, %p198
      %p201 = scmp.ne.s32.totalorder %s186, %s200
      %p202 = scmp.eq.s32.totalorder %s24, 0
      %p203 = por %p201, %p202
      %s204 = ssub.s32 %s18, %s25
      %p205 = scmp.eq.s32.totalorder %s204, 0
      %s207 = sadd.s32 %s206, 1
      %s208 = scalar_select %p205, %s206, %s207
      %p211 = pneg %p205
      %p212 = scmp.eq.s32.totalorder %s18, 1
      %p213 = por %p211, %p212
      %p214 = scmp.ne.s32.totalorder %s206, %s209
      %p215 = scmp.eq.s32.totalorder %s18, 0
      %p216 = por %p214, %p215
      %p217 = scmp.ne.s32.totalorder %s206, %s209
      %p218 = scmp.eq.s32.totalorder %s23, 1
      %p219 = por %p217, %p218
      %p220 = scmp.ne.s32.totalorder %s209, %s210
      %p221 = scmp.eq.s32.totalorder %s23, 0
      %p222 = por %p220, %p221
      %p223 = scmp.ne.s32.totalorder %s209, %s210
      %p224 = scmp.eq.s32.totalorder %s24, 1
      %p225 = por %p223, %p224
      %p227 = scmp.ne.s32.totalorder %s210, %s226
      %p228 = scmp.eq.s32.totalorder %s24, 0
      %p229 = por %p227, %p228
      %p230 = scmp.le.s32.totalorder 1, %s18
      %p231 = scmp.lt.s32.totalorder %s18, 3
      %p232 = pnand %p230, %p231
      %p233 = pneg %p232
      // Predicated region
      $region9: #{skip_decode_transformer.9} parent=5 // pred_check
        _
      $region10: #{skip_decode_transformer.9} parent=5 // pred_check_branch
        %235 = sbr.rel (%p232) target = $region12
      $region11: #{skip_decode_transformer.9} parent=5 // pred_region
        %s236 = ssub.s32 %s18, 1
        // Predicated region
        $region13: #{skip_decode_transformer.9} parent=11 // pred_check
          %p237 = pneg %p91
        $region14: #{skip_decode_transformer.9} parent=11 // pred_check_branch
          %239 = sbr.rel (%p237) target = $region16
        $region15: #{skip_decode_transformer.9} parent=11 // pred_region
          %241 = vsyncadd [#allocation3], 0
          %s242 = sshll.u32 %s2, 4
          %s243 = int_to_ptr.hbm [resolvable:$true] %s242
          %s244 = sshll.u32 [#allocation2], 4
          %s245 = int_to_ptr.vmem [resolvable:$true] %s244
          %250 = dma.hbm_to_vmem [thread:$0]  %s243, 256, %s245, [#allocation3], 64, 64, 4
        $region16: #{skip_decode_transformer.9} parent=11 // pred_fallthru
          _
        // Predicated region
        $region17: #{skip_decode_transformer.9} parent=11 // pred_check
          %p251 = pneg %p112
        $region18: #{skip_decode_transformer.9} parent=11 // pred_check_branch
          %253 = sbr.rel (%p251) target = $region20
        $region19: #{skip_decode_transformer.9} parent=11 // pred_region
          %255 = vsyncadd [#allocation5], 0
          %s257 = sshll.u32 %s3, 4
          %s258 = int_to_ptr.hbm [resolvable:$true] %s257
          %s259 = sshll.u32 [#allocation4], 4
          %s260 = int_to_ptr.vmem [resolvable:$true] %s259
          %262 = dma.hbm_to_vmem [thread:$0]  %s258, 16, %s260, [#allocation5]
        $region20: #{skip_decode_transformer.9} parent=11 // pred_fallthru
          _
        // Predicated region
        $region21: #{skip_decode_transformer.9} parent=11 // pred_check
          %p263 = pneg %p133
        $region22: #{skip_decode_transformer.9} parent=11 // pred_check_branch
          %265 = sbr.rel (%p263) target = $region24
        $region23: #{skip_decode_transformer.9} parent=11 // pred_region
          %267 = vsyncadd [#allocation5], 0
          %s268 = sshll.u32 %s4, 4
          %s269 = int_to_ptr.hbm [resolvable:$true] %s268
          %s270 = sshll.u32 [#allocation6], 4
          %s271 = int_to_ptr.vmem [resolvable:$true] %s270
          %276 = dma.hbm_to_vmem [thread:$0]  %s269, 256, %s271, [#allocation5], 64, 64, 4
        $region24: #{skip_decode_transformer.9} parent=11 // pred_fallthru
          _
        // Predicated region
        $region25: #{skip_decode_transformer.9} parent=11 // pred_check
          %p277 = pneg %p154
        $region26: #{skip_decode_transformer.9} parent=11 // pred_check_branch
          %279 = sbr.rel (%p277) target = $region28
        $region27: #{skip_decode_transformer.9} parent=11 // pred_region
          %281 = vsyncadd [#allocation8], 0
          %s283 = sshll.u32 %s5, 4
          %s284 = int_to_ptr.hbm [resolvable:$true] %s283
          %s285 = sshll.u32 [#allocation7], 4
          %s286 = int_to_ptr.vmem [resolvable:$true] %s285
          %288 = dma.hbm_to_vmem [thread:$0]  %s284, 16, %s286, [#allocation8]
        $region28: #{skip_decode_transformer.9} parent=11 // pred_fallthru
          _
        // Predicated region
        $region29: #{skip_decode_transformer.9} parent=11 // pred_check
          %p289 = pneg %p175
        $region30: #{skip_decode_transformer.9} parent=11 // pred_check_branch
          %291 = sbr.rel (%p289) target = $region32
        $region31: #{skip_decode_transformer.9} parent=11 // pred_region
          %293 = vsyncadd [#allocation8], 0
          %s295 = sshll.u32 %s6, 4
          %s296 = int_to_ptr.hbm [resolvable:$true] %s295
          %s297 = sshll.u32 [#allocation9], 4
          %s298 = int_to_ptr.vmem [resolvable:$true] %s297
          %300 = dma.hbm_to_vmem [thread:$0]  %s296, 16, %s298, [#allocation8]
        $region32: #{skip_decode_transformer.9} parent=11 // pred_fallthru
          _
        // Predicated region
        $region33: #{skip_decode_transformer.9} parent=11 // pred_check
          %p301 = pneg %p196
        $region34: #{skip_decode_transformer.9} parent=11 // pred_check_branch
          %303 = sbr.rel (%p301) target = $region36
        $region35: #{skip_decode_transformer.9} parent=11 // pred_region
          %305 = vsyncadd [#allocation11], 0
          %s307 = sshll.u32 %s7, 4
          %s308 = int_to_ptr.hbm [resolvable:$true] %s307
          %s309 = sshll.u32 [#allocation10], 4
          %s310 = int_to_ptr.vmem [resolvable:$true] %s309
          %312 = dma.hbm_to_vmem [thread:$0]  %s308, 16, %s310, [#allocation11]
        $region36: #{skip_decode_transformer.9} parent=11 // pred_fallthru
          _
      $region12: #{skip_decode_transformer.9} parent=5 // pred_fallthru
        _
      %p313 = scmp.lt.s32.totalorder %s18, 2
      // Predicated region
      $region37: #{skip_decode_transformer.9} parent=5 // pred_check
        %p314 = pneg %p313
      $region38: #{skip_decode_transformer.9} parent=5 // pred_check_branch
        %316 = sbr.rel (%p314) target = $region40
      $region39: #{skip_decode_transformer.9} parent=5 // pred_region
        // Predicated region
        $region41: #{skip_decode_transformer.9} parent=39 // pred_check
          %p317 = pneg %p38
        $region42: #{skip_decode_transformer.9} parent=39 // pred_check_branch
          %319 = sbr.rel (%p317) target = $region44
        $region43: #{skip_decode_transformer.9} parent=39 // pred_region
          %p320 = scmp.lt.s32.totalorder %s18, 1
          %s321 = scalar_select %p320, %s18, 1
          %s322 = smul.addr %s321, 8
          %s323 = scalar_lea.vmem %s0, %s322
        $region44: #{skip_decode_transformer.9} parent=39 // pred_fallthru
          _
        // Predicated region
        $region45: #{skip_decode_transformer.9} parent=39 // pred_check
          %p324 = pneg %p64
        $region46: #{skip_decode_transformer.9} parent=39 // pred_check_branch
          %326 = sbr.rel (%p324) target = $region48
        $region47: #{skip_decode_transformer.9} parent=39 // pred_region
          %p327 = scmp.lt.s32.totalorder %s18, 1
          %s328 = scalar_select %p327, %s18, 1
          %s329 = scalar_lea.vmem %s1, %s328
        $region48: #{skip_decode_transformer.9} parent=39 // pred_fallthru
          _
      $region40: #{skip_decode_transformer.9} parent=5 // pred_fallthru
        _
      %p330 = scmp.le.s32.totalorder 1, %s18
      %p331 = scmp.lt.s32.totalorder %s18, 3
      %p332 = pnand %p330, %p331
      %p333 = pneg %p332
      // Predicated region
      $region49: #{skip_decode_transformer.9} parent=5 // pred_check
        _
      $region50: #{skip_decode_transformer.9} parent=5 // pred_check_branch
        %335 = sbr.rel (%p332) target = $region52
      $region51: #{skip_decode_transformer.9} parent=5 // pred_region
        %s336 = ssub.s32 %s18, 1
        // Predicated region
        $region53: #{skip_decode_transformer.9} parent=51 // pred_check
          %p337 = pneg %p91
        $region54: #{skip_decode_transformer.9} parent=51 // pred_check_branch
          %339 = sbr.rel (%p337) target = $region56
        $region55: #{skip_decode_transformer.9} parent=51 // pred_region
          %341 = dma.done [#allocation3], 256
        $region56: #{skip_decode_transformer.9} parent=51 // pred_fallthru
          _
        // Predicated region
        $region57: #{skip_decode_transformer.9} parent=51 // pred_check
          %p342 = pneg %p112
        $region58: #{skip_decode_transformer.9} parent=51 // pred_check_branch
          %344 = sbr.rel (%p342) target = $region60
        $region59: #{skip_decode_transformer.9} parent=51 // pred_region
          %346 = dma.done [#allocation5], 16
        $region60: #{skip_decode_transformer.9} parent=51 // pred_fallthru
          _
        // Predicated region
        $region61: #{skip_decode_transformer.9} parent=51 // pred_check
          %p347 = pneg %p133
        $region62: #{skip_decode_transformer.9} parent=51 // pred_check_branch
          %349 = sbr.rel (%p347) target = $region64
        $region63: #{skip_decode_transformer.9} parent=51 // pred_region
          %351 = dma.done [#allocation5], 256
        $region64: #{skip_decode_transformer.9} parent=51 // pred_fallthru
          _
        // Predicated region
        $region65: #{skip_decode_transformer.9} parent=51 // pred_check
          %p352 = pneg %p154
        $region66: #{skip_decode_transformer.9} parent=51 // pred_check_branch
          %354 = sbr.rel (%p352) target = $region68
        $region67: #{skip_decode_transformer.9} parent=51 // pred_region
          %356 = dma.done [#allocation8], 16
        $region68: #{skip_decode_transformer.9} parent=51 // pred_fallthru
          _
        // Predicated region
        $region69: #{skip_decode_transformer.9} parent=51 // pred_check
          %p357 = pneg %p175
        $region70: #{skip_decode_transformer.9} parent=51 // pred_check_branch
          %359 = sbr.rel (%p357) target = $region72
        $region71: #{skip_decode_transformer.9} parent=51 // pred_region
          %361 = dma.done [#allocation8], 16
        $region72: #{skip_decode_transformer.9} parent=51 // pred_fallthru
          _
        // Predicated region
        $region73: #{skip_decode_transformer.9} parent=51 // pred_check
          %p362 = pneg %p196
        $region74: #{skip_decode_transformer.9} parent=51 // pred_check_branch
          %364 = sbr.rel (%p362) target = $region76
        $region75: #{skip_decode_transformer.9} parent=51 // pred_region
          %366 = dma.done [#allocation11], 16
        $region76: #{skip_decode_transformer.9} parent=51 // pred_fallthru
          _
        %p367 = scmp.lt.s32.totalorder %s23, 1
        %s368 = scalar_select %p367, %s23, 1
        %s369 = smul.addr %s368, 8
        %s370 = scalar_lea.vmem %s0, %s369
        %p371 = pneg %p44
        %p372 = pneg %p41
        %p373 = scmp.lt.s32.totalorder %s23, 1
        %s374 = scalar_select %p373, %s23, 1
        %s375 = scalar_lea.vmem %s1, %s374
        %p376 = pneg %p70
        %p377 = pneg %p67
        %p378 = pneg %p91
        %p379 = pneg %p88
        %p380 = pneg %p112
        %p381 = pneg %p109
        %p382 = pneg %p133
        %p383 = pneg %p130
        %p384 = pneg %p154
        %p385 = pneg %p151
        %p386 = pneg %p175
        %p387 = pneg %p172
        %p388 = pneg %p196
        %p389 = pneg %p193
        %p390 = pneg %p222
        %p391 = pneg %p219
        %p392 = scmp.lt.s32.totalorder %s23, 1
        %s393 = scalar_select %p392, %s23, 1
        %s394 = smul.addr %s393, 8
        %s395 = scalar_lea.vmem %s8, %s394
        %p396 = scmp.lt.s32.totalorder %s23, 1
        %s397 = scalar_select %p396, %s23, 1
        %s398 = smul.addr %s397, 8
        %s399 = scalar_lea.vmem %s0, %s398
        %p400 = scmp.lt.s32.totalorder %s23, 1
        %s401 = scalar_select %p400, %s23, 1
        %s402 = scalar_lea.vmem %s1, %s401
        %p403 = scmp.lt.s32.totalorder %s23, 1
        %s404 = scalar_select %p403, %s23, 1
        %s405 = smul.addr %s404, 8
        %s406 = scalar_lea.vmem %s8, %s405
        %v408 = vld [vmem:[%s399] sm:$0xff]
        %v409 = vpack.c.bf16 %v408, %v408
        %v410 = vld [vmem:[#allocation2] sm:$0xf]
        %v411 = vld [vmem:[#allocation2 + $0x4] sm:$0xf]
        %v412 = vld [vmem:[#allocation2 + $0x8] sm:$0xf]
        %v413 = vld [vmem:[#allocation2 + $0xc] sm:$0xf]
        %v414 = vld [vmem:[#allocation4] sm:$0x1]
        %v416 = vperm.slane %v414, 0
        %v422 = vunpack.c.l.b16 %v410
        %v423 = vunpack.c.l.b16 %v411
        %v424 = vunpack.c.l.b16 %v412
        %v425 = vunpack.c.l.b16 %v413
        %v426 = vpack.c.b16 %v423, %v422
        %v427 = vpack.c.b16 %v425, %v424
        %vm430 = vcmask 261120
        %v432 = vsel %vm430, %v409, 0
        %434 = vmatpush.bf16.msra.mxu0 0
        %435 = vmatpush.bf16.msra.mxu0 0
        %436 = vmatpush.bf16.msra.mxu0 0
        %437 = vmatpush.bf16.msra.mxu0 0
        %438 = vmatpush.bf16.msra.mxu0 0
        %439 = vmatpush.bf16.msra.mxu0 0
        %440 = vmatpush.bf16.msra.mxu0 %v427
        %441 = vmatpush.bf16.msra.mxu0 %v426
        %442 = vmatmul.bf16.gmra.mxu0 %v432
        %v443 = vpop.f32.mrf.mxu0
        %v444 = vadd.f32 %v416, %v443
        %v445 = vpop.f32.mrf.mxu0
        %446 = vdwg.mxu0
        %v447 = vld [vmem:[%s402] sm:$0x1]
        %v448 = vpack.c.bf16 %v444, %v444
        %v450 = vperm.slane %v447, 0
        %453 = vrot.lane.b32.xlu0 %v448, 96
        %v454 = vpop.permute.xlu0 %453
        %vm455 = vcmask 64512
        %v457 = vsel %vm455, %v448, 0
        %v460 = vsel %vm455, %v454, 0
        %462 = vmatpush.bf16.xpose.msra.mxu0 0
        %463 = vmatpush.bf16.xpose.msra.mxu0 0
        %464 = vmatpush.bf16.xpose.msra.mxu0 0
        %465 = vmatpush.bf16.xpose.msra.mxu0 0
        %466 = vmatpush.bf16.xpose.msra.mxu0 0
        %467 = vmatpush.bf16.xpose.msra.mxu0 0
        %468 = vmatpush.bf16.xpose.msra.mxu0 0
        %469 = vmatpush.bf16.xpose.msra.mxu0 %v460
        %470 = vmatmul.bf16.gmra.mxu0 %v457
        %v471 = vpop.f32.mrf.mxu0
        %v472 = vadd.f32 %v450, %v471
        %v473 = vpop.f32.mrf.mxu0
        %474 = vdwg.mxu0
        %v475 = vsel %vm455, %v472, -inf
        %476 = vmax.xlane.f32.xlu0 %v475
        %v477 = vpop.xlane.xlu0 %476
        %v478 = vsub.f32 %v472, %v477
        %v479 = vmul.f32 %v478, 1.442695
        %v480 = vpow.pop %v479
        %v481 = vsel %vm455, %v480, 0.0
        %482 = vadd.xlane.f32.xlu0 %v481
        %v483 = vpop.xlane.xlu0 %482
        %v484 = vrcp.pop %v483
        %v485 = vmul.f32 %v480, %v484
        %v486 = vpack.c.bf16 %v485, %v485
        %487 = vrot.lane.b32.xlu0 %v448, 64
        %v488 = vpop.permute.xlu0 %487
        %v490 = vsel %vm455, %v486, 0
        %vm492 = vcmask 1043456
        %v494 = vsel %vm492, %v488, 0
        %496 = vmatpush.bf16.msra.mxu0 0
        %497 = vmatpush.bf16.msra.mxu0 0
        %498 = vmatpush.bf16.msra.mxu0 0
        %499 = vmatpush.bf16.msra.mxu0 0
        %500 = vmatpush.bf16.msra.mxu0 0
        %501 = vmatpush.bf16.msra.mxu0 0
        %502 = vmatpush.bf16.msra.mxu0 0
        %503 = vmatpush.bf16.msra.mxu0 %v494
        %504 = vmatmul.bf16.gmra.mxu0 %v490
        %v505 = vpop.f32.mrf.mxu0
        %v506 = vadd.f32 0.0, %v505
        %v507 = vpop.f32.mrf.mxu0
        %508 = vdwg.mxu0
        %509 = vrot.lane.b32.xlu0 %v448, 120
        %v510 = vpop.permute.xlu0 %509
        %511 = vrot.lane.b32.xlu0 %v448, 88
        %v512 = vpop.permute.xlu0 %511
        %v514 = vsel %vm455, %v510, 0
        %v517 = vsel %vm455, %v512, 0
        %519 = vmatpush.bf16.xpose.msra.mxu0 0
        %520 = vmatpush.bf16.xpose.msra.mxu0 0
        %521 = vmatpush.bf16.xpose.msra.mxu0 0
        %522 = vmatpush.bf16.xpose.msra.mxu0 0
        %523 = vmatpush.bf16.xpose.msra.mxu0 0
        %524 = vmatpush.bf16.xpose.msra.mxu0 0
        %525 = vmatpush.bf16.xpose.msra.mxu0 0
        %526 = vmatpush.bf16.xpose.msra.mxu0 %v517
        %527 = vmatmul.bf16.gmra.mxu0 %v514
        %v528 = vpop.f32.mrf.mxu0
        %v529 = vadd.f32 %v450, %v528
        %v530 = vpop.f32.mrf.mxu0
        %531 = vdwg.mxu0
        %v532 = vsel %vm455, %v529, -inf
        %533 = vmax.xlane.f32.xlu0 %v532
        %v534 = vpop.xlane.xlu0 %533
        %v535 = vsub.f32 %v529, %v534
        %v536 = vmul.f32 %v535, 1.442695
        %v537 = vpow.pop %v536
        %v538 = vsel %vm455, %v537, 0.0
        %539 = vadd.xlane.f32.xlu0 %v538
        %v540 = vpop.xlane.xlu0 %539
        %v541 = vrcp.pop %v540
        %v542 = vmul.f32 %v537, %v541
        %v543 = vpack.c.bf16 %v542, %v542
        %544 = vrot.lane.b32.xlu0 %v448, 56
        %v545 = vpop.permute.xlu0 %544
        %v547 = vsel %vm455, %v543, 0
        %v550 = vsel %vm492, %v545, 0
        %552 = vmatpush.bf16.msra.mxu0 0
        %553 = vmatpush.bf16.msra.mxu0 0
        %554 = vmatpush.bf16.msra.mxu0 0
        %555 = vmatpush.bf16.msra.mxu0 0
        %556 = vmatpush.bf16.msra.mxu0 0
        %557 = vmatpush.bf16.msra.mxu0 0
        %558 = vmatpush.bf16.msra.mxu0 0
        %559 = vmatpush.bf16.msra.mxu0 %v550
        %560 = vmatmul.bf16.gmra.mxu0 %v547
        %v561 = vpop.f32.mrf.mxu0
        %v562 = vadd.f32 0.0, %v561
        %v563 = vpop.f32.mrf.mxu0
        %564 = vdwg.mxu0
        %565 = vrot.lane.b32.xlu0 %v448, 112
        %v566 = vpop.permute.xlu0 %565
        %567 = vrot.lane.b32.xlu0 %v448, 80
        %v568 = vpop.permute.xlu0 %567
        %v570 = vsel %vm455, %v566, 0
        %v573 = vsel %vm455, %v568, 0
        %575 = vmatpush.bf16.xpose.msra.mxu0 0
        %576 = vmatpush.bf16.xpose.msra.mxu0 0
        %577 = vmatpush.bf16.xpose.msra.mxu0 0
        %578 = vmatpush.bf16.xpose.msra.mxu0 0
        %579 = vmatpush.bf16.xpose.msra.mxu0 0
        %580 = vmatpush.bf16.xpose.msra.mxu0 0
        %581 = vmatpush.bf16.xpose.msra.mxu0 0
        %582 = vmatpush.bf16.xpose.msra.mxu0 %v573
        %583 = vmatmul.bf16.gmra.mxu0 %v570
        %v584 = vpop.f32.mrf.mxu0
        %v585 = vadd.f32 %v450, %v584
        %v586 = vpop.f32.mrf.mxu0
        %587 = vdwg.mxu0
        %v588 = vsel %vm455, %v585, -inf
        %589 = vmax.xlane.f32.xlu0 %v588
        %v590 = vpop.xlane.xlu0 %589
        %v591 = vsub.f32 %v585, %v590
        %v592 = vmul.f32 %v591, 1.442695
        %v593 = vpow.pop %v592
        %v594 = vsel %vm455, %v593, 0.0
        %595 = vadd.xlane.f32.xlu0 %v594
        %v596 = vpop.xlane.xlu0 %595
        %v597 = vrcp.pop %v596
        %v598 = vmul.f32 %v593, %v597
        %v599 = vpack.c.bf16 %v598, %v598
        %600 = vrot.lane.b32.xlu0 %v448, 48
        %v601 = vpop.permute.xlu0 %600
        %v603 = vsel %vm455, %v599, 0
        %v606 = vsel %vm492, %v601, 0
        %608 = vmatpush.bf16.msra.mxu0 0
        %609 = vmatpush.bf16.msra.mxu0 0
        %610 = vmatpush.bf16.msra.mxu0 0
        %611 = vmatpush.bf16.msra.mxu0 0
        %612 = vmatpush.bf16.msra.mxu0 0
        %613 = vmatpush.bf16.msra.mxu0 0
        %614 = vmatpush.bf16.msra.mxu0 0
        %615 = vmatpush.bf16.msra.mxu0 %v606
        %616 = vmatmul.bf16.gmra.mxu0 %v603
        %v617 = vpop.f32.mrf.mxu0
        %v618 = vadd.f32 0.0, %v617
        %v619 = vpop.f32.mrf.mxu0
        %620 = vdwg.mxu0
        %621 = vrot.lane.b32.xlu0 %v448, 104
        %v622 = vpop.permute.xlu0 %621
        %623 = vrot.lane.b32.xlu0 %v448, 72
        %v624 = vpop.permute.xlu0 %623
        %v626 = vsel %vm455, %v622, 0
        %v629 = vsel %vm455, %v624, 0
        %631 = vmatpush.bf16.xpose.msra.mxu0 0
        %632 = vmatpush.bf16.xpose.msra.mxu0 0
        %633 = vmatpush.bf16.xpose.msra.mxu0 0
        %634 = vmatpush.bf16.xpose.msra.mxu0 0
        %635 = vmatpush.bf16.xpose.msra.mxu0 0
        %636 = vmatpush.bf16.xpose.msra.mxu0 0
        %637 = vmatpush.bf16.xpose.msra.mxu0 0
        %638 = vmatpush.bf16.xpose.msra.mxu0 %v629
        %639 = vmatmul.bf16.gmra.mxu0 %v626
        %v640 = vpop.f32.mrf.mxu0
        %v641 = vadd.f32 %v450, %v640
        %v642 = vpop.f32.mrf.mxu0
        %643 = vdwg.mxu0
        %v644 = vsel %vm455, %v641, -inf
        %645 = vmax.xlane.f32.xlu0 %v644
        %v646 = vpop.xlane.xlu0 %645
        %v647 = vsub.f32 %v641, %v646
        %v648 = vmul.f32 %v647, 1.442695
        %v649 = vpow.pop %v648
        %v650 = vsel %vm455, %v649, 0.0
        %651 = vadd.xlane.f32.xlu0 %v650
        %v652 = vpop.xlane.xlu0 %651
        %v653 = vrcp.pop %v652
        %v654 = vmul.f32 %v649, %v653
        %v655 = vpack.c.bf16 %v654, %v654
        %656 = vrot.lane.b32.xlu0 %v448, 40
        %v657 = vpop.permute.xlu0 %656
        %v659 = vsel %vm455, %v655, 0
        %v662 = vsel %vm492, %v657, 0
        %664 = vmatpush.bf16.msra.mxu0 0
        %665 = vmatpush.bf16.msra.mxu0 0
        %666 = vmatpush.bf16.msra.mxu0 0
        %667 = vmatpush.bf16.msra.mxu0 0
        %668 = vmatpush.bf16.msra.mxu0 0
        %669 = vmatpush.bf16.msra.mxu0 0
        %670 = vmatpush.bf16.msra.mxu0 0
        %671 = vmatpush.bf16.msra.mxu0 %v662
        %672 = vmatmul.bf16.gmra.mxu0 %v659
        %v673 = vpop.f32.mrf.mxu0
        %v674 = vadd.f32 0.0, %v673
        %v675 = vpop.f32.mrf.mxu0
        %676 = vdwg.mxu0
        %678 = vrot.lane.b32.xlu0 %v562, 8
        %v679 = vpop.permute.xlu0 %678
        %682 = vrot.lane.b32.xlu0 %v618, 16
        %v683 = vpop.permute.xlu0 %682
        %686 = vrot.lane.b32.xlu0 %v674, 24
        %v687 = vpop.permute.xlu0 %686
        %v689 = vsel %vm455, %v506, %v679
        %vm690 = vcmask 130048
        %v691 = vsel %vm690, %v689, %v683
        %vm692 = vcmask 195584
        %v693 = vsel %vm692, %v691, %v687
        %v694 = vld [vmem:[#allocation6] sm:$0xf]
        %v695 = vld [vmem:[#allocation6 + $0x4] sm:$0xf]
        %v696 = vld [vmem:[#allocation6 + $0x8] sm:$0xf]
        %v697 = vld [vmem:[#allocation6 + $0xc] sm:$0xf]
        %v698 = vld [vmem:[#allocation7] sm:$0x1]
        %v699 = vld [vmem:[#allocation9] sm:$0x1]
        %v700 = vld [vmem:[#allocation10] sm:$0x1]
        %v701 = vpack.c.bf16 %v693, %v693
        %v703 = vperm.slane %v698, 0
        %v709 = vunpack.c.l.b16 %v694
        %v710 = vunpack.c.l.b16 %v695
        %v711 = vunpack.c.l.b16 %v696
        %v712 = vunpack.c.l.b16 %v697
        %v713 = vpack.c.b16 %v710, %v709
        %v714 = vpack.c.b16 %v712, %v711
        %v718 = vsel %vm430, %v701, 0
        %720 = vmatpush.bf16.msra.mxu0 0
        %721 = vmatpush.bf16.msra.mxu0 0
        %722 = vmatpush.bf16.msra.mxu0 0
        %723 = vmatpush.bf16.msra.mxu0 0
        %724 = vmatpush.bf16.msra.mxu0 0
        %725 = vmatpush.bf16.msra.mxu0 0
        %726 = vmatpush.bf16.msra.mxu0 %v714
        %727 = vmatpush.bf16.msra.mxu0 %v713
        %728 = vmatmul.bf16.gmra.mxu0 %v718
        %v729 = vpop.f32.mrf.mxu0
        %v730 = vadd.f32 %v703, %v729
        %v731 = vpop.f32.mrf.mxu0
        %732 = vdwg.mxu0
        %v733 = vadd.f32 %v730, %v408
        %v734 = vsel %vm430, %v733, 0.0
        %735 = vadd.xlane.f32.xlu0 %v734
        %v736 = vpop.xlane.xlu0 %735
        %v737 = vrcp.pop 32.0
        %v738 = vmul.f32 32.0, %v737
        %v739 = vsub.f32 1.0, %v738
        %v740 = vmul.f32 %v737, %v739
        %v741 = vadd.f32 %v737, %v740
        %vm742 = vweird.f32 %v737
        %v743 = vsel %vm742, %v737, %v741
        %v744 = vmul.f32 %v736, %v743
        %v745 = vsub.f32 %v733, %v744
        %v746 = vmul.f32 %v745, %v745
        %v747 = vsel %vm430, %v746, 0.0
        %748 = vadd.xlane.f32.xlu0 %v747
        %v749 = vpop.xlane.xlu0 %748
        %v750 = vmul.f32 %v749, %v743
        %v751 = vadd.f32 %v750, 1e-05
        %v752 = vrsqrt.pop %v751
        %v753 = vmul.f32 %v752, %v751
        %v754 = vmul.f32 %v753, %v752
        %v755 = vmul.f32 0.5, %v754
        %v756 = vsub.f32 1.5, %v755
        %v757 = vmul.f32 %v752, %v756
        %vm758 = vweird.f32 %v751
        %vm759 = vweird.f32 %v752
        %vm760 = vmor %vm758, %vm759
        %v761 = vsel %vm760, %v752, %v757
        %v762 = vmul.f32 %v745, %v761
        %v764 = vperm.slane %v699, 0
        %v766 = vmul.f32 %v762, %v764
        %v768 = vperm.slane %v700, 0
        %v770 = vadd.f32 %v766, %v768
        %771 = vst.msk [vmem:[%s406] sm:$0xff] %vm430, %v770
        %p772 = scmp.lt.s32.totalorder %s23, 1
        %s773 = scalar_select %p772, %s23, 1
        %s774 = smul.addr %s773, 8
        %s775 = scalar_lea.vmem %s8, %s774
        // Predicated region
        $region77: #{skip_decode_transformer.9} parent=51 // pred_check
          %p776 = pneg %p219
        $region78: #{skip_decode_transformer.9} parent=51 // pred_check_branch
          %778 = sbr.rel (%p776) target = $region80
        $region79: #{skip_decode_transformer.9} parent=51 // pred_region
          _
        $region80: #{skip_decode_transformer.9} parent=51 // pred_fallthru
          _
      $region52: #{skip_decode_transformer.9} parent=5 // pred_fallthru
        _
      %p779 = scmp.le.s32.totalorder 2, %s18
      // Predicated region
      $region81: #{skip_decode_transformer.9} parent=5 // pred_check
        %p780 = pneg %p779
      $region82: #{skip_decode_transformer.9} parent=5 // pred_check_branch
        %782 = sbr.rel (%p780) target = $region84
      $region83: #{skip_decode_transformer.9} parent=5 // pred_region
        %s783 = ssub.s32 %s18, 2
        // Predicated region
        $region85: #{skip_decode_transformer.9} parent=83 // pred_check
          %p784 = pneg %p225
        $region86: #{skip_decode_transformer.9} parent=83 // pred_check_branch
          %786 = sbr.rel (%p784) target = $region88
        $region87: #{skip_decode_transformer.9} parent=83 // pred_region
          %p787 = scmp.lt.s32.totalorder %s24, 1
          %s788 = scalar_select %p787, %s24, 1
          %s789 = smul.addr %s788, 8
          %s790 = scalar_lea.vmem %s8, %s789
        $region88: #{skip_decode_transformer.9} parent=83 // pred_fallthru
          _
      $region84: #{skip_decode_transformer.9} parent=5 // pred_fallthru
        _
    $region6: #{skip_decode_transformer.9} parent=1 // loop_footer
      %s22 = sadd.s32 1, %s18
    $region7: #{skip_decode_transformer.9} parent=1 // loop_footer_branch
      %17 = sbr.rel target = $region3
    $region8: #{skip_decode_transformer.9} parent=1 // loop_exit
      _
    %791 = vsyncpa [#allocation3], 1
    %s792 = scalar_lea.sflag [#allocation3], 1
    %793 = vsyncpa %s792, 1
    %794 = vsyncpa [#allocation5], 1
    %795 = vsyncpa [#allocation8], 1
    %796 = vsyncpa [#allocation11], 1

// kernel: skip_decode_transformer.10
$region0: #{skip_decode_transformer.10}
  #allocation0 [shape = 'u32[]', space=smem, size = 0x4, offset = 0x4, fixed_abs, tag = 'smem constant byte address 0x4 - core index']
  #allocation1 [shape = 'u32[72,128]{1,0:T(1,128)}', space=vmem, size = 0x9000, scoped, tag = 'internal scratch']
  %s0 = inlined_call_operand.vmem [shape: f32[2,8,32], index: 0, kind: input, shape index: {}]
  %s1 = inlined_call_operand.hbm [shape: f32[2,8,32], index: 1, kind: input, shape index: {}]
  %s2 = inlined_call_operand.vmem [shape: f32[2,1,8], index: 2, kind: input, shape index: {}]
  %s3 = inlined_call_operand.hbm [shape: bf16[32,32], index: 3, kind: input, shape index: {}]
  %s4 = inlined_call_operand.hbm [shape: f32[1,32], index: 4, kind: input, shape index: {}]
  %s5 = inlined_call_operand.hbm [shape: bf16[32,64], index: 5, kind: input, shape index: {}]
  %s6 = inlined_call_operand.hbm [shape: f32[1,64], index: 6, kind: input, shape index: {}]
  %s7 = inlined_call_operand.hbm [shape: bf16[32,32], index: 7, kind: input, shape index: {}]
  %s8 = inlined_call_operand.hbm [shape: f32[1,32], index: 8, kind: input, shape index: {}]
  %s9 = inlined_call_operand.hbm [shape: f32[1,32], index: 9, kind: input, shape index: {}]
  %s10 = inlined_call_operand.hbm [shape: f32[1,32], index: 10, kind: input, shape index: {}]
  %s11 = inlined_call_operand.vmem [shape: f32[2,8,32], index: 11, kind: output, shape index: {}]
  %s12 = sld [smem:[#allocation0]]
  $region113: #{skip_decode_transformer.10} parent=0
    _
  %s14 = ssub.s32 1, %s12
  %s15 = scalar_select 0, %s14, %s12
  $region1: #{skip_decode_transformer.10} parent=0
    #allocation2 [shape = 'u8[8192]{0}', space=vmem, size = 0x2000, scoped, tag = 'input window, operand 1']
    #allocation3 [shape = 's32[2]{0}', space=sflag, size = 0x8, scoped, tag = 'scoped memory for skip_decode_transformer.10']
    #allocation4 [shape = 'u8[8192]{0}', space=vmem, size = 0x2000, scoped, tag = 'input window, operand 3, single buffered']
    #allocation5 [shape = 's32[1]{0}', space=sflag, size = 0x4, scoped, tag = 'scoped memory for skip_decode_transformer.10']
    #allocation6 [shape = 'u8[512]{0}', space=vmem, size = 0x400, scoped, tag = 'input window, operand 4, single buffered']
    #allocation7 [shape = 'u8[8192]{0}', space=vmem, size = 0x2000, scoped, tag = 'input window, operand 5, single buffered']
    #allocation8 [shape = 's32[1]{0}', space=sflag, size = 0x4, scoped, tag = 'scoped memory for skip_decode_transformer.10']
    #allocation9 [shape = 'u8[512]{0}', space=vmem, size = 0x400, scoped, tag = 'input window, operand 6, single buffered']
    #allocation10 [shape = 'u8[8192]{0}', space=vmem, size = 0x2000, scoped, tag = 'input window, operand 7, single buffered']
    #allocation11 [shape = 's32[1]{0}', space=sflag, size = 0x4, scoped, tag = 'scoped memory for skip_decode_transformer.10']
    #allocation12 [shape = 'u8[512]{0}', space=vmem, size = 0x400, scoped, tag = 'input window, operand 8, single buffered']
    #allocation13 [shape = 'u8[512]{0}', space=vmem, size = 0x400, scoped, tag = 'input window, operand 9, single buffered']
    #allocation14 [shape = 's32[1]{0}', space=sflag, size = 0x4, scoped, tag = 'scoped memory for skip_decode_transformer.10']
    #allocation15 [shape = 'u8[512]{0}', space=vmem, size = 0x400, scoped, tag = 'input window, operand 10, single buffered']
    %16 = vsyncpa [#allocation3], 0
    %s17 = scalar_lea.sflag [#allocation3], 1
    %18 = vsyncpa %s17, 0
    %19 = vsyncpa [#allocation5], 0
    %20 = vsyncpa [#allocation8], 0
    %21 = vsyncpa [#allocation11], 0
    %22 = vsyncpa [#allocation14], 0
    loop: start=0, step=1, limit=4
    $region2: #{skip_decode_transformer.10} parent=1 // loop_pre_header
      _
    $region3: #{skip_decode_transformer.10} parent=1 // loop_header
      %s24 = sphi 0, %s28
      %p25 = scmp.ge.s32.totalorder %s24, 4
      %s34 = sphi 0, %s36
      %s37 = sphi 0, %s34
      %s38 = sphi 0, %s37
      %s54 = sphi 0, %s38
      %s60 = sphi 0, %s62
      %s63 = sphi 0, %s60
      %s64 = sphi 0, %s63
      %s80 = sphi 0, %s64
      %s86 = sphi 0, %s88
      %s89 = sphi 0, %s86
      %s90 = sphi 0, %s89
      %s106 = sphi 0, %s90
      %s110 = sphi 0, %s110
      %s112 = sphi 0, %s110
      %s113 = sphi 0, %s112
      %s127 = sphi 0, %s113
      %s131 = sphi 0, %s131
      %s133 = sphi 0, %s131
      %s134 = sphi 0, %s133
      %s148 = sphi 0, %s134
      %s152 = sphi 0, %s152
      %s154 = sphi 0, %s152
      %s155 = sphi 0, %s154
      %s169 = sphi 0, %s155
      %s173 = sphi 0, %s173
      %s175 = sphi 0, %s173
      %s176 = sphi 0, %s175
      %s190 = sphi 0, %s176
      %s194 = sphi 0, %s194
      %s196 = sphi 0, %s194
      %s197 = sphi 0, %s196
      %s211 = sphi 0, %s197
      %s215 = sphi 0, %s215
      %s217 = sphi 0, %s215
      %s218 = sphi 0, %s217
      %s232 = sphi 0, %s218
      %s236 = sphi 0, %s236
      %s238 = sphi 0, %s236
      %s239 = sphi 0, %s238
      %s253 = sphi 0, %s239
      %s257 = sphi 0, %s257
      %s259 = sphi 0, %s257
      %s260 = sphi 0, %s259
      %s274 = sphi 0, %s260
      %s280 = sphi 0, %s282
      %s283 = sphi 0, %s280
      %s284 = sphi 0, %s283
      %s300 = sphi 0, %s284
    $region4: #{skip_decode_transformer.10} parent=1 // loop_header_branch
      %27 = sbr.rel (%p25) target = $region8
    $region5: #{skip_decode_transformer.10} parent=1 // loop_body
      %s29 = ssub.s32 %s24, 1
      %s30 = ssub.s32 %s24, 2
      %s31 = sadd.s32 %s24, 1
      %s32 = ssub.s32 %s24, %s31
      %p33 = scmp.eq.s32.totalorder %s32, 0
      %s35 = sadd.s32 %s34, 1
      %s36 = scalar_select %p33, %s34, %s35
      %p39 = pneg %p33
      %p40 = scmp.eq.s32.totalorder %s24, 1
      %p41 = por %p39, %p40
      %p42 = scmp.ne.s32.totalorder %s34, %s37
      %p43 = scmp.eq.s32.totalorder %s24, 0
      %p44 = por %p42, %p43
      %p45 = scmp.ne.s32.totalorder %s34, %s37
      %p46 = scmp.eq.s32.totalorder %s29, 1
      %p47 = por %p45, %p46
      %p48 = scmp.ne.s32.totalorder %s37, %s38
      %p49 = scmp.eq.s32.totalorder %s29, 0
      %p50 = por %p48, %p49
      %p51 = scmp.ne.s32.totalorder %s37, %s38
      %p52 = scmp.eq.s32.totalorder %s30, 1
      %p53 = por %p51, %p52
      %p55 = scmp.ne.s32.totalorder %s38, %s54
      %p56 = scmp.eq.s32.totalorder %s30, 0
      %p57 = por %p55, %p56
      %s58 = ssub.s32 %s24, %s31
      %p59 = scmp.eq.s32.totalorder %s58, 0
      %s61 = sadd.s32 %s60, 1
      %s62 = scalar_select %p59, %s60, %s61
      %p65 = pneg %p59
      %p66 = scmp.eq.s32.totalorder %s24, 1
      %p67 = por %p65, %p66
      %p68 = scmp.ne.s32.totalorder %s60, %s63
      %p69 = scmp.eq.s32.totalorder %s24, 0
      %p70 = por %p68, %p69
      %p71 = scmp.ne.s32.totalorder %s60, %s63
      %p72 = scmp.eq.s32.totalorder %s29, 1
      %p73 = por %p71, %p72
      %p74 = scmp.ne.s32.totalorder %s63, %s64
      %p75 = scmp.eq.s32.totalorder %s29, 0
      %p76 = por %p74, %p75
      %p77 = scmp.ne.s32.totalorder %s63, %s64
      %p78 = scmp.eq.s32.totalorder %s30, 1
      %p79 = por %p77, %p78
      %p81 = scmp.ne.s32.totalorder %s64, %s80
      %p82 = scmp.eq.s32.totalorder %s30, 0
      %p83 = por %p81, %p82
      %s84 = ssub.s32 %s24, %s31
      %p85 = scmp.eq.s32.totalorder %s84, 0
      %s87 = sadd.s32 %s86, 1
      %s88 = scalar_select %p85, %s86, %s87
      %p91 = pneg %p85
      %p92 = scmp.eq.s32.totalorder %s24, 1
      %p93 = por %p91, %p92
      %p94 = scmp.ne.s32.totalorder %s86, %s89
      %p95 = scmp.eq.s32.totalorder %s24, 0
      %p96 = por %p94, %p95
      %p97 = scmp.ne.s32.totalorder %s86, %s89
      %p98 = scmp.eq.s32.totalorder %s29, 1
      %p99 = por %p97, %p98
      %p100 = scmp.ne.s32.totalorder %s89, %s90
      %p101 = scmp.eq.s32.totalorder %s29, 0
      %p102 = por %p100, %p101
      %p103 = scmp.ne.s32.totalorder %s89, %s90
      %p104 = scmp.eq.s32.totalorder %s30, 1
      %p105 = por %p103, %p104
      %p107 = scmp.ne.s32.totalorder %s90, %s106
      %p108 = scmp.eq.s32.totalorder %s30, 0
      %p109 = por %p107, %p108
      %s111 = sadd.s32 %s110, 1
      %p114 = scmp.eq.s32.totalorder %s24, 1
      %p115 = scmp.ne.s32.totalorder %s110, %s112
      %p116 = scmp.eq.s32.totalorder %s24, 0
      %p117 = por %p115, %p116
      %p118 = scmp.ne.s32.totalorder %s110, %s112
      %p119 = scmp.eq.s32.totalorder %s29, 1
      %p120 = por %p118, %p119
      %p121 = scmp.ne.s32.totalorder %s112, %s113
      %p122 = scmp.eq.s32.totalorder %s29, 0
      %p123 = por %p121, %p122
      %p124 = scmp.ne.s32.totalorder %s112, %s113
      %p125 = scmp.eq.s32.totalorder %s30, 1
      %p126 = por %p124, %p125
      %p128 = scmp.ne.s32.totalorder %s113, %s127
      %p129 = scmp.eq.s32.totalorder %s30, 0
      %p130 = por %p128, %p129
      %s132 = sadd.s32 %s131, 1
      %p135 = scmp.eq.s32.totalorder %s24, 1
      %p136 = scmp.ne.s32.totalorder %s131, %s133
      %p137 = scmp.eq.s32.totalorder %s24, 0
      %p138 = por %p136, %p137
      %p139 = scmp.ne.s32.totalorder %s131, %s133
      %p140 = scmp.eq.s32.totalorder %s29, 1
      %p141 = por %p139, %p140
      %p142 = scmp.ne.s32.totalorder %s133, %s134
      %p143 = scmp.eq.s32.totalorder %s29, 0
      %p144 = por %p142, %p143
      %p145 = scmp.ne.s32.totalorder %s133, %s134
      %p146 = scmp.eq.s32.totalorder %s30, 1
      %p147 = por %p145, %p146
      %p149 = scmp.ne.s32.totalorder %s134, %s148
      %p150 = scmp.eq.s32.totalorder %s30, 0
      %p151 = por %p149, %p150
      %s153 = sadd.s32 %s152, 1
      %p156 = scmp.eq.s32.totalorder %s24, 1
      %p157 = scmp.ne.s32.totalorder %s152, %s154
      %p158 = scmp.eq.s32.totalorder %s24, 0
      %p159 = por %p157, %p158
      %p160 = scmp.ne.s32.totalorder %s152, %s154
      %p161 = scmp.eq.s32.totalorder %s29, 1
      %p162 = por %p160, %p161
      %p163 = scmp.ne.s32.totalorder %s154, %s155
      %p164 = scmp.eq.s32.totalorder %s29, 0
      %p165 = por %p163, %p164
      %p166 = scmp.ne.s32.totalorder %s154, %s155
      %p167 = scmp.eq.s32.totalorder %s30, 1
      %p168 = por %p166, %p167
      %p170 = scmp.ne.s32.totalorder %s155, %s169
      %p171 = scmp.eq.s32.totalorder %s30, 0
      %p172 = por %p170, %p171
      %s174 = sadd.s32 %s173, 1
      %p177 = scmp.eq.s32.totalorder %s24, 1
      %p178 = scmp.ne.s32.totalorder %s173, %s175
      %p179 = scmp.eq.s32.totalorder %s24, 0
      %p180 = por %p178, %p179
      %p181 = scmp.ne.s32.totalorder %s173, %s175
      %p182 = scmp.eq.s32.totalorder %s29, 1
      %p183 = por %p181, %p182
      %p184 = scmp.ne.s32.totalorder %s175, %s176
      %p185 = scmp.eq.s32.totalorder %s29, 0
      %p186 = por %p184, %p185
      %p187 = scmp.ne.s32.totalorder %s175, %s176
      %p188 = scmp.eq.s32.totalorder %s30, 1
      %p189 = por %p187, %p188
      %p191 = scmp.ne.s32.totalorder %s176, %s190
      %p192 = scmp.eq.s32.totalorder %s30, 0
      %p193 = por %p191, %p192
      %s195 = sadd.s32 %s194, 1
      %p198 = scmp.eq.s32.totalorder %s24, 1
      %p199 = scmp.ne.s32.totalorder %s194, %s196
      %p200 = scmp.eq.s32.totalorder %s24, 0
      %p201 = por %p199, %p200
      %p202 = scmp.ne.s32.totalorder %s194, %s196
      %p203 = scmp.eq.s32.totalorder %s29, 1
      %p204 = por %p202, %p203
      %p205 = scmp.ne.s32.totalorder %s196, %s197
      %p206 = scmp.eq.s32.totalorder %s29, 0
      %p207 = por %p205, %p206
      %p208 = scmp.ne.s32.totalorder %s196, %s197
      %p209 = scmp.eq.s32.totalorder %s30, 1
      %p210 = por %p208, %p209
      %p212 = scmp.ne.s32.totalorder %s197, %s211
      %p213 = scmp.eq.s32.totalorder %s30, 0
      %p214 = por %p212, %p213
      %s216 = sadd.s32 %s215, 1
      %p219 = scmp.eq.s32.totalorder %s24, 1
      %p220 = scmp.ne.s32.totalorder %s215, %s217
      %p221 = scmp.eq.s32.totalorder %s24, 0
      %p222 = por %p220, %p221
      %p223 = scmp.ne.s32.totalorder %s215, %s217
      %p224 = scmp.eq.s32.totalorder %s29, 1
      %p225 = por %p223, %p224
      %p226 = scmp.ne.s32.totalorder %s217, %s218
      %p227 = scmp.eq.s32.totalorder %s29, 0
      %p228 = por %p226, %p227
      %p229 = scmp.ne.s32.totalorder %s217, %s218
      %p230 = scmp.eq.s32.totalorder %s30, 1
      %p231 = por %p229, %p230
      %p233 = scmp.ne.s32.totalorder %s218, %s232
      %p234 = scmp.eq.s32.totalorder %s30, 0
      %p235 = por %p233, %p234
      %s237 = sadd.s32 %s236, 1
      %p240 = scmp.eq.s32.totalorder %s24, 1
      %p241 = scmp.ne.s32.totalorder %s236, %s238
      %p242 = scmp.eq.s32.totalorder %s24, 0
      %p243 = por %p241, %p242
      %p244 = scmp.ne.s32.totalorder %s236, %s238
      %p245 = scmp.eq.s32.totalorder %s29, 1
      %p246 = por %p244, %p245
      %p247 = scmp.ne.s32.totalorder %s238, %s239
      %p248 = scmp.eq.s32.totalorder %s29, 0
      %p249 = por %p247, %p248
      %p250 = scmp.ne.s32.totalorder %s238, %s239
      %p251 = scmp.eq.s32.totalorder %s30, 1
      %p252 = por %p250, %p251
      %p254 = scmp.ne.s32.totalorder %s239, %s253
      %p255 = scmp.eq.s32.totalorder %s30, 0
      %p256 = por %p254, %p255
      %s258 = sadd.s32 %s257, 1
      %p261 = scmp.eq.s32.totalorder %s24, 1
      %p262 = scmp.ne.s32.totalorder %s257, %s259
      %p263 = scmp.eq.s32.totalorder %s24, 0
      %p264 = por %p262, %p263
      %p265 = scmp.ne.s32.totalorder %s257, %s259
      %p266 = scmp.eq.s32.totalorder %s29, 1
      %p267 = por %p265, %p266
      %p268 = scmp.ne.s32.totalorder %s259, %s260
      %p269 = scmp.eq.s32.totalorder %s29, 0
      %p270 = por %p268, %p269
      %p271 = scmp.ne.s32.totalorder %s259, %s260
      %p272 = scmp.eq.s32.totalorder %s30, 1
      %p273 = por %p271, %p272
      %p275 = scmp.ne.s32.totalorder %s260, %s274
      %p276 = scmp.eq.s32.totalorder %s30, 0
      %p277 = por %p275, %p276
      %s278 = ssub.s32 %s24, %s31
      %p279 = scmp.eq.s32.totalorder %s278, 0
      %s281 = sadd.s32 %s280, 1
      %s282 = scalar_select %p279, %s280, %s281
      %p285 = pneg %p279
      %p286 = scmp.eq.s32.totalorder %s24, 1
      %p287 = por %p285, %p286
      %p288 = scmp.ne.s32.totalorder %s280, %s283
      %p289 = scmp.eq.s32.totalorder %s24, 0
      %p290 = por %p288, %p289
      %p291 = scmp.ne.s32.totalorder %s280, %s283
      %p292 = scmp.eq.s32.totalorder %s29, 1
      %p293 = por %p291, %p292
      %p294 = scmp.ne.s32.totalorder %s283, %s284
      %p295 = scmp.eq.s32.totalorder %s29, 0
      %p296 = por %p294, %p295
      %p297 = scmp.ne.s32.totalorder %s283, %s284
      %p298 = scmp.eq.s32.totalorder %s30, 1
      %p299 = por %p297, %p298
      %p301 = scmp.ne.s32.totalorder %s284, %s300
      %p302 = scmp.eq.s32.totalorder %s30, 0
      %p303 = por %p301, %p302
      %p304 = scmp.le.s32.totalorder 1, %s24
      %p305 = scmp.lt.s32.totalorder %s24, 3
      %p306 = pnand %p304, %p305
      %p307 = pneg %p306
      // Predicated region
      $region9: #{skip_decode_transformer.10} parent=5 // pred_check
        _
      $region10: #{skip_decode_transformer.10} parent=5 // pred_check_branch
        %309 = sbr.rel (%p306) target = $region12
      $region11: #{skip_decode_transformer.10} parent=5 // pred_region
        %s310 = ssub.s32 %s24, 1
        // Predicated region
        $region13: #{skip_decode_transformer.10} parent=11 // pred_check
          %p311 = pneg %p123
        $region14: #{skip_decode_transformer.10} parent=11 // pred_check_branch
          %313 = sbr.rel (%p311) target = $region16
        $region15: #{skip_decode_transformer.10} parent=11 // pred_region
          %315 = vsyncadd [#allocation5], 0
          %s316 = sshll.u32 %s3, 4
          %s317 = int_to_ptr.hbm [resolvable:$true] %s316
          %s318 = sshll.u32 [#allocation4], 4
          %s319 = int_to_ptr.vmem [resolvable:$true] %s318
          %324 = dma.hbm_to_vmem [thread:$0]  %s317, 256, %s319, [#allocation5], 64, 64, 4
        $region16: #{skip_decode_transformer.10} parent=11 // pred_fallthru
          _
        // Predicated region
        $region17: #{skip_decode_transformer.10} parent=11 // pred_check
          %p325 = pneg %p144
        $region18: #{skip_decode_transformer.10} parent=11 // pred_check_branch
          %327 = sbr.rel (%p325) target = $region20
        $region19: #{skip_decode_transformer.10} parent=11 // pred_region
          %329 = vsyncadd [#allocation5], 0
          %s331 = sshll.u32 %s4, 4
          %s332 = int_to_ptr.hbm [resolvable:$true] %s331
          %s333 = sshll.u32 [#allocation6], 4
          %s334 = int_to_ptr.vmem [resolvable:$true] %s333
          %336 = dma.hbm_to_vmem [thread:$0]  %s332, 16, %s334, [#allocation5]
        $region20: #{skip_decode_transformer.10} parent=11 // pred_fallthru
          _
        // Predicated region
        $region21: #{skip_decode_transformer.10} parent=11 // pred_check
          %p337 = pneg %p165
        $region22: #{skip_decode_transformer.10} parent=11 // pred_check_branch
          %339 = sbr.rel (%p337) target = $region24
        $region23: #{skip_decode_transformer.10} parent=11 // pred_region
          %341 = vsyncadd [#allocation8], 0
          %s342 = sshll.u32 %s5, 4
          %s343 = int_to_ptr.hbm [resolvable:$true] %s342
          %s344 = sshll.u32 [#allocation7], 4
          %s345 = int_to_ptr.vmem [resolvable:$true] %s344
          %350 = dma.hbm_to_vmem [thread:$0]  %s343, 256, %s345, [#allocation8], 64, 64, 4
        $region24: #{skip_decode_transformer.10} parent=11 // pred_fallthru
          _
        // Predicated region
        $region25: #{skip_decode_transformer.10} parent=11 // pred_check
          %p351 = pneg %p186
        $region26: #{skip_decode_transformer.10} parent=11 // pred_check_branch
          %353 = sbr.rel (%p351) target = $region28
        $region27: #{skip_decode_transformer.10} parent=11 // pred_region
          %355 = vsyncadd [#allocation8], 0
          %s357 = sshll.u32 %s6, 4
          %s358 = int_to_ptr.hbm [resolvable:$true] %s357
          %s359 = sshll.u32 [#allocation9], 4
          %s360 = int_to_ptr.vmem [resolvable:$true] %s359
          %362 = dma.hbm_to_vmem [thread:$0]  %s358, 16, %s360, [#allocation8]
        $region28: #{skip_decode_transformer.10} parent=11 // pred_fallthru
          _
        // Predicated region
        $region29: #{skip_decode_transformer.10} parent=11 // pred_check
          %p363 = pneg %p207
        $region30: #{skip_decode_transformer.10} parent=11 // pred_check_branch
          %365 = sbr.rel (%p363) target = $region32
        $region31: #{skip_decode_transformer.10} parent=11 // pred_region
          %367 = vsyncadd [#allocation11], 0
          %s368 = sshll.u32 %s7, 4
          %s369 = int_to_ptr.hbm [resolvable:$true] %s368
          %s370 = sshll.u32 [#allocation10], 4
          %s371 = int_to_ptr.vmem [resolvable:$true] %s370
          %376 = dma.hbm_to_vmem [thread:$0]  %s369, 256, %s371, [#allocation11], 64, 64, 4
        $region32: #{skip_decode_transformer.10} parent=11 // pred_fallthru
          _
        // Predicated region
        $region33: #{skip_decode_transformer.10} parent=11 // pred_check
          %p377 = pneg %p228
        $region34: #{skip_decode_transformer.10} parent=11 // pred_check_branch
          %379 = sbr.rel (%p377) target = $region36
        $region35: #{skip_decode_transformer.10} parent=11 // pred_region
          %381 = vsyncadd [#allocation11], 0
          %s383 = sshll.u32 %s8, 4
          %s384 = int_to_ptr.hbm [resolvable:$true] %s383
          %s385 = sshll.u32 [#allocation12], 4
          %s386 = int_to_ptr.vmem [resolvable:$true] %s385
          %388 = dma.hbm_to_vmem [thread:$0]  %s384, 16, %s386, [#allocation11]
        $region36: #{skip_decode_transformer.10} parent=11 // pred_fallthru
          _
        // Predicated region
        $region37: #{skip_decode_transformer.10} parent=11 // pred_check
          %p389 = pneg %p249
        $region38: #{skip_decode_transformer.10} parent=11 // pred_check_branch
          %391 = sbr.rel (%p389) target = $region40
        $region39: #{skip_decode_transformer.10} parent=11 // pred_region
          %393 = vsyncadd [#allocation14], 0
          %s395 = sshll.u32 %s9, 4
          %s396 = int_to_ptr.hbm [resolvable:$true] %s395
          %s397 = sshll.u32 [#allocation13], 4
          %s398 = int_to_ptr.vmem [resolvable:$true] %s397
          %400 = dma.hbm_to_vmem [thread:$0]  %s396, 16, %s398, [#allocation14]
        $region40: #{skip_decode_transformer.10} parent=11 // pred_fallthru
          _
        // Predicated region
        $region41: #{skip_decode_transformer.10} parent=11 // pred_check
          %p401 = pneg %p270
        $region42: #{skip_decode_transformer.10} parent=11 // pred_check_branch
          %403 = sbr.rel (%p401) target = $region44
        $region43: #{skip_decode_transformer.10} parent=11 // pred_region
          %405 = vsyncadd [#allocation14], 0
          %s407 = sshll.u32 %s10, 4
          %s408 = int_to_ptr.hbm [resolvable:$true] %s407
          %s409 = sshll.u32 [#allocation15], 4
          %s410 = int_to_ptr.vmem [resolvable:$true] %s409
          %412 = dma.hbm_to_vmem [thread:$0]  %s408, 16, %s410, [#allocation14]
        $region44: #{skip_decode_transformer.10} parent=11 // pred_fallthru
          _
      $region12: #{skip_decode_transformer.10} parent=5 // pred_fallthru
        _
      %p413 = scmp.lt.s32.totalorder %s24, 2
      // Predicated region
      $region45: #{skip_decode_transformer.10} parent=5 // pred_check
        %p414 = pneg %p413
      $region46: #{skip_decode_transformer.10} parent=5 // pred_check_branch
        %416 = sbr.rel (%p414) target = $region48
      $region47: #{skip_decode_transformer.10} parent=5 // pred_region
        // Predicated region
        $region49: #{skip_decode_transformer.10} parent=47 // pred_check
          %p417 = pneg %p44
        $region50: #{skip_decode_transformer.10} parent=47 // pred_check_branch
          %419 = sbr.rel (%p417) target = $region52
        $region51: #{skip_decode_transformer.10} parent=47 // pred_region
          %p420 = scmp.lt.s32.totalorder %s24, 1
          %s421 = scalar_select %p420, %s24, 1
          %s422 = smul.addr %s421, 8
          %s423 = scalar_lea.vmem %s0, %s422
        $region52: #{skip_decode_transformer.10} parent=47 // pred_fallthru
          _
        // Predicated region
        $region53: #{skip_decode_transformer.10} parent=47 // pred_check
          %p424 = pneg %p70
        $region54: #{skip_decode_transformer.10} parent=47 // pred_check_branch
          %426 = sbr.rel (%p424) target = $region56
        $region55: #{skip_decode_transformer.10} parent=47 // pred_region
          %s427 = sand.u32 %s60, 1
          %s428 = scalar_lea.sflag [#allocation3], %s427
          %s429 = sand.u32 %s60, 1
          %s430 = smul.addr %s429, 8
          %s431 = scalar_lea.vmem [#allocation2], %s430
          %433 = vsyncadd %s428, 0
          %s434 = smul.addr %s24, 8
          %s435 = scalar_lea.hbm %s1, %s434
          %s437 = sshll.u32 %s435, 4
          %s438 = int_to_ptr.hbm [resolvable:$true] %s437
          %s439 = sshll.u32 %s431, 4
          %s440 = int_to_ptr.vmem [resolvable:$true] %s439
          %442 = dma.hbm_to_vmem [thread:$0]  %s438, 128, %s440, %s428
        $region56: #{skip_decode_transformer.10} parent=47 // pred_fallthru
          _
        // Predicated region
        $region57: #{skip_decode_transformer.10} parent=47 // pred_check
          %p443 = pneg %p96
        $region58: #{skip_decode_transformer.10} parent=47 // pred_check_branch
          %445 = sbr.rel (%p443) target = $region60
        $region59: #{skip_decode_transformer.10} parent=47 // pred_region
          %p446 = scmp.lt.s32.totalorder %s24, 1
          %s447 = scalar_select %p446, %s24, 1
          %s448 = scalar_lea.vmem %s2, %s447
        $region60: #{skip_decode_transformer.10} parent=47 // pred_fallthru
          _
      $region48: #{skip_decode_transformer.10} parent=5 // pred_fallthru
        _
      %p449 = scmp.le.s32.totalorder 1, %s24
      %p450 = scmp.lt.s32.totalorder %s24, 3
      %p451 = pnand %p449, %p450
      %p452 = pneg %p451
      // Predicated region
      $region61: #{skip_decode_transformer.10} parent=5 // pred_check
        _
      $region62: #{skip_decode_transformer.10} parent=5 // pred_check_branch
        %454 = sbr.rel (%p451) target = $region64
      $region63: #{skip_decode_transformer.10} parent=5 // pred_region
        %s455 = ssub.s32 %s24, 1
        %s456 = sand.u32 %s63, 1
        %s457 = scalar_lea.sflag [#allocation3], %s456
        %s458 = sand.u32 %s63, 1
        %s459 = smul.addr %s458, 8
        %s460 = scalar_lea.vmem [#allocation2], %s459
        // Predicated region
        $region65: #{skip_decode_transformer.10} parent=63 // pred_check
          %p461 = pneg %p76
        $region66: #{skip_decode_transformer.10} parent=63 // pred_check_branch
          %463 = sbr.rel (%p461) target = $region68
        $region67: #{skip_decode_transformer.10} parent=63 // pred_region
          %465 = dma.done %s457, 128
        $region68: #{skip_decode_transformer.10} parent=63 // pred_fallthru
          _
        // Predicated region
        $region69: #{skip_decode_transformer.10} parent=63 // pred_check
          %p466 = pneg %p123
        $region70: #{skip_decode_transformer.10} parent=63 // pred_check_branch
          %468 = sbr.rel (%p466) target = $region72
        $region71: #{skip_decode_transformer.10} parent=63 // pred_region
          %470 = dma.done [#allocation5], 256
        $region72: #{skip_decode_transformer.10} parent=63 // pred_fallthru
          _
        // Predicated region
        $region73: #{skip_decode_transformer.10} parent=63 // pred_check
          %p471 = pneg %p144
        $region74: #{skip_decode_transformer.10} parent=63 // pred_check_branch
          %473 = sbr.rel (%p471) target = $region76
        $region75: #{skip_decode_transformer.10} parent=63 // pred_region
          %475 = dma.done [#allocation5], 16
        $region76: #{skip_decode_transformer.10} parent=63 // pred_fallthru
          _
        // Predicated region
        $region77: #{skip_decode_transformer.10} parent=63 // pred_check
          %p476 = pneg %p165
        $region78: #{skip_decode_transformer.10} parent=63 // pred_check_branch
          %478 = sbr.rel (%p476) target = $region80
        $region79: #{skip_decode_transformer.10} parent=63 // pred_region
          %480 = dma.done [#allocation8], 256
        $region80: #{skip_decode_transformer.10} parent=63 // pred_fallthru
          _
        // Predicated region
        $region81: #{skip_decode_transformer.10} parent=63 // pred_check
          %p481 = pneg %p186
        $region82: #{skip_decode_transformer.10} parent=63 // pred_check_branch
          %483 = sbr.rel (%p481) target = $region84
        $region83: #{skip_decode_transformer.10} parent=63 // pred_region
          %485 = dma.done [#allocation8], 16
        $region84: #{skip_decode_transformer.10} parent=63 // pred_fallthru
          _
        // Predicated region
        $region85: #{skip_decode_transformer.10} parent=63 // pred_check
          %p486 = pneg %p207
        $region86: #{skip_decode_transformer.10} parent=63 // pred_check_branch
          %488 = sbr.rel (%p486) target = $region88
        $region87: #{skip_decode_transformer.10} parent=63 // pred_region
          %490 = dma.done [#allocation11], 256
        $region88: #{skip_decode_transformer.10} parent=63 // pred_fallthru
          _
        // Predicated region
        $region89: #{skip_decode_transformer.10} parent=63 // pred_check
          %p491 = pneg %p228
        $region90: #{skip_decode_transformer.10} parent=63 // pred_check_branch
          %493 = sbr.rel (%p491) target = $region92
        $region91: #{skip_decode_transformer.10} parent=63 // pred_region
          %495 = dma.done [#allocation11], 16
        $region92: #{skip_decode_transformer.10} parent=63 // pred_fallthru
          _
        // Predicated region
        $region93: #{skip_decode_transformer.10} parent=63 // pred_check
          %p496 = pneg %p249
        $region94: #{skip_decode_transformer.10} parent=63 // pred_check_branch
          %498 = sbr.rel (%p496) target = $region96
        $region95: #{skip_decode_transformer.10} parent=63 // pred_region
          %500 = dma.done [#allocation14], 16
        $region96: #{skip_decode_transformer.10} parent=63 // pred_fallthru
          _
        // Predicated region
        $region97: #{skip_decode_transformer.10} parent=63 // pred_check
          %p501 = pneg %p270
        $region98: #{skip_decode_transformer.10} parent=63 // pred_check_branch
          %503 = sbr.rel (%p501) target = $region100
        $region99: #{skip_decode_transformer.10} parent=63 // pred_region
          %505 = dma.done [#allocation14], 16
        $region100: #{skip_decode_transformer.10} parent=63 // pred_fallthru
          _
        %p506 = scmp.lt.s32.totalorder %s29, 1
        %s507 = scalar_select %p506, %s29, 1
        %s508 = smul.addr %s507, 8
        %s509 = scalar_lea.vmem %s0, %s508
        %p510 = pneg %p50
        %p511 = pneg %p47
        %s512 = sand.u32 %s63, 1
        %s513 = scalar_lea.sflag [#allocation3], %s512
        %s514 = sand.u32 %s63, 1
        %s515 = smul.addr %s514, 8
        %s516 = scalar_lea.vmem [#allocation2], %s515
        %p517 = pneg %p76
        %p518 = pneg %p73
        %p519 = scmp.lt.s32.totalorder %s29, 1
        %s520 = scalar_select %p519, %s29, 1
        %s521 = scalar_lea.vmem %s2, %s520
        %p522 = pneg %p102
        %p523 = pneg %p99
        %p524 = pneg %p123
        %p525 = pneg %p120
        %p526 = pneg %p144
        %p527 = pneg %p141
        %p528 = pneg %p165
        %p529 = pneg %p162
        %p530 = pneg %p186
        %p531 = pneg %p183
        %p532 = pneg %p207
        %p533 = pneg %p204
        %p534 = pneg %p228
        %p535 = pneg %p225
        %p536 = pneg %p249
        %p537 = pneg %p246
        %p538 = pneg %p270
        %p539 = pneg %p267
        %p540 = pneg %p296
        %p541 = pneg %p293
        %p542 = scmp.lt.s32.totalorder %s29, 1
        %s543 = scalar_select %p542, %s29, 1
        %s544 = smul.addr %s543, 8
        %s545 = scalar_lea.vmem %s11, %s544
        %p546 = scmp.lt.s32.totalorder %s29, 1
        %s547 = scalar_select %p546, %s29, 1
        %s548 = smul.addr %s547, 8
        %s549 = scalar_lea.vmem %s0, %s548
        %p550 = scmp.lt.s32.totalorder %s29, 1
        %s551 = scalar_select %p550, %s29, 1
        %s552 = scalar_lea.vmem %s2, %s551
        %p553 = scmp.lt.s32.totalorder %s29, 1
        %s554 = scalar_select %p553, %s29, 1
        %s555 = smul.addr %s554, 8
        %s556 = scalar_lea.vmem %s11, %s555
        %v558 = vld [vmem:[%s549] sm:$0xff]
        %v559 = vld [vmem:[%s460] sm:$0xff]
        %v560 = vpack.c.bf16 %v558, %v558
        %v561 = vld [vmem:[#allocation4] sm:$0xf]
        %v562 = vld [vmem:[#allocation4 + $0x4] sm:$0xf]
        %v563 = vld [vmem:[#allocation4 + $0x8] sm:$0xf]
        %v564 = vld [vmem:[#allocation4 + $0xc] sm:$0xf]
        %v565 = vld [vmem:[#allocation6] sm:$0x1]
        %v567 = vperm.slane %v565, 0
        %v573 = vunpack.c.l.b16 %v561
        %v574 = vunpack.c.l.b16 %v562
        %v575 = vunpack.c.l.b16 %v563
        %v576 = vunpack.c.l.b16 %v564
        %v577 = vpack.c.b16 %v574, %v573
        %v578 = vpack.c.b16 %v576, %v575
        %vm581 = vcmask 261120
        %v583 = vsel %vm581, %v560, 0
        %585 = vmatpush.bf16.msra.mxu0 0
        %586 = vmatpush.bf16.msra.mxu0 0
        %587 = vmatpush.bf16.msra.mxu0 0
        %588 = vmatpush.bf16.msra.mxu0 0
        %589 = vmatpush.bf16.msra.mxu0 0
        %590 = vmatpush.bf16.msra.mxu0 0
        %591 = vmatpush.bf16.msra.mxu0 %v578
        %592 = vmatpush.bf16.msra.mxu0 %v577
        %593 = vmatmul.bf16.gmra.mxu0 %v583
        %v594 = vpop.f32.mrf.mxu0
        %v595 = vadd.f32 %v567, %v594
        %v596 = vpop.f32.mrf.mxu0
        %597 = vdwg.mxu0
        %v598 = vpack.c.bf16 %v559, %v559
        %v599 = vld [vmem:[#allocation7] sm:$0xf]
        %v600 = vld [vmem:[#allocation7 + $0x4] sm:$0xf]
        %v601 = vld [vmem:[#allocation7 + $0x8] sm:$0xf]
        %v602 = vld [vmem:[#allocation7 + $0xc] sm:$0xf]
        %v603 = vld [vmem:[#allocation9] sm:$0x1]
        %v605 = vperm.slane %v603, 0
        %v611 = vunpack.c.l.b16 %v599
        %v612 = vunpack.c.l.b16 %v600
        %v613 = vunpack.c.l.b16 %v601
        %v614 = vunpack.c.l.b16 %v602
        %v615 = vpack.c.b16 %v612, %v611
        %v616 = vpack.c.b16 %v614, %v613
        %v620 = vsel %vm581, %v598, 0
        %622 = vmatpush.bf16.msra.mxu0 0
        %623 = vmatpush.bf16.msra.mxu0 0
        %624 = vmatpush.bf16.msra.mxu0 0
        %625 = vmatpush.bf16.msra.mxu0 0
        %626 = vmatpush.bf16.msra.mxu0 0
        %627 = vmatpush.bf16.msra.mxu0 0
        %628 = vmatpush.bf16.msra.mxu0 %v616
        %629 = vmatpush.bf16.msra.mxu0 %v615
        %630 = vmatmul.bf16.gmra.mxu0 %v620
        %v631 = vpop.f32.mrf.mxu0
        %v632 = vadd.f32 %v605, %v631
        %v633 = vpop.f32.mrf.mxu0
        %634 = vdwg.mxu0
        %v635 = vld [vmem:[%s552] sm:$0x1]
        %v636 = vpack.c.bf16 %v595, %v595
        %v637 = vpack.c.bf16 %v632, %v632
        %v639 = vperm.slane %v635, 0
        %vm641 = vcmask 64512
        %v643 = vsel %vm641, %v636, 0
        %v646 = vsel %vm641, %v637, 0
        %648 = vmatpush.bf16.xpose.msra.mxu0 0
        %649 = vmatpush.bf16.xpose.msra.mxu0 0
        %650 = vmatpush.bf16.xpose.msra.mxu0 0
        %651 = vmatpush.bf16.xpose.msra.mxu0 0
        %652 = vmatpush.bf16.xpose.msra.mxu0 0
        %653 = vmatpush.bf16.xpose.msra.mxu0 0
        %654 = vmatpush.bf16.xpose.msra.mxu0 0
        %655 = vmatpush.bf16.xpose.msra.mxu0 %v646
        %656 = vmatmul.bf16.gmra.mxu0 %v643
        %v657 = vpop.f32.mrf.mxu0
        %v658 = vadd.f32 %v639, %v657
        %v659 = vpop.f32.mrf.mxu0
        %660 = vdwg.mxu0
        %v661 = vsel %vm641, %v658, -inf
        %662 = vmax.xlane.f32.xlu0 %v661
        %v663 = vpop.xlane.xlu0 %662
        %v664 = vsub.f32 %v658, %v663
        %v665 = vmul.f32 %v664, 1.442695
        %v666 = vpow.pop %v665
        %v667 = vsel %vm641, %v666, 0.0
        %668 = vadd.xlane.f32.xlu0 %v667
        %v669 = vpop.xlane.xlu0 %668
        %v670 = vrcp.pop %v669
        %v671 = vmul.f32 %v666, %v670
        %v672 = vpack.c.bf16 %v671, %v671
        %674 = vrot.lane.b32.xlu0 %v637, 96
        %v675 = vpop.permute.xlu0 %674
        %v677 = vsel %vm641, %v672, 0
        %vm679 = vcmask 1043456
        %v681 = vsel %vm679, %v675, 0
        %683 = vmatpush.bf16.msra.mxu0 0
        %684 = vmatpush.bf16.msra.mxu0 0
        %685 = vmatpush.bf16.msra.mxu0 0
        %686 = vmatpush.bf16.msra.mxu0 0
        %687 = vmatpush.bf16.msra.mxu0 0
        %688 = vmatpush.bf16.msra.mxu0 0
        %689 = vmatpush.bf16.msra.mxu0 0
        %690 = vmatpush.bf16.msra.mxu0 %v681
        %691 = vmatmul.bf16.gmra.mxu0 %v677
        %v692 = vpop.f32.mrf.mxu0
        %v693 = vadd.f32 0.0, %v692
        %v694 = vpop.f32.mrf.mxu0
        %695 = vdwg.mxu0
        %697 = vrot.lane.b32.xlu0 %v636, 120
        %v698 = vpop.permute.xlu0 %697
        %699 = vrot.lane.b32.xlu0 %v637, 120
        %v700 = vpop.permute.xlu0 %699
        %v702 = vsel %vm641, %v698, 0
        %v705 = vsel %vm641, %v700, 0
        %707 = vmatpush.bf16.xpose.msra.mxu0 0
        %708 = vmatpush.bf16.xpose.msra.mxu0 0
        %709 = vmatpush.bf16.xpose.msra.mxu0 0
        %710 = vmatpush.bf16.xpose.msra.mxu0 0
        %711 = vmatpush.bf16.xpose.msra.mxu0 0
        %712 = vmatpush.bf16.xpose.msra.mxu0 0
        %713 = vmatpush.bf16.xpose.msra.mxu0 0
        %714 = vmatpush.bf16.xpose.msra.mxu0 %v705
        %715 = vmatmul.bf16.gmra.mxu0 %v702
        %v716 = vpop.f32.mrf.mxu0
        %v717 = vadd.f32 %v639, %v716
        %v718 = vpop.f32.mrf.mxu0
        %719 = vdwg.mxu0
        %v720 = vsel %vm641, %v717, -inf
        %721 = vmax.xlane.f32.xlu0 %v720
        %v722 = vpop.xlane.xlu0 %721
        %v723 = vsub.f32 %v717, %v722
        %v724 = vmul.f32 %v723, 1.442695
        %v725 = vpow.pop %v724
        %v726 = vsel %vm641, %v725, 0.0
        %727 = vadd.xlane.f32.xlu0 %v726
        %v728 = vpop.xlane.xlu0 %727
        %v729 = vrcp.pop %v728
        %v730 = vmul.f32 %v725, %v729
        %v731 = vpack.c.bf16 %v730, %v730
        %732 = vrot.lane.b32.xlu0 %v637, 88
        %v733 = vpop.permute.xlu0 %732
        %v735 = vsel %vm641, %v731, 0
        %v738 = vsel %vm679, %v733, 0
        %740 = vmatpush.bf16.msra.mxu0 0
        %741 = vmatpush.bf16.msra.mxu0 0
        %742 = vmatpush.bf16.msra.mxu0 0
        %743 = vmatpush.bf16.msra.mxu0 0
        %744 = vmatpush.bf16.msra.mxu0 0
        %745 = vmatpush.bf16.msra.mxu0 0
        %746 = vmatpush.bf16.msra.mxu0 0
        %747 = vmatpush.bf16.msra.mxu0 %v738
        %748 = vmatmul.bf16.gmra.mxu0 %v735
        %v749 = vpop.f32.mrf.mxu0
        %v750 = vadd.f32 0.0, %v749
        %v751 = vpop.f32.mrf.mxu0
        %752 = vdwg.mxu0
        %753 = vrot.lane.b32.xlu0 %v636, 112
        %v754 = vpop.permute.xlu0 %753
        %755 = vrot.lane.b32.xlu0 %v637, 112
        %v756 = vpop.permute.xlu0 %755
        %v758 = vsel %vm641, %v754, 0
        %v761 = vsel %vm641, %v756, 0
        %763 = vmatpush.bf16.xpose.msra.mxu0 0
        %764 = vmatpush.bf16.xpose.msra.mxu0 0
        %765 = vmatpush.bf16.xpose.msra.mxu0 0
        %766 = vmatpush.bf16.xpose.msra.mxu0 0
        %767 = vmatpush.bf16.xpose.msra.mxu0 0
        %768 = vmatpush.bf16.xpose.msra.mxu0 0
        %769 = vmatpush.bf16.xpose.msra.mxu0 0
        %770 = vmatpush.bf16.xpose.msra.mxu0 %v761
        %771 = vmatmul.bf16.gmra.mxu0 %v758
        %v772 = vpop.f32.mrf.mxu0
        %v773 = vadd.f32 %v639, %v772
        %v774 = vpop.f32.mrf.mxu0
        %775 = vdwg.mxu0
        %v776 = vsel %vm641, %v773, -inf
        %777 = vmax.xlane.f32.xlu0 %v776
        %v778 = vpop.xlane.xlu0 %777
        %v779 = vsub.f32 %v773, %v778
        %v780 = vmul.f32 %v779, 1.442695
        %v781 = vpow.pop %v780
        %v782 = vsel %vm641, %v781, 0.0
        %783 = vadd.xlane.f32.xlu0 %v782
        %v784 = vpop.xlane.xlu0 %783
        %v785 = vrcp.pop %v784
        %v786 = vmul.f32 %v781, %v785
        %v787 = vpack.c.bf16 %v786, %v786
        %788 = vrot.lane.b32.xlu0 %v637, 80
        %v789 = vpop.permute.xlu0 %788
        %v791 = vsel %vm641, %v787, 0
        %v794 = vsel %vm679, %v789, 0
        %796 = vmatpush.bf16.msra.mxu0 0
        %797 = vmatpush.bf16.msra.mxu0 0
        %798 = vmatpush.bf16.msra.mxu0 0
        %799 = vmatpush.bf16.msra.mxu0 0
        %800 = vmatpush.bf16.msra.mxu0 0
        %801 = vmatpush.bf16.msra.mxu0 0
        %802 = vmatpush.bf16.msra.mxu0 0
        %803 = vmatpush.bf16.msra.mxu0 %v794
        %804 = vmatmul.bf16.gmra.mxu0 %v791
        %v805 = vpop.f32.mrf.mxu0
        %v806 = vadd.f32 0.0, %v805
        %v807 = vpop.f32.mrf.mxu0
        %808 = vdwg.mxu0
        %809 = vrot.lane.b32.xlu0 %v636, 104
        %v810 = vpop.permute.xlu0 %809
        %811 = vrot.lane.b32.xlu0 %v637, 104
        %v812 = vpop.permute.xlu0 %811
        %v814 = vsel %vm641, %v810, 0
        %v817 = vsel %vm641, %v812, 0
        %819 = vmatpush.bf16.xpose.msra.mxu0 0
        %820 = vmatpush.bf16.xpose.msra.mxu0 0
        %821 = vmatpush.bf16.xpose.msra.mxu0 0
        %822 = vmatpush.bf16.xpose.msra.mxu0 0
        %823 = vmatpush.bf16.xpose.msra.mxu0 0
        %824 = vmatpush.bf16.xpose.msra.mxu0 0
        %825 = vmatpush.bf16.xpose.msra.mxu0 0
        %826 = vmatpush.bf16.xpose.msra.mxu0 %v817
        %827 = vmatmul.bf16.gmra.mxu0 %v814
        %v828 = vpop.f32.mrf.mxu0
        %v829 = vadd.f32 %v639, %v828
        %v830 = vpop.f32.mrf.mxu0
        %831 = vdwg.mxu0
        %v832 = vsel %vm641, %v829, -inf
        %833 = vmax.xlane.f32.xlu0 %v832
        %v834 = vpop.xlane.xlu0 %833
        %v835 = vsub.f32 %v829, %v834
        %v836 = vmul.f32 %v835, 1.442695
        %v837 = vpow.pop %v836
        %v838 = vsel %vm641, %v837, 0.0
        %839 = vadd.xlane.f32.xlu0 %v838
        %v840 = vpop.xlane.xlu0 %839
        %v841 = vrcp.pop %v840
        %v842 = vmul.f32 %v837, %v841
        %v843 = vpack.c.bf16 %v842, %v842
        %844 = vrot.lane.b32.xlu0 %v637, 72
        %v845 = vpop.permute.xlu0 %844
        %v847 = vsel %vm641, %v843, 0
        %v850 = vsel %vm679, %v845, 0
        %852 = vmatpush.bf16.msra.mxu0 0
        %853 = vmatpush.bf16.msra.mxu0 0
        %854 = vmatpush.bf16.msra.mxu0 0
        %855 = vmatpush.bf16.msra.mxu0 0
        %856 = vmatpush.bf16.msra.mxu0 0
        %857 = vmatpush.bf16.msra.mxu0 0
        %858 = vmatpush.bf16.msra.mxu0 0
        %859 = vmatpush.bf16.msra.mxu0 %v850
        %860 = vmatmul.bf16.gmra.mxu0 %v847
        %v861 = vpop.f32.mrf.mxu0
        %v862 = vadd.f32 0.0, %v861
        %v863 = vpop.f32.mrf.mxu0
        %864 = vdwg.mxu0
        %866 = vrot.lane.b32.xlu0 %v750, 8
        %v867 = vpop.permute.xlu0 %866
        %870 = vrot.lane.b32.xlu0 %v806, 16
        %v871 = vpop.permute.xlu0 %870
        %874 = vrot.lane.b32.xlu0 %v862, 24
        %v875 = vpop.permute.xlu0 %874
        %v877 = vsel %vm641, %v693, %v867
        %vm878 = vcmask 130048
        %v879 = vsel %vm878, %v877, %v871
        %vm880 = vcmask 195584
        %v881 = vsel %vm880, %v879, %v875
        %v882 = vld [vmem:[#allocation10] sm:$0xf]
        %v883 = vld [vmem:[#allocation10 + $0x4] sm:$0xf]
        %v884 = vld [vmem:[#allocation10 + $0x8] sm:$0xf]
        %v885 = vld [vmem:[#allocation10 + $0xc] sm:$0xf]
        %v886 = vld [vmem:[#allocation12] sm:$0x1]
        %v887 = vld [vmem:[#allocation13] sm:$0x1]
        %v888 = vld [vmem:[#allocation15] sm:$0x1]
        %v889 = vpack.c.bf16 %v881, %v881
        %v891 = vperm.slane %v886, 0
        %v897 = vunpack.c.l.b16 %v882
        %v898 = vunpack.c.l.b16 %v883
        %v899 = vunpack.c.l.b16 %v884
        %v900 = vunpack.c.l.b16 %v885
        %v901 = vpack.c.b16 %v898, %v897
        %v902 = vpack.c.b16 %v900, %v899
        %v906 = vsel %vm581, %v889, 0
        %908 = vmatpush.bf16.msra.mxu0 0
        %909 = vmatpush.bf16.msra.mxu0 0
        %910 = vmatpush.bf16.msra.mxu0 0
        %911 = vmatpush.bf16.msra.mxu0 0
        %912 = vmatpush.bf16.msra.mxu0 0
        %913 = vmatpush.bf16.msra.mxu0 0
        %914 = vmatpush.bf16.msra.mxu0 %v902
        %915 = vmatpush.bf16.msra.mxu0 %v901
        %916 = vmatmul.bf16.gmra.mxu0 %v906
        %v917 = vpop.f32.mrf.mxu0
        %v918 = vadd.f32 %v891, %v917
        %v919 = vpop.f32.mrf.mxu0
        %920 = vdwg.mxu0
        %v921 = vadd.f32 %v918, %v558
        %v922 = vsel %vm581, %v921, 0.0
        %923 = vadd.xlane.f32.xlu0 %v922
        %v924 = vpop.xlane.xlu0 %923
        %v925 = vrcp.pop 32.0
        %v926 = vmul.f32 32.0, %v925
        %v927 = vsub.f32 1.0, %v926
        %v928 = vmul.f32 %v925, %v927
        %v929 = vadd.f32 %v925, %v928
        %vm930 = vweird.f32 %v925
        %v931 = vsel %vm930, %v925, %v929
        %v932 = vmul.f32 %v924, %v931
        %v933 = vsub.f32 %v921, %v932
        %v934 = vmul.f32 %v933, %v933
        %v935 = vsel %vm581, %v934, 0.0
        %936 = vadd.xlane.f32.xlu0 %v935
        %v937 = vpop.xlane.xlu0 %936
        %v938 = vmul.f32 %v937, %v931
        %v939 = vadd.f32 %v938, 1e-05
        %v940 = vrsqrt.pop %v939
        %v941 = vmul.f32 %v940, %v939
        %v942 = vmul.f32 %v941, %v940
        %v943 = vmul.f32 0.5, %v942
        %v944 = vsub.f32 1.5, %v943
        %v945 = vmul.f32 %v940, %v944
        %vm946 = vweird.f32 %v939
        %vm947 = vweird.f32 %v940
        %vm948 = vmor %vm946, %vm947
        %v949 = vsel %vm948, %v940, %v945
        %v950 = vmul.f32 %v933, %v949
        %v952 = vperm.slane %v887, 0
        %v954 = vmul.f32 %v950, %v952
        %v956 = vperm.slane %v888, 0
        %v958 = vadd.f32 %v954, %v956
        %959 = vst.msk [vmem:[%s556] sm:$0xff] %vm581, %v958
        %p960 = scmp.lt.s32.totalorder %s29, 1
        %s961 = scalar_select %p960, %s29, 1
        %s962 = smul.addr %s961, 8
        %s963 = scalar_lea.vmem %s11, %s962
        // Predicated region
        $region101: #{skip_decode_transformer.10} parent=63 // pred_check
          %p964 = pneg %p293
        $region102: #{skip_decode_transformer.10} parent=63 // pred_check_branch
          %966 = sbr.rel (%p964) target = $region104
        $region103: #{skip_decode_transformer.10} parent=63 // pred_region
          _
        $region104: #{skip_decode_transformer.10} parent=63 // pred_fallthru
          _
      $region64: #{skip_decode_transformer.10} parent=5 // pred_fallthru
        _
      %p967 = scmp.le.s32.totalorder 2, %s24
      // Predicated region
      $region105: #{skip_decode_transformer.10} parent=5 // pred_check
        %p968 = pneg %p967
      $region106: #{skip_decode_transformer.10} parent=5 // pred_check_branch
        %970 = sbr.rel (%p968) target = $region108
      $region107: #{skip_decode_transformer.10} parent=5 // pred_region
        %s971 = ssub.s32 %s24, 2
        // Predicated region
        $region109: #{skip_decode_transformer.10} parent=107 // pred_check
          %p972 = pneg %p299
        $region110: #{skip_decode_transformer.10} parent=107 // pred_check_branch
          %974 = sbr.rel (%p972) target = $region112
        $region111: #{skip_decode_transformer.10} parent=107 // pred_region
          %p975 = scmp.lt.s32.totalorder %s30, 1
          %s976 = scalar_select %p975, %s30, 1
          %s977 = smul.addr %s976, 8
          %s978 = scalar_lea.vmem %s11, %s977
        $region112: #{skip_decode_transformer.10} parent=107 // pred_fallthru
          _
      $region108: #{skip_decode_transformer.10} parent=5 // pred_fallthru
        _
    $region6: #{skip_decode_transformer.10} parent=1 // loop_footer
      %s28 = sadd.s32 1, %s24
    $region7: #{skip_decode_transformer.10} parent=1 // loop_footer_branch
      %23 = sbr.rel target = $region3
    $region8: #{skip_decode_transformer.10} parent=1 // loop_exit
      _
    %979 = vsyncpa [#allocation3], 1
    %s980 = scalar_lea.sflag [#allocation3], 1
    %981 = vsyncpa %s980, 1
    %982 = vsyncpa [#allocation5], 1
    %983 = vsyncpa [#allocation8], 1
    %984 = vsyncpa [#allocation11], 1
    %985 = vsyncpa [#allocation14], 1

// kernel: skip_decode_transformer.12
$region0: #{skip_decode_transformer.12}
  #allocation0 [shape = 'u32[]', space=smem, size = 0x4, offset = 0x4, fixed_abs, tag = 'smem constant byte address 0x4 - core index']
  #allocation1 [shape = 'u32[72,128]{1,0:T(1,128)}', space=vmem, size = 0x9000, scoped, tag = 'internal scratch']
  %s0 = inlined_call_operand.vmem [shape: f32[2,8,32], index: 0, kind: input, shape index: {}]
  %s1 = inlined_call_operand.vmem [shape: f32[2,1,8], index: 1, kind: input, shape index: {}]
  %s2 = inlined_call_operand.vmem [shape: bf16[32,96], index: 2, kind: input, shape index: {}]
  %s3 = inlined_call_operand.hbm [shape: f32[1,96], index: 3, kind: input, shape index: {}]
  %s4 = inlined_call_operand.hbm [shape: bf16[32,32], index: 4, kind: input, shape index: {}]
  %s5 = inlined_call_operand.hbm [shape: f32[1,32], index: 5, kind: input, shape index: {}]
  %s6 = inlined_call_operand.hbm [shape: f32[1,32], index: 6, kind: input, shape index: {}]
  %s7 = inlined_call_operand.hbm [shape: f32[1,32], index: 7, kind: input, shape index: {}]
  %s8 = inlined_call_operand.vmem [shape: f32[2,8,32], index: 8, kind: output, shape index: {}]
  %s9 = sld [smem:[#allocation0]]
  $region85: #{skip_decode_transformer.12} parent=0
    _
  %s11 = ssub.s32 1, %s9
  %s12 = scalar_select 0, %s11, %s9
  $region1: #{skip_decode_transformer.12} parent=0
    #allocation2 [shape = 'u8[512]{0}', space=vmem, size = 0x400, scoped, tag = 'input window, operand 3, single buffered']
    #allocation3 [shape = 's32[2]{0}', space=sflag, size = 0x8, scoped, tag = 'scoped memory for skip_decode_transformer.12']
    #allocation4 [shape = 'u8[8192]{0}', space=vmem, size = 0x2000, scoped, tag = 'input window, operand 4, single buffered']
    #allocation5 [shape = 's32[1]{0}', space=sflag, size = 0x4, scoped, tag = 'scoped memory for skip_decode_transformer.12']
    #allocation6 [shape = 'u8[512]{0}', space=vmem, size = 0x400, scoped, tag = 'input window, operand 5, single buffered']
    #allocation7 [shape = 'u8[512]{0}', space=vmem, size = 0x400, scoped, tag = 'input window, operand 6, single buffered']
    #allocation8 [shape = 's32[1]{0}', space=sflag, size = 0x4, scoped, tag = 'scoped memory for skip_decode_transformer.12']
    #allocation9 [shape = 'u8[512]{0}', space=vmem, size = 0x400, scoped, tag = 'input window, operand 7, single buffered']
    %13 = vsyncpa [#allocation3], 0
    %14 = vsyncpa [#allocation5], 0
    %15 = vsyncpa [#allocation8], 0
    loop: start=0, step=1, limit=4
    $region2: #{skip_decode_transformer.12} parent=1 // loop_pre_header
      _
    $region3: #{skip_decode_transformer.12} parent=1 // loop_header
      %s17 = sphi 0, %s21
      %p18 = scmp.ge.s32.totalorder %s17, 4
      %s27 = sphi 0, %s29
      %s30 = sphi 0, %s27
      %s31 = sphi 0, %s30
      %s47 = sphi 0, %s31
      %s53 = sphi 0, %s55
      %s56 = sphi 0, %s53
      %s57 = sphi 0, %s56
      %s73 = sphi 0, %s57
      %s77 = sphi 0, %s77
      %s79 = sphi 0, %s77
      %s80 = sphi 0, %s79
      %s94 = sphi 0, %s80
      %s98 = sphi 0, %s98
      %s100 = sphi 0, %s98
      %s101 = sphi 0, %s100
      %s115 = sphi 0, %s101
      %s119 = sphi 0, %s119
      %s121 = sphi 0, %s119
      %s122 = sphi 0, %s121
      %s136 = sphi 0, %s122
      %s140 = sphi 0, %s140
      %s142 = sphi 0, %s140
      %s143 = sphi 0, %s142
      %s157 = sphi 0, %s143
      %s161 = sphi 0, %s161
      %s163 = sphi 0, %s161
      %s164 = sphi 0, %s163
      %s178 = sphi 0, %s164
      %s182 = sphi 0, %s182
      %s184 = sphi 0, %s182
      %s185 = sphi 0, %s184
      %s199 = sphi 0, %s185
      %s205 = sphi 0, %s207
      %s208 = sphi 0, %s205
      %s209 = sphi 0, %s208
      %s225 = sphi 0, %s209
    $region4: #{skip_decode_transformer.12} parent=1 // loop_header_branch
      %20 = sbr.rel (%p18) target = $region8
    $region5: #{skip_decode_transformer.12} parent=1 // loop_body
      %s22 = ssub.s32 %s17, 1
      %s23 = ssub.s32 %s17, 2
      %s24 = sadd.s32 %s17, 1
      %s25 = ssub.s32 %s17, %s24
      %p26 = scmp.eq.s32.totalorder %s25, 0
      %s28 = sadd.s32 %s27, 1
      %s29 = scalar_select %p26, %s27, %s28
      %p32 = pneg %p26
      %p33 = scmp.eq.s32.totalorder %s17, 1
      %p34 = por %p32, %p33
      %p35 = scmp.ne.s32.totalorder %s27, %s30
      %p36 = scmp.eq.s32.totalorder %s17, 0
      %p37 = por %p35, %p36
      %p38 = scmp.ne.s32.totalorder %s27, %s30
      %p39 = scmp.eq.s32.totalorder %s22, 1
      %p40 = por %p38, %p39
      %p41 = scmp.ne.s32.totalorder %s30, %s31
      %p42 = scmp.eq.s32.totalorder %s22, 0
      %p43 = por %p41, %p42
      %p44 = scmp.ne.s32.totalorder %s30, %s31
      %p45 = scmp.eq.s32.totalorder %s23, 1
      %p46 = por %p44, %p45
      %p48 = scmp.ne.s32.totalorder %s31, %s47
      %p49 = scmp.eq.s32.totalorder %s23, 0
      %p50 = por %p48, %p49
      %s51 = ssub.s32 %s17, %s24
      %p52 = scmp.eq.s32.totalorder %s51, 0
      %s54 = sadd.s32 %s53, 1
      %s55 = scalar_select %p52, %s53, %s54
      %p58 = pneg %p52
      %p59 = scmp.eq.s32.totalorder %s17, 1
      %p60 = por %p58, %p59
      %p61 = scmp.ne.s32.totalorder %s53, %s56
      %p62 = scmp.eq.s32.totalorder %s17, 0
      %p63 = por %p61, %p62
      %p64 = scmp.ne.s32.totalorder %s53, %s56
      %p65 = scmp.eq.s32.totalorder %s22, 1
      %p66 = por %p64, %p65
      %p67 = scmp.ne.s32.totalorder %s56, %s57
      %p68 = scmp.eq.s32.totalorder %s22, 0
      %p69 = por %p67, %p68
      %p70 = scmp.ne.s32.totalorder %s56, %s57
      %p71 = scmp.eq.s32.totalorder %s23, 1
      %p72 = por %p70, %p71
      %p74 = scmp.ne.s32.totalorder %s57, %s73
      %p75 = scmp.eq.s32.totalorder %s23, 0
      %p76 = por %p74, %p75
      %s78 = sadd.s32 %s77, 1
      %p81 = scmp.eq.s32.totalorder %s17, 1
      %p82 = scmp.ne.s32.totalorder %s77, %s79
      %p83 = scmp.eq.s32.totalorder %s17, 0
      %p84 = por %p82, %p83
      %p85 = scmp.ne.s32.totalorder %s77, %s79
      %p86 = scmp.eq.s32.totalorder %s22, 1
      %p87 = por %p85, %p86
      %p88 = scmp.ne.s32.totalorder %s79, %s80
      %p89 = scmp.eq.s32.totalorder %s22, 0
      %p90 = por %p88, %p89
      %p91 = scmp.ne.s32.totalorder %s79, %s80
      %p92 = scmp.eq.s32.totalorder %s23, 1
      %p93 = por %p91, %p92
      %p95 = scmp.ne.s32.totalorder %s80, %s94
      %p96 = scmp.eq.s32.totalorder %s23, 0
      %p97 = por %p95, %p96
      %s99 = sadd.s32 %s98, 1
      %p102 = scmp.eq.s32.totalorder %s17, 1
      %p103 = scmp.ne.s32.totalorder %s98, %s100
      %p104 = scmp.eq.s32.totalorder %s17, 0
      %p105 = por %p103, %p104
      %p106 = scmp.ne.s32.totalorder %s98, %s100
      %p107 = scmp.eq.s32.totalorder %s22, 1
      %p108 = por %p106, %p107
      %p109 = scmp.ne.s32.totalorder %s100, %s101
      %p110 = scmp.eq.s32.totalorder %s22, 0
      %p111 = por %p109, %p110
      %p112 = scmp.ne.s32.totalorder %s100, %s101
      %p113 = scmp.eq.s32.totalorder %s23, 1
      %p114 = por %p112, %p113
      %p116 = scmp.ne.s32.totalorder %s101, %s115
      %p117 = scmp.eq.s32.totalorder %s23, 0
      %p118 = por %p116, %p117
      %s120 = sadd.s32 %s119, 1
      %p123 = scmp.eq.s32.totalorder %s17, 1
      %p124 = scmp.ne.s32.totalorder %s119, %s121
      %p125 = scmp.eq.s32.totalorder %s17, 0
      %p126 = por %p124, %p125
      %p127 = scmp.ne.s32.totalorder %s119, %s121
      %p128 = scmp.eq.s32.totalorder %s22, 1
      %p129 = por %p127, %p128
      %p130 = scmp.ne.s32.totalorder %s121, %s122
      %p131 = scmp.eq.s32.totalorder %s22, 0
      %p132 = por %p130, %p131
      %p133 = scmp.ne.s32.totalorder %s121, %s122
      %p134 = scmp.eq.s32.totalorder %s23, 1
      %p135 = por %p133, %p134
      %p137 = scmp.ne.s32.totalorder %s122, %s136
      %p138 = scmp.eq.s32.totalorder %s23, 0
      %p139 = por %p137, %p138
      %s141 = sadd.s32 %s140, 1
      %p144 = scmp.eq.s32.totalorder %s17, 1
      %p145 = scmp.ne.s32.totalorder %s140, %s142
      %p146 = scmp.eq.s32.totalorder %s17, 0
      %p147 = por %p145, %p146
      %p148 = scmp.ne.s32.totalorder %s140, %s142
      %p149 = scmp.eq.s32.totalorder %s22, 1
      %p150 = por %p148, %p149
      %p151 = scmp.ne.s32.totalorder %s142, %s143
      %p152 = scmp.eq.s32.totalorder %s22, 0
      %p153 = por %p151, %p152
      %p154 = scmp.ne.s32.totalorder %s142, %s143
      %p155 = scmp.eq.s32.totalorder %s23, 1
      %p156 = por %p154, %p155
      %p158 = scmp.ne.s32.totalorder %s143, %s157
      %p159 = scmp.eq.s32.totalorder %s23, 0
      %p160 = por %p158, %p159
      %s162 = sadd.s32 %s161, 1
      %p165 = scmp.eq.s32.totalorder %s17, 1
      %p166 = scmp.ne.s32.totalorder %s161, %s163
      %p167 = scmp.eq.s32.totalorder %s17, 0
      %p168 = por %p166, %p167
      %p169 = scmp.ne.s32.totalorder %s161, %s163
      %p170 = scmp.eq.s32.totalorder %s22, 1
      %p171 = por %p169, %p170
      %p172 = scmp.ne.s32.totalorder %s163, %s164
      %p173 = scmp.eq.s32.totalorder %s22, 0
      %p174 = por %p172, %p173
      %p175 = scmp.ne.s32.totalorder %s163, %s164
      %p176 = scmp.eq.s32.totalorder %s23, 1
      %p177 = por %p175, %p176
      %p179 = scmp.ne.s32.totalorder %s164, %s178
      %p180 = scmp.eq.s32.totalorder %s23, 0
      %p181 = por %p179, %p180
      %s183 = sadd.s32 %s182, 1
      %p186 = scmp.eq.s32.totalorder %s17, 1
      %p187 = scmp.ne.s32.totalorder %s182, %s184
      %p188 = scmp.eq.s32.totalorder %s17, 0
      %p189 = por %p187, %p188
      %p190 = scmp.ne.s32.totalorder %s182, %s184
      %p191 = scmp.eq.s32.totalorder %s22, 1
      %p192 = por %p190, %p191
      %p193 = scmp.ne.s32.totalorder %s184, %s185
      %p194 = scmp.eq.s32.totalorder %s22, 0
      %p195 = por %p193, %p194
      %p196 = scmp.ne.s32.totalorder %s184, %s185
      %p197 = scmp.eq.s32.totalorder %s23, 1
      %p198 = por %p196, %p197
      %p200 = scmp.ne.s32.totalorder %s185, %s199
      %p201 = scmp.eq.s32.totalorder %s23, 0
      %p202 = por %p200, %p201
      %s203 = ssub.s32 %s17, %s24
      %p204 = scmp.eq.s32.totalorder %s203, 0
      %s206 = sadd.s32 %s205, 1
      %s207 = scalar_select %p204, %s205, %s206
      %p210 = pneg %p204
      %p211 = scmp.eq.s32.totalorder %s17, 1
      %p212 = por %p210, %p211
      %p213 = scmp.ne.s32.totalorder %s205, %s208
      %p214 = scmp.eq.s32.totalorder %s17, 0
      %p215 = por %p213, %p214
      %p216 = scmp.ne.s32.totalorder %s205, %s208
      %p217 = scmp.eq.s32.totalorder %s22, 1
      %p218 = por %p216, %p217
      %p219 = scmp.ne.s32.totalorder %s208, %s209
      %p220 = scmp.eq.s32.totalorder %s22, 0
      %p221 = por %p219, %p220
      %p222 = scmp.ne.s32.totalorder %s208, %s209
      %p223 = scmp.eq.s32.totalorder %s23, 1
      %p224 = por %p222, %p223
      %p226 = scmp.ne.s32.totalorder %s209, %s225
      %p227 = scmp.eq.s32.totalorder %s23, 0
      %p228 = por %p226, %p227
      %p229 = scmp.le.s32.totalorder 1, %s17
      %p230 = scmp.lt.s32.totalorder %s17, 3
      %p231 = pnand %p229, %p230
      %p232 = pneg %p231
      // Predicated region
      $region9: #{skip_decode_transformer.12} parent=5 // pred_check
        _
      $region10: #{skip_decode_transformer.12} parent=5 // pred_check_branch
        %234 = sbr.rel (%p231) target = $region12
      $region11: #{skip_decode_transformer.12} parent=5 // pred_region
        %s235 = ssub.s32 %s17, 1
        // Predicated region
        $region13: #{skip_decode_transformer.12} parent=11 // pred_check
          %p236 = pneg %p90
        $region14: #{skip_decode_transformer.12} parent=11 // pred_check_branch
          %238 = sbr.rel (%p236) target = $region16
        $region15: #{skip_decode_transformer.12} parent=11 // pred_region
          _
        $region16: #{skip_decode_transformer.12} parent=11 // pred_fallthru
          _
        // Predicated region
        $region17: #{skip_decode_transformer.12} parent=11 // pred_check
          %p239 = pneg %p111
        $region18: #{skip_decode_transformer.12} parent=11 // pred_check_branch
          %241 = sbr.rel (%p239) target = $region20
        $region19: #{skip_decode_transformer.12} parent=11 // pred_region
          %243 = vsyncadd [#allocation3], 0
          %s245 = sshll.u32 %s3, 4
          %s246 = int_to_ptr.hbm [resolvable:$true] %s245
          %s247 = sshll.u32 [#allocation2], 4
          %s248 = int_to_ptr.vmem [resolvable:$true] %s247
          %250 = dma.hbm_to_vmem [thread:$0]  %s246, 16, %s248, [#allocation3]
        $region20: #{skip_decode_transformer.12} parent=11 // pred_fallthru
          _
        // Predicated region
        $region21: #{skip_decode_transformer.12} parent=11 // pred_check
          %p251 = pneg %p132
        $region22: #{skip_decode_transformer.12} parent=11 // pred_check_branch
          %253 = sbr.rel (%p251) target = $region24
        $region23: #{skip_decode_transformer.12} parent=11 // pred_region
          %255 = vsyncadd [#allocation5], 0
          %s256 = sshll.u32 %s4, 4
          %s257 = int_to_ptr.hbm [resolvable:$true] %s256
          %s258 = sshll.u32 [#allocation4], 4
          %s259 = int_to_ptr.vmem [resolvable:$true] %s258
          %264 = dma.hbm_to_vmem [thread:$0]  %s257, 256, %s259, [#allocation5], 64, 64, 4
        $region24: #{skip_decode_transformer.12} parent=11 // pred_fallthru
          _
        // Predicated region
        $region25: #{skip_decode_transformer.12} parent=11 // pred_check
          %p265 = pneg %p153
        $region26: #{skip_decode_transformer.12} parent=11 // pred_check_branch
          %267 = sbr.rel (%p265) target = $region28
        $region27: #{skip_decode_transformer.12} parent=11 // pred_region
          %269 = vsyncadd [#allocation5], 0
          %s271 = sshll.u32 %s5, 4
          %s272 = int_to_ptr.hbm [resolvable:$true] %s271
          %s273 = sshll.u32 [#allocation6], 4
          %s274 = int_to_ptr.vmem [resolvable:$true] %s273
          %276 = dma.hbm_to_vmem [thread:$0]  %s272, 16, %s274, [#allocation5]
        $region28: #{skip_decode_transformer.12} parent=11 // pred_fallthru
          _
        // Predicated region
        $region29: #{skip_decode_transformer.12} parent=11 // pred_check
          %p277 = pneg %p174
        $region30: #{skip_decode_transformer.12} parent=11 // pred_check_branch
          %279 = sbr.rel (%p277) target = $region32
        $region31: #{skip_decode_transformer.12} parent=11 // pred_region
          %281 = vsyncadd [#allocation8], 0
          %s283 = sshll.u32 %s6, 4
          %s284 = int_to_ptr.hbm [resolvable:$true] %s283
          %s285 = sshll.u32 [#allocation7], 4
          %s286 = int_to_ptr.vmem [resolvable:$true] %s285
          %288 = dma.hbm_to_vmem [thread:$0]  %s284, 16, %s286, [#allocation8]
        $region32: #{skip_decode_transformer.12} parent=11 // pred_fallthru
          _
        // Predicated region
        $region33: #{skip_decode_transformer.12} parent=11 // pred_check
          %p289 = pneg %p195
        $region34: #{skip_decode_transformer.12} parent=11 // pred_check_branch
          %291 = sbr.rel (%p289) target = $region36
        $region35: #{skip_decode_transformer.12} parent=11 // pred_region
          %293 = vsyncadd [#allocation8], 0
          %s295 = sshll.u32 %s7, 4
          %s296 = int_to_ptr.hbm [resolvable:$true] %s295
          %s297 = sshll.u32 [#allocation9], 4
          %s298 = int_to_ptr.vmem [resolvable:$true] %s297
          %300 = dma.hbm_to_vmem [thread:$0]  %s296, 16, %s298, [#allocation8]
        $region36: #{skip_decode_transformer.12} parent=11 // pred_fallthru
          _
      $region12: #{skip_decode_transformer.12} parent=5 // pred_fallthru
        _
      %p301 = scmp.lt.s32.totalorder %s17, 2
      // Predicated region
      $region37: #{skip_decode_transformer.12} parent=5 // pred_check
        %p302 = pneg %p301
      $region38: #{skip_decode_transformer.12} parent=5 // pred_check_branch
        %304 = sbr.rel (%p302) target = $region40
      $region39: #{skip_decode_transformer.12} parent=5 // pred_region
        // Predicated region
        $region41: #{skip_decode_transformer.12} parent=39 // pred_check
          %p305 = pneg %p37
        $region42: #{skip_decode_transformer.12} parent=39 // pred_check_branch
          %307 = sbr.rel (%p305) target = $region44
        $region43: #{skip_decode_transformer.12} parent=39 // pred_region
          %p308 = scmp.lt.s32.totalorder %s17, 1
          %s309 = scalar_select %p308, %s17, 1
          %s310 = smul.addr %s309, 8
          %s311 = scalar_lea.vmem %s0, %s310
        $region44: #{skip_decode_transformer.12} parent=39 // pred_fallthru
          _
        // Predicated region
        $region45: #{skip_decode_transformer.12} parent=39 // pred_check
          %p312 = pneg %p63
        $region46: #{skip_decode_transformer.12} parent=39 // pred_check_branch
          %314 = sbr.rel (%p312) target = $region48
        $region47: #{skip_decode_transformer.12} parent=39 // pred_region
          %p315 = scmp.lt.s32.totalorder %s17, 1
          %s316 = scalar_select %p315, %s17, 1
          %s317 = scalar_lea.vmem %s1, %s316
        $region48: #{skip_decode_transformer.12} parent=39 // pred_fallthru
          _
      $region40: #{skip_decode_transformer.12} parent=5 // pred_fallthru
        _
      %p318 = scmp.le.s32.totalorder 1, %s17
      %p319 = scmp.lt.s32.totalorder %s17, 3
      %p320 = pnand %p318, %p319
      %p321 = pneg %p320
      // Predicated region
      $region49: #{skip_decode_transformer.12} parent=5 // pred_check
        _
      $region50: #{skip_decode_transformer.12} parent=5 // pred_check_branch
        %323 = sbr.rel (%p320) target = $region52
      $region51: #{skip_decode_transformer.12} parent=5 // pred_region
        %s324 = ssub.s32 %s17, 1
        // Predicated region
        $region53: #{skip_decode_transformer.12} parent=51 // pred_check
          %p325 = pneg %p111
        $region54: #{skip_decode_transformer.12} parent=51 // pred_check_branch
          %327 = sbr.rel (%p325) target = $region56
        $region55: #{skip_decode_transformer.12} parent=51 // pred_region
          %329 = dma.done [#allocation3], 16
        $region56: #{skip_decode_transformer.12} parent=51 // pred_fallthru
          _
        // Predicated region
        $region57: #{skip_decode_transformer.12} parent=51 // pred_check
          %p330 = pneg %p132
        $region58: #{skip_decode_transformer.12} parent=51 // pred_check_branch
          %332 = sbr.rel (%p330) target = $region60
        $region59: #{skip_decode_transformer.12} parent=51 // pred_region
          %334 = dma.done [#allocation5], 256
        $region60: #{skip_decode_transformer.12} parent=51 // pred_fallthru
          _
        // Predicated region
        $region61: #{skip_decode_transformer.12} parent=51 // pred_check
          %p335 = pneg %p153
        $region62: #{skip_decode_transformer.12} parent=51 // pred_check_branch
          %337 = sbr.rel (%p335) target = $region64
        $region63: #{skip_decode_transformer.12} parent=51 // pred_region
          %339 = dma.done [#allocation5], 16
        $region64: #{skip_decode_transformer.12} parent=51 // pred_fallthru
          _
        // Predicated region
        $region65: #{skip_decode_transformer.12} parent=51 // pred_check
          %p340 = pneg %p174
        $region66: #{skip_decode_transformer.12} parent=51 // pred_check_branch
          %342 = sbr.rel (%p340) target = $region68
        $region67: #{skip_decode_transformer.12} parent=51 // pred_region
          %344 = dma.done [#allocation8], 16
        $region68: #{skip_decode_transformer.12} parent=51 // pred_fallthru
          _
        // Predicated region
        $region69: #{skip_decode_transformer.12} parent=51 // pred_check
          %p345 = pneg %p195
        $region70: #{skip_decode_transformer.12} parent=51 // pred_check_branch
          %347 = sbr.rel (%p345) target = $region72
        $region71: #{skip_decode_transformer.12} parent=51 // pred_region
          %349 = dma.done [#allocation8], 16
        $region72: #{skip_decode_transformer.12} parent=51 // pred_fallthru
          _
        %p350 = scmp.lt.s32.totalorder %s22, 1
        %s351 = scalar_select %p350, %s22, 1
        %s352 = smul.addr %s351, 8
        %s353 = scalar_lea.vmem %s0, %s352
        %p354 = pneg %p43
        %p355 = pneg %p40
        %p356 = scmp.lt.s32.totalorder %s22, 1
        %s357 = scalar_select %p356, %s22, 1
        %s358 = scalar_lea.vmem %s1, %s357
        %p359 = pneg %p69
        %p360 = pneg %p66
        %p361 = pneg %p90
        %p362 = pneg %p87
        %p363 = pneg %p111
        %p364 = pneg %p108
        %p365 = pneg %p132
        %p366 = pneg %p129
        %p367 = pneg %p153
        %p368 = pneg %p150
        %p369 = pneg %p174
        %p370 = pneg %p171
        %p371 = pneg %p195
        %p372 = pneg %p192
        %p373 = pneg %p221
        %p374 = pneg %p218
        %p375 = scmp.lt.s32.totalorder %s22, 1
        %s376 = scalar_select %p375, %s22, 1
        %s377 = smul.addr %s376, 8
        %s378 = scalar_lea.vmem %s8, %s377
        %p379 = scmp.lt.s32.totalorder %s22, 1
        %s380 = scalar_select %p379, %s22, 1
        %s381 = smul.addr %s380, 8
        %s382 = scalar_lea.vmem %s0, %s381
        %p383 = scmp.lt.s32.totalorder %s22, 1
        %s384 = scalar_select %p383, %s22, 1
        %s385 = scalar_lea.vmem %s1, %s384
        %p386 = scmp.lt.s32.totalorder %s22, 1
        %s387 = scalar_select %p386, %s22, 1
        %s388 = smul.addr %s387, 8
        %s389 = scalar_lea.vmem %s8, %s388
        %v391 = vld [vmem:[%s382] sm:$0xff]
        %v392 = vpack.c.bf16 %v391, %v391
        %v393 = vld [vmem:[%s2] sm:$0xf]
        %v394 = vld [vmem:[%s2 + $0x4] sm:$0xf]
        %v395 = vld [vmem:[%s2 + $0x8] sm:$0xf]
        %v396 = vld [vmem:[%s2 + $0xc] sm:$0xf]
        %v397 = vld [vmem:[#allocation2] sm:$0x1]
        %v399 = vperm.slane %v397, 0
        %v405 = vunpack.c.l.b16 %v393
        %v406 = vunpack.c.l.b16 %v394
        %v407 = vunpack.c.l.b16 %v395
        %v408 = vunpack.c.l.b16 %v396
        %v409 = vpack.c.b16 %v406, %v405
        %v410 = vpack.c.b16 %v408, %v407
        %vm413 = vcmask 261120
        %v415 = vsel %vm413, %v392, 0
        %417 = vmatpush.bf16.msra.mxu0 0
        %418 = vmatpush.bf16.msra.mxu0 0
        %419 = vmatpush.bf16.msra.mxu0 0
        %420 = vmatpush.bf16.msra.mxu0 0
        %421 = vmatpush.bf16.msra.mxu0 0
        %422 = vmatpush.bf16.msra.mxu0 0
        %423 = vmatpush.bf16.msra.mxu0 %v410
        %424 = vmatpush.bf16.msra.mxu0 %v409
        %425 = vmatmul.bf16.gmra.mxu0 %v415
        %v426 = vpop.f32.mrf.mxu0
        %v427 = vadd.f32 %v399, %v426
        %v428 = vpop.f32.mrf.mxu0
        %429 = vdwg.mxu0
        %v430 = vld [vmem:[%s385] sm:$0x1]
        %v431 = vpack.c.bf16 %v427, %v427
        %v433 = vperm.slane %v430, 0
        %436 = vrot.lane.b32.xlu0 %v431, 96
        %v437 = vpop.permute.xlu0 %436
        %vm438 = vcmask 64512
        %v440 = vsel %vm438, %v431, 0
        %v443 = vsel %vm438, %v437, 0
        %445 = vmatpush.bf16.xpose.msra.mxu0 0
        %446 = vmatpush.bf16.xpose.msra.mxu0 0
        %447 = vmatpush.bf16.xpose.msra.mxu0 0
        %448 = vmatpush.bf16.xpose.msra.mxu0 0
        %449 = vmatpush.bf16.xpose.msra.mxu0 0
        %450 = vmatpush.bf16.xpose.msra.mxu0 0
        %451 = vmatpush.bf16.xpose.msra.mxu0 0
        %452 = vmatpush.bf16.xpose.msra.mxu0 %v443
        %453 = vmatmul.bf16.gmra.mxu0 %v440
        %v454 = vpop.f32.mrf.mxu0
        %v455 = vadd.f32 %v433, %v454
        %v456 = vpop.f32.mrf.mxu0
        %457 = vdwg.mxu0
        %v458 = vsel %vm438, %v455, -inf
        %459 = vmax.xlane.f32.xlu0 %v458
        %v460 = vpop.xlane.xlu0 %459
        %v461 = vsub.f32 %v455, %v460
        %v462 = vmul.f32 %v461, 1.442695
        %v463 = vpow.pop %v462
        %v464 = vsel %vm438, %v463, 0.0
        %465 = vadd.xlane.f32.xlu0 %v464
        %v466 = vpop.xlane.xlu0 %465
        %v467 = vrcp.pop %v466
        %v468 = vmul.f32 %v463, %v467
        %v469 = vpack.c.bf16 %v468, %v468
        %470 = vrot.lane.b32.xlu0 %v431, 64
        %v471 = vpop.permute.xlu0 %470
        %v473 = vsel %vm438, %v469, 0
        %vm475 = vcmask 1043456
        %v477 = vsel %vm475, %v471, 0
        %479 = vmatpush.bf16.msra.mxu0 0
        %480 = vmatpush.bf16.msra.mxu0 0
        %481 = vmatpush.bf16.msra.mxu0 0
        %482 = vmatpush.bf16.msra.mxu0 0
        %483 = vmatpush.bf16.msra.mxu0 0
        %484 = vmatpush.bf16.msra.mxu0 0
        %485 = vmatpush.bf16.msra.mxu0 0
        %486 = vmatpush.bf16.msra.mxu0 %v477
        %487 = vmatmul.bf16.gmra.mxu0 %v473
        %v488 = vpop.f32.mrf.mxu0
        %v489 = vadd.f32 0.0, %v488
        %v490 = vpop.f32.mrf.mxu0
        %491 = vdwg.mxu0
        %492 = vrot.lane.b32.xlu0 %v431, 120
        %v493 = vpop.permute.xlu0 %492
        %494 = vrot.lane.b32.xlu0 %v431, 88
        %v495 = vpop.permute.xlu0 %494
        %v497 = vsel %vm438, %v493, 0
        %v500 = vsel %vm438, %v495, 0
        %502 = vmatpush.bf16.xpose.msra.mxu0 0
        %503 = vmatpush.bf16.xpose.msra.mxu0 0
        %504 = vmatpush.bf16.xpose.msra.mxu0 0
        %505 = vmatpush.bf16.xpose.msra.mxu0 0
        %506 = vmatpush.bf16.xpose.msra.mxu0 0
        %507 = vmatpush.bf16.xpose.msra.mxu0 0
        %508 = vmatpush.bf16.xpose.msra.mxu0 0
        %509 = vmatpush.bf16.xpose.msra.mxu0 %v500
        %510 = vmatmul.bf16.gmra.mxu0 %v497
        %v511 = vpop.f32.mrf.mxu0
        %v512 = vadd.f32 %v433, %v511
        %v513 = vpop.f32.mrf.mxu0
        %514 = vdwg.mxu0
        %v515 = vsel %vm438, %v512, -inf
        %516 = vmax.xlane.f32.xlu0 %v515
        %v517 = vpop.xlane.xlu0 %516
        %v518 = vsub.f32 %v512, %v517
        %v519 = vmul.f32 %v518, 1.442695
        %v520 = vpow.pop %v519
        %v521 = vsel %vm438, %v520, 0.0
        %522 = vadd.xlane.f32.xlu0 %v521
        %v523 = vpop.xlane.xlu0 %522
        %v524 = vrcp.pop %v523
        %v525 = vmul.f32 %v520, %v524
        %v526 = vpack.c.bf16 %v525, %v525
        %527 = vrot.lane.b32.xlu0 %v431, 56
        %v528 = vpop.permute.xlu0 %527
        %v530 = vsel %vm438, %v526, 0
        %v533 = vsel %vm475, %v528, 0
        %535 = vmatpush.bf16.msra.mxu0 0
        %536 = vmatpush.bf16.msra.mxu0 0
        %537 = vmatpush.bf16.msra.mxu0 0
        %538 = vmatpush.bf16.msra.mxu0 0
        %539 = vmatpush.bf16.msra.mxu0 0
        %540 = vmatpush.bf16.msra.mxu0 0
        %541 = vmatpush.bf16.msra.mxu0 0
        %542 = vmatpush.bf16.msra.mxu0 %v533
        %543 = vmatmul.bf16.gmra.mxu0 %v530
        %v544 = vpop.f32.mrf.mxu0
        %v545 = vadd.f32 0.0, %v544
        %v546 = vpop.f32.mrf.mxu0
        %547 = vdwg.mxu0
        %548 = vrot.lane.b32.xlu0 %v431, 112
        %v549 = vpop.permute.xlu0 %548
        %550 = vrot.lane.b32.xlu0 %v431, 80
        %v551 = vpop.permute.xlu0 %550
        %v553 = vsel %vm438, %v549, 0
        %v556 = vsel %vm438, %v551, 0
        %558 = vmatpush.bf16.xpose.msra.mxu0 0
        %559 = vmatpush.bf16.xpose.msra.mxu0 0
        %560 = vmatpush.bf16.xpose.msra.mxu0 0
        %561 = vmatpush.bf16.xpose.msra.mxu0 0
        %562 = vmatpush.bf16.xpose.msra.mxu0 0
        %563 = vmatpush.bf16.xpose.msra.mxu0 0
        %564 = vmatpush.bf16.xpose.msra.mxu0 0
        %565 = vmatpush.bf16.xpose.msra.mxu0 %v556
        %566 = vmatmul.bf16.gmra.mxu0 %v553
        %v567 = vpop.f32.mrf.mxu0
        %v568 = vadd.f32 %v433, %v567
        %v569 = vpop.f32.mrf.mxu0
        %570 = vdwg.mxu0
        %v571 = vsel %vm438, %v568, -inf
        %572 = vmax.xlane.f32.xlu0 %v571
        %v573 = vpop.xlane.xlu0 %572
        %v574 = vsub.f32 %v568, %v573
        %v575 = vmul.f32 %v574, 1.442695
        %v576 = vpow.pop %v575
        %v577 = vsel %vm438, %v576, 0.0
        %578 = vadd.xlane.f32.xlu0 %v577
        %v579 = vpop.xlane.xlu0 %578
        %v580 = vrcp.pop %v579
        %v581 = vmul.f32 %v576, %v580
        %v582 = vpack.c.bf16 %v581, %v581
        %583 = vrot.lane.b32.xlu0 %v431, 48
        %v584 = vpop.permute.xlu0 %583
        %v586 = vsel %vm438, %v582, 0
        %v589 = vsel %vm475, %v584, 0
        %591 = vmatpush.bf16.msra.mxu0 0
        %592 = vmatpush.bf16.msra.mxu0 0
        %593 = vmatpush.bf16.msra.mxu0 0
        %594 = vmatpush.bf16.msra.mxu0 0
        %595 = vmatpush.bf16.msra.mxu0 0
        %596 = vmatpush.bf16.msra.mxu0 0
        %597 = vmatpush.bf16.msra.mxu0 0
        %598 = vmatpush.bf16.msra.mxu0 %v589
        %599 = vmatmul.bf16.gmra.mxu0 %v586
        %v600 = vpop.f32.mrf.mxu0
        %v601 = vadd.f32 0.0, %v600
        %v602 = vpop.f32.mrf.mxu0
        %603 = vdwg.mxu0
        %604 = vrot.lane.b32.xlu0 %v431, 104
        %v605 = vpop.permute.xlu0 %604
        %606 = vrot.lane.b32.xlu0 %v431, 72
        %v607 = vpop.permute.xlu0 %606
        %v609 = vsel %vm438, %v605, 0
        %v612 = vsel %vm438, %v607, 0
        %614 = vmatpush.bf16.xpose.msra.mxu0 0
        %615 = vmatpush.bf16.xpose.msra.mxu0 0
        %616 = vmatpush.bf16.xpose.msra.mxu0 0
        %617 = vmatpush.bf16.xpose.msra.mxu0 0
        %618 = vmatpush.bf16.xpose.msra.mxu0 0
        %619 = vmatpush.bf16.xpose.msra.mxu0 0
        %620 = vmatpush.bf16.xpose.msra.mxu0 0
        %621 = vmatpush.bf16.xpose.msra.mxu0 %v612
        %622 = vmatmul.bf16.gmra.mxu0 %v609
        %v623 = vpop.f32.mrf.mxu0
        %v624 = vadd.f32 %v433, %v623
        %v625 = vpop.f32.mrf.mxu0
        %626 = vdwg.mxu0
        %v627 = vsel %vm438, %v624, -inf
        %628 = vmax.xlane.f32.xlu0 %v627
        %v629 = vpop.xlane.xlu0 %628
        %v630 = vsub.f32 %v624, %v629
        %v631 = vmul.f32 %v630, 1.442695
        %v632 = vpow.pop %v631
        %v633 = vsel %vm438, %v632, 0.0
        %634 = vadd.xlane.f32.xlu0 %v633
        %v635 = vpop.xlane.xlu0 %634
        %v636 = vrcp.pop %v635
        %v637 = vmul.f32 %v632, %v636
        %v638 = vpack.c.bf16 %v637, %v637
        %639 = vrot.lane.b32.xlu0 %v431, 40
        %v640 = vpop.permute.xlu0 %639
        %v642 = vsel %vm438, %v638, 0
        %v645 = vsel %vm475, %v640, 0
        %647 = vmatpush.bf16.msra.mxu0 0
        %648 = vmatpush.bf16.msra.mxu0 0
        %649 = vmatpush.bf16.msra.mxu0 0
        %650 = vmatpush.bf16.msra.mxu0 0
        %651 = vmatpush.bf16.msra.mxu0 0
        %652 = vmatpush.bf16.msra.mxu0 0
        %653 = vmatpush.bf16.msra.mxu0 0
        %654 = vmatpush.bf16.msra.mxu0 %v645
        %655 = vmatmul.bf16.gmra.mxu0 %v642
        %v656 = vpop.f32.mrf.mxu0
        %v657 = vadd.f32 0.0, %v656
        %v658 = vpop.f32.mrf.mxu0
        %659 = vdwg.mxu0
        %661 = vrot.lane.b32.xlu0 %v545, 8
        %v662 = vpop.permute.xlu0 %661
        %665 = vrot.lane.b32.xlu0 %v601, 16
        %v666 = vpop.permute.xlu0 %665
        %669 = vrot.lane.b32.xlu0 %v657, 24
        %v670 = vpop.permute.xlu0 %669
        %v672 = vsel %vm438, %v489, %v662
        %vm673 = vcmask 130048
        %v674 = vsel %vm673, %v672, %v666
        %vm675 = vcmask 195584
        %v676 = vsel %vm675, %v674, %v670
        %v677 = vld [vmem:[#allocation4] sm:$0xf]
        %v678 = vld [vmem:[#allocation4 + $0x4] sm:$0xf]
        %v679 = vld [vmem:[#allocation4 + $0x8] sm:$0xf]
        %v680 = vld [vmem:[#allocation4 + $0xc] sm:$0xf]
        %v681 = vld [vmem:[#allocation6] sm:$0x1]
        %v682 = vld [vmem:[#allocation7] sm:$0x1]
        %v683 = vld [vmem:[#allocation9] sm:$0x1]
        %v684 = vpack.c.bf16 %v676, %v676
        %v686 = vperm.slane %v681, 0
        %v692 = vunpack.c.l.b16 %v677
        %v693 = vunpack.c.l.b16 %v678
        %v694 = vunpack.c.l.b16 %v679
        %v695 = vunpack.c.l.b16 %v680
        %v696 = vpack.c.b16 %v693, %v692
        %v697 = vpack.c.b16 %v695, %v694
        %v701 = vsel %vm413, %v684, 0
        %703 = vmatpush.bf16.msra.mxu0 0
        %704 = vmatpush.bf16.msra.mxu0 0
        %705 = vmatpush.bf16.msra.mxu0 0
        %706 = vmatpush.bf16.msra.mxu0 0
        %707 = vmatpush.bf16.msra.mxu0 0
        %708 = vmatpush.bf16.msra.mxu0 0
        %709 = vmatpush.bf16.msra.mxu0 %v697
        %710 = vmatpush.bf16.msra.mxu0 %v696
        %711 = vmatmul.bf16.gmra.mxu0 %v701
        %v712 = vpop.f32.mrf.mxu0
        %v713 = vadd.f32 %v686, %v712
        %v714 = vpop.f32.mrf.mxu0
        %715 = vdwg.mxu0
        %v716 = vadd.f32 %v713, %v391
        %v717 = vsel %vm413, %v716, 0.0
        %718 = vadd.xlane.f32.xlu0 %v717
        %v719 = vpop.xlane.xlu0 %718
        %v720 = vrcp.pop 32.0
        %v721 = vmul.f32 32.0, %v720
        %v722 = vsub.f32 1.0, %v721
        %v723 = vmul.f32 %v720, %v722
        %v724 = vadd.f32 %v720, %v723
        %vm725 = vweird.f32 %v720
        %v726 = vsel %vm725, %v720, %v724
        %v727 = vmul.f32 %v719, %v726
        %v728 = vsub.f32 %v716, %v727
        %v729 = vmul.f32 %v728, %v728
        %v730 = vsel %vm413, %v729, 0.0
        %731 = vadd.xlane.f32.xlu0 %v730
        %v732 = vpop.xlane.xlu0 %731
        %v733 = vmul.f32 %v732, %v726
        %v734 = vadd.f32 %v733, 1e-05
        %v735 = vrsqrt.pop %v734
        %v736 = vmul.f32 %v735, %v734
        %v737 = vmul.f32 %v736, %v735
        %v738 = vmul.f32 0.5, %v737
        %v739 = vsub.f32 1.5, %v738
        %v740 = vmul.f32 %v735, %v739
        %vm741 = vweird.f32 %v734
        %vm742 = vweird.f32 %v735
        %vm743 = vmor %vm741, %vm742
        %v744 = vsel %vm743, %v735, %v740
        %v745 = vmul.f32 %v728, %v744
        %v747 = vperm.slane %v682, 0
        %v749 = vmul.f32 %v745, %v747
        %v751 = vperm.slane %v683, 0
        %v753 = vadd.f32 %v749, %v751
        %754 = vst.msk [vmem:[%s389] sm:$0xff] %vm413, %v753
        %p755 = scmp.lt.s32.totalorder %s22, 1
        %s756 = scalar_select %p755, %s22, 1
        %s757 = smul.addr %s756, 8
        %s758 = scalar_lea.vmem %s8, %s757
        // Predicated region
        $region73: #{skip_decode_transformer.12} parent=51 // pred_check
          %p759 = pneg %p218
        $region74: #{skip_decode_transformer.12} parent=51 // pred_check_branch
          %761 = sbr.rel (%p759) target = $region76
        $region75: #{skip_decode_transformer.12} parent=51 // pred_region
          _
        $region76: #{skip_decode_transformer.12} parent=51 // pred_fallthru
          _
      $region52: #{skip_decode_transformer.12} parent=5 // pred_fallthru
        _
      %p762 = scmp.le.s32.totalorder 2, %s17
      // Predicated region
      $region77: #{skip_decode_transformer.12} parent=5 // pred_check
        %p763 = pneg %p762
      $region78: #{skip_decode_transformer.12} parent=5 // pred_check_branch
        %765 = sbr.rel (%p763) target = $region80
      $region79: #{skip_decode_transformer.12} parent=5 // pred_region
        %s766 = ssub.s32 %s17, 2
        // Predicated region
        $region81: #{skip_decode_transformer.12} parent=79 // pred_check
          %p767 = pneg %p224
        $region82: #{skip_decode_transformer.12} parent=79 // pred_check_branch
          %769 = sbr.rel (%p767) target = $region84
        $region83: #{skip_decode_transformer.12} parent=79 // pred_region
          %p770 = scmp.lt.s32.totalorder %s23, 1
          %s771 = scalar_select %p770, %s23, 1
          %s772 = smul.addr %s771, 8
          %s773 = scalar_lea.vmem %s8, %s772
        $region84: #{skip_decode_transformer.12} parent=79 // pred_fallthru
          _
      $region80: #{skip_decode_transformer.12} parent=5 // pred_fallthru
        _
    $region6: #{skip_decode_transformer.12} parent=1 // loop_footer
      %s21 = sadd.s32 1, %s17
    $region7: #{skip_decode_transformer.12} parent=1 // loop_footer_branch
      %16 = sbr.rel target = $region3
    $region8: #{skip_decode_transformer.12} parent=1 // loop_exit
      _
    %774 = vsyncpa [#allocation3], 1
    %s775 = scalar_lea.sflag [#allocation3], 1
    %776 = vsyncpa %s775, 1
    %777 = vsyncpa [#allocation5], 1
    %778 = vsyncpa [#allocation8], 1

// kernel: skip_decode_transformer.13
$region0: #{skip_decode_transformer.13}
  #allocation0 [shape = 'u32[]', space=smem, size = 0x4, offset = 0x4, fixed_abs, tag = 'smem constant byte address 0x4 - core index']
  #allocation1 [shape = 'u32[72,128]{1,0:T(1,128)}', space=vmem, size = 0x9000, scoped, tag = 'internal scratch']
  %s0 = inlined_call_operand.vmem [shape: f32[2,8,32], index: 0, kind: input, shape index: {}]
  %s1 = inlined_call_operand.hbm [shape: f32[2,8,32], index: 1, kind: input, shape index: {}]
  %s2 = inlined_call_operand.vmem [shape: f32[2,1,8], index: 2, kind: input, shape index: {}]
  %s3 = inlined_call_operand.hbm [shape: bf16[32,32], index: 3, kind: input, shape index: {}]
  %s4 = inlined_call_operand.vmem [shape: f32[1,32], index: 4, kind: input, shape index: {}]
  %s5 = inlined_call_operand.hbm [shape: bf16[32,64], index: 5, kind: input, shape index: {}]
  %s6 = inlined_call_operand.hbm [shape: f32[1,64], index: 6, kind: input, shape index: {}]
  %s7 = inlined_call_operand.hbm [shape: bf16[32,32], index: 7, kind: input, shape index: {}]
  %s8 = inlined_call_operand.hbm [shape: f32[1,32], index: 8, kind: input, shape index: {}]
  %s9 = inlined_call_operand.hbm [shape: f32[1,32], index: 9, kind: input, shape index: {}]
  %s10 = inlined_call_operand.hbm [shape: f32[1,32], index: 10, kind: input, shape index: {}]
  %s11 = inlined_call_operand.vmem [shape: f32[2,8,32], index: 11, kind: output, shape index: {}]
  %s12 = sld [smem:[#allocation0]]
  $region109: #{skip_decode_transformer.13} parent=0
    _
  %s14 = ssub.s32 1, %s12
  %s15 = scalar_select 0, %s14, %s12
  $region1: #{skip_decode_transformer.13} parent=0
    #allocation2 [shape = 'u8[8192]{0}', space=vmem, size = 0x2000, scoped, tag = 'input window, operand 1']
    #allocation3 [shape = 's32[2]{0}', space=sflag, size = 0x8, scoped, tag = 'scoped memory for skip_decode_transformer.13']
    #allocation4 [shape = 'u8[8192]{0}', space=vmem, size = 0x2000, scoped, tag = 'input window, operand 3, single buffered']
    #allocation5 [shape = 's32[1]{0}', space=sflag, size = 0x4, scoped, tag = 'scoped memory for skip_decode_transformer.13']
    #allocation6 [shape = 'u8[8192]{0}', space=vmem, size = 0x2000, scoped, tag = 'input window, operand 5, single buffered']
    #allocation7 [shape = 'u8[512]{0}', space=vmem, size = 0x400, scoped, tag = 'input window, operand 6, single buffered']
    #allocation8 [shape = 's32[1]{0}', space=sflag, size = 0x4, scoped, tag = 'scoped memory for skip_decode_transformer.13']
    #allocation9 [shape = 'u8[8192]{0}', space=vmem, size = 0x2000, scoped, tag = 'input window, operand 7, single buffered']
    #allocation10 [shape = 'u8[512]{0}', space=vmem, size = 0x400, scoped, tag = 'input window, operand 8, single buffered']
    #allocation11 [shape = 's32[1]{0}', space=sflag, size = 0x4, scoped, tag = 'scoped memory for skip_decode_transformer.13']
    #allocation12 [shape = 'u8[512]{0}', space=vmem, size = 0x400, scoped, tag = 'input window, operand 9, single buffered']
    #allocation13 [shape = 'u8[512]{0}', space=vmem, size = 0x400, scoped, tag = 'input window, operand 10, single buffered']
    #allocation14 [shape = 's32[1]{0}', space=sflag, size = 0x4, scoped, tag = 'scoped memory for skip_decode_transformer.13']
    %16 = vsyncpa [#allocation3], 0
    %s17 = scalar_lea.sflag [#allocation3], 1
    %18 = vsyncpa %s17, 0
    %19 = vsyncpa [#allocation5], 0
    %20 = vsyncpa [#allocation8], 0
    %21 = vsyncpa [#allocation11], 0
    %22 = vsyncpa [#allocation14], 0
    loop: start=0, step=1, limit=4
    $region2: #{skip_decode_transformer.13} parent=1 // loop_pre_header
      _
    $region3: #{skip_decode_transformer.13} parent=1 // loop_header
      %s24 = sphi 0, %s28
      %p25 = scmp.ge.s32.totalorder %s24, 4
      %s34 = sphi 0, %s36
      %s37 = sphi 0, %s34
      %s38 = sphi 0, %s37
      %s54 = sphi 0, %s38
      %s60 = sphi 0, %s62
      %s63 = sphi 0, %s60
      %s64 = sphi 0, %s63
      %s80 = sphi 0, %s64
      %s86 = sphi 0, %s88
      %s89 = sphi 0, %s86
      %s90 = sphi 0, %s89
      %s106 = sphi 0, %s90
      %s110 = sphi 0, %s110
      %s112 = sphi 0, %s110
      %s113 = sphi 0, %s112
      %s127 = sphi 0, %s113
      %s131 = sphi 0, %s131
      %s133 = sphi 0, %s131
      %s134 = sphi 0, %s133
      %s148 = sphi 0, %s134
      %s152 = sphi 0, %s152
      %s154 = sphi 0, %s152
      %s155 = sphi 0, %s154
      %s169 = sphi 0, %s155
      %s173 = sphi 0, %s173
      %s175 = sphi 0, %s173
      %s176 = sphi 0, %s175
      %s190 = sphi 0, %s176
      %s194 = sphi 0, %s194
      %s196 = sphi 0, %s194
      %s197 = sphi 0, %s196
      %s211 = sphi 0, %s197
      %s215 = sphi 0, %s215
      %s217 = sphi 0, %s215
      %s218 = sphi 0, %s217
      %s232 = sphi 0, %s218
      %s236 = sphi 0, %s236
      %s238 = sphi 0, %s236
      %s239 = sphi 0, %s238
      %s253 = sphi 0, %s239
      %s257 = sphi 0, %s257
      %s259 = sphi 0, %s257
      %s260 = sphi 0, %s259
      %s274 = sphi 0, %s260
      %s280 = sphi 0, %s282
      %s283 = sphi 0, %s280
      %s284 = sphi 0, %s283
      %s300 = sphi 0, %s284
    $region4: #{skip_decode_transformer.13} parent=1 // loop_header_branch
      %27 = sbr.rel (%p25) target = $region8
    $region5: #{skip_decode_transformer.13} parent=1 // loop_body
      %s29 = ssub.s32 %s24, 1
      %s30 = ssub.s32 %s24, 2
      %s31 = sadd.s32 %s24, 1
      %s32 = ssub.s32 %s24, %s31
      %p33 = scmp.eq.s32.totalorder %s32, 0
      %s35 = sadd.s32 %s34, 1
      %s36 = scalar_select %p33, %s34, %s35
      %p39 = pneg %p33
      %p40 = scmp.eq.s32.totalorder %s24, 1
      %p41 = por %p39, %p40
      %p42 = scmp.ne.s32.totalorder %s34, %s37
      %p43 = scmp.eq.s32.totalorder %s24, 0
      %p44 = por %p42, %p43
      %p45 = scmp.ne.s32.totalorder %s34, %s37
      %p46 = scmp.eq.s32.totalorder %s29, 1
      %p47 = por %p45, %p46
      %p48 = scmp.ne.s32.totalorder %s37, %s38
      %p49 = scmp.eq.s32.totalorder %s29, 0
      %p50 = por %p48, %p49
      %p51 = scmp.ne.s32.totalorder %s37, %s38
      %p52 = scmp.eq.s32.totalorder %s30, 1
      %p53 = por %p51, %p52
      %p55 = scmp.ne.s32.totalorder %s38, %s54
      %p56 = scmp.eq.s32.totalorder %s30, 0
      %p57 = por %p55, %p56
      %s58 = ssub.s32 %s24, %s31
      %p59 = scmp.eq.s32.totalorder %s58, 0
      %s61 = sadd.s32 %s60, 1
      %s62 = scalar_select %p59, %s60, %s61
      %p65 = pneg %p59
      %p66 = scmp.eq.s32.totalorder %s24, 1
      %p67 = por %p65, %p66
      %p68 = scmp.ne.s32.totalorder %s60, %s63
      %p69 = scmp.eq.s32.totalorder %s24, 0
      %p70 = por %p68, %p69
      %p71 = scmp.ne.s32.totalorder %s60, %s63
      %p72 = scmp.eq.s32.totalorder %s29, 1
      %p73 = por %p71, %p72
      %p74 = scmp.ne.s32.totalorder %s63, %s64
      %p75 = scmp.eq.s32.totalorder %s29, 0
      %p76 = por %p74, %p75
      %p77 = scmp.ne.s32.totalorder %s63, %s64
      %p78 = scmp.eq.s32.totalorder %s30, 1
      %p79 = por %p77, %p78
      %p81 = scmp.ne.s32.totalorder %s64, %s80
      %p82 = scmp.eq.s32.totalorder %s30, 0
      %p83 = por %p81, %p82
      %s84 = ssub.s32 %s24, %s31
      %p85 = scmp.eq.s32.totalorder %s84, 0
      %s87 = sadd.s32 %s86, 1
      %s88 = scalar_select %p85, %s86, %s87
      %p91 = pneg %p85
      %p92 = scmp.eq.s32.totalorder %s24, 1
      %p93 = por %p91, %p92
      %p94 = scmp.ne.s32.totalorder %s86, %s89
      %p95 = scmp.eq.s32.totalorder %s24, 0
      %p96 = por %p94, %p95
      %p97 = scmp.ne.s32.totalorder %s86, %s89
      %p98 = scmp.eq.s32.totalorder %s29, 1
      %p99 = por %p97, %p98
      %p100 = scmp.ne.s32.totalorder %s89, %s90
      %p101 = scmp.eq.s32.totalorder %s29, 0
      %p102 = por %p100, %p101
      %p103 = scmp.ne.s32.totalorder %s89, %s90
      %p104 = scmp.eq.s32.totalorder %s30, 1
      %p105 = por %p103, %p104
      %p107 = scmp.ne.s32.totalorder %s90, %s106
      %p108 = scmp.eq.s32.totalorder %s30, 0
      %p109 = por %p107, %p108
      %s111 = sadd.s32 %s110, 1
      %p114 = scmp.eq.s32.totalorder %s24, 1
      %p115 = scmp.ne.s32.totalorder %s110, %s112
      %p116 = scmp.eq.s32.totalorder %s24, 0
      %p117 = por %p115, %p116
      %p118 = scmp.ne.s32.totalorder %s110, %s112
      %p119 = scmp.eq.s32.totalorder %s29, 1
      %p120 = por %p118, %p119
      %p121 = scmp.ne.s32.totalorder %s112, %s113
      %p122 = scmp.eq.s32.totalorder %s29, 0
      %p123 = por %p121, %p122
      %p124 = scmp.ne.s32.totalorder %s112, %s113
      %p125 = scmp.eq.s32.totalorder %s30, 1
      %p126 = por %p124, %p125
      %p128 = scmp.ne.s32.totalorder %s113, %s127
      %p129 = scmp.eq.s32.totalorder %s30, 0
      %p130 = por %p128, %p129
      %s132 = sadd.s32 %s131, 1
      %p135 = scmp.eq.s32.totalorder %s24, 1
      %p136 = scmp.ne.s32.totalorder %s131, %s133
      %p137 = scmp.eq.s32.totalorder %s24, 0
      %p138 = por %p136, %p137
      %p139 = scmp.ne.s32.totalorder %s131, %s133
      %p140 = scmp.eq.s32.totalorder %s29, 1
      %p141 = por %p139, %p140
      %p142 = scmp.ne.s32.totalorder %s133, %s134
      %p143 = scmp.eq.s32.totalorder %s29, 0
      %p144 = por %p142, %p143
      %p145 = scmp.ne.s32.totalorder %s133, %s134
      %p146 = scmp.eq.s32.totalorder %s30, 1
      %p147 = por %p145, %p146
      %p149 = scmp.ne.s32.totalorder %s134, %s148
      %p150 = scmp.eq.s32.totalorder %s30, 0
      %p151 = por %p149, %p150
      %s153 = sadd.s32 %s152, 1
      %p156 = scmp.eq.s32.totalorder %s24, 1
      %p157 = scmp.ne.s32.totalorder %s152, %s154
      %p158 = scmp.eq.s32.totalorder %s24, 0
      %p159 = por %p157, %p158
      %p160 = scmp.ne.s32.totalorder %s152, %s154
      %p161 = scmp.eq.s32.totalorder %s29, 1
      %p162 = por %p160, %p161
      %p163 = scmp.ne.s32.totalorder %s154, %s155
      %p164 = scmp.eq.s32.totalorder %s29, 0
      %p165 = por %p163, %p164
      %p166 = scmp.ne.s32.totalorder %s154, %s155
      %p167 = scmp.eq.s32.totalorder %s30, 1
      %p168 = por %p166, %p167
      %p170 = scmp.ne.s32.totalorder %s155, %s169
      %p171 = scmp.eq.s32.totalorder %s30, 0
      %p172 = por %p170, %p171
      %s174 = sadd.s32 %s173, 1
      %p177 = scmp.eq.s32.totalorder %s24, 1
      %p178 = scmp.ne.s32.totalorder %s173, %s175
      %p179 = scmp.eq.s32.totalorder %s24, 0
      %p180 = por %p178, %p179
      %p181 = scmp.ne.s32.totalorder %s173, %s175
      %p182 = scmp.eq.s32.totalorder %s29, 1
      %p183 = por %p181, %p182
      %p184 = scmp.ne.s32.totalorder %s175, %s176
      %p185 = scmp.eq.s32.totalorder %s29, 0
      %p186 = por %p184, %p185
      %p187 = scmp.ne.s32.totalorder %s175, %s176
      %p188 = scmp.eq.s32.totalorder %s30, 1
      %p189 = por %p187, %p188
      %p191 = scmp.ne.s32.totalorder %s176, %s190
      %p192 = scmp.eq.s32.totalorder %s30, 0
      %p193 = por %p191, %p192
      %s195 = sadd.s32 %s194, 1
      %p198 = scmp.eq.s32.totalorder %s24, 1
      %p199 = scmp.ne.s32.totalorder %s194, %s196
      %p200 = scmp.eq.s32.totalorder %s24, 0
      %p201 = por %p199, %p200
      %p202 = scmp.ne.s32.totalorder %s194, %s196
      %p203 = scmp.eq.s32.totalorder %s29, 1
      %p204 = por %p202, %p203
      %p205 = scmp.ne.s32.totalorder %s196, %s197
      %p206 = scmp.eq.s32.totalorder %s29, 0
      %p207 = por %p205, %p206
      %p208 = scmp.ne.s32.totalorder %s196, %s197
      %p209 = scmp.eq.s32.totalorder %s30, 1
      %p210 = por %p208, %p209
      %p212 = scmp.ne.s32.totalorder %s197, %s211
      %p213 = scmp.eq.s32.totalorder %s30, 0
      %p214 = por %p212, %p213
      %s216 = sadd.s32 %s215, 1
      %p219 = scmp.eq.s32.totalorder %s24, 1
      %p220 = scmp.ne.s32.totalorder %s215, %s217
      %p221 = scmp.eq.s32.totalorder %s24, 0
      %p222 = por %p220, %p221
      %p223 = scmp.ne.s32.totalorder %s215, %s217
      %p224 = scmp.eq.s32.totalorder %s29, 1
      %p225 = por %p223, %p224
      %p226 = scmp.ne.s32.totalorder %s217, %s218
      %p227 = scmp.eq.s32.totalorder %s29, 0
      %p228 = por %p226, %p227
      %p229 = scmp.ne.s32.totalorder %s217, %s218
      %p230 = scmp.eq.s32.totalorder %s30, 1
      %p231 = por %p229, %p230
      %p233 = scmp.ne.s32.totalorder %s218, %s232
      %p234 = scmp.eq.s32.totalorder %s30, 0
      %p235 = por %p233, %p234
      %s237 = sadd.s32 %s236, 1
      %p240 = scmp.eq.s32.totalorder %s24, 1
      %p241 = scmp.ne.s32.totalorder %s236, %s238
      %p242 = scmp.eq.s32.totalorder %s24, 0
      %p243 = por %p241, %p242
      %p244 = scmp.ne.s32.totalorder %s236, %s238
      %p245 = scmp.eq.s32.totalorder %s29, 1
      %p246 = por %p244, %p245
      %p247 = scmp.ne.s32.totalorder %s238, %s239
      %p248 = scmp.eq.s32.totalorder %s29, 0
      %p249 = por %p247, %p248
      %p250 = scmp.ne.s32.totalorder %s238, %s239
      %p251 = scmp.eq.s32.totalorder %s30, 1
      %p252 = por %p250, %p251
      %p254 = scmp.ne.s32.totalorder %s239, %s253
      %p255 = scmp.eq.s32.totalorder %s30, 0
      %p256 = por %p254, %p255
      %s258 = sadd.s32 %s257, 1
      %p261 = scmp.eq.s32.totalorder %s24, 1
      %p262 = scmp.ne.s32.totalorder %s257, %s259
      %p263 = scmp.eq.s32.totalorder %s24, 0
      %p264 = por %p262, %p263
      %p265 = scmp.ne.s32.totalorder %s257, %s259
      %p266 = scmp.eq.s32.totalorder %s29, 1
      %p267 = por %p265, %p266
      %p268 = scmp.ne.s32.totalorder %s259, %s260
      %p269 = scmp.eq.s32.totalorder %s29, 0
      %p270 = por %p268, %p269
      %p271 = scmp.ne.s32.totalorder %s259, %s260
      %p272 = scmp.eq.s32.totalorder %s30, 1
      %p273 = por %p271, %p272
      %p275 = scmp.ne.s32.totalorder %s260, %s274
      %p276 = scmp.eq.s32.totalorder %s30, 0
      %p277 = por %p275, %p276
      %s278 = ssub.s32 %s24, %s31
      %p279 = scmp.eq.s32.totalorder %s278, 0
      %s281 = sadd.s32 %s280, 1
      %s282 = scalar_select %p279, %s280, %s281
      %p285 = pneg %p279
      %p286 = scmp.eq.s32.totalorder %s24, 1
      %p287 = por %p285, %p286
      %p288 = scmp.ne.s32.totalorder %s280, %s283
      %p289 = scmp.eq.s32.totalorder %s24, 0
      %p290 = por %p288, %p289
      %p291 = scmp.ne.s32.totalorder %s280, %s283
      %p292 = scmp.eq.s32.totalorder %s29, 1
      %p293 = por %p291, %p292
      %p294 = scmp.ne.s32.totalorder %s283, %s284
      %p295 = scmp.eq.s32.totalorder %s29, 0
      %p296 = por %p294, %p295
      %p297 = scmp.ne.s32.totalorder %s283, %s284
      %p298 = scmp.eq.s32.totalorder %s30, 1
      %p299 = por %p297, %p298
      %p301 = scmp.ne.s32.totalorder %s284, %s300
      %p302 = scmp.eq.s32.totalorder %s30, 0
      %p303 = por %p301, %p302
      %p304 = scmp.le.s32.totalorder 1, %s24
      %p305 = scmp.lt.s32.totalorder %s24, 3
      %p306 = pnand %p304, %p305
      %p307 = pneg %p306
      // Predicated region
      $region9: #{skip_decode_transformer.13} parent=5 // pred_check
        _
      $region10: #{skip_decode_transformer.13} parent=5 // pred_check_branch
        %309 = sbr.rel (%p306) target = $region12
      $region11: #{skip_decode_transformer.13} parent=5 // pred_region
        %s310 = ssub.s32 %s24, 1
        // Predicated region
        $region13: #{skip_decode_transformer.13} parent=11 // pred_check
          %p311 = pneg %p123
        $region14: #{skip_decode_transformer.13} parent=11 // pred_check_branch
          %313 = sbr.rel (%p311) target = $region16
        $region15: #{skip_decode_transformer.13} parent=11 // pred_region
          %315 = vsyncadd [#allocation5], 0
          %s316 = sshll.u32 %s3, 4
          %s317 = int_to_ptr.hbm [resolvable:$true] %s316
          %s318 = sshll.u32 [#allocation4], 4
          %s319 = int_to_ptr.vmem [resolvable:$true] %s318
          %324 = dma.hbm_to_vmem [thread:$0]  %s317, 256, %s319, [#allocation5], 64, 64, 4
        $region16: #{skip_decode_transformer.13} parent=11 // pred_fallthru
          _
        // Predicated region
        $region17: #{skip_decode_transformer.13} parent=11 // pred_check
          %p325 = pneg %p144
        $region18: #{skip_decode_transformer.13} parent=11 // pred_check_branch
          %327 = sbr.rel (%p325) target = $region20
        $region19: #{skip_decode_transformer.13} parent=11 // pred_region
          _
        $region20: #{skip_decode_transformer.13} parent=11 // pred_fallthru
          _
        // Predicated region
        $region21: #{skip_decode_transformer.13} parent=11 // pred_check
          %p328 = pneg %p165
        $region22: #{skip_decode_transformer.13} parent=11 // pred_check_branch
          %330 = sbr.rel (%p328) target = $region24
        $region23: #{skip_decode_transformer.13} parent=11 // pred_region
          %332 = vsyncadd [#allocation5], 0
          %s333 = sshll.u32 %s5, 4
          %s334 = int_to_ptr.hbm [resolvable:$true] %s333
          %s335 = sshll.u32 [#allocation6], 4
          %s336 = int_to_ptr.vmem [resolvable:$true] %s335
          %341 = dma.hbm_to_vmem [thread:$0]  %s334, 256, %s336, [#allocation5], 64, 64, 4
        $region24: #{skip_decode_transformer.13} parent=11 // pred_fallthru
          _
        // Predicated region
        $region25: #{skip_decode_transformer.13} parent=11 // pred_check
          %p342 = pneg %p186
        $region26: #{skip_decode_transformer.13} parent=11 // pred_check_branch
          %344 = sbr.rel (%p342) target = $region28
        $region27: #{skip_decode_transformer.13} parent=11 // pred_region
          %346 = vsyncadd [#allocation8], 0
          %s348 = sshll.u32 %s6, 4
          %s349 = int_to_ptr.hbm [resolvable:$true] %s348
          %s350 = sshll.u32 [#allocation7], 4
          %s351 = int_to_ptr.vmem [resolvable:$true] %s350
          %353 = dma.hbm_to_vmem [thread:$0]  %s349, 16, %s351, [#allocation8]
        $region28: #{skip_decode_transformer.13} parent=11 // pred_fallthru
          _
        // Predicated region
        $region29: #{skip_decode_transformer.13} parent=11 // pred_check
          %p354 = pneg %p207
        $region30: #{skip_decode_transformer.13} parent=11 // pred_check_branch
          %356 = sbr.rel (%p354) target = $region32
        $region31: #{skip_decode_transformer.13} parent=11 // pred_region
          %358 = vsyncadd [#allocation8], 0
          %s359 = sshll.u32 %s7, 4
          %s360 = int_to_ptr.hbm [resolvable:$true] %s359
          %s361 = sshll.u32 [#allocation9], 4
          %s362 = int_to_ptr.vmem [resolvable:$true] %s361
          %367 = dma.hbm_to_vmem [thread:$0]  %s360, 256, %s362, [#allocation8], 64, 64, 4
        $region32: #{skip_decode_transformer.13} parent=11 // pred_fallthru
          _
        // Predicated region
        $region33: #{skip_decode_transformer.13} parent=11 // pred_check
          %p368 = pneg %p228
        $region34: #{skip_decode_transformer.13} parent=11 // pred_check_branch
          %370 = sbr.rel (%p368) target = $region36
        $region35: #{skip_decode_transformer.13} parent=11 // pred_region
          %372 = vsyncadd [#allocation11], 0
          %s374 = sshll.u32 %s8, 4
          %s375 = int_to_ptr.hbm [resolvable:$true] %s374
          %s376 = sshll.u32 [#allocation10], 4
          %s377 = int_to_ptr.vmem [resolvable:$true] %s376
          %379 = dma.hbm_to_vmem [thread:$0]  %s375, 16, %s377, [#allocation11]
        $region36: #{skip_decode_transformer.13} parent=11 // pred_fallthru
          _
        // Predicated region
        $region37: #{skip_decode_transformer.13} parent=11 // pred_check
          %p380 = pneg %p249
        $region38: #{skip_decode_transformer.13} parent=11 // pred_check_branch
          %382 = sbr.rel (%p380) target = $region40
        $region39: #{skip_decode_transformer.13} parent=11 // pred_region
          %384 = vsyncadd [#allocation11], 0
          %s386 = sshll.u32 %s9, 4
          %s387 = int_to_ptr.hbm [resolvable:$true] %s386
          %s388 = sshll.u32 [#allocation12], 4
          %s389 = int_to_ptr.vmem [resolvable:$true] %s388
          %391 = dma.hbm_to_vmem [thread:$0]  %s387, 16, %s389, [#allocation11]
        $region40: #{skip_decode_transformer.13} parent=11 // pred_fallthru
          _
        // Predicated region
        $region41: #{skip_decode_transformer.13} parent=11 // pred_check
          %p392 = pneg %p270
        $region42: #{skip_decode_transformer.13} parent=11 // pred_check_branch
          %394 = sbr.rel (%p392) target = $region44
        $region43: #{skip_decode_transformer.13} parent=11 // pred_region
          %396 = vsyncadd [#allocation14], 0
          %s398 = sshll.u32 %s10, 4
          %s399 = int_to_ptr.hbm [resolvable:$true] %s398
          %s400 = sshll.u32 [#allocation13], 4
          %s401 = int_to_ptr.vmem [resolvable:$true] %s400
          %403 = dma.hbm_to_vmem [thread:$0]  %s399, 16, %s401, [#allocation14]
        $region44: #{skip_decode_transformer.13} parent=11 // pred_fallthru
          _
      $region12: #{skip_decode_transformer.13} parent=5 // pred_fallthru
        _
      %p404 = scmp.lt.s32.totalorder %s24, 2
      // Predicated region
      $region45: #{skip_decode_transformer.13} parent=5 // pred_check
        %p405 = pneg %p404
      $region46: #{skip_decode_transformer.13} parent=5 // pred_check_branch
        %407 = sbr.rel (%p405) target = $region48
      $region47: #{skip_decode_transformer.13} parent=5 // pred_region
        // Predicated region
        $region49: #{skip_decode_transformer.13} parent=47 // pred_check
          %p408 = pneg %p44
        $region50: #{skip_decode_transformer.13} parent=47 // pred_check_branch
          %410 = sbr.rel (%p408) target = $region52
        $region51: #{skip_decode_transformer.13} parent=47 // pred_region
          %p411 = scmp.lt.s32.totalorder %s24, 1
          %s412 = scalar_select %p411, %s24, 1
          %s413 = smul.addr %s412, 8
          %s414 = scalar_lea.vmem %s0, %s413
        $region52: #{skip_decode_transformer.13} parent=47 // pred_fallthru
          _
        // Predicated region
        $region53: #{skip_decode_transformer.13} parent=47 // pred_check
          %p415 = pneg %p70
        $region54: #{skip_decode_transformer.13} parent=47 // pred_check_branch
          %417 = sbr.rel (%p415) target = $region56
        $region55: #{skip_decode_transformer.13} parent=47 // pred_region
          %s418 = sand.u32 %s60, 1
          %s419 = scalar_lea.sflag [#allocation3], %s418
          %s420 = sand.u32 %s60, 1
          %s421 = smul.addr %s420, 8
          %s422 = scalar_lea.vmem [#allocation2], %s421
          %424 = vsyncadd %s419, 0
          %s425 = smul.addr %s24, 8
          %s426 = scalar_lea.hbm %s1, %s425
          %s428 = sshll.u32 %s426, 4
          %s429 = int_to_ptr.hbm [resolvable:$true] %s428
          %s430 = sshll.u32 %s422, 4
          %s431 = int_to_ptr.vmem [resolvable:$true] %s430
          %433 = dma.hbm_to_vmem [thread:$0]  %s429, 128, %s431, %s419
        $region56: #{skip_decode_transformer.13} parent=47 // pred_fallthru
          _
        // Predicated region
        $region57: #{skip_decode_transformer.13} parent=47 // pred_check
          %p434 = pneg %p96
        $region58: #{skip_decode_transformer.13} parent=47 // pred_check_branch
          %436 = sbr.rel (%p434) target = $region60
        $region59: #{skip_decode_transformer.13} parent=47 // pred_region
          %p437 = scmp.lt.s32.totalorder %s24, 1
          %s438 = scalar_select %p437, %s24, 1
          %s439 = scalar_lea.vmem %s2, %s438
        $region60: #{skip_decode_transformer.13} parent=47 // pred_fallthru
          _
      $region48: #{skip_decode_transformer.13} parent=5 // pred_fallthru
        _
      %p440 = scmp.le.s32.totalorder 1, %s24
      %p441 = scmp.lt.s32.totalorder %s24, 3
      %p442 = pnand %p440, %p441
      %p443 = pneg %p442
      // Predicated region
      $region61: #{skip_decode_transformer.13} parent=5 // pred_check
        _
      $region62: #{skip_decode_transformer.13} parent=5 // pred_check_branch
        %445 = sbr.rel (%p442) target = $region64
      $region63: #{skip_decode_transformer.13} parent=5 // pred_region
        %s446 = ssub.s32 %s24, 1
        %s447 = sand.u32 %s63, 1
        %s448 = scalar_lea.sflag [#allocation3], %s447
        %s449 = sand.u32 %s63, 1
        %s450 = smul.addr %s449, 8
        %s451 = scalar_lea.vmem [#allocation2], %s450
        // Predicated region
        $region65: #{skip_decode_transformer.13} parent=63 // pred_check
          %p452 = pneg %p76
        $region66: #{skip_decode_transformer.13} parent=63 // pred_check_branch
          %454 = sbr.rel (%p452) target = $region68
        $region67: #{skip_decode_transformer.13} parent=63 // pred_region
          %456 = dma.done %s448, 128
        $region68: #{skip_decode_transformer.13} parent=63 // pred_fallthru
          _
        // Predicated region
        $region69: #{skip_decode_transformer.13} parent=63 // pred_check
          %p457 = pneg %p123
        $region70: #{skip_decode_transformer.13} parent=63 // pred_check_branch
          %459 = sbr.rel (%p457) target = $region72
        $region71: #{skip_decode_transformer.13} parent=63 // pred_region
          %461 = dma.done [#allocation5], 256
        $region72: #{skip_decode_transformer.13} parent=63 // pred_fallthru
          _
        // Predicated region
        $region73: #{skip_decode_transformer.13} parent=63 // pred_check
          %p462 = pneg %p165
        $region74: #{skip_decode_transformer.13} parent=63 // pred_check_branch
          %464 = sbr.rel (%p462) target = $region76
        $region75: #{skip_decode_transformer.13} parent=63 // pred_region
          %466 = dma.done [#allocation5], 256
        $region76: #{skip_decode_transformer.13} parent=63 // pred_fallthru
          _
        // Predicated region
        $region77: #{skip_decode_transformer.13} parent=63 // pred_check
          %p467 = pneg %p186
        $region78: #{skip_decode_transformer.13} parent=63 // pred_check_branch
          %469 = sbr.rel (%p467) target = $region80
        $region79: #{skip_decode_transformer.13} parent=63 // pred_region
          %471 = dma.done [#allocation8], 16
        $region80: #{skip_decode_transformer.13} parent=63 // pred_fallthru
          _
        // Predicated region
        $region81: #{skip_decode_transformer.13} parent=63 // pred_check
          %p472 = pneg %p207
        $region82: #{skip_decode_transformer.13} parent=63 // pred_check_branch
          %474 = sbr.rel (%p472) target = $region84
        $region83: #{skip_decode_transformer.13} parent=63 // pred_region
          %476 = dma.done [#allocation8], 256
        $region84: #{skip_decode_transformer.13} parent=63 // pred_fallthru
          _
        // Predicated region
        $region85: #{skip_decode_transformer.13} parent=63 // pred_check
          %p477 = pneg %p228
        $region86: #{skip_decode_transformer.13} parent=63 // pred_check_branch
          %479 = sbr.rel (%p477) target = $region88
        $region87: #{skip_decode_transformer.13} parent=63 // pred_region
          %481 = dma.done [#allocation11], 16
        $region88: #{skip_decode_transformer.13} parent=63 // pred_fallthru
          _
        // Predicated region
        $region89: #{skip_decode_transformer.13} parent=63 // pred_check
          %p482 = pneg %p249
        $region90: #{skip_decode_transformer.13} parent=63 // pred_check_branch
          %484 = sbr.rel (%p482) target = $region92
        $region91: #{skip_decode_transformer.13} parent=63 // pred_region
          %486 = dma.done [#allocation11], 16
        $region92: #{skip_decode_transformer.13} parent=63 // pred_fallthru
          _
        // Predicated region
        $region93: #{skip_decode_transformer.13} parent=63 // pred_check
          %p487 = pneg %p270
        $region94: #{skip_decode_transformer.13} parent=63 // pred_check_branch
          %489 = sbr.rel (%p487) target = $region96
        $region95: #{skip_decode_transformer.13} parent=63 // pred_region
          %491 = dma.done [#allocation14], 16
        $region96: #{skip_decode_transformer.13} parent=63 // pred_fallthru
          _
        %p492 = scmp.lt.s32.totalorder %s29, 1
        %s493 = scalar_select %p492, %s29, 1
        %s494 = smul.addr %s493, 8
        %s495 = scalar_lea.vmem %s0, %s494
        %p496 = pneg %p50
        %p497 = pneg %p47
        %s498 = sand.u32 %s63, 1
        %s499 = scalar_lea.sflag [#allocation3], %s498
        %s500 = sand.u32 %s63, 1
        %s501 = smul.addr %s500, 8
        %s502 = scalar_lea.vmem [#allocation2], %s501
        %p503 = pneg %p76
        %p504 = pneg %p73
        %p505 = scmp.lt.s32.totalorder %s29, 1
        %s506 = scalar_select %p505, %s29, 1
        %s507 = scalar_lea.vmem %s2, %s506
        %p508 = pneg %p102
        %p509 = pneg %p99
        %p510 = pneg %p123
        %p511 = pneg %p120
        %p512 = pneg %p144
        %p513 = pneg %p141
        %p514 = pneg %p165
        %p515 = pneg %p162
        %p516 = pneg %p186
        %p517 = pneg %p183
        %p518 = pneg %p207
        %p519 = pneg %p204
        %p520 = pneg %p228
        %p521 = pneg %p225
        %p522 = pneg %p249
        %p523 = pneg %p246
        %p524 = pneg %p270
        %p525 = pneg %p267
        %p526 = pneg %p296
        %p527 = pneg %p293
        %p528 = scmp.lt.s32.totalorder %s29, 1
        %s529 = scalar_select %p528, %s29, 1
        %s530 = smul.addr %s529, 8
        %s531 = scalar_lea.vmem %s11, %s530
        %p532 = scmp.lt.s32.totalorder %s29, 1
        %s533 = scalar_select %p532, %s29, 1
        %s534 = smul.addr %s533, 8
        %s535 = scalar_lea.vmem %s0, %s534
        %p536 = scmp.lt.s32.totalorder %s29, 1
        %s537 = scalar_select %p536, %s29, 1
        %s538 = scalar_lea.vmem %s2, %s537
        %p539 = scmp.lt.s32.totalorder %s29, 1
        %s540 = scalar_select %p539, %s29, 1
        %s541 = smul.addr %s540, 8
        %s542 = scalar_lea.vmem %s11, %s541
        %v544 = vld [vmem:[%s535] sm:$0xff]
        %v545 = vld [vmem:[%s451] sm:$0xff]
        %v546 = vpack.c.bf16 %v544, %v544
        %v547 = vld [vmem:[#allocation4] sm:$0xf]
        %v548 = vld [vmem:[#allocation4 + $0x4] sm:$0xf]
        %v549 = vld [vmem:[#allocation4 + $0x8] sm:$0xf]
        %v550 = vld [vmem:[#allocation4 + $0xc] sm:$0xf]
        %v551 = vld [vmem:[%s4] sm:$0x1]
        %v553 = vperm.slane %v551, 0
        %v559 = vunpack.c.l.b16 %v547
        %v560 = vunpack.c.l.b16 %v548
        %v561 = vunpack.c.l.b16 %v549
        %v562 = vunpack.c.l.b16 %v550
        %v563 = vpack.c.b16 %v560, %v559
        %v564 = vpack.c.b16 %v562, %v561
        %vm567 = vcmask 261120
        %v569 = vsel %vm567, %v546, 0
        %571 = vmatpush.bf16.msra.mxu0 0
        %572 = vmatpush.bf16.msra.mxu0 0
        %573 = vmatpush.bf16.msra.mxu0 0
        %574 = vmatpush.bf16.msra.mxu0 0
        %575 = vmatpush.bf16.msra.mxu0 0
        %576 = vmatpush.bf16.msra.mxu0 0
        %577 = vmatpush.bf16.msra.mxu0 %v564
        %578 = vmatpush.bf16.msra.mxu0 %v563
        %579 = vmatmul.bf16.gmra.mxu0 %v569
        %v580 = vpop.f32.mrf.mxu0
        %v581 = vadd.f32 %v553, %v580
        %v582 = vpop.f32.mrf.mxu0
        %583 = vdwg.mxu0
        %v584 = vpack.c.bf16 %v545, %v545
        %v585 = vld [vmem:[#allocation6] sm:$0xf]
        %v586 = vld [vmem:[#allocation6 + $0x4] sm:$0xf]
        %v587 = vld [vmem:[#allocation6 + $0x8] sm:$0xf]
        %v588 = vld [vmem:[#allocation6 + $0xc] sm:$0xf]
        %v589 = vld [vmem:[#allocation7] sm:$0x1]
        %v591 = vperm.slane %v589, 0
        %v597 = vunpack.c.l.b16 %v585
        %v598 = vunpack.c.l.b16 %v586
        %v599 = vunpack.c.l.b16 %v587
        %v600 = vunpack.c.l.b16 %v588
        %v601 = vpack.c.b16 %v598, %v597
        %v602 = vpack.c.b16 %v600, %v599
        %v606 = vsel %vm567, %v584, 0
        %608 = vmatpush.bf16.msra.mxu0 0
        %609 = vmatpush.bf16.msra.mxu0 0
        %610 = vmatpush.bf16.msra.mxu0 0
        %611 = vmatpush.bf16.msra.mxu0 0
        %612 = vmatpush.bf16.msra.mxu0 0
        %613 = vmatpush.bf16.msra.mxu0 0
        %614 = vmatpush.bf16.msra.mxu0 %v602
        %615 = vmatpush.bf16.msra.mxu0 %v601
        %616 = vmatmul.bf16.gmra.mxu0 %v606
        %v617 = vpop.f32.mrf.mxu0
        %v618 = vadd.f32 %v591, %v617
        %v619 = vpop.f32.mrf.mxu0
        %620 = vdwg.mxu0
        %v621 = vld [vmem:[%s538] sm:$0x1]
        %v622 = vpack.c.bf16 %v581, %v581
        %v623 = vpack.c.bf16 %v618, %v618
        %v625 = vperm.slane %v621, 0
        %vm627 = vcmask 64512
        %v629 = vsel %vm627, %v622, 0
        %v632 = vsel %vm627, %v623, 0
        %634 = vmatpush.bf16.xpose.msra.mxu0 0
        %635 = vmatpush.bf16.xpose.msra.mxu0 0
        %636 = vmatpush.bf16.xpose.msra.mxu0 0
        %637 = vmatpush.bf16.xpose.msra.mxu0 0
        %638 = vmatpush.bf16.xpose.msra.mxu0 0
        %639 = vmatpush.bf16.xpose.msra.mxu0 0
        %640 = vmatpush.bf16.xpose.msra.mxu0 0
        %641 = vmatpush.bf16.xpose.msra.mxu0 %v632
        %642 = vmatmul.bf16.gmra.mxu0 %v629
        %v643 = vpop.f32.mrf.mxu0
        %v644 = vadd.f32 %v625, %v643
        %v645 = vpop.f32.mrf.mxu0
        %646 = vdwg.mxu0
        %v647 = vsel %vm627, %v644, -inf
        %648 = vmax.xlane.f32.xlu0 %v647
        %v649 = vpop.xlane.xlu0 %648
        %v650 = vsub.f32 %v644, %v649
        %v651 = vmul.f32 %v650, 1.442695
        %v652 = vpow.pop %v651
        %v653 = vsel %vm627, %v652, 0.0
        %654 = vadd.xlane.f32.xlu0 %v653
        %v655 = vpop.xlane.xlu0 %654
        %v656 = vrcp.pop %v655
        %v657 = vmul.f32 %v652, %v656
        %v658 = vpack.c.bf16 %v657, %v657
        %660 = vrot.lane.b32.xlu0 %v623, 96
        %v661 = vpop.permute.xlu0 %660
        %v663 = vsel %vm627, %v658, 0
        %vm665 = vcmask 1043456
        %v667 = vsel %vm665, %v661, 0
        %669 = vmatpush.bf16.msra.mxu0 0
        %670 = vmatpush.bf16.msra.mxu0 0
        %671 = vmatpush.bf16.msra.mxu0 0
        %672 = vmatpush.bf16.msra.mxu0 0
        %673 = vmatpush.bf16.msra.mxu0 0
        %674 = vmatpush.bf16.msra.mxu0 0
        %675 = vmatpush.bf16.msra.mxu0 0
        %676 = vmatpush.bf16.msra.mxu0 %v667
        %677 = vmatmul.bf16.gmra.mxu0 %v663
        %v678 = vpop.f32.mrf.mxu0
        %v679 = vadd.f32 0.0, %v678
        %v680 = vpop.f32.mrf.mxu0
        %681 = vdwg.mxu0
        %683 = vrot.lane.b32.xlu0 %v622, 120
        %v684 = vpop.permute.xlu0 %683
        %685 = vrot.lane.b32.xlu0 %v623, 120
        %v686 = vpop.permute.xlu0 %685
        %v688 = vsel %vm627, %v684, 0
        %v691 = vsel %vm627, %v686, 0
        %693 = vmatpush.bf16.xpose.msra.mxu0 0
        %694 = vmatpush.bf16.xpose.msra.mxu0 0
        %695 = vmatpush.bf16.xpose.msra.mxu0 0
        %696 = vmatpush.bf16.xpose.msra.mxu0 0
        %697 = vmatpush.bf16.xpose.msra.mxu0 0
        %698 = vmatpush.bf16.xpose.msra.mxu0 0
        %699 = vmatpush.bf16.xpose.msra.mxu0 0
        %700 = vmatpush.bf16.xpose.msra.mxu0 %v691
        %701 = vmatmul.bf16.gmra.mxu0 %v688
        %v702 = vpop.f32.mrf.mxu0
        %v703 = vadd.f32 %v625, %v702
        %v704 = vpop.f32.mrf.mxu0
        %705 = vdwg.mxu0
        %v706 = vsel %vm627, %v703, -inf
        %707 = vmax.xlane.f32.xlu0 %v706
        %v708 = vpop.xlane.xlu0 %707
        %v709 = vsub.f32 %v703, %v708
        %v710 = vmul.f32 %v709, 1.442695
        %v711 = vpow.pop %v710
        %v712 = vsel %vm627, %v711, 0.0
        %713 = vadd.xlane.f32.xlu0 %v712
        %v714 = vpop.xlane.xlu0 %713
        %v715 = vrcp.pop %v714
        %v716 = vmul.f32 %v711, %v715
        %v717 = vpack.c.bf16 %v716, %v716
        %718 = vrot.lane.b32.xlu0 %v623, 88
        %v719 = vpop.permute.xlu0 %718
        %v721 = vsel %vm627, %v717, 0
        %v724 = vsel %vm665, %v719, 0
        %726 = vmatpush.bf16.msra.mxu0 0
        %727 = vmatpush.bf16.msra.mxu0 0
        %728 = vmatpush.bf16.msra.mxu0 0
        %729 = vmatpush.bf16.msra.mxu0 0
        %730 = vmatpush.bf16.msra.mxu0 0
        %731 = vmatpush.bf16.msra.mxu0 0
        %732 = vmatpush.bf16.msra.mxu0 0
        %733 = vmatpush.bf16.msra.mxu0 %v724
        %734 = vmatmul.bf16.gmra.mxu0 %v721
        %v735 = vpop.f32.mrf.mxu0
        %v736 = vadd.f32 0.0, %v735
        %v737 = vpop.f32.mrf.mxu0
        %738 = vdwg.mxu0
        %739 = vrot.lane.b32.xlu0 %v622, 112
        %v740 = vpop.permute.xlu0 %739
        %741 = vrot.lane.b32.xlu0 %v623, 112
        %v742 = vpop.permute.xlu0 %741
        %v744 = vsel %vm627, %v740, 0
        %v747 = vsel %vm627, %v742, 0
        %749 = vmatpush.bf16.xpose.msra.mxu0 0
        %750 = vmatpush.bf16.xpose.msra.mxu0 0
        %751 = vmatpush.bf16.xpose.msra.mxu0 0
        %752 = vmatpush.bf16.xpose.msra.mxu0 0
        %753 = vmatpush.bf16.xpose.msra.mxu0 0
        %754 = vmatpush.bf16.xpose.msra.mxu0 0
        %755 = vmatpush.bf16.xpose.msra.mxu0 0
        %756 = vmatpush.bf16.xpose.msra.mxu0 %v747
        %757 = vmatmul.bf16.gmra.mxu0 %v744
        %v758 = vpop.f32.mrf.mxu0
        %v759 = vadd.f32 %v625, %v758
        %v760 = vpop.f32.mrf.mxu0
        %761 = vdwg.mxu0
        %v762 = vsel %vm627, %v759, -inf
        %763 = vmax.xlane.f32.xlu0 %v762
        %v764 = vpop.xlane.xlu0 %763
        %v765 = vsub.f32 %v759, %v764
        %v766 = vmul.f32 %v765, 1.442695
        %v767 = vpow.pop %v766
        %v768 = vsel %vm627, %v767, 0.0
        %769 = vadd.xlane.f32.xlu0 %v768
        %v770 = vpop.xlane.xlu0 %769
        %v771 = vrcp.pop %v770
        %v772 = vmul.f32 %v767, %v771
        %v773 = vpack.c.bf16 %v772, %v772
        %774 = vrot.lane.b32.xlu0 %v623, 80
        %v775 = vpop.permute.xlu0 %774
        %v777 = vsel %vm627, %v773, 0
        %v780 = vsel %vm665, %v775, 0
        %782 = vmatpush.bf16.msra.mxu0 0
        %783 = vmatpush.bf16.msra.mxu0 0
        %784 = vmatpush.bf16.msra.mxu0 0
        %785 = vmatpush.bf16.msra.mxu0 0
        %786 = vmatpush.bf16.msra.mxu0 0
        %787 = vmatpush.bf16.msra.mxu0 0
        %788 = vmatpush.bf16.msra.mxu0 0
        %789 = vmatpush.bf16.msra.mxu0 %v780
        %790 = vmatmul.bf16.gmra.mxu0 %v777
        %v791 = vpop.f32.mrf.mxu0
        %v792 = vadd.f32 0.0, %v791
        %v793 = vpop.f32.mrf.mxu0
        %794 = vdwg.mxu0
        %795 = vrot.lane.b32.xlu0 %v622, 104
        %v796 = vpop.permute.xlu0 %795
        %797 = vrot.lane.b32.xlu0 %v623, 104
        %v798 = vpop.permute.xlu0 %797
        %v800 = vsel %vm627, %v796, 0
        %v803 = vsel %vm627, %v798, 0
        %805 = vmatpush.bf16.xpose.msra.mxu0 0
        %806 = vmatpush.bf16.xpose.msra.mxu0 0
        %807 = vmatpush.bf16.xpose.msra.mxu0 0
        %808 = vmatpush.bf16.xpose.msra.mxu0 0
        %809 = vmatpush.bf16.xpose.msra.mxu0 0
        %810 = vmatpush.bf16.xpose.msra.mxu0 0
        %811 = vmatpush.bf16.xpose.msra.mxu0 0
        %812 = vmatpush.bf16.xpose.msra.mxu0 %v803
        %813 = vmatmul.bf16.gmra.mxu0 %v800
        %v814 = vpop.f32.mrf.mxu0
        %v815 = vadd.f32 %v625, %v814
        %v816 = vpop.f32.mrf.mxu0
        %817 = vdwg.mxu0
        %v818 = vsel %vm627, %v815, -inf
        %819 = vmax.xlane.f32.xlu0 %v818
        %v820 = vpop.xlane.xlu0 %819
        %v821 = vsub.f32 %v815, %v820
        %v822 = vmul.f32 %v821, 1.442695
        %v823 = vpow.pop %v822
        %v824 = vsel %vm627, %v823, 0.0
        %825 = vadd.xlane.f32.xlu0 %v824
        %v826 = vpop.xlane.xlu0 %825
        %v827 = vrcp.pop %v826
        %v828 = vmul.f32 %v823, %v827
        %v829 = vpack.c.bf16 %v828, %v828
        %830 = vrot.lane.b32.xlu0 %v623, 72
        %v831 = vpop.permute.xlu0 %830
        %v833 = vsel %vm627, %v829, 0
        %v836 = vsel %vm665, %v831, 0
        %838 = vmatpush.bf16.msra.mxu0 0
        %839 = vmatpush.bf16.msra.mxu0 0
        %840 = vmatpush.bf16.msra.mxu0 0
        %841 = vmatpush.bf16.msra.mxu0 0
        %842 = vmatpush.bf16.msra.mxu0 0
        %843 = vmatpush.bf16.msra.mxu0 0
        %844 = vmatpush.bf16.msra.mxu0 0
        %845 = vmatpush.bf16.msra.mxu0 %v836
        %846 = vmatmul.bf16.gmra.mxu0 %v833
        %v847 = vpop.f32.mrf.mxu0
        %v848 = vadd.f32 0.0, %v847
        %v849 = vpop.f32.mrf.mxu0
        %850 = vdwg.mxu0
        %852 = vrot.lane.b32.xlu0 %v736, 8
        %v853 = vpop.permute.xlu0 %852
        %856 = vrot.lane.b32.xlu0 %v792, 16
        %v857 = vpop.permute.xlu0 %856
        %860 = vrot.lane.b32.xlu0 %v848, 24
        %v861 = vpop.permute.xlu0 %860
        %v863 = vsel %vm627, %v679, %v853
        %vm864 = vcmask 130048
        %v865 = vsel %vm864, %v863, %v857
        %vm866 = vcmask 195584
        %v867 = vsel %vm866, %v865, %v861
        %v868 = vld [vmem:[#allocation9] sm:$0xf]
        %v869 = vld [vmem:[#allocation9 + $0x4] sm:$0xf]
        %v870 = vld [vmem:[#allocation9 + $0x8] sm:$0xf]
        %v871 = vld [vmem:[#allocation9 + $0xc] sm:$0xf]
        %v872 = vld [vmem:[#allocation10] sm:$0x1]
        %v873 = vld [vmem:[#allocation12] sm:$0x1]
        %v874 = vld [vmem:[#allocation13] sm:$0x1]
        %v875 = vpack.c.bf16 %v867, %v867
        %v877 = vperm.slane %v872, 0
        %v883 = vunpack.c.l.b16 %v868
        %v884 = vunpack.c.l.b16 %v869
        %v885 = vunpack.c.l.b16 %v870
        %v886 = vunpack.c.l.b16 %v871
        %v887 = vpack.c.b16 %v884, %v883
        %v888 = vpack.c.b16 %v886, %v885
        %v892 = vsel %vm567, %v875, 0
        %894 = vmatpush.bf16.msra.mxu0 0
        %895 = vmatpush.bf16.msra.mxu0 0
        %896 = vmatpush.bf16.msra.mxu0 0
        %897 = vmatpush.bf16.msra.mxu0 0
        %898 = vmatpush.bf16.msra.mxu0 0
        %899 = vmatpush.bf16.msra.mxu0 0
        %900 = vmatpush.bf16.msra.mxu0 %v888
        %901 = vmatpush.bf16.msra.mxu0 %v887
        %902 = vmatmul.bf16.gmra.mxu0 %v892
        %v903 = vpop.f32.mrf.mxu0
        %v904 = vadd.f32 %v877, %v903
        %v905 = vpop.f32.mrf.mxu0
        %906 = vdwg.mxu0
        %v907 = vadd.f32 %v904, %v544
        %v908 = vsel %vm567, %v907, 0.0
        %909 = vadd.xlane.f32.xlu0 %v908
        %v910 = vpop.xlane.xlu0 %909
        %v911 = vrcp.pop 32.0
        %v912 = vmul.f32 32.0, %v911
        %v913 = vsub.f32 1.0, %v912
        %v914 = vmul.f32 %v911, %v913
        %v915 = vadd.f32 %v911, %v914
        %vm916 = vweird.f32 %v911
        %v917 = vsel %vm916, %v911, %v915
        %v918 = vmul.f32 %v910, %v917
        %v919 = vsub.f32 %v907, %v918
        %v920 = vmul.f32 %v919, %v919
        %v921 = vsel %vm567, %v920, 0.0
        %922 = vadd.xlane.f32.xlu0 %v921
        %v923 = vpop.xlane.xlu0 %922
        %v924 = vmul.f32 %v923, %v917
        %v925 = vadd.f32 %v924, 1e-05
        %v926 = vrsqrt.pop %v925
        %v927 = vmul.f32 %v926, %v925
        %v928 = vmul.f32 %v927, %v926
        %v929 = vmul.f32 0.5, %v928
        %v930 = vsub.f32 1.5, %v929
        %v931 = vmul.f32 %v926, %v930
        %vm932 = vweird.f32 %v925
        %vm933 = vweird.f32 %v926
        %vm934 = vmor %vm932, %vm933
        %v935 = vsel %vm934, %v926, %v931
        %v936 = vmul.f32 %v919, %v935
        %v938 = vperm.slane %v873, 0
        %v940 = vmul.f32 %v936, %v938
        %v942 = vperm.slane %v874, 0
        %v944 = vadd.f32 %v940, %v942
        %945 = vst.msk [vmem:[%s542] sm:$0xff] %vm567, %v944
        %p946 = scmp.lt.s32.totalorder %s29, 1
        %s947 = scalar_select %p946, %s29, 1
        %s948 = smul.addr %s947, 8
        %s949 = scalar_lea.vmem %s11, %s948
        // Predicated region
        $region97: #{skip_decode_transformer.13} parent=63 // pred_check
          %p950 = pneg %p293
        $region98: #{skip_decode_transformer.13} parent=63 // pred_check_branch
          %952 = sbr.rel (%p950) target = $region100
        $region99: #{skip_decode_transformer.13} parent=63 // pred_region
          _
        $region100: #{skip_decode_transformer.13} parent=63 // pred_fallthru
          _
      $region64: #{skip_decode_transformer.13} parent=5 // pred_fallthru
        _
      %p953 = scmp.le.s32.totalorder 2, %s24
      // Predicated region
      $region101: #{skip_decode_transformer.13} parent=5 // pred_check
        %p954 = pneg %p953
      $region102: #{skip_decode_transformer.13} parent=5 // pred_check_branch
        %956 = sbr.rel (%p954) target = $region104
      $region103: #{skip_decode_transformer.13} parent=5 // pred_region
        %s957 = ssub.s32 %s24, 2
        // Predicated region
        $region105: #{skip_decode_transformer.13} parent=103 // pred_check
          %p958 = pneg %p299
        $region106: #{skip_decode_transformer.13} parent=103 // pred_check_branch
          %960 = sbr.rel (%p958) target = $region108
        $region107: #{skip_decode_transformer.13} parent=103 // pred_region
          %p961 = scmp.lt.s32.totalorder %s30, 1
          %s962 = scalar_select %p961, %s30, 1
          %s963 = smul.addr %s962, 8
          %s964 = scalar_lea.vmem %s11, %s963
        $region108: #{skip_decode_transformer.13} parent=103 // pred_fallthru
          _
      $region104: #{skip_decode_transformer.13} parent=5 // pred_fallthru
        _
    $region6: #{skip_decode_transformer.13} parent=1 // loop_footer
      %s28 = sadd.s32 1, %s24
    $region7: #{skip_decode_transformer.13} parent=1 // loop_footer_branch
      %23 = sbr.rel target = $region3
    $region8: #{skip_decode_transformer.13} parent=1 // loop_exit
      _
    %965 = vsyncpa [#allocation3], 1
    %s966 = scalar_lea.sflag [#allocation3], 1
    %967 = vsyncpa %s966, 1
    %968 = vsyncpa [#allocation5], 1
    %969 = vsyncpa [#allocation8], 1
    %970 = vsyncpa [#allocation11], 1
    %971 = vsyncpa [#allocation14], 1

// kernel: skip_decode_transformer.14
$region0: #{skip_decode_transformer.14}
  #allocation0 [shape = 'u32[]', space=smem, size = 0x4, offset = 0x4, fixed_abs, tag = 'smem constant byte address 0x4 - core index']
  #allocation1 [shape = 'u32[72,128]{1,0:T(1,128)}', space=vmem, size = 0x9000, scoped, tag = 'internal scratch']
  #allocation2 [shape = 'f32[16,32]{1,0:T(8,128)}', space=vmem, size = 0x2000, scoped, tag = 'scratch operand']
  %s0 = inlined_call_operand.vmem [shape: f32[16,32], index: 0, kind: input, shape index: {}]
  %s1 = inlined_call_operand.vmem [shape: bf16[32,64], index: 1, kind: input, shape index: {}]
  %s2 = inlined_call_operand.vmem [shape: f32[1,64], index: 2, kind: input, shape index: {}]
  %s3 = inlined_call_operand.vmem [shape: bf16[64,32], index: 3, kind: input, shape index: {}]
  %s4 = inlined_call_operand.vmem [shape: f32[1,32], index: 4, kind: input, shape index: {}]
  %s5 = inlined_call_operand.vmem [shape: f32[1,32], index: 5, kind: input, shape index: {}]
  %s6 = inlined_call_operand.vmem [shape: f32[1,32], index: 6, kind: input, shape index: {}]
  %s7 = inlined_call_operand.vmem [shape: f32[16,32], index: 7, kind: output, shape index: {}]
  %s8 = sld [smem:[#allocation0]]
  $region46: #{skip_decode_transformer.14} parent=0
    _
  %s10 = ssub.s32 1, %s8
  %s11 = scalar_select 0, %s10, %s8
  // Predicated region
  $region2: #{skip_decode_transformer.14} parent=0 // pred_check
    _
  $region3: #{skip_decode_transformer.14} parent=0 // pred_check_branch
    %13 = sbr.rel (0) target = $region5
  $region4: #{skip_decode_transformer.14} parent=0 // pred_region
    _
  $region5: #{skip_decode_transformer.14} parent=0 // pred_fallthru
    _
  // Predicated region
  $region6: #{skip_decode_transformer.14} parent=0 // pred_check
    _
  $region7: #{skip_decode_transformer.14} parent=0 // pred_check_branch
    %15 = sbr.rel (0) target = $region9
  $region8: #{skip_decode_transformer.14} parent=0 // pred_region
    _
  $region9: #{skip_decode_transformer.14} parent=0 // pred_fallthru
    _
  // Predicated region
  $region10: #{skip_decode_transformer.14} parent=0 // pred_check
    _
  $region11: #{skip_decode_transformer.14} parent=0 // pred_check_branch
    %17 = sbr.rel (0) target = $region13
  $region12: #{skip_decode_transformer.14} parent=0 // pred_region
    _
  $region13: #{skip_decode_transformer.14} parent=0 // pred_fallthru
    _
  // Predicated region
  $region14: #{skip_decode_transformer.14} parent=0 // pred_check
    _
  $region15: #{skip_decode_transformer.14} parent=0 // pred_check_branch
    %19 = sbr.rel (0) target = $region17
  $region16: #{skip_decode_transformer.14} parent=0 // pred_region
    _
  $region17: #{skip_decode_transformer.14} parent=0 // pred_fallthru
    _
  // Predicated region
  $region18: #{skip_decode_transformer.14} parent=0 // pred_check
    _
  $region19: #{skip_decode_transformer.14} parent=0 // pred_check_branch
    %21 = sbr.rel (0) target = $region21
  $region20: #{skip_decode_transformer.14} parent=0 // pred_region
    _
  $region21: #{skip_decode_transformer.14} parent=0 // pred_fallthru
    _
  // Predicated region
  $region22: #{skip_decode_transformer.14} parent=0 // pred_check
    _
  $region23: #{skip_decode_transformer.14} parent=0 // pred_check_branch
    %23 = sbr.rel (0) target = $region25
  $region24: #{skip_decode_transformer.14} parent=0 // pred_region
    _
  $region25: #{skip_decode_transformer.14} parent=0 // pred_fallthru
    _
  // Predicated region
  $region26: #{skip_decode_transformer.14} parent=0 // pred_check
    _
  $region27: #{skip_decode_transformer.14} parent=0 // pred_check_branch
    %25 = sbr.rel (0) target = $region29
  $region28: #{skip_decode_transformer.14} parent=0 // pred_region
    _
  $region29: #{skip_decode_transformer.14} parent=0 // pred_fallthru
    _
  %p27 = scmp.eq.s32.totalorder 0, 0
  // Predicated region
  $region30: #{skip_decode_transformer.14} parent=0 // pred_check
    %p28 = pneg %p27
  $region31: #{skip_decode_transformer.14} parent=0 // pred_check_branch
    %30 = sbr.rel (%p28) target = $region33
  $region32: #{skip_decode_transformer.14} parent=0 // pred_region
    %vm31 = vcmask 261120
    %32 = vst.msk [vmem:[#allocation2] sm:$0xff] %vm31, 0.0
    %33 = vst.msk [vmem:[#allocation2 + $0x8] sm:$0xff] %vm31, 0.0
  $region33: #{skip_decode_transformer.14} parent=0 // pred_fallthru
    _
  %v34 = vld [vmem:[%s0] sm:$0xff]
  %v35 = vld [vmem:[%s0 + $0x8] sm:$0xff]
  %v36 = vpack.c.bf16 %v35, %v34
  %v37 = vld [vmem:[%s1] sm:$0xf]
  %v38 = vld [vmem:[%s1 + $0x4] sm:$0xf]
  %v39 = vld [vmem:[%s1 + $0x8] sm:$0xf]
  %v40 = vld [vmem:[%s1 + $0xc] sm:$0xf]
  %v41 = vld [vmem:[%s2] sm:$0x1]
  %v43 = vperm.slane %v41, 0
  %v49 = vunpack.c.l.b16 %v37
  %v50 = vunpack.c.l.b16 %v38
  %v51 = vunpack.c.l.b16 %v39
  %v52 = vunpack.c.l.b16 %v40
  %v53 = vpack.c.b16 %v50, %v49
  %v54 = vpack.c.b16 %v52, %v51
  %vm57 = vcmask 261120
  %v59 = vsel %vm57, %v36, 0
  %61 = vmatpush.bf16.msra.mxu0 0
  %62 = vmatpush.bf16.msra.mxu0 0
  %63 = vmatpush.bf16.msra.mxu0 0
  %64 = vmatpush.bf16.msra.mxu0 0
  %65 = vmatpush.bf16.msra.mxu0 0
  %66 = vmatpush.bf16.msra.mxu0 0
  %67 = vmatpush.bf16.msra.mxu0 %v54
  %68 = vmatpush.bf16.msra.mxu0 %v53
  %69 = vmatmul.bf16.gmra.mxu0 %v59
  %v70 = vpop.f32.mrf.mxu0
  %v71 = vadd.f32 %v43, %v70
  %v72 = vpop.f32.mrf.mxu0
  %v73 = vadd.f32 %v43, %v72
  %74 = vdwg.mxu0
  %v75 = vmax.f32 %v71, 0.0
  %v76 = vmax.f32 %v73, 0.0
  %v77 = vld [vmem:[#allocation2] sm:$0xff]
  %v78 = vld [vmem:[#allocation2 + $0x8] sm:$0xff]
  %v79 = vpack.c.bf16 %v76, %v75
  %v80 = vld [vmem:[%s3] sm:$0xf]
  %v81 = vld [vmem:[%s3 + $0x4] sm:$0xf]
  %v82 = vld [vmem:[%s3 + $0x8] sm:$0xf]
  %v83 = vld [vmem:[%s3 + $0xc] sm:$0xf]
  %v84 = vld [vmem:[%s3 + $0x10] sm:$0xf]
  %v85 = vld [vmem:[%s3 + $0x14] sm:$0xf]
  %v86 = vld [vmem:[%s3 + $0x18] sm:$0xf]
  %v87 = vld [vmem:[%s3 + $0x1c] sm:$0xf]
  %v96 = vunpack.c.l.b16 %v80
  %v97 = vunpack.c.l.b16 %v81
  %v98 = vunpack.c.l.b16 %v82
  %v99 = vunpack.c.l.b16 %v83
  %v100 = vunpack.c.l.b16 %v84
  %v101 = vunpack.c.l.b16 %v85
  %v102 = vunpack.c.l.b16 %v86
  %v103 = vunpack.c.l.b16 %v87
  %v104 = vpack.c.b16 %v97, %v96
  %v105 = vpack.c.b16 %v99, %v98
  %v106 = vpack.c.b16 %v101, %v100
  %v107 = vpack.c.b16 %v103, %v102
  %vm112 = vcmask 523264
  %v114 = vsel %vm112, %v79, 0
  %116 = vmatpush.bf16.msra.mxu0 0
  %117 = vmatpush.bf16.msra.mxu0 0
  %118 = vmatpush.bf16.msra.mxu0 0
  %119 = vmatpush.bf16.msra.mxu0 0
  %120 = vmatpush.bf16.msra.mxu0 %v107
  %121 = vmatpush.bf16.msra.mxu0 %v106
  %122 = vmatpush.bf16.msra.mxu0 %v105
  %123 = vmatpush.bf16.msra.mxu0 %v104
  %124 = vmatmul.bf16.gmra.mxu0 %v114
  %v125 = vpop.f32.mrf.mxu0
  %v126 = vadd.f32 0.0, %v125
  %v127 = vpop.f32.mrf.mxu0
  %v128 = vadd.f32 0.0, %v127
  %129 = vdwg.mxu0
  %v130 = vadd.f32 %v77, %v126
  %v131 = vadd.f32 %v78, %v128
  %132 = vst.msk [vmem:[#allocation2] sm:$0xff] %vm57, %v130
  %133 = vst.msk [vmem:[#allocation2 + $0x8] sm:$0xff] %vm57, %v131
  // Predicated region
  $region34: #{skip_decode_transformer.14} parent=0 // pred_check
    %p134 = pneg %p27
  $region35: #{skip_decode_transformer.14} parent=0 // pred_check_branch
    %136 = sbr.rel (%p134) target = $region37
  $region36: #{skip_decode_transformer.14} parent=0 // pred_region
    %v137 = vld [vmem:[#allocation2] sm:$0xff]
    %v138 = vld [vmem:[#allocation2 + $0x8] sm:$0xff]
    %v139 = vld [vmem:[%s4] sm:$0x1]
    %v141 = vperm.slane %v139, 0
    %v143 = vadd.f32 %v137, %v141
    %v144 = vadd.f32 %v138, %v141
    %v145 = vld [vmem:[%s0] sm:$0xff]
    %v146 = vld [vmem:[%s0 + $0x8] sm:$0xff]
    %v147 = vadd.f32 %v143, %v145
    %v148 = vadd.f32 %v144, %v146
    %v149 = vld [vmem:[%s5] sm:$0x1]
    %v150 = vld [vmem:[%s6] sm:$0x1]
    %v151 = vsel %vm57, %v147, 0.0
    %152 = vadd.xlane.f32.xlu0 %v151
    %v153 = vpop.xlane.xlu0 %152
    %v154 = vsel %vm57, %v148, 0.0
    %155 = vadd.xlane.f32.xlu0 %v154
    %v156 = vpop.xlane.xlu0 %155
    %v157 = vrcp.pop 32.0
    %v158 = vmul.f32 32.0, %v157
    %v159 = vsub.f32 1.0, %v158
    %v160 = vmul.f32 %v157, %v159
    %v161 = vadd.f32 %v157, %v160
    %vm162 = vweird.f32 %v157
    %v163 = vsel %vm162, %v157, %v161
    %v164 = vmul.f32 %v153, %v163
    %v165 = vmul.f32 %v156, %v163
    %v166 = vsub.f32 %v147, %v164
    %v167 = vsub.f32 %v148, %v165
    %v168 = vmul.f32 %v166, %v166
    %v169 = vmul.f32 %v167, %v167
    %v170 = vsel %vm57, %v168, 0.0
    %171 = vadd.xlane.f32.xlu0 %v170
    %v172 = vpop.xlane.xlu0 %171
    %v173 = vsel %vm57, %v169, 0.0
    %174 = vadd.xlane.f32.xlu0 %v173
    %v175 = vpop.xlane.xlu0 %174
    %v176 = vmul.f32 %v172, %v163
    %v177 = vmul.f32 %v175, %v163
    %v178 = vadd.f32 %v176, 1e-05
    %v179 = vadd.f32 %v177, 1e-05
    %v180 = vrsqrt.pop %v178
    %v181 = vmul.f32 %v180, %v178
    %v182 = vmul.f32 %v181, %v180
    %v183 = vmul.f32 0.5, %v182
    %v184 = vsub.f32 1.5, %v183
    %v185 = vmul.f32 %v180, %v184
    %vm186 = vweird.f32 %v178
    %vm187 = vweird.f32 %v180
    %vm188 = vmor %vm186, %vm187
    %v189 = vsel %vm188, %v180, %v185
    %v190 = vrsqrt.pop %v179
    %v191 = vmul.f32 %v190, %v179
    %v192 = vmul.f32 %v191, %v190
    %v193 = vmul.f32 0.5, %v192
    %v194 = vsub.f32 1.5, %v193
    %v195 = vmul.f32 %v190, %v194
    %vm196 = vweird.f32 %v179
    %vm197 = vweird.f32 %v190
    %vm198 = vmor %vm196, %vm197
    %v199 = vsel %vm198, %v190, %v195
    %v200 = vmul.f32 %v166, %v189
    %v201 = vmul.f32 %v167, %v199
    %v203 = vperm.slane %v149, 0
    %v205 = vmul.f32 %v200, %v203
    %v206 = vmul.f32 %v201, %v203
    %v208 = vperm.slane %v150, 0
    %v210 = vadd.f32 %v205, %v208
    %v211 = vadd.f32 %v206, %v208
    %212 = vst.msk [vmem:[%s7] sm:$0xff] %vm57, %v210
    %213 = vst.msk [vmem:[%s7 + $0x8] sm:$0xff] %vm57, %v211
  $region37: #{skip_decode_transformer.14} parent=0 // pred_fallthru
    _
  // Predicated region
  $region38: #{skip_decode_transformer.14} parent=0 // pred_check
    _
  $region39: #{skip_decode_transformer.14} parent=0 // pred_check_branch
    %215 = sbr.rel (0) target = $region41
  $region40: #{skip_decode_transformer.14} parent=0 // pred_region
    _
  $region41: #{skip_decode_transformer.14} parent=0 // pred_fallthru
    _
  // Predicated region
  $region42: #{skip_decode_transformer.14} parent=0 // pred_check
    _
  $region43: #{skip_decode_transformer.14} parent=0 // pred_check_branch
    %217 = sbr.rel (0) target = $region45
  $region44: #{skip_decode_transformer.14} parent=0 // pred_region
    _
  $region45: #{skip_decode_transformer.14} parent=0 // pred_fallthru
    _

// kernel: skip_decode_transformer.17
$region0: #{skip_decode_transformer.17}
  #allocation0 [shape = 'u32[]', space=smem, size = 0x4, offset = 0x4, fixed_abs, tag = 'smem constant byte address 0x4 - core index']
  #allocation1 [shape = 'u32[72,128]{1,0:T(1,128)}', space=vmem, size = 0x9000, scoped, tag = 'internal scratch']
  #allocation2 [shape = 'f32[16,32]{1,0:T(8,128)}', space=vmem, size = 0x2000, scoped, tag = 'scratch operand']
  %s0 = inlined_call_operand.vmem [shape: f32[16,32], index: 0, kind: input, shape index: {}]
  %s1 = inlined_call_operand.vmem [shape: bf16[32,64], index: 1, kind: input, shape index: {}]
  %s2 = inlined_call_operand.vmem [shape: f32[1,64], index: 2, kind: input, shape index: {}]
  %s3 = inlined_call_operand.vmem [shape: bf16[64,32], index: 3, kind: input, shape index: {}]
  %s4 = inlined_call_operand.vmem [shape: f32[1,32], index: 4, kind: input, shape index: {}]
  %s5 = inlined_call_operand.vmem [shape: f32[1,32], index: 5, kind: input, shape index: {}]
  %s6 = inlined_call_operand.vmem [shape: f32[1,32], index: 6, kind: input, shape index: {}]
  %s7 = inlined_call_operand.hbm [shape: f32[16,32], index: 7, kind: output, shape index: {}]
  %s8 = sld [smem:[#allocation0]]
  $region46: #{skip_decode_transformer.17} parent=0
    _
  %s10 = ssub.s32 1, %s8
  %s11 = scalar_select 0, %s10, %s8
  $region1: #{skip_decode_transformer.17} parent=0
    #allocation3 [shape = 'u8[8192]{0}', space=vmem, size = 0x2000, scoped, tag = 'output window, operand 0, single buffered']
    #allocation4 [shape = 's32[1]{0}', space=sflag, size = 0x4, scoped, tag = 'scoped memory for skip_decode_transformer.17']
    %12 = vsyncpa [#allocation4], 0
    // Predicated region
    $region2: #{skip_decode_transformer.17} parent=1 // pred_check
      _
    $region3: #{skip_decode_transformer.17} parent=1 // pred_check_branch
      %14 = sbr.rel (0) target = $region5
    $region4: #{skip_decode_transformer.17} parent=1 // pred_region
      _
    $region5: #{skip_decode_transformer.17} parent=1 // pred_fallthru
      _
    // Predicated region
    $region6: #{skip_decode_transformer.17} parent=1 // pred_check
      _
    $region7: #{skip_decode_transformer.17} parent=1 // pred_check_branch
      %16 = sbr.rel (0) target = $region9
    $region8: #{skip_decode_transformer.17} parent=1 // pred_region
      _
    $region9: #{skip_decode_transformer.17} parent=1 // pred_fallthru
      _
    // Predicated region
    $region10: #{skip_decode_transformer.17} parent=1 // pred_check
      _
    $region11: #{skip_decode_transformer.17} parent=1 // pred_check_branch
      %18 = sbr.rel (0) target = $region13
    $region12: #{skip_decode_transformer.17} parent=1 // pred_region
      _
    $region13: #{skip_decode_transformer.17} parent=1 // pred_fallthru
      _
    // Predicated region
    $region14: #{skip_decode_transformer.17} parent=1 // pred_check
      _
    $region15: #{skip_decode_transformer.17} parent=1 // pred_check_branch
      %20 = sbr.rel (0) target = $region17
    $region16: #{skip_decode_transformer.17} parent=1 // pred_region
      _
    $region17: #{skip_decode_transformer.17} parent=1 // pred_fallthru
      _
    // Predicated region
    $region18: #{skip_decode_transformer.17} parent=1 // pred_check
      _
    $region19: #{skip_decode_transformer.17} parent=1 // pred_check_branch
      %22 = sbr.rel (0) target = $region21
    $region20: #{skip_decode_transformer.17} parent=1 // pred_region
      _
    $region21: #{skip_decode_transformer.17} parent=1 // pred_fallthru
      _
    // Predicated region
    $region22: #{skip_decode_transformer.17} parent=1 // pred_check
      _
    $region23: #{skip_decode_transformer.17} parent=1 // pred_check_branch
      %24 = sbr.rel (0) target = $region25
    $region24: #{skip_decode_transformer.17} parent=1 // pred_region
      _
    $region25: #{skip_decode_transformer.17} parent=1 // pred_fallthru
      _
    // Predicated region
    $region26: #{skip_decode_transformer.17} parent=1 // pred_check
      _
    $region27: #{skip_decode_transformer.17} parent=1 // pred_check_branch
      %26 = sbr.rel (0) target = $region29
    $region28: #{skip_decode_transformer.17} parent=1 // pred_region
      _
    $region29: #{skip_decode_transformer.17} parent=1 // pred_fallthru
      _
    %p28 = scmp.eq.s32.totalorder 0, 0
    // Predicated region
    $region30: #{skip_decode_transformer.17} parent=1 // pred_check
      %p29 = pneg %p28
    $region31: #{skip_decode_transformer.17} parent=1 // pred_check_branch
      %31 = sbr.rel (%p29) target = $region33
    $region32: #{skip_decode_transformer.17} parent=1 // pred_region
      %vm32 = vcmask 261120
      %33 = vst.msk [vmem:[#allocation2] sm:$0xff] %vm32, 0.0
      %34 = vst.msk [vmem:[#allocation2 + $0x8] sm:$0xff] %vm32, 0.0
    $region33: #{skip_decode_transformer.17} parent=1 // pred_fallthru
      _
    %v35 = vld [vmem:[%s0] sm:$0xff]
    %v36 = vld [vmem:[%s0 + $0x8] sm:$0xff]
    %v37 = vpack.c.bf16 %v36, %v35
    %v38 = vld [vmem:[%s1] sm:$0xf]
    %v39 = vld [vmem:[%s1 + $0x4] sm:$0xf]
    %v40 = vld [vmem:[%s1 + $0x8] sm:$0xf]
    %v41 = vld [vmem:[%s1 + $0xc] sm:$0xf]
    %v42 = vld [vmem:[%s2] sm:$0x1]
    %v44 = vperm.slane %v42, 0
    %v50 = vunpack.c.l.b16 %v38
    %v51 = vunpack.c.l.b16 %v39
    %v52 = vunpack.c.l.b16 %v40
    %v53 = vunpack.c.l.b16 %v41
    %v54 = vpack.c.b16 %v51, %v50
    %v55 = vpack.c.b16 %v53, %v52
    %vm58 = vcmask 261120
    %v60 = vsel %vm58, %v37, 0
    %62 = vmatpush.bf16.msra.mxu0 0
    %63 = vmatpush.bf16.msra.mxu0 0
    %64 = vmatpush.bf16.msra.mxu0 0
    %65 = vmatpush.bf16.msra.mxu0 0
    %66 = vmatpush.bf16.msra.mxu0 0
    %67 = vmatpush.bf16.msra.mxu0 0
    %68 = vmatpush.bf16.msra.mxu0 %v55
    %69 = vmatpush.bf16.msra.mxu0 %v54
    %70 = vmatmul.bf16.gmra.mxu0 %v60
    %v71 = vpop.f32.mrf.mxu0
    %v72 = vadd.f32 %v44, %v71
    %v73 = vpop.f32.mrf.mxu0
    %v74 = vadd.f32 %v44, %v73
    %75 = vdwg.mxu0
    %v76 = vmax.f32 %v72, 0.0
    %v77 = vmax.f32 %v74, 0.0
    %v78 = vld [vmem:[#allocation2] sm:$0xff]
    %v79 = vld [vmem:[#allocation2 + $0x8] sm:$0xff]
    %v80 = vpack.c.bf16 %v77, %v76
    %v81 = vld [vmem:[%s3] sm:$0xf]
    %v82 = vld [vmem:[%s3 + $0x4] sm:$0xf]
    %v83 = vld [vmem:[%s3 + $0x8] sm:$0xf]
    %v84 = vld [vmem:[%s3 + $0xc] sm:$0xf]
    %v85 = vld [vmem:[%s3 + $0x10] sm:$0xf]
    %v86 = vld [vmem:[%s3 + $0x14] sm:$0xf]
    %v87 = vld [vmem:[%s3 + $0x18] sm:$0xf]
    %v88 = vld [vmem:[%s3 + $0x1c] sm:$0xf]
    %v97 = vunpack.c.l.b16 %v81
    %v98 = vunpack.c.l.b16 %v82
    %v99 = vunpack.c.l.b16 %v83
    %v100 = vunpack.c.l.b16 %v84
    %v101 = vunpack.c.l.b16 %v85
    %v102 = vunpack.c.l.b16 %v86
    %v103 = vunpack.c.l.b16 %v87
    %v104 = vunpack.c.l.b16 %v88
    %v105 = vpack.c.b16 %v98, %v97
    %v106 = vpack.c.b16 %v100, %v99
    %v107 = vpack.c.b16 %v102, %v101
    %v108 = vpack.c.b16 %v104, %v103
    %vm113 = vcmask 523264
    %v115 = vsel %vm113, %v80, 0
    %117 = vmatpush.bf16.msra.mxu0 0
    %118 = vmatpush.bf16.msra.mxu0 0
    %119 = vmatpush.bf16.msra.mxu0 0
    %120 = vmatpush.bf16.msra.mxu0 0
    %121 = vmatpush.bf16.msra.mxu0 %v108
    %122 = vmatpush.bf16.msra.mxu0 %v107
    %123 = vmatpush.bf16.msra.mxu0 %v106
    %124 = vmatpush.bf16.msra.mxu0 %v105
    %125 = vmatmul.bf16.gmra.mxu0 %v115
    %v126 = vpop.f32.mrf.mxu0
    %v127 = vadd.f32 0.0, %v126
    %v128 = vpop.f32.mrf.mxu0
    %v129 = vadd.f32 0.0, %v128
    %130 = vdwg.mxu0
    %v131 = vadd.f32 %v78, %v127
    %v132 = vadd.f32 %v79, %v129
    %133 = vst.msk [vmem:[#allocation2] sm:$0xff] %vm58, %v131
    %134 = vst.msk [vmem:[#allocation2 + $0x8] sm:$0xff] %vm58, %v132
    // Predicated region
    $region34: #{skip_decode_transformer.17} parent=1 // pred_check
      %p135 = pneg %p28
    $region35: #{skip_decode_transformer.17} parent=1 // pred_check_branch
      %137 = sbr.rel (%p135) target = $region37
    $region36: #{skip_decode_transformer.17} parent=1 // pred_region
      %v138 = vld [vmem:[#allocation2] sm:$0xff]
      %v139 = vld [vmem:[#allocation2 + $0x8] sm:$0xff]
      %v140 = vld [vmem:[%s4] sm:$0x1]
      %v142 = vperm.slane %v140, 0
      %v144 = vadd.f32 %v138, %v142
      %v145 = vadd.f32 %v139, %v142
      %v146 = vld [vmem:[%s0] sm:$0xff]
      %v147 = vld [vmem:[%s0 + $0x8] sm:$0xff]
      %v148 = vadd.f32 %v144, %v146
      %v149 = vadd.f32 %v145, %v147
      %v150 = vld [vmem:[%s5] sm:$0x1]
      %v151 = vld [vmem:[%s6] sm:$0x1]
      %v152 = vsel %vm58, %v148, 0.0
      %153 = vadd.xlane.f32.xlu0 %v152
      %v154 = vpop.xlane.xlu0 %153
      %v155 = vsel %vm58, %v149, 0.0
      %156 = vadd.xlane.f32.xlu0 %v155
      %v157 = vpop.xlane.xlu0 %156
      %v158 = vrcp.pop 32.0
      %v159 = vmul.f32 32.0, %v158
      %v160 = vsub.f32 1.0, %v159
      %v161 = vmul.f32 %v158, %v160
      %v162 = vadd.f32 %v158, %v161
      %vm163 = vweird.f32 %v158
      %v164 = vsel %vm163, %v158, %v162
      %v165 = vmul.f32 %v154, %v164
      %v166 = vmul.f32 %v157, %v164
      %v167 = vsub.f32 %v148, %v165
      %v168 = vsub.f32 %v149, %v166
      %v169 = vmul.f32 %v167, %v167
      %v170 = vmul.f32 %v168, %v168
      %v171 = vsel %vm58, %v169, 0.0
      %172 = vadd.xlane.f32.xlu0 %v171
      %v173 = vpop.xlane.xlu0 %172
      %v174 = vsel %vm58, %v170, 0.0
      %175 = vadd.xlane.f32.xlu0 %v174
      %v176 = vpop.xlane.xlu0 %175
      %v177 = vmul.f32 %v173, %v164
      %v178 = vmul.f32 %v176, %v164
      %v179 = vadd.f32 %v177, 1e-05
      %v180 = vadd.f32 %v178, 1e-05
      %v181 = vrsqrt.pop %v179
      %v182 = vmul.f32 %v181, %v179
      %v183 = vmul.f32 %v182, %v181
      %v184 = vmul.f32 0.5, %v183
      %v185 = vsub.f32 1.5, %v184
      %v186 = vmul.f32 %v181, %v185
      %vm187 = vweird.f32 %v179
      %vm188 = vweird.f32 %v181
      %vm189 = vmor %vm187, %vm188
      %v190 = vsel %vm189, %v181, %v186
      %v191 = vrsqrt.pop %v180
      %v192 = vmul.f32 %v191, %v180
      %v193 = vmul.f32 %v192, %v191
      %v194 = vmul.f32 0.5, %v193
      %v195 = vsub.f32 1.5, %v194
      %v196 = vmul.f32 %v191, %v195
      %vm197 = vweird.f32 %v180
      %vm198 = vweird.f32 %v191
      %vm199 = vmor %vm197, %vm198
      %v200 = vsel %vm199, %v191, %v196
      %v201 = vmul.f32 %v167, %v190
      %v202 = vmul.f32 %v168, %v200
      %v204 = vperm.slane %v150, 0
      %v206 = vmul.f32 %v201, %v204
      %v207 = vmul.f32 %v202, %v204
      %v209 = vperm.slane %v151, 0
      %v211 = vadd.f32 %v206, %v209
      %v212 = vadd.f32 %v207, %v209
      %213 = vst.msk [vmem:[#allocation3] sm:$0xff] %vm58, %v211
      %214 = vst.msk [vmem:[#allocation3 + $0x8] sm:$0xff] %vm58, %v212
    $region37: #{skip_decode_transformer.17} parent=1 // pred_fallthru
      _
    // Predicated region
    $region38: #{skip_decode_transformer.17} parent=1 // pred_check
      _
    $region39: #{skip_decode_transformer.17} parent=1 // pred_check_branch
      %216 = sbr.rel (0) target = $region41
    $region40: #{skip_decode_transformer.17} parent=1 // pred_region
      %218 = vsyncadd [#allocation4], 0
      %s219 = sshll.u32 [#allocation3], 4
      %s220 = int_to_ptr.vmem [resolvable:$true] %s219
      %s221 = sshll.u32 %s7, 4
      %s222 = int_to_ptr.hbm [resolvable:$true] %s221
      %227 = dma.vmem_to_hbm [thread:$0]  %s220, 256, %s222, [#allocation4], 128, 128, 8
    $region41: #{skip_decode_transformer.17} parent=1 // pred_fallthru
      _
    // Predicated region
    $region42: #{skip_decode_transformer.17} parent=1 // pred_check
      _
    $region43: #{skip_decode_transformer.17} parent=1 // pred_check_branch
      %229 = sbr.rel (0) target = $region45
    $region44: #{skip_decode_transformer.17} parent=1 // pred_region
      %231 = dma.done [#allocation4], 256
    $region45: #{skip_decode_transformer.17} parent=1 // pred_fallthru
      _
    %232 = vsyncpa [#allocation4], 1

// kernel: skip_decode_transformer.15
$region0: #{skip_decode_transformer.15}
  #allocation0 [shape = 'u32[]', space=smem, size = 0x4, offset = 0x4, fixed_abs, tag = 'smem constant byte address 0x4 - core index']
  #allocation1 [shape = 'u32[72,128]{1,0:T(1,128)}', space=vmem, size = 0x9000, scoped, tag = 'internal scratch']
  %s0 = inlined_call_operand.vmem [shape: f32[2,8,32], index: 0, kind: input, shape index: {}]
  %s1 = inlined_call_operand.vmem [shape: f32[2,8,32], index: 1, kind: input, shape index: {}]
  %s2 = inlined_call_operand.vmem [shape: f32[2,1,8], index: 2, kind: input, shape index: {}]
  %s3 = inlined_call_operand.vmem [shape: bf16[32,32], index: 3, kind: input, shape index: {}]
  %s4 = inlined_call_operand.hbm [shape: bf16[32,32], index: 4, kind: input, shape index: {}]
  %s5 = inlined_call_operand.hbm [shape: f32[1,32], index: 5, kind: input, shape index: {}]
  %s6 = inlined_call_operand.vmem [shape: bf16[32,96], index: 6, kind: input, shape index: {}]
  %s7 = inlined_call_operand.vmem [shape: f32[1,96], index: 7, kind: input, shape index: {}]
  %s8 = inlined_call_operand.vmem [shape: bf16[32,32], index: 8, kind: input, shape index: {}]
  %s9 = inlined_call_operand.hbm [shape: f32[1,32], index: 9, kind: input, shape index: {}]
  %s10 = inlined_call_operand.hbm [shape: f32[1,32], index: 10, kind: input, shape index: {}]
  %s11 = inlined_call_operand.hbm [shape: f32[1,32], index: 11, kind: input, shape index: {}]
  %s12 = inlined_call_operand.vmem [shape: f32[2,8,32], index: 12, kind: output, shape index: {}]
  %s13 = sld [smem:[#allocation0]]
  $region101: #{skip_decode_transformer.15} parent=0
    _
  %s15 = ssub.s32 1, %s13
  %s16 = scalar_select 0, %s15, %s13
  $region1: #{skip_decode_transformer.15} parent=0
    #allocation2 [shape = 'u8[8192]{0}', space=vmem, size = 0x2000, scoped, tag = 'input window, operand 4, single buffered']
    #allocation3 [shape = 's32[2]{0}', space=sflag, size = 0x8, scoped, tag = 'scoped memory for skip_decode_transformer.15']
    #allocation4 [shape = 'u8[512]{0}', space=vmem, size = 0x400, scoped, tag = 'input window, operand 5, single buffered']
    #allocation5 [shape = 's32[1]{0}', space=sflag, size = 0x4, scoped, tag = 'scoped memory for skip_decode_transformer.15']
    #allocation6 [shape = 'u8[512]{0}', space=vmem, size = 0x400, scoped, tag = 'input window, operand 9, single buffered']
    #allocation7 [shape = 'u8[512]{0}', space=vmem, size = 0x400, scoped, tag = 'input window, operand 10, single buffered']
    #allocation8 [shape = 's32[1]{0}', space=sflag, size = 0x4, scoped, tag = 'scoped memory for skip_decode_transformer.15']
    #allocation9 [shape = 'u8[512]{0}', space=vmem, size = 0x400, scoped, tag = 'input window, operand 11, single buffered']
    %17 = vsyncpa [#allocation3], 0
    %18 = vsyncpa [#allocation5], 0
    %19 = vsyncpa [#allocation8], 0
    loop: start=0, step=1, limit=4
    $region2: #{skip_decode_transformer.15} parent=1 // loop_pre_header
      _
    $region3: #{skip_decode_transformer.15} parent=1 // loop_header
      %s21 = sphi 0, %s25
      %p22 = scmp.ge.s32.totalorder %s21, 4
      %s31 = sphi 0, %s33
      %s34 = sphi 0, %s31
      %s35 = sphi 0, %s34
      %s51 = sphi 0, %s35
      %s57 = sphi 0, %s59
      %s60 = sphi 0, %s57
      %s61 = sphi 0, %s60
      %s77 = sphi 0, %s61
      %s83 = sphi 0, %s85
      %s86 = sphi 0, %s83
      %s87 = sphi 0, %s86
      %s103 = sphi 0, %s87
      %s107 = sphi 0, %s107
      %s109 = sphi 0, %s107
      %s110 = sphi 0, %s109
      %s124 = sphi 0, %s110
      %s128 = sphi 0, %s128
      %s130 = sphi 0, %s128
      %s131 = sphi 0, %s130
      %s145 = sphi 0, %s131
      %s149 = sphi 0, %s149
      %s151 = sphi 0, %s149
      %s152 = sphi 0, %s151
      %s166 = sphi 0, %s152
      %s170 = sphi 0, %s170
      %s172 = sphi 0, %s170
      %s173 = sphi 0, %s172
      %s187 = sphi 0, %s173
      %s191 = sphi 0, %s191
      %s193 = sphi 0, %s191
      %s194 = sphi 0, %s193
      %s208 = sphi 0, %s194
      %s212 = sphi 0, %s212
      %s214 = sphi 0, %s212
      %s215 = sphi 0, %s214
      %s229 = sphi 0, %s215
      %s233 = sphi 0, %s233
      %s235 = sphi 0, %s233
      %s236 = sphi 0, %s235
      %s250 = sphi 0, %s236
      %s254 = sphi 0, %s254
      %s256 = sphi 0, %s254
      %s257 = sphi 0, %s256
      %s271 = sphi 0, %s257
      %s275 = sphi 0, %s275
      %s277 = sphi 0, %s275
      %s278 = sphi 0, %s277
      %s292 = sphi 0, %s278
      %s298 = sphi 0, %s300
      %s301 = sphi 0, %s298
      %s302 = sphi 0, %s301
      %s318 = sphi 0, %s302
    $region4: #{skip_decode_transformer.15} parent=1 // loop_header_branch
      %24 = sbr.rel (%p22) target = $region8
    $region5: #{skip_decode_transformer.15} parent=1 // loop_body
      %s26 = ssub.s32 %s21, 1
      %s27 = ssub.s32 %s21, 2
      %s28 = sadd.s32 %s21, 1
      %s29 = ssub.s32 %s21, %s28
      %p30 = scmp.eq.s32.totalorder %s29, 0
      %s32 = sadd.s32 %s31, 1
      %s33 = scalar_select %p30, %s31, %s32
      %p36 = pneg %p30
      %p37 = scmp.eq.s32.totalorder %s21, 1
      %p38 = por %p36, %p37
      %p39 = scmp.ne.s32.totalorder %s31, %s34
      %p40 = scmp.eq.s32.totalorder %s21, 0
      %p41 = por %p39, %p40
      %p42 = scmp.ne.s32.totalorder %s31, %s34
      %p43 = scmp.eq.s32.totalorder %s26, 1
      %p44 = por %p42, %p43
      %p45 = scmp.ne.s32.totalorder %s34, %s35
      %p46 = scmp.eq.s32.totalorder %s26, 0
      %p47 = por %p45, %p46
      %p48 = scmp.ne.s32.totalorder %s34, %s35
      %p49 = scmp.eq.s32.totalorder %s27, 1
      %p50 = por %p48, %p49
      %p52 = scmp.ne.s32.totalorder %s35, %s51
      %p53 = scmp.eq.s32.totalorder %s27, 0
      %p54 = por %p52, %p53
      %s55 = ssub.s32 %s21, %s28
      %p56 = scmp.eq.s32.totalorder %s55, 0
      %s58 = sadd.s32 %s57, 1
      %s59 = scalar_select %p56, %s57, %s58
      %p62 = pneg %p56
      %p63 = scmp.eq.s32.totalorder %s21, 1
      %p64 = por %p62, %p63
      %p65 = scmp.ne.s32.totalorder %s57, %s60
      %p66 = scmp.eq.s32.totalorder %s21, 0
      %p67 = por %p65, %p66
      %p68 = scmp.ne.s32.totalorder %s57, %s60
      %p69 = scmp.eq.s32.totalorder %s26, 1
      %p70 = por %p68, %p69
      %p71 = scmp.ne.s32.totalorder %s60, %s61
      %p72 = scmp.eq.s32.totalorder %s26, 0
      %p73 = por %p71, %p72
      %p74 = scmp.ne.s32.totalorder %s60, %s61
      %p75 = scmp.eq.s32.totalorder %s27, 1
      %p76 = por %p74, %p75
      %p78 = scmp.ne.s32.totalorder %s61, %s77
      %p79 = scmp.eq.s32.totalorder %s27, 0
      %p80 = por %p78, %p79
      %s81 = ssub.s32 %s21, %s28
      %p82 = scmp.eq.s32.totalorder %s81, 0
      %s84 = sadd.s32 %s83, 1
      %s85 = scalar_select %p82, %s83, %s84
      %p88 = pneg %p82
      %p89 = scmp.eq.s32.totalorder %s21, 1
      %p90 = por %p88, %p89
      %p91 = scmp.ne.s32.totalorder %s83, %s86
      %p92 = scmp.eq.s32.totalorder %s21, 0
      %p93 = por %p91, %p92
      %p94 = scmp.ne.s32.totalorder %s83, %s86
      %p95 = scmp.eq.s32.totalorder %s26, 1
      %p96 = por %p94, %p95
      %p97 = scmp.ne.s32.totalorder %s86, %s87
      %p98 = scmp.eq.s32.totalorder %s26, 0
      %p99 = por %p97, %p98
      %p100 = scmp.ne.s32.totalorder %s86, %s87
      %p101 = scmp.eq.s32.totalorder %s27, 1
      %p102 = por %p100, %p101
      %p104 = scmp.ne.s32.totalorder %s87, %s103
      %p105 = scmp.eq.s32.totalorder %s27, 0
      %p106 = por %p104, %p105
      %s108 = sadd.s32 %s107, 1
      %p111 = scmp.eq.s32.totalorder %s21, 1
      %p112 = scmp.ne.s32.totalorder %s107, %s109
      %p113 = scmp.eq.s32.totalorder %s21, 0
      %p114 = por %p112, %p113
      %p115 = scmp.ne.s32.totalorder %s107, %s109
      %p116 = scmp.eq.s32.totalorder %s26, 1
      %p117 = por %p115, %p116
      %p118 = scmp.ne.s32.totalorder %s109, %s110
      %p119 = scmp.eq.s32.totalorder %s26, 0
      %p120 = por %p118, %p119
      %p121 = scmp.ne.s32.totalorder %s109, %s110
      %p122 = scmp.eq.s32.totalorder %s27, 1
      %p123 = por %p121, %p122
      %p125 = scmp.ne.s32.totalorder %s110, %s124
      %p126 = scmp.eq.s32.totalorder %s27, 0
      %p127 = por %p125, %p126
      %s129 = sadd.s32 %s128, 1
      %p132 = scmp.eq.s32.totalorder %s21, 1
      %p133 = scmp.ne.s32.totalorder %s128, %s130
      %p134 = scmp.eq.s32.totalorder %s21, 0
      %p135 = por %p133, %p134
      %p136 = scmp.ne.s32.totalorder %s128, %s130
      %p137 = scmp.eq.s32.totalorder %s26, 1
      %p138 = por %p136, %p137
      %p139 = scmp.ne.s32.totalorder %s130, %s131
      %p140 = scmp.eq.s32.totalorder %s26, 0
      %p141 = por %p139, %p140
      %p142 = scmp.ne.s32.totalorder %s130, %s131
      %p143 = scmp.eq.s32.totalorder %s27, 1
      %p144 = por %p142, %p143
      %p146 = scmp.ne.s32.totalorder %s131, %s145
      %p147 = scmp.eq.s32.totalorder %s27, 0
      %p148 = por %p146, %p147
      %s150 = sadd.s32 %s149, 1
      %p153 = scmp.eq.s32.totalorder %s21, 1
      %p154 = scmp.ne.s32.totalorder %s149, %s151
      %p155 = scmp.eq.s32.totalorder %s21, 0
      %p156 = por %p154, %p155
      %p157 = scmp.ne.s32.totalorder %s149, %s151
      %p158 = scmp.eq.s32.totalorder %s26, 1
      %p159 = por %p157, %p158
      %p160 = scmp.ne.s32.totalorder %s151, %s152
      %p161 = scmp.eq.s32.totalorder %s26, 0
      %p162 = por %p160, %p161
      %p163 = scmp.ne.s32.totalorder %s151, %s152
      %p164 = scmp.eq.s32.totalorder %s27, 1
      %p165 = por %p163, %p164
      %p167 = scmp.ne.s32.totalorder %s152, %s166
      %p168 = scmp.eq.s32.totalorder %s27, 0
      %p169 = por %p167, %p168
      %s171 = sadd.s32 %s170, 1
      %p174 = scmp.eq.s32.totalorder %s21, 1
      %p175 = scmp.ne.s32.totalorder %s170, %s172
      %p176 = scmp.eq.s32.totalorder %s21, 0
      %p177 = por %p175, %p176
      %p178 = scmp.ne.s32.totalorder %s170, %s172
      %p179 = scmp.eq.s32.totalorder %s26, 1
      %p180 = por %p178, %p179
      %p181 = scmp.ne.s32.totalorder %s172, %s173
      %p182 = scmp.eq.s32.totalorder %s26, 0
      %p183 = por %p181, %p182
      %p184 = scmp.ne.s32.totalorder %s172, %s173
      %p185 = scmp.eq.s32.totalorder %s27, 1
      %p186 = por %p184, %p185
      %p188 = scmp.ne.s32.totalorder %s173, %s187
      %p189 = scmp.eq.s32.totalorder %s27, 0
      %p190 = por %p188, %p189
      %s192 = sadd.s32 %s191, 1
      %p195 = scmp.eq.s32.totalorder %s21, 1
      %p196 = scmp.ne.s32.totalorder %s191, %s193
      %p197 = scmp.eq.s32.totalorder %s21, 0
      %p198 = por %p196, %p197
      %p199 = scmp.ne.s32.totalorder %s191, %s193
      %p200 = scmp.eq.s32.totalorder %s26, 1
      %p201 = por %p199, %p200
      %p202 = scmp.ne.s32.totalorder %s193, %s194
      %p203 = scmp.eq.s32.totalorder %s26, 0
      %p204 = por %p202, %p203
      %p205 = scmp.ne.s32.totalorder %s193, %s194
      %p206 = scmp.eq.s32.totalorder %s27, 1
      %p207 = por %p205, %p206
      %p209 = scmp.ne.s32.totalorder %s194, %s208
      %p210 = scmp.eq.s32.totalorder %s27, 0
      %p211 = por %p209, %p210
      %s213 = sadd.s32 %s212, 1
      %p216 = scmp.eq.s32.totalorder %s21, 1
      %p217 = scmp.ne.s32.totalorder %s212, %s214
      %p218 = scmp.eq.s32.totalorder %s21, 0
      %p219 = por %p217, %p218
      %p220 = scmp.ne.s32.totalorder %s212, %s214
      %p221 = scmp.eq.s32.totalorder %s26, 1
      %p222 = por %p220, %p221
      %p223 = scmp.ne.s32.totalorder %s214, %s215
      %p224 = scmp.eq.s32.totalorder %s26, 0
      %p225 = por %p223, %p224
      %p226 = scmp.ne.s32.totalorder %s214, %s215
      %p227 = scmp.eq.s32.totalorder %s27, 1
      %p228 = por %p226, %p227
      %p230 = scmp.ne.s32.totalorder %s215, %s229
      %p231 = scmp.eq.s32.totalorder %s27, 0
      %p232 = por %p230, %p231
      %s234 = sadd.s32 %s233, 1
      %p237 = scmp.eq.s32.totalorder %s21, 1
      %p238 = scmp.ne.s32.totalorder %s233, %s235
      %p239 = scmp.eq.s32.totalorder %s21, 0
      %p240 = por %p238, %p239
      %p241 = scmp.ne.s32.totalorder %s233, %s235
      %p242 = scmp.eq.s32.totalorder %s26, 1
      %p243 = por %p241, %p242
      %p244 = scmp.ne.s32.totalorder %s235, %s236
      %p245 = scmp.eq.s32.totalorder %s26, 0
      %p246 = por %p244, %p245
      %p247 = scmp.ne.s32.totalorder %s235, %s236
      %p248 = scmp.eq.s32.totalorder %s27, 1
      %p249 = por %p247, %p248
      %p251 = scmp.ne.s32.totalorder %s236, %s250
      %p252 = scmp.eq.s32.totalorder %s27, 0
      %p253 = por %p251, %p252
      %s255 = sadd.s32 %s254, 1
      %p258 = scmp.eq.s32.totalorder %s21, 1
      %p259 = scmp.ne.s32.totalorder %s254, %s256
      %p260 = scmp.eq.s32.totalorder %s21, 0
      %p261 = por %p259, %p260
      %p262 = scmp.ne.s32.totalorder %s254, %s256
      %p263 = scmp.eq.s32.totalorder %s26, 1
      %p264 = por %p262, %p263
      %p265 = scmp.ne.s32.totalorder %s256, %s257
      %p266 = scmp.eq.s32.totalorder %s26, 0
      %p267 = por %p265, %p266
      %p268 = scmp.ne.s32.totalorder %s256, %s257
      %p269 = scmp.eq.s32.totalorder %s27, 1
      %p270 = por %p268, %p269
      %p272 = scmp.ne.s32.totalorder %s257, %s271
      %p273 = scmp.eq.s32.totalorder %s27, 0
      %p274 = por %p272, %p273
      %s276 = sadd.s32 %s275, 1
      %p279 = scmp.eq.s32.totalorder %s21, 1
      %p280 = scmp.ne.s32.totalorder %s275, %s277
      %p281 = scmp.eq.s32.totalorder %s21, 0
      %p282 = por %p280, %p281
      %p283 = scmp.ne.s32.totalorder %s275, %s277
      %p284 = scmp.eq.s32.totalorder %s26, 1
      %p285 = por %p283, %p284
      %p286 = scmp.ne.s32.totalorder %s277, %s278
      %p287 = scmp.eq.s32.totalorder %s26, 0
      %p288 = por %p286, %p287
      %p289 = scmp.ne.s32.totalorder %s277, %s278
      %p290 = scmp.eq.s32.totalorder %s27, 1
      %p291 = por %p289, %p290
      %p293 = scmp.ne.s32.totalorder %s278, %s292
      %p294 = scmp.eq.s32.totalorder %s27, 0
      %p295 = por %p293, %p294
      %s296 = ssub.s32 %s21, %s28
      %p297 = scmp.eq.s32.totalorder %s296, 0
      %s299 = sadd.s32 %s298, 1
      %s300 = scalar_select %p297, %s298, %s299
      %p303 = pneg %p297
      %p304 = scmp.eq.s32.totalorder %s21, 1
      %p305 = por %p303, %p304
      %p306 = scmp.ne.s32.totalorder %s298, %s301
      %p307 = scmp.eq.s32.totalorder %s21, 0
      %p308 = por %p306, %p307
      %p309 = scmp.ne.s32.totalorder %s298, %s301
      %p310 = scmp.eq.s32.totalorder %s26, 1
      %p311 = por %p309, %p310
      %p312 = scmp.ne.s32.totalorder %s301, %s302
      %p313 = scmp.eq.s32.totalorder %s26, 0
      %p314 = por %p312, %p313
      %p315 = scmp.ne.s32.totalorder %s301, %s302
      %p316 = scmp.eq.s32.totalorder %s27, 1
      %p317 = por %p315, %p316
      %p319 = scmp.ne.s32.totalorder %s302, %s318
      %p320 = scmp.eq.s32.totalorder %s27, 0
      %p321 = por %p319, %p320
      %p322 = scmp.le.s32.totalorder 1, %s21
      %p323 = scmp.lt.s32.totalorder %s21, 3
      %p324 = pnand %p322, %p323
      %p325 = pneg %p324
      // Predicated region
      $region9: #{skip_decode_transformer.15} parent=5 // pred_check
        _
      $region10: #{skip_decode_transformer.15} parent=5 // pred_check_branch
        %327 = sbr.rel (%p324) target = $region12
      $region11: #{skip_decode_transformer.15} parent=5 // pred_region
        %s328 = ssub.s32 %s21, 1
        // Predicated region
        $region13: #{skip_decode_transformer.15} parent=11 // pred_check
          %p329 = pneg %p120
        $region14: #{skip_decode_transformer.15} parent=11 // pred_check_branch
          %331 = sbr.rel (%p329) target = $region16
        $region15: #{skip_decode_transformer.15} parent=11 // pred_region
          _
        $region16: #{skip_decode_transformer.15} parent=11 // pred_fallthru
          _
        // Predicated region
        $region17: #{skip_decode_transformer.15} parent=11 // pred_check
          %p332 = pneg %p141
        $region18: #{skip_decode_transformer.15} parent=11 // pred_check_branch
          %334 = sbr.rel (%p332) target = $region20
        $region19: #{skip_decode_transformer.15} parent=11 // pred_region
          %336 = vsyncadd [#allocation3], 0
          %s337 = sshll.u32 %s4, 4
          %s338 = int_to_ptr.hbm [resolvable:$true] %s337
          %s339 = sshll.u32 [#allocation2], 4
          %s340 = int_to_ptr.vmem [resolvable:$true] %s339
          %345 = dma.hbm_to_vmem [thread:$0]  %s338, 256, %s340, [#allocation3], 64, 64, 4
        $region20: #{skip_decode_transformer.15} parent=11 // pred_fallthru
          _
        // Predicated region
        $region21: #{skip_decode_transformer.15} parent=11 // pred_check
          %p346 = pneg %p162
        $region22: #{skip_decode_transformer.15} parent=11 // pred_check_branch
          %348 = sbr.rel (%p346) target = $region24
        $region23: #{skip_decode_transformer.15} parent=11 // pred_region
          %350 = vsyncadd [#allocation5], 0
          %s352 = sshll.u32 %s5, 4
          %s353 = int_to_ptr.hbm [resolvable:$true] %s352
          %s354 = sshll.u32 [#allocation4], 4
          %s355 = int_to_ptr.vmem [resolvable:$true] %s354
          %357 = dma.hbm_to_vmem [thread:$0]  %s353, 16, %s355, [#allocation5]
        $region24: #{skip_decode_transformer.15} parent=11 // pred_fallthru
          _
        // Predicated region
        $region25: #{skip_decode_transformer.15} parent=11 // pred_check
          %p358 = pneg %p183
        $region26: #{skip_decode_transformer.15} parent=11 // pred_check_branch
          %360 = sbr.rel (%p358) target = $region28
        $region27: #{skip_decode_transformer.15} parent=11 // pred_region
          _
        $region28: #{skip_decode_transformer.15} parent=11 // pred_fallthru
          _
        // Predicated region
        $region29: #{skip_decode_transformer.15} parent=11 // pred_check
          %p361 = pneg %p204
        $region30: #{skip_decode_transformer.15} parent=11 // pred_check_branch
          %363 = sbr.rel (%p361) target = $region32
        $region31: #{skip_decode_transformer.15} parent=11 // pred_region
          _
        $region32: #{skip_decode_transformer.15} parent=11 // pred_fallthru
          _
        // Predicated region
        $region33: #{skip_decode_transformer.15} parent=11 // pred_check
          %p364 = pneg %p225
        $region34: #{skip_decode_transformer.15} parent=11 // pred_check_branch
          %366 = sbr.rel (%p364) target = $region36
        $region35: #{skip_decode_transformer.15} parent=11 // pred_region
          _
        $region36: #{skip_decode_transformer.15} parent=11 // pred_fallthru
          _
        // Predicated region
        $region37: #{skip_decode_transformer.15} parent=11 // pred_check
          %p367 = pneg %p246
        $region38: #{skip_decode_transformer.15} parent=11 // pred_check_branch
          %369 = sbr.rel (%p367) target = $region40
        $region39: #{skip_decode_transformer.15} parent=11 // pred_region
          %371 = vsyncadd [#allocation5], 0
          %s373 = sshll.u32 %s9, 4
          %s374 = int_to_ptr.hbm [resolvable:$true] %s373
          %s375 = sshll.u32 [#allocation6], 4
          %s376 = int_to_ptr.vmem [resolvable:$true] %s375
          %378 = dma.hbm_to_vmem [thread:$0]  %s374, 16, %s376, [#allocation5]
        $region40: #{skip_decode_transformer.15} parent=11 // pred_fallthru
          _
        // Predicated region
        $region41: #{skip_decode_transformer.15} parent=11 // pred_check
          %p379 = pneg %p267
        $region42: #{skip_decode_transformer.15} parent=11 // pred_check_branch
          %381 = sbr.rel (%p379) target = $region44
        $region43: #{skip_decode_transformer.15} parent=11 // pred_region
          %383 = vsyncadd [#allocation8], 0
          %s385 = sshll.u32 %s10, 4
          %s386 = int_to_ptr.hbm [resolvable:$true] %s385
          %s387 = sshll.u32 [#allocation7], 4
          %s388 = int_to_ptr.vmem [resolvable:$true] %s387
          %390 = dma.hbm_to_vmem [thread:$0]  %s386, 16, %s388, [#allocation8]
        $region44: #{skip_decode_transformer.15} parent=11 // pred_fallthru
          _
        // Predicated region
        $region45: #{skip_decode_transformer.15} parent=11 // pred_check
          %p391 = pneg %p288
        $region46: #{skip_decode_transformer.15} parent=11 // pred_check_branch
          %393 = sbr.rel (%p391) target = $region48
        $region47: #{skip_decode_transformer.15} parent=11 // pred_region
          %395 = vsyncadd [#allocation8], 0
          %s397 = sshll.u32 %s11, 4
          %s398 = int_to_ptr.hbm [resolvable:$true] %s397
          %s399 = sshll.u32 [#allocation9], 4
          %s400 = int_to_ptr.vmem [resolvable:$true] %s399
          %402 = dma.hbm_to_vmem [thread:$0]  %s398, 16, %s400, [#allocation8]
        $region48: #{skip_decode_transformer.15} parent=11 // pred_fallthru
          _
      $region12: #{skip_decode_transformer.15} parent=5 // pred_fallthru
        _
      %p403 = scmp.lt.s32.totalorder %s21, 2
      // Predicated region
      $region49: #{skip_decode_transformer.15} parent=5 // pred_check
        %p404 = pneg %p403
      $region50: #{skip_decode_transformer.15} parent=5 // pred_check_branch
        %406 = sbr.rel (%p404) target = $region52
      $region51: #{skip_decode_transformer.15} parent=5 // pred_region
        // Predicated region
        $region53: #{skip_decode_transformer.15} parent=51 // pred_check
          %p407 = pneg %p41
        $region54: #{skip_decode_transformer.15} parent=51 // pred_check_branch
          %409 = sbr.rel (%p407) target = $region56
        $region55: #{skip_decode_transformer.15} parent=51 // pred_region
          %p410 = scmp.lt.s32.totalorder %s21, 1
          %s411 = scalar_select %p410, %s21, 1
          %s412 = smul.addr %s411, 8
          %s413 = scalar_lea.vmem %s0, %s412
        $region56: #{skip_decode_transformer.15} parent=51 // pred_fallthru
          _
        // Predicated region
        $region57: #{skip_decode_transformer.15} parent=51 // pred_check
          %p414 = pneg %p67
        $region58: #{skip_decode_transformer.15} parent=51 // pred_check_branch
          %416 = sbr.rel (%p414) target = $region60
        $region59: #{skip_decode_transformer.15} parent=51 // pred_region
          %p417 = scmp.lt.s32.totalorder %s21, 1
          %s418 = scalar_select %p417, %s21, 1
          %s419 = smul.addr %s418, 8
          %s420 = scalar_lea.vmem %s1, %s419
        $region60: #{skip_decode_transformer.15} parent=51 // pred_fallthru
          _
        // Predicated region
        $region61: #{skip_decode_transformer.15} parent=51 // pred_check
          %p421 = pneg %p93
        $region62: #{skip_decode_transformer.15} parent=51 // pred_check_branch
          %423 = sbr.rel (%p421) target = $region64
        $region63: #{skip_decode_transformer.15} parent=51 // pred_region
          %p424 = scmp.lt.s32.totalorder %s21, 1
          %s425 = scalar_select %p424, %s21, 1
          %s426 = scalar_lea.vmem %s2, %s425
        $region64: #{skip_decode_transformer.15} parent=51 // pred_fallthru
          _
      $region52: #{skip_decode_transformer.15} parent=5 // pred_fallthru
        _
      %p427 = scmp.le.s32.totalorder 1, %s21
      %p428 = scmp.lt.s32.totalorder %s21, 3
      %p429 = pnand %p427, %p428
      %p430 = pneg %p429
      // Predicated region
      $region65: #{skip_decode_transformer.15} parent=5 // pred_check
        _
      $region66: #{skip_decode_transformer.15} parent=5 // pred_check_branch
        %432 = sbr.rel (%p429) target = $region68
      $region67: #{skip_decode_transformer.15} parent=5 // pred_region
        %s433 = ssub.s32 %s21, 1
        // Predicated region
        $region69: #{skip_decode_transformer.15} parent=67 // pred_check
          %p434 = pneg %p141
        $region70: #{skip_decode_transformer.15} parent=67 // pred_check_branch
          %436 = sbr.rel (%p434) target = $region72
        $region71: #{skip_decode_transformer.15} parent=67 // pred_region
          %438 = dma.done [#allocation3], 256
        $region72: #{skip_decode_transformer.15} parent=67 // pred_fallthru
          _
        // Predicated region
        $region73: #{skip_decode_transformer.15} parent=67 // pred_check
          %p439 = pneg %p162
        $region74: #{skip_decode_transformer.15} parent=67 // pred_check_branch
          %441 = sbr.rel (%p439) target = $region76
        $region75: #{skip_decode_transformer.15} parent=67 // pred_region
          %443 = dma.done [#allocation5], 16
        $region76: #{skip_decode_transformer.15} parent=67 // pred_fallthru
          _
        // Predicated region
        $region77: #{skip_decode_transformer.15} parent=67 // pred_check
          %p444 = pneg %p246
        $region78: #{skip_decode_transformer.15} parent=67 // pred_check_branch
          %446 = sbr.rel (%p444) target = $region80
        $region79: #{skip_decode_transformer.15} parent=67 // pred_region
          %448 = dma.done [#allocation5], 16
        $region80: #{skip_decode_transformer.15} parent=67 // pred_fallthru
          _
        // Predicated region
        $region81: #{skip_decode_transformer.15} parent=67 // pred_check
          %p449 = pneg %p267
        $region82: #{skip_decode_transformer.15} parent=67 // pred_check_branch
          %451 = sbr.rel (%p449) target = $region84
        $region83: #{skip_decode_transformer.15} parent=67 // pred_region
          %453 = dma.done [#allocation8], 16
        $region84: #{skip_decode_transformer.15} parent=67 // pred_fallthru
          _
        // Predicated region
        $region85: #{skip_decode_transformer.15} parent=67 // pred_check
          %p454 = pneg %p288
        $region86: #{skip_decode_transformer.15} parent=67 // pred_check_branch
          %456 = sbr.rel (%p454) target = $region88
        $region87: #{skip_decode_transformer.15} parent=67 // pred_region
          %458 = dma.done [#allocation8], 16
        $region88: #{skip_decode_transformer.15} parent=67 // pred_fallthru
          _
        %p459 = scmp.lt.s32.totalorder %s26, 1
        %s460 = scalar_select %p459, %s26, 1
        %s461 = smul.addr %s460, 8
        %s462 = scalar_lea.vmem %s0, %s461
        %p463 = pneg %p47
        %p464 = pneg %p44
        %p465 = scmp.lt.s32.totalorder %s26, 1
        %s466 = scalar_select %p465, %s26, 1
        %s467 = smul.addr %s466, 8
        %s468 = scalar_lea.vmem %s1, %s467
        %p469 = pneg %p73
        %p470 = pneg %p70
        %p471 = scmp.lt.s32.totalorder %s26, 1
        %s472 = scalar_select %p471, %s26, 1
        %s473 = scalar_lea.vmem %s2, %s472
        %p474 = pneg %p99
        %p475 = pneg %p96
        %p476 = pneg %p120
        %p477 = pneg %p117
        %p478 = pneg %p141
        %p479 = pneg %p138
        %p480 = pneg %p162
        %p481 = pneg %p159
        %p482 = pneg %p183
        %p483 = pneg %p180
        %p484 = pneg %p204
        %p485 = pneg %p201
        %p486 = pneg %p225
        %p487 = pneg %p222
        %p488 = pneg %p246
        %p489 = pneg %p243
        %p490 = pneg %p267
        %p491 = pneg %p264
        %p492 = pneg %p288
        %p493 = pneg %p285
        %p494 = pneg %p314
        %p495 = pneg %p311
        %p496 = scmp.lt.s32.totalorder %s26, 1
        %s497 = scalar_select %p496, %s26, 1
        %s498 = smul.addr %s497, 8
        %s499 = scalar_lea.vmem %s12, %s498
        %p500 = scmp.lt.s32.totalorder %s26, 1
        %s501 = scalar_select %p500, %s26, 1
        %s502 = smul.addr %s501, 8
        %s503 = scalar_lea.vmem %s0, %s502
        %p504 = scmp.lt.s32.totalorder %s26, 1
        %s505 = scalar_select %p504, %s26, 1
        %s506 = smul.addr %s505, 8
        %s507 = scalar_lea.vmem %s1, %s506
        %p508 = scmp.lt.s32.totalorder %s26, 1
        %s509 = scalar_select %p508, %s26, 1
        %s510 = scalar_lea.vmem %s2, %s509
        %p511 = scmp.lt.s32.totalorder %s26, 1
        %s512 = scalar_select %p511, %s26, 1
        %s513 = smul.addr %s512, 8
        %s514 = scalar_lea.vmem %s12, %s513
        %v516 = vld [vmem:[%s503] sm:$0xff]
        %v517 = vpack.c.bf16 %v516, %v516
        %v518 = vld [vmem:[%s3] sm:$0xf]
        %v519 = vld [vmem:[%s3 + $0x4] sm:$0xf]
        %v520 = vld [vmem:[%s3 + $0x8] sm:$0xf]
        %v521 = vld [vmem:[%s3 + $0xc] sm:$0xf]
        %v522 = vld [vmem:[%s507] sm:$0xff]
        %v523 = vpack.c.bf16 %v522, %v522
        %v524 = vld [vmem:[#allocation2] sm:$0xf]
        %v525 = vld [vmem:[#allocation2 + $0x4] sm:$0xf]
        %v526 = vld [vmem:[#allocation2 + $0x8] sm:$0xf]
        %v527 = vld [vmem:[#allocation2 + $0xc] sm:$0xf]
        %v532 = vunpack.c.l.b16 %v524
        %v533 = vunpack.c.l.b16 %v525
        %v534 = vunpack.c.l.b16 %v526
        %v535 = vunpack.c.l.b16 %v527
        %v536 = vpack.c.b16 %v533, %v532
        %v537 = vpack.c.b16 %v535, %v534
        %vm540 = vcmask 261120
        %v542 = vsel %vm540, %v523, 0
        %544 = vmatpush.bf16.msra.mxu0 0
        %545 = vmatpush.bf16.msra.mxu0 0
        %546 = vmatpush.bf16.msra.mxu0 0
        %547 = vmatpush.bf16.msra.mxu0 0
        %548 = vmatpush.bf16.msra.mxu0 0
        %549 = vmatpush.bf16.msra.mxu0 0
        %550 = vmatpush.bf16.msra.mxu0 %v537
        %551 = vmatpush.bf16.msra.mxu0 %v536
        %552 = vmatmul.bf16.gmra.mxu0 %v542
        %v553 = vpop.f32.mrf.mxu0
        %v554 = vadd.f32 0.0, %v553
        %v555 = vpop.f32.mrf.mxu0
        %556 = vdwg.mxu0
        %v561 = vunpack.c.l.b16 %v518
        %v562 = vunpack.c.l.b16 %v519
        %v563 = vunpack.c.l.b16 %v520
        %v564 = vunpack.c.l.b16 %v521
        %v565 = vpack.c.b16 %v562, %v561
        %v566 = vpack.c.b16 %v564, %v563
        %v570 = vsel %vm540, %v517, 0
        %572 = vmatpush.bf16.msra.mxu0 0
        %573 = vmatpush.bf16.msra.mxu0 0
        %574 = vmatpush.bf16.msra.mxu0 0
        %575 = vmatpush.bf16.msra.mxu0 0
        %576 = vmatpush.bf16.msra.mxu0 0
        %577 = vmatpush.bf16.msra.mxu0 0
        %578 = vmatpush.bf16.msra.mxu0 %v566
        %579 = vmatpush.bf16.msra.mxu0 %v565
        %580 = vmatmul.bf16.gmra.mxu0 %v570
        %v581 = vpop.f32.mrf.mxu0
        %v582 = vadd.f32 %v554, %v581
        %v583 = vpop.f32.mrf.mxu0
        %584 = vdwg.mxu0
        %v585 = vld [vmem:[#allocation4] sm:$0x1]
        %v587 = vperm.slane %v585, 0
        %v589 = vadd.f32 %v582, %v587
        %v590 = vpack.c.bf16 %v589, %v589
        %v591 = vld [vmem:[%s6] sm:$0xf]
        %v592 = vld [vmem:[%s6 + $0x4] sm:$0xf]
        %v593 = vld [vmem:[%s6 + $0x8] sm:$0xf]
        %v594 = vld [vmem:[%s6 + $0xc] sm:$0xf]
        %v595 = vld [vmem:[%s7] sm:$0x1]
        %v597 = vperm.slane %v595, 0
        %v603 = vunpack.c.l.b16 %v591
        %v604 = vunpack.c.l.b16 %v592
        %v605 = vunpack.c.l.b16 %v593
        %v606 = vunpack.c.l.b16 %v594
        %v607 = vpack.c.b16 %v604, %v603
        %v608 = vpack.c.b16 %v606, %v605
        %v612 = vsel %vm540, %v590, 0
        %614 = vmatpush.bf16.msra.mxu0 0
        %615 = vmatpush.bf16.msra.mxu0 0
        %616 = vmatpush.bf16.msra.mxu0 0
        %617 = vmatpush.bf16.msra.mxu0 0
        %618 = vmatpush.bf16.msra.mxu0 0
        %619 = vmatpush.bf16.msra.mxu0 0
        %620 = vmatpush.bf16.msra.mxu0 %v608
        %621 = vmatpush.bf16.msra.mxu0 %v607
        %622 = vmatmul.bf16.gmra.mxu0 %v612
        %v623 = vpop.f32.mrf.mxu0
        %v624 = vadd.f32 %v597, %v623
        %v625 = vpop.f32.mrf.mxu0
        %626 = vdwg.mxu0
        %v627 = vld [vmem:[%s510] sm:$0x1]
        %v628 = vpack.c.bf16 %v624, %v624
        %v630 = vperm.slane %v627, 0
        %633 = vrot.lane.b32.xlu0 %v628, 96
        %v634 = vpop.permute.xlu0 %633
        %vm635 = vcmask 64512
        %v637 = vsel %vm635, %v628, 0
        %v640 = vsel %vm635, %v634, 0
        %642 = vmatpush.bf16.xpose.msra.mxu0 0
        %643 = vmatpush.bf16.xpose.msra.mxu0 0
        %644 = vmatpush.bf16.xpose.msra.mxu0 0
        %645 = vmatpush.bf16.xpose.msra.mxu0 0
        %646 = vmatpush.bf16.xpose.msra.mxu0 0
        %647 = vmatpush.bf16.xpose.msra.mxu0 0
        %648 = vmatpush.bf16.xpose.msra.mxu0 0
        %649 = vmatpush.bf16.xpose.msra.mxu0 %v640
        %650 = vmatmul.bf16.gmra.mxu0 %v637
        %v651 = vpop.f32.mrf.mxu0
        %v652 = vadd.f32 %v630, %v651
        %v653 = vpop.f32.mrf.mxu0
        %654 = vdwg.mxu0
        %v655 = vsel %vm635, %v652, -inf
        %656 = vmax.xlane.f32.xlu0 %v655
        %v657 = vpop.xlane.xlu0 %656
        %v658 = vsub.f32 %v652, %v657
        %v659 = vmul.f32 %v658, 1.442695
        %v660 = vpow.pop %v659
        %v661 = vsel %vm635, %v660, 0.0
        %662 = vadd.xlane.f32.xlu0 %v661
        %v663 = vpop.xlane.xlu0 %662
        %v664 = vrcp.pop %v663
        %v665 = vmul.f32 %v660, %v664
        %v666 = vpack.c.bf16 %v665, %v665
        %667 = vrot.lane.b32.xlu0 %v628, 64
        %v668 = vpop.permute.xlu0 %667
        %v670 = vsel %vm635, %v666, 0
        %vm672 = vcmask 1043456
        %v674 = vsel %vm672, %v668, 0
        %676 = vmatpush.bf16.msra.mxu0 0
        %677 = vmatpush.bf16.msra.mxu0 0
        %678 = vmatpush.bf16.msra.mxu0 0
        %679 = vmatpush.bf16.msra.mxu0 0
        %680 = vmatpush.bf16.msra.mxu0 0
        %681 = vmatpush.bf16.msra.mxu0 0
        %682 = vmatpush.bf16.msra.mxu0 0
        %683 = vmatpush.bf16.msra.mxu0 %v674
        %684 = vmatmul.bf16.gmra.mxu0 %v670
        %v685 = vpop.f32.mrf.mxu0
        %v686 = vadd.f32 0.0, %v685
        %v687 = vpop.f32.mrf.mxu0
        %688 = vdwg.mxu0
        %689 = vrot.lane.b32.xlu0 %v628, 120
        %v690 = vpop.permute.xlu0 %689
        %691 = vrot.lane.b32.xlu0 %v628, 88
        %v692 = vpop.permute.xlu0 %691
        %v694 = vsel %vm635, %v690, 0
        %v697 = vsel %vm635, %v692, 0
        %699 = vmatpush.bf16.xpose.msra.mxu0 0
        %700 = vmatpush.bf16.xpose.msra.mxu0 0
        %701 = vmatpush.bf16.xpose.msra.mxu0 0
        %702 = vmatpush.bf16.xpose.msra.mxu0 0
        %703 = vmatpush.bf16.xpose.msra.mxu0 0
        %704 = vmatpush.bf16.xpose.msra.mxu0 0
        %705 = vmatpush.bf16.xpose.msra.mxu0 0
        %706 = vmatpush.bf16.xpose.msra.mxu0 %v697
        %707 = vmatmul.bf16.gmra.mxu0 %v694
        %v708 = vpop.f32.mrf.mxu0
        %v709 = vadd.f32 %v630, %v708
        %v710 = vpop.f32.mrf.mxu0
        %711 = vdwg.mxu0
        %v712 = vsel %vm635, %v709, -inf
        %713 = vmax.xlane.f32.xlu0 %v712
        %v714 = vpop.xlane.xlu0 %713
        %v715 = vsub.f32 %v709, %v714
        %v716 = vmul.f32 %v715, 1.442695
        %v717 = vpow.pop %v716
        %v718 = vsel %vm635, %v717, 0.0
        %719 = vadd.xlane.f32.xlu0 %v718
        %v720 = vpop.xlane.xlu0 %719
        %v721 = vrcp.pop %v720
        %v722 = vmul.f32 %v717, %v721
        %v723 = vpack.c.bf16 %v722, %v722
        %724 = vrot.lane.b32.xlu0 %v628, 56
        %v725 = vpop.permute.xlu0 %724
        %v727 = vsel %vm635, %v723, 0
        %v730 = vsel %vm672, %v725, 0
        %732 = vmatpush.bf16.msra.mxu0 0
        %733 = vmatpush.bf16.msra.mxu0 0
        %734 = vmatpush.bf16.msra.mxu0 0
        %735 = vmatpush.bf16.msra.mxu0 0
        %736 = vmatpush.bf16.msra.mxu0 0
        %737 = vmatpush.bf16.msra.mxu0 0
        %738 = vmatpush.bf16.msra.mxu0 0
        %739 = vmatpush.bf16.msra.mxu0 %v730
        %740 = vmatmul.bf16.gmra.mxu0 %v727
        %v741 = vpop.f32.mrf.mxu0
        %v742 = vadd.f32 0.0, %v741
        %v743 = vpop.f32.mrf.mxu0
        %744 = vdwg.mxu0
        %745 = vrot.lane.b32.xlu0 %v628, 112
        %v746 = vpop.permute.xlu0 %745
        %747 = vrot.lane.b32.xlu0 %v628, 80
        %v748 = vpop.permute.xlu0 %747
        %v750 = vsel %vm635, %v746, 0
        %v753 = vsel %vm635, %v748, 0
        %755 = vmatpush.bf16.xpose.msra.mxu0 0
        %756 = vmatpush.bf16.xpose.msra.mxu0 0
        %757 = vmatpush.bf16.xpose.msra.mxu0 0
        %758 = vmatpush.bf16.xpose.msra.mxu0 0
        %759 = vmatpush.bf16.xpose.msra.mxu0 0
        %760 = vmatpush.bf16.xpose.msra.mxu0 0
        %761 = vmatpush.bf16.xpose.msra.mxu0 0
        %762 = vmatpush.bf16.xpose.msra.mxu0 %v753
        %763 = vmatmul.bf16.gmra.mxu0 %v750
        %v764 = vpop.f32.mrf.mxu0
        %v765 = vadd.f32 %v630, %v764
        %v766 = vpop.f32.mrf.mxu0
        %767 = vdwg.mxu0
        %v768 = vsel %vm635, %v765, -inf
        %769 = vmax.xlane.f32.xlu0 %v768
        %v770 = vpop.xlane.xlu0 %769
        %v771 = vsub.f32 %v765, %v770
        %v772 = vmul.f32 %v771, 1.442695
        %v773 = vpow.pop %v772
        %v774 = vsel %vm635, %v773, 0.0
        %775 = vadd.xlane.f32.xlu0 %v774
        %v776 = vpop.xlane.xlu0 %775
        %v777 = vrcp.pop %v776
        %v778 = vmul.f32 %v773, %v777
        %v779 = vpack.c.bf16 %v778, %v778
        %780 = vrot.lane.b32.xlu0 %v628, 48
        %v781 = vpop.permute.xlu0 %780
        %v783 = vsel %vm635, %v779, 0
        %v786 = vsel %vm672, %v781, 0
        %788 = vmatpush.bf16.msra.mxu0 0
        %789 = vmatpush.bf16.msra.mxu0 0
        %790 = vmatpush.bf16.msra.mxu0 0
        %791 = vmatpush.bf16.msra.mxu0 0
        %792 = vmatpush.bf16.msra.mxu0 0
        %793 = vmatpush.bf16.msra.mxu0 0
        %794 = vmatpush.bf16.msra.mxu0 0
        %795 = vmatpush.bf16.msra.mxu0 %v786
        %796 = vmatmul.bf16.gmra.mxu0 %v783
        %v797 = vpop.f32.mrf.mxu0
        %v798 = vadd.f32 0.0, %v797
        %v799 = vpop.f32.mrf.mxu0
        %800 = vdwg.mxu0
        %801 = vrot.lane.b32.xlu0 %v628, 104
        %v802 = vpop.permute.xlu0 %801
        %803 = vrot.lane.b32.xlu0 %v628, 72
        %v804 = vpop.permute.xlu0 %803
        %v806 = vsel %vm635, %v802, 0
        %v809 = vsel %vm635, %v804, 0
        %811 = vmatpush.bf16.xpose.msra.mxu0 0
        %812 = vmatpush.bf16.xpose.msra.mxu0 0
        %813 = vmatpush.bf16.xpose.msra.mxu0 0
        %814 = vmatpush.bf16.xpose.msra.mxu0 0
        %815 = vmatpush.bf16.xpose.msra.mxu0 0
        %816 = vmatpush.bf16.xpose.msra.mxu0 0
        %817 = vmatpush.bf16.xpose.msra.mxu0 0
        %818 = vmatpush.bf16.xpose.msra.mxu0 %v809
        %819 = vmatmul.bf16.gmra.mxu0 %v806
        %v820 = vpop.f32.mrf.mxu0
        %v821 = vadd.f32 %v630, %v820
        %v822 = vpop.f32.mrf.mxu0
        %823 = vdwg.mxu0
        %v824 = vsel %vm635, %v821, -inf
        %825 = vmax.xlane.f32.xlu0 %v824
        %v826 = vpop.xlane.xlu0 %825
        %v827 = vsub.f32 %v821, %v826
        %v828 = vmul.f32 %v827, 1.442695
        %v829 = vpow.pop %v828
        %v830 = vsel %vm635, %v829, 0.0
        %831 = vadd.xlane.f32.xlu0 %v830
        %v832 = vpop.xlane.xlu0 %831
        %v833 = vrcp.pop %v832
        %v834 = vmul.f32 %v829, %v833
        %v835 = vpack.c.bf16 %v834, %v834
        %836 = vrot.lane.b32.xlu0 %v628, 40
        %v837 = vpop.permute.xlu0 %836
        %v839 = vsel %vm635, %v835, 0
        %v842 = vsel %vm672, %v837, 0
        %844 = vmatpush.bf16.msra.mxu0 0
        %845 = vmatpush.bf16.msra.mxu0 0
        %846 = vmatpush.bf16.msra.mxu0 0
        %847 = vmatpush.bf16.msra.mxu0 0
        %848 = vmatpush.bf16.msra.mxu0 0
        %849 = vmatpush.bf16.msra.mxu0 0
        %850 = vmatpush.bf16.msra.mxu0 0
        %851 = vmatpush.bf16.msra.mxu0 %v842
        %852 = vmatmul.bf16.gmra.mxu0 %v839
        %v853 = vpop.f32.mrf.mxu0
        %v854 = vadd.f32 0.0, %v853
        %v855 = vpop.f32.mrf.mxu0
        %856 = vdwg.mxu0
        %858 = vrot.lane.b32.xlu0 %v742, 8
        %v859 = vpop.permute.xlu0 %858
        %862 = vrot.lane.b32.xlu0 %v798, 16
        %v863 = vpop.permute.xlu0 %862
        %866 = vrot.lane.b32.xlu0 %v854, 24
        %v867 = vpop.permute.xlu0 %866
        %v869 = vsel %vm635, %v686, %v859
        %vm870 = vcmask 130048
        %v871 = vsel %vm870, %v869, %v863
        %vm872 = vcmask 195584
        %v873 = vsel %vm872, %v871, %v867
        %v874 = vld [vmem:[%s8] sm:$0xf]
        %v875 = vld [vmem:[%s8 + $0x4] sm:$0xf]
        %v876 = vld [vmem:[%s8 + $0x8] sm:$0xf]
        %v877 = vld [vmem:[%s8 + $0xc] sm:$0xf]
        %v878 = vld [vmem:[#allocation6] sm:$0x1]
        %v879 = vld [vmem:[#allocation7] sm:$0x1]
        %v880 = vld [vmem:[#allocation9] sm:$0x1]
        %v881 = vpack.c.bf16 %v873, %v873
        %v883 = vperm.slane %v878, 0
        %v889 = vunpack.c.l.b16 %v874
        %v890 = vunpack.c.l.b16 %v875
        %v891 = vunpack.c.l.b16 %v876
        %v892 = vunpack.c.l.b16 %v877
        %v893 = vpack.c.b16 %v890, %v889
        %v894 = vpack.c.b16 %v892, %v891
        %v898 = vsel %vm540, %v881, 0
        %900 = vmatpush.bf16.msra.mxu0 0
        %901 = vmatpush.bf16.msra.mxu0 0
        %902 = vmatpush.bf16.msra.mxu0 0
        %903 = vmatpush.bf16.msra.mxu0 0
        %904 = vmatpush.bf16.msra.mxu0 0
        %905 = vmatpush.bf16.msra.mxu0 0
        %906 = vmatpush.bf16.msra.mxu0 %v894
        %907 = vmatpush.bf16.msra.mxu0 %v893
        %908 = vmatmul.bf16.gmra.mxu0 %v898
        %v909 = vpop.f32.mrf.mxu0
        %v910 = vadd.f32 %v883, %v909
        %v911 = vpop.f32.mrf.mxu0
        %912 = vdwg.mxu0
        %v913 = vadd.f32 %v910, %v589
        %v914 = vsel %vm540, %v913, 0.0
        %915 = vadd.xlane.f32.xlu0 %v914
        %v916 = vpop.xlane.xlu0 %915
        %v917 = vrcp.pop 32.0
        %v918 = vmul.f32 32.0, %v917
        %v919 = vsub.f32 1.0, %v918
        %v920 = vmul.f32 %v917, %v919
        %v921 = vadd.f32 %v917, %v920
        %vm922 = vweird.f32 %v917
        %v923 = vsel %vm922, %v917, %v921
        %v924 = vmul.f32 %v916, %v923
        %v925 = vsub.f32 %v913, %v924
        %v926 = vmul.f32 %v925, %v925
        %v927 = vsel %vm540, %v926, 0.0
        %928 = vadd.xlane.f32.xlu0 %v927
        %v929 = vpop.xlane.xlu0 %928
        %v930 = vmul.f32 %v929, %v923
        %v931 = vadd.f32 %v930, 1e-05
        %v932 = vrsqrt.pop %v931
        %v933 = vmul.f32 %v932, %v931
        %v934 = vmul.f32 %v933, %v932
        %v935 = vmul.f32 0.5, %v934
        %v936 = vsub.f32 1.5, %v935
        %v937 = vmul.f32 %v932, %v936
        %vm938 = vweird.f32 %v931
        %vm939 = vweird.f32 %v932
        %vm940 = vmor %vm938, %vm939
        %v941 = vsel %vm940, %v932, %v937
        %v942 = vmul.f32 %v925, %v941
        %v944 = vperm.slane %v879, 0
        %v946 = vmul.f32 %v942, %v944
        %v948 = vperm.slane %v880, 0
        %v950 = vadd.f32 %v946, %v948
        %951 = vst.msk [vmem:[%s514] sm:$0xff] %vm540, %v950
        %p952 = scmp.lt.s32.totalorder %s26, 1
        %s953 = scalar_select %p952, %s26, 1
        %s954 = smul.addr %s953, 8
        %s955 = scalar_lea.vmem %s12, %s954
        // Predicated region
        $region89: #{skip_decode_transformer.15} parent=67 // pred_check
          %p956 = pneg %p311
        $region90: #{skip_decode_transformer.15} parent=67 // pred_check_branch
          %958 = sbr.rel (%p956) target = $region92
        $region91: #{skip_decode_transformer.15} parent=67 // pred_region
          _
        $region92: #{skip_decode_transformer.15} parent=67 // pred_fallthru
          _
      $region68: #{skip_decode_transformer.15} parent=5 // pred_fallthru
        _
      %p959 = scmp.le.s32.totalorder 2, %s21
      // Predicated region
      $region93: #{skip_decode_transformer.15} parent=5 // pred_check
        %p960 = pneg %p959
      $region94: #{skip_decode_transformer.15} parent=5 // pred_check_branch
        %962 = sbr.rel (%p960) target = $region96
      $region95: #{skip_decode_transformer.15} parent=5 // pred_region
        %s963 = ssub.s32 %s21, 2
        // Predicated region
        $region97: #{skip_decode_transformer.15} parent=95 // pred_check
          %p964 = pneg %p317
        $region98: #{skip_decode_transformer.15} parent=95 // pred_check_branch
          %966 = sbr.rel (%p964) target = $region100
        $region99: #{skip_decode_transformer.15} parent=95 // pred_region
          %p967 = scmp.lt.s32.totalorder %s27, 1
          %s968 = scalar_select %p967, %s27, 1
          %s969 = smul.addr %s968, 8
          %s970 = scalar_lea.vmem %s12, %s969
        $region100: #{skip_decode_transformer.15} parent=95 // pred_fallthru
          _
      $region96: #{skip_decode_transformer.15} parent=5 // pred_fallthru
        _
    $region6: #{skip_decode_transformer.15} parent=1 // loop_footer
      %s25 = sadd.s32 1, %s21
    $region7: #{skip_decode_transformer.15} parent=1 // loop_footer_branch
      %20 = sbr.rel target = $region3
    $region8: #{skip_decode_transformer.15} parent=1 // loop_exit
      _
    %971 = vsyncpa [#allocation3], 1
    %s972 = scalar_lea.sflag [#allocation3], 1
    %973 = vsyncpa %s972, 1
    %974 = vsyncpa [#allocation5], 1
    %975 = vsyncpa [#allocation8], 1

</llo_original>
